<compile_context>
chip_gen: v7x
topology: tpu7x:2x2x1
jax: 0.10.0
libtpu: 0.0.40
codegen_flags: <defaults>
</compile_context>

<pallas_src>
import functools

import jax
import jax.numpy as jnp
from jax.experimental import pallas as pl
from jax.experimental.pallas import tpu as pltpu


# ----------------------------- small utilities ----------------------------- #

def _round_up(x, m):
    return -(-x // m) * m


def _tpu_vmem_capacity_bytes():
    try:
        return int(pltpu.get_tpu_info().vmem_capacity_bytes)
    except Exception:                      # no TPU / API mismatch -> be safe
        return 64 * 1024 * 1024


_VMEM_CAP = _tpu_vmem_capacity_bytes()
# ~48 MiB budget on v7x (64 MiB physical), ~96 MiB on v5e/v6e (128 MiB).
_VMEM_LIMIT = max(32 * 1024 * 1024, min(int(_VMEM_CAP * 0.75), 100 * 1024 * 1024))
# Bigger row tiles where VMEM allows it (v5e/v6e).
_DEFAULT_TR = 8 if _VMEM_CAP <= 64 * 1024 * 1024 else 16

_CONV_CP = pltpu.CompilerParams(
    dimension_semantics=("parallel", "parallel", "arbitrary"),
    vmem_limit_bytes=_VMEM_LIMIT)


# ----------------------------- layout helpers ------------------------------ #

def _conv_geometry(H, W, tr):
    """Row-tile geometry for the flattened-halo 3x3 conv."""
    tr = max(1, min(tr, H))
    Hp = _round_up(H, tr)            # H rounded up to a whole number of tiles
    T = Hp // tr
    Wp = _round_up(W + 2, 8)         # padded width, sublane (8) aligned
    Lt = (tr + 3) * Wp               # input rows per tile (2-row halo + spare)
    Mt = tr * Wp                     # output rows per tile
    return tr, Hp, T, Wp, Lt, Mt


def _make_conv_tiles(x, tr, Hp, Wp):
    """(N,H,W,C) -> (N, T, (tr+3)*Wp, C) bf16: overlapping zero-haloed row tiles.

    Padded image (single jnp.pad): 1 top halo row, (Hp-H)+2 bottom zero rows,
    1 left zero col, Wp-W-1 right zero cols.  Tile t covers padded rows
    [t*tr, t*tr + tr + 3), flattened so tap (dy,dx) of output row m is the
    contiguous slab rows [dy*Wp + dx + m].
    """
    N, H, W, C = x.shape
    T = Hp // tr
    xp = jnp.pad(x.astype(jnp.bfloat16),
                 ((0, 0), (1, Hp - H + 2), (1, Wp - W - 1), (0, 0)))
    idx = jnp.arange(T)[:, None] * tr + jnp.arange(tr + 3)[None, :]   # (T,tr+3)
    xt = xp[:, idx]                                     # (N, T, tr+3, Wp, C)
    return xt.reshape(N, T, (tr + 3) * Wp, C)


def _make_row_tiles(x, tr, Hp, Wp):
    """(N,H,W,C) -> (N, T, tr*Wp, C) bf16 non-overlapping padded-width tiles."""
    N, H, W, C = x.shape
    T = Hp // tr
    xp = jnp.pad(x.astype(jnp.bfloat16),
                 ((0, 0), (0, Hp - H), (0, Wp - W), (0, 0)))
    return xp.reshape(N, T, tr * Wp, C)


def _untile_rows(y, H, W, tr):
    """(N, T, tr*Wp, C) -> (N, H, W, C): drop row/width padding."""
    N, T, Mt, C = y.shape
    Wp = Mt // tr
    return y.reshape(N, T * tr, Wp, C)[:, :H, :W, :]


# ----------------------------- Pallas kernels ------------------------------ #

def _accum_taps(xt_ref, w3_ref, acc_ref, dy, *, Wp, Mt):
    """Accumulate the three dx taps of stencil row `dy` (static row offsets).

    Each tap is one K=Cin MXU matmul on a contiguous slab of the flattened
    haloed tile -> no im2col concat copies (preferred at production Cin>=512).
    """
    cout = w3_ref.shape[-1]
    part = jnp.zeros((Mt, cout), jnp.float32)
    base = dy * Wp
    for dx in range(3):
        part += jnp.dot(xt_ref[base + dx: base + dx + Mt, :], w3_ref[dx],
                        preferred_element_type=jnp.float32)
    acc_ref[...] += part


def _localup_kernel(xt_ref, w3_ref, b3_ref, w1_ref, b1_ref, res_ref, o_ref,
                    acc_ref, *, Wp, Mt):
    """Fused localUp row tile: conv3x3+BN+ReLU -> 1x1+BN+ReLU -> + residual.

    grid = (batch, row tile, dy); dy is the K/reduction axis ('arbitrary'):
    the f32 accumulator is zeroed at dy==0 and the epilogue runs at dy==last.
    """
    dy = pl.program_id(2)

    @pl.when(dy == 0)
    def _init():
        acc_ref[...] = jnp.zeros_like(acc_ref)

    # Static-offset branch per dy value (weight chunk for this dy is streamed
    # in via the BlockSpec index map).
    for d in range(3):
        @pl.when(dy == d)
        def _acc(d=d):
            _accum_taps(xt_ref, w3_ref, acc_ref, d, Wp=Wp, Mt=Mt)

    @pl.when(dy == pl.num_programs(2) - 1)
    def _finalize():
        y = jnp.maximum(acc_ref[...] + b3_ref[...], 0.0)          # BN + ReLU
        y = jnp.dot(y.astype(jnp.bfloat16), w1_ref[...],
                    preferred_element_type=jnp.float32)           # fused 1x1
        y = jnp.maximum(y + b1_ref[...], 0.0)                     # BN + ReLU
        o_ref[...] = (y + res_ref[...].astype(jnp.float32)).astype(o_ref.dtype)


def _conv3x3_kernel(xt_ref, w3_ref, b3_ref, o_ref, acc_ref, *, Wp, Mt):
    """psp tail row tile: conv3x3 + folded BN + ReLU (same grid structure)."""
    dy = pl.program_id(2)

    @pl.when(dy == 0)
    def _init():
        acc_ref[...] = jnp.zeros_like(acc_ref)

    for d in range(3):
        @pl.when(dy == d)
        def _acc(d=d):
            _accum_taps(xt_ref, w3_ref, acc_ref, d, Wp=Wp, Mt=Mt)

    @pl.when(dy == pl.num_programs(2) - 1)
    def _finalize():
        o_ref[...] = jnp.maximum(acc_ref[...] + b3_ref[...], 0.0
                                 ).astype(o_ref.dtype)


def _mm_bias_kernel(x_ref, w_ref, b_ref, o_ref, *, relu):
    y = jnp.dot(x_ref[...], w_ref[...], preferred_element_type=jnp.float32)
    y = y + b_ref[...]
    if relu:
        y = jnp.maximum(y, 0.0)
    o_ref[...] = y.astype(o_ref.dtype)


def _psp_pool_mm_kernel(x_ref, w_ref, b_ref, o_ref):
    y = jnp.dot(x_ref[...], w_ref[...], preferred_element_type=jnp.float32)
    o_ref[...] = jnp.maximum(y + b_ref[...], 0.0).astype(o_ref.dtype)


# ------------------------------ kernel wrappers ----------------------------- #

def localup_fused(x, w3, bn3_scale, bn3_shift, w1, bn1_scale, bn1_shift, res,
                  tr=_DEFAULT_TR):
    """x: (N,H,W,Cin) f32/bf16; w3: (9,Cin,Cin); w1: (Cin,Cmid); res: (N,H,W,Cmid).

    Returns (N,H,W,Cmid) bf16.
    """
    N, H, W, Cin = x.shape
    Cmid = w1.shape[1]
    tr, Hp, T, Wp, Lt, Mt = _conv_geometry(H, W, tr)

    # Fold BN scale into the conv weights at trace time; kernels see shift only.
    w3f = (w3 * bn3_scale[None, None, :]).astype(jnp.bfloat16)
    w3f = w3f.reshape(3, 3, Cin, Cin)                  # (dy, dx, cin, cout)
    b3 = bn3_shift.reshape(1, Cin).astype(jnp.float32)
    w1f = (w1 * bn1_scale[None, :]).astype(jnp.bfloat16)
    b1 = bn1_shift.reshape(1, Cmid).astype(jnp.float32)

    xt = _make_conv_tiles(x, tr, Hp, Wp)               # (N, T, Lt, Cin) bf16
    rt = _make_row_tiles(res, tr, Hp, Wp)              # (N, T, Mt, Cmid) bf16

    kern = functools.partial(_localup_kernel, Wp=Wp, Mt=Mt)
    out = pl.pallas_call(
        kern,
        out_shape=jax.ShapeDtypeStruct((N, T, Mt, Cmid), jnp.bfloat16),
        grid=(N, T, 3),
        in_specs=[
            # input tile: constant over dy -> VMEM-resident for the 3 K-steps
            pl.BlockSpec((None, None, Lt, Cin), lambda b, t, k: (b, t, 0, 0)),
            # 3x3 weight: one dy-chunk per K-step (streamed, not fully resident)
            pl.BlockSpec((None, 3, Cin, Cin), lambda b, t, k: (k, 0, 0, 0)),
            pl.BlockSpec((1, Cin), lambda b, t, k: (0, 0)),
            pl.BlockSpec((Cin, Cmid), lambda b, t, k: (0, 0)),
            pl.BlockSpec((1, Cmid), lambda b, t, k: (0, 0)),
            pl.BlockSpec((None, None, Mt, Cmid), lambda b, t, k: (b, t, 0, 0)),
        ],
        out_specs=pl.BlockSpec((None, None, Mt, Cmid),
                               lambda b, t, k: (b, t, 0, 0)),
        scratch_shapes=[pltpu.VMEM((Mt, Cin), jnp.float32)],
        compiler_params=_CONV_CP,
    )(xt, w3f, b3, w1f, b1, rt)
    return _untile_rows(out, H, W, tr)


def conv3x3_bn_relu(x, w3, bn_scale, bn_shift, tr=_DEFAULT_TR):
    """x: (N,H,W,Cin); w3: (9,Cin,Cout) taps in (dy,dx) order. Returns bf16."""
    N, H, W, Cin = x.shape
    Cout = w3.shape[-1]
    tr, Hp, T, Wp, Lt, Mt = _conv_geometry(H, W, tr)

    w3f = (w3 * bn_scale[None, None, :]).astype(jnp.bfloat16)
    w3f = w3f.reshape(3, 3, Cin, Cout)
    b3 = bn_shift.reshape(1, Cout).astype(jnp.float32)
    xt = _make_conv_tiles(x, tr, Hp, Wp)

    kern = functools.partial(_conv3x3_kernel, Wp=Wp, Mt=Mt)
    out = pl.pallas_call(
        kern,
        out_shape=jax.ShapeDtypeStruct((N, T, Mt, Cout), jnp.bfloat16),
        grid=(N, T, 3),
        in_specs=[
            pl.BlockSpec((None, None, Lt, Cin), lambda b, t, k: (b, t, 0, 0)),
            pl.BlockSpec((None, 3, Cin, Cout), lambda b, t, k: (k, 0, 0, 0)),
            pl.BlockSpec((1, Cout), lambda b, t, k: (0, 0)),
        ],
        out_specs=pl.BlockSpec((None, None, Mt, Cout),
                               lambda b, t, k: (b, t, 0, 0)),
        scratch_shapes=[pltpu.VMEM((Mt, Cout), jnp.float32)],
        compiler_params=_CONV_CP,
    )(xt, w3f, b3)
    return _untile_rows(out, H, W, tr)


def matmul_bias(x, w, bias, relu):
    """(M,Cin) @ (Cin,Cout) + bias (+ReLU); bf16 MXU, f32 epilogue/output.

    tm is chosen to divide M when possible (no zero-pad copy), up to 2048 rows.
    """
    M, Cin = x.shape
    Cout = w.shape[1]
    tm = None
    for cand in (2048, 1536, 1024, 768, 512, 384, 256, 128, 64, 32, 16, 8):
        if cand <= M and M % cand == 0:
            tm = cand
            break
    if tm is None:
        tm = min(1024, _round_up(M, 8))
    mp = _round_up(M, tm)
    xb = x.astype(jnp.bfloat16)
    if mp != M:
        xb = jnp.pad(xb, ((0, mp - M), (0, 0)))

    out = pl.pallas_call(
        functools.partial(_mm_bias_kernel, relu=relu),
        out_shape=jax.ShapeDtypeStruct((mp, Cout), jnp.float32),
        grid=(mp // tm,),
        in_specs=[
            pl.BlockSpec((tm, Cin), lambda i: (i, 0)),
            pl.BlockSpec((Cin, Cout), lambda i: (0, 0)),   # resident over grid
            pl.BlockSpec((1, Cout), lambda i: (0, 0)),
        ],
        out_specs=pl.BlockSpec((tm, Cout), lambda i: (i, 0)),
        compiler_params=pltpu.CompilerParams(
            dimension_semantics=("parallel",),
            vmem_limit_bytes=_VMEM_LIMIT),
    )(xb, w.astype(jnp.bfloat16),
      jnp.asarray(bias, jnp.float32).reshape(1, Cout))
    return out[:M]


def psp_pooled_convs(pooled, weights, scales, shifts):
    """All four pyramid-pool 1x1 convs (+folded BN+ReLU) in one pallas_call.

    Pooled features (bins 1/2/3/6) are row-padded to a common M and stacked on
    a grid axis of 4, replacing four tiny separate launches.  Outputs bf16.
    """
    n_bins = len(pooled)
    N = pooled[0].shape[0]
    Cin = pooled[0].shape[-1]
    Cout = weights[0].shape[1]
    rows = [p.shape[1] * p.shape[2] * N for p in pooled]
    max_m = _round_up(max(rows), 8)
    xs = []
    for p, r in zip(pooled, rows):
        flat = p.astype(jnp.bfloat16).reshape(r, Cin)
        if r < max_m:
            flat = jnp.pad(flat, ((0, max_m - r), (0, 0)))
        xs.append(flat)
    x = jnp.stack(xs, axis=0)                                   # (4, maxM, Cin)
    wf = jnp.stack([w * s[None, :] for w, s in zip(weights, scales)],
                   axis=0).astype(jnp.bfloat16)                 # (4, Cin, Cout)
    bf = jnp.stack([sh.reshape(1, Cout) for sh in shifts],
                   axis=0).astype(jnp.float32)                  # (4, 1, Cout)

    out = pl.pallas_call(
        _psp_pool_mm_kernel,
        out_shape=jax.ShapeDtypeStruct((n_bins, max_m, Cout), jnp.bfloat16),
        grid=(n_bins,),
        in_specs=[
            pl.BlockSpec((None, max_m, Cin), lambda i: (i, 0, 0)),
            pl.BlockSpec((None, Cin, Cout), lambda i: (i, 0, 0)),
            pl.BlockSpec((None, 1, Cout), lambda i: (i, 0, 0)),
        ],
        out_specs=pl.BlockSpec((None, max_m, Cout), lambda i: (i, 0, 0)),
        compiler_params=pltpu.CompilerParams(
            dimension_semantics=("parallel",)),
    )(x, wf, bf)

    res = []
    for i, p in enumerate(pooled):
        k = p.shape[1]
        res.append(out[i, :rows[i]].reshape(N, k, k, Cout))
    return res


# ------------------------------ JAX glue ops ------------------------------- #

def upsample_bilinear_ac(x, out_h, out_w):
    """Bilinear upsample, align_corners=True (PyTorch semantics). NHWC.

    Lerp in f32, result cast back to x.dtype (bf16 stays bf16).
    """
    N, H, W, C = x.shape

    def coords(size_in, size_out):
        if size_out == 1:
            src = jnp.zeros((1,), jnp.float32)
        else:
            scale = (size_in - 1) / (size_out - 1)
            src = jnp.arange(size_out, dtype=jnp.float32) * scale
        i0 = jnp.clip(jnp.floor(src).astype(jnp.int32), 0, size_in - 1)
        i1 = jnp.clip(i0 + 1, 0, size_in - 1)
        frac = src - i0.astype(jnp.float32)
        return i0, i1, frac

    h0, h1, fh = coords(H, out_h)
    w0, w1, fw = coords(W, out_w)
    xa = (x[:, h0] * (1.0 - fh)[None, :, None, None]
          + x[:, h1] * fh[None, :, None, None])
    y = (xa[:, :, w0] * (1.0 - fw)[None, None, :, None]
         + xa[:, :, w1] * fw[None, None, :, None])
    return y.astype(x.dtype)


def adaptive_avg_pool(x, k):
    """Exact PyTorch AdaptiveAvgPool2d(k) semantics, NHWC, f32 accumulation."""
    N, H, W, C = x.shape
    xf = x.astype(jnp.float32)

    def bins(size, kk):
        return [(int((i * size) // kk), int(-((-(i + 1) * size) // kk)))
                for i in range(kk)]

    hb, wb = bins(H, k), bins(W, k)
    rows = []
    for (hs, he) in hb:
        cols = [jnp.mean(xf[:, hs:he, ws:we, :], axis=(1, 2))
                for (ws, we) in wb]
        rows.append(jnp.stack(cols, axis=1))
    return jnp.stack(rows, axis=1)  # (N, k, k, C) f32


def pyramid_pools(x):
    """Adaptive pools to 1/2/3/6 bins reading the big activation ONCE when
    6 | H and 6 | W (uniform bins nest exactly); otherwise falls back to four
    exact adaptive pools (used at the toy test size)."""
    N, H, W, C = x.shape
    if H % 6 == 0 and W % 6 == 0:
        xf = x.astype(jnp.float32)
        p6 = xf.reshape(N, 6, H // 6, 6, W // 6, C).mean(axis=(2, 4))
        p3 = p6.reshape(N, 3, 2, 3, 2, C).mean(axis=(2, 4))
        p2 = p6.reshape(N, 2, 3, 2, 3, C).mean(axis=(2, 4))
        p1 = p6.mean(axis=(1, 2), keepdims=True)
        return [p1, p2, p3, p6]
    return [adaptive_avg_pool(x, k) for k in (1, 2, 3, 6)]


# ------------------------------- Parameters -------------------------------- #

def init_params(key, c2_ch, c3_ch, in_ch, out_ch):
    inter = in_ch // 4
    keys = iter(jax.random.split(key, 64))

    def nrm(shape, s=0.05):
        return s * jax.random.normal(next(keys), shape, jnp.float32)

    def bn(c):
        gamma = 1.0 + 0.1 * jax.random.normal(next(keys), (c,), jnp.float32)
        beta = 0.1 * jax.random.normal(next(keys), (c,), jnp.float32)
        mean = 0.1 * jax.random.normal(next(keys), (c,), jnp.float32)
        var = 1.0 + 0.5 * jax.random.uniform(next(keys), (c,), jnp.float32)
        scale = gamma / jnp.sqrt(var + 1e-5)
        shift = beta - mean * scale
        return scale, shift

    def local_up(cin):
        w3 = nrm((9, cin, cin))          # 3x3 conv, cin->cin
        s3, b3 = bn(cin)
        w1 = nrm((cin, in_ch))           # 1x1 conv, cin->in_ch
        s1, b1 = bn(in_ch)
        return dict(w3=w3, bn3_scale=s3, bn3_shift=b3,
                    w1=w1, bn1_scale=s1, bn1_shift=b1)

    params = {
        "localUp4": local_up(c3_ch),
        "localUp3": local_up(c2_ch),
        "psp_pool": [],
    }
    for _ in range(4):                   # conv1..conv4 of PyramidPooling
        w = nrm((in_ch, inter))
        s, b = bn(inter)
        params["psp_pool"].append(dict(w=w, bn_scale=s, bn_shift=b))
    w = nrm((9, 2 * in_ch, inter))       # psp 3x3 conv: 2*in_ch -> inter
    s, b = bn(inter)
    params["psp_conv"] = dict(w3=w, bn_scale=s, bn_shift=b)
    params["conv6"] = dict(w=nrm((inter, out_ch)),
                           b=0.05 * jax.random.normal(next(keys), (out_ch,),
                                                      jnp.float32))
    return params


# --------------------------------- Forward --------------------------------- #

def fpn_psp_head_forward(params, c1, c2, c3, c4, c20, c30, c40):
    """Matches fpn_pspHead.forward; c1/c20/c30/c40 are accepted but unused."""
    del c1, c20, c30, c40
    to_nhwc = lambda t: jnp.transpose(t, (0, 2, 3, 1))
    c2n, c3n, c4n = to_nhwc(c2), to_nhwc(c3), to_nhwc(c4)

    # localUp4(c3, c4): fused conv3x3+BN+ReLU -> 1x1+BN+ReLU -> + upsampled c4
    H3, W3 = c3n.shape[1], c3n.shape[2]
    p = params["localUp4"]
    out = localup_fused(c3n, p["w3"], p["bn3_scale"], p["bn3_shift"],
                        p["w1"], p["bn1_scale"], p["bn1_shift"],
                        upsample_bilinear_ac(c4n.astype(jnp.bfloat16), H3, W3))

    # localUp3(c2, out)
    H2, W2 = c2n.shape[1], c2n.shape[2]
    p = params["localUp3"]
    out = localup_fused(c2n, p["w3"], p["bn3_scale"], p["bn3_shift"],
                        p["w1"], p["bn1_scale"], p["bn1_shift"],
                        upsample_bilinear_ac(out, H2, W2))

    # PyramidPooling: pools (single pass when 6|H,W) -> one batched 1x1 kernel
    pooled = pyramid_pools(out)
    pp = params["psp_pool"]
    convs = psp_pooled_convs(pooled,
                             [q["w"] for q in pp],
                             [q["bn_scale"] for q in pp],
                             [q["bn_shift"] for q in pp])
    feats = [out] + [upsample_bilinear_ac(f, H2, W2) for f in convs]
    cat = jnp.concatenate(feats, axis=-1)        # bf16, torch.cat(dim=1) in NHWC

    # psp tail: 3x3 conv (2*in_ch -> inter) + BN + ReLU (row/K tiled kernel)
    pc = params["psp_conv"]
    out = conv3x3_bn_relu(cat, pc["w3"], pc["bn_scale"], pc["bn_shift"])

    # conv6: Dropout2d(0.1) identity at inference; 1x1 conv with bias.
    # Cout padded to 128 for lane-dense stores; classes sliced back afterwards.
    p6 = params["conv6"]
    inter, n_cls = p6["w"].shape
    cout_p = _round_up(n_cls, 128)
    w6 = jnp.zeros((inter, cout_p), jnp.float32).at[:, :n_cls].set(p6["w"])
    b6 = jnp.zeros((cout_p,), jnp.float32).at[:n_cls].set(p6["b"])
    N = out.shape[0]
    y = matmul_bias(out.reshape(N * H2 * W2, inter), w6, b6, relu=False)
    out = y[:, :n_cls].reshape(N, H2, W2, n_cls)

    return jnp.transpose(out, (0, 3, 1, 2))      # back to NCHW, f32


# ----------------------------------- Main ----------------------------------- #

if __name__ == "__main__":
    key = jax.random.PRNGKey(0)
    kp, kc1, kc2, kc3, kc4, kd = jax.random.split(key, 6)

    N = 2
    C2_CH, C3_CH, IN_CH, OUT_CH = 16, 32, 64, 8      # scaled-down 512/1024/2048
    H2 = W2 = 16
    H3 = W3 = 8
    H4 = W4 = 4

    # NCHW inputs, like the PyTorch module
    c1 = jax.random.normal(kc1, (N, 8, 32, 32), jnp.float32)      # unused
    c2 = jax.random.normal(kc2, (N, C2_CH, H2, W2), jnp.float32)
    c3 = jax.random.normal(kc3, (N, C3_CH, H3, W3), jnp.float32)
    c4 = jax.random.normal(kc4, (N, IN_CH, H4, W4), jnp.float32)
    c20 = jax.random.normal(kd, (N, 4, 4, 4), jnp.float32)        # unused
    c30, c40 = c20, c20                                           # unused

    params = init_params(kp, C2_CH, C3_CH, IN_CH, OUT_CH)

    fwd = jax.jit(fpn_psp_head_forward)
    out = jax.block_until_ready(fwd(params, c1, c2, c3, c4, c20, c30, c40))
    assert out.shape == (N, OUT_CH, H2, W2), out.shape
    assert bool(jnp.all(jnp.isfinite(out)))
    print("KERNEL_OK")
</pallas_src>

<mosaic_0001>
module attributes {stable_mosaic.version = 11 : i64} {
  func.func @_localup_kernel(%arg0: i32, %arg1: i32, %arg2: i32, %arg3: memref<1x1x176x32xbf16, #tpu.memory_space<vmem>>, %arg4: memref<1x3x32x32xbf16, #tpu.memory_space<vmem>>, %arg5: memref<1x32xf32, #tpu.memory_space<vmem>>, %arg6: memref<32x64xbf16, #tpu.memory_space<vmem>>, %arg7: memref<1x64xf32, #tpu.memory_space<vmem>>, %arg8: memref<1x1x128x64xbf16, #tpu.memory_space<vmem>>, %arg9: memref<1x1x128x64xbf16, #tpu.memory_space<vmem>>, %arg10: memref<128x32xf32, #tpu.memory_space<vmem>>) attributes {dimension_semantics = [#tpu.dimension_semantics<parallel>, #tpu.dimension_semantics<parallel>, #tpu.dimension_semantics<arbitrary>], iteration_bounds = array<i64: 2, 1, 3>, scalar_prefetch = 0 : i64, scratch_operands = 1 : i64, tpu.core_type = #tpu.core_type<tc>, window_params = [{transform_indices = @transform_0, window_bounds = array<i64: 1, 1, 176, 32>}, {transform_indices = @transform_1, window_bounds = array<i64: 1, 3, 32, 32>}, {pipeline_mode = #tpu.pipeline_mode<synchronous>, transform_indices = @transform_2, window_bounds = array<i64: 1, 32>}, {pipeline_mode = #tpu.pipeline_mode<synchronous>, transform_indices = @transform_3, window_bounds = array<i64: 32, 64>}, {pipeline_mode = #tpu.pipeline_mode<synchronous>, transform_indices = @transform_4, window_bounds = array<i64: 1, 64>}, {transform_indices = @transform_5, window_bounds = array<i64: 1, 1, 128, 64>}, {transform_indices = @transform_6, window_bounds = array<i64: 1, 1, 128, 64>}]} {
    %c0_i32 = arith.constant 0 : i32
    %0 = arith.cmpi eq, %arg2, %c0_i32 : i32
    %1 = arith.extui %0 : i1 to i32
    %c0_i32_0 = arith.constant 0 : i32
    %2 = arith.cmpi ne, %1, %c0_i32_0 : i32
    scf.if %2 {
      %cst = arith.constant 0.000000e+00 : f32
      %15 = vector.broadcast %cst : f32 to vector<128x32xf32>
      %c0 = arith.constant 0 : index
      %c0_7 = arith.constant 0 : index
      %16 = vector.load %arg10[%c0, %c0_7] : memref<128x32xf32, #tpu.memory_space<vmem>>, vector<128x32xf32>
      tpu.vector_store %arg10[%c0, %c0_7], %15 {strides = array<i32>} : memref<128x32xf32, #tpu.memory_space<vmem>>, vector<128x32xf32>,
    } else {
    }
    %c0_i32_1 = arith.constant 0 : i32
    %3 = arith.cmpi eq, %arg2, %c0_i32_1 : i32
    %4 = arith.extui %3 : i1 to i32
    %c0_i32_2 = arith.constant 0 : i32
    %5 = arith.cmpi ne, %4, %c0_i32_2 : i32
    scf.if %5 {
      %cst = arith.constant 0.000000e+00 : f32
      %15 = vector.broadcast %cst : f32 to vector<128x32xf32>
      %c0 = arith.constant 0 : index
      %c0_7 = arith.constant 0 : index
      %c0_8 = arith.constant 0 : index
      %c0_9 = arith.constant 0 : index
      %16 = vector.load %arg3[%c0, %c0_7, %c0_8, %c0_9] : memref<1x1x176x32xbf16, #tpu.memory_space<vmem>>, vector<1x1x128x32xbf16>
      %17 = vector.shape_cast %16 : vector<1x1x128x32xbf16> to vector<128x32xbf16>
      %c0_10 = arith.constant 0 : index
      %c0_11 = arith.constant 0 : index
      %c0_12 = arith.constant 0 : index
      %c0_13 = arith.constant 0 : index
      %18 = vector.load %arg4[%c0_10, %c0_11, %c0_12, %c0_13] : memref<1x3x32x32xbf16, #tpu.memory_space<vmem>>, vector<1x1x32x32xbf16>
      %19 = vector.shape_cast %18 : vector<1x1x32x32xbf16> to vector<32x32xbf16>
      %cst_14 = arith.constant dense<0.000000e+00> : vector<128x32xf32>
      %20 = tpu.matmul %17, %19, %cst_14 {dimension_numbers = #tpu.dot_dimension_numbers<[1], [0], [0], [1], [0, 0, 1, 1], [], []>} : vector<128x32xbf16>, vector<32x32xbf16>, vector<128x32xf32> -> vector<128x32xf32>
      %21 = arith.addf %15, %20 : vector<128x32xf32>
      %c0_15 = arith.constant 0 : index
      %c0_16 = arith.constant 0 : index
      %c1 = arith.constant 1 : index
      %c0_17 = arith.constant 0 : index
      %22 = vector.load %arg3[%c0_15, %c0_16, %c1, %c0_17] : memref<1x1x176x32xbf16, #tpu.memory_space<vmem>>, vector<1x1x128x32xbf16>
      %23 = vector.shape_cast %22 : vector<1x1x128x32xbf16> to vector<128x32xbf16>
      %c0_18 = arith.constant 0 : index
      %c1_19 = arith.constant 1 : index
      %c0_20 = arith.constant 0 : index
      %c0_21 = arith.constant 0 : index
      %24 = vector.load %arg4[%c0_18, %c1_19, %c0_20, %c0_21] : memref<1x3x32x32xbf16, #tpu.memory_space<vmem>>, vector<1x1x32x32xbf16>
      %25 = vector.shape_cast %24 : vector<1x1x32x32xbf16> to vector<32x32xbf16>
      %cst_22 = arith.constant dense<0.000000e+00> : vector<128x32xf32>
      %26 = tpu.matmul %23, %25, %cst_22 {dimension_numbers = #tpu.dot_dimension_numbers<[1], [0], [0], [1], [0, 0, 1, 1], [], []>} : vector<128x32xbf16>, vector<32x32xbf16>, vector<128x32xf32> -> vector<128x32xf32>
      %27 = arith.addf %21, %26 : vector<128x32xf32>
      %c0_23 = arith.constant 0 : index
      %c0_24 = arith.constant 0 : index
      %c2 = arith.constant 2 : index
      %c0_25 = arith.constant 0 : index
      %28 = vector.load %arg3[%c0_23, %c0_24, %c2, %c0_25] : memref<1x1x176x32xbf16, #tpu.memory_space<vmem>>, vector<1x1x128x32xbf16>
      %29 = vector.shape_cast %28 : vector<1x1x128x32xbf16> to vector<128x32xbf16>
      %c0_26 = arith.constant 0 : index
      %c2_27 = arith.constant 2 : index
      %c0_28 = arith.constant 0 : index
      %c0_29 = arith.constant 0 : index
      %30 = vector.load %arg4[%c0_26, %c2_27, %c0_28, %c0_29] : memref<1x3x32x32xbf16, #tpu.memory_space<vmem>>, vector<1x1x32x32xbf16>
      %31 = vector.shape_cast %30 : vector<1x1x32x32xbf16> to vector<32x32xbf16>
      %cst_30 = arith.constant dense<0.000000e+00> : vector<128x32xf32>
      %32 = tpu.matmul %29, %31, %cst_30 {dimension_numbers = #tpu.dot_dimension_numbers<[1], [0], [0], [1], [0, 0, 1, 1], [], []>} : vector<128x32xbf16>, vector<32x32xbf16>, vector<128x32xf32> -> vector<128x32xf32>
      %33 = arith.addf %27, %32 : vector<128x32xf32>
      %c0_31 = arith.constant 0 : index
      %c0_32 = arith.constant 0 : index
      %34 = vector.load %arg10[%c0_31, %c0_32] : memref<128x32xf32, #tpu.memory_space<vmem>>, vector<128x32xf32>
      %35 = arith.addf %34, %33 : vector<128x32xf32>
      %c0_33 = arith.constant 0 : index
      %c0_34 = arith.constant 0 : index
      %36 = vector.load %arg10[%c0_33, %c0_34] : memref<128x32xf32, #tpu.memory_space<vmem>>, vector<128x32xf32>
      tpu.vector_store %arg10[%c0_33, %c0_34], %35 {strides = array<i32>} : memref<128x32xf32, #tpu.memory_space<vmem>>, vector<128x32xf32>,
    } else {
    }
    %c1_i32 = arith.constant 1 : i32
    %6 = arith.cmpi eq, %arg2, %c1_i32 : i32
    %7 = arith.extui %6 : i1 to i32
    %c0_i32_3 = arith.constant 0 : i32
    %8 = arith.cmpi ne, %7, %c0_i32_3 : i32
    scf.if %8 {
      %cst = arith.constant 0.000000e+00 : f32
      %15 = vector.broadcast %cst : f32 to vector<128x32xf32>
      %c0 = arith.constant 0 : index
      %c0_7 = arith.constant 0 : index
      %c16 = arith.constant 16 : index
      %c0_8 = arith.constant 0 : index
      %16 = vector.load %arg3[%c0, %c0_7, %c16, %c0_8] : memref<1x1x176x32xbf16, #tpu.memory_space<vmem>>, vector<1x1x128x32xbf16>
      %17 = vector.shape_cast %16 : vector<1x1x128x32xbf16> to vector<128x32xbf16>
      %c0_9 = arith.constant 0 : index
      %c0_10 = arith.constant 0 : index
      %c0_11 = arith.constant 0 : index
      %c0_12 = arith.constant 0 : index
      %18 = vector.load %arg4[%c0_9, %c0_10, %c0_11, %c0_12] : memref<1x3x32x32xbf16, #tpu.memory_space<vmem>>, vector<1x1x32x32xbf16>
      %19 = vector.shape_cast %18 : vector<1x1x32x32xbf16> to vector<32x32xbf16>
      %cst_13 = arith.constant dense<0.000000e+00> : vector<128x32xf32>
      %20 = tpu.matmul %17, %19, %cst_13 {dimension_numbers = #tpu.dot_dimension_numbers<[1], [0], [0], [1], [0, 0, 1, 1], [], []>} : vector<128x32xbf16>, vector<32x32xbf16>, vector<128x32xf32> -> vector<128x32xf32>
      %21 = arith.addf %15, %20 : vector<128x32xf32>
      %c0_14 = arith.constant 0 : index
      %c0_15 = arith.constant 0 : index
      %c17 = arith.constant 17 : index
      %c0_16 = arith.constant 0 : index
      %22 = vector.load %arg3[%c0_14, %c0_15, %c17, %c0_16] : memref<1x1x176x32xbf16, #tpu.memory_space<vmem>>, vector<1x1x128x32xbf16>
      %23 = vector.shape_cast %22 : vector<1x1x128x32xbf16> to vector<128x32xbf16>
      %c0_17 = arith.constant 0 : index
      %c1 = arith.constant 1 : index
      %c0_18 = arith.constant 0 : index
      %c0_19 = arith.constant 0 : index
      %24 = vector.load %arg4[%c0_17, %c1, %c0_18, %c0_19] : memref<1x3x32x32xbf16, #tpu.memory_space<vmem>>, vector<1x1x32x32xbf16>
      %25 = vector.shape_cast %24 : vector<1x1x32x32xbf16> to vector<32x32xbf16>
      %cst_20 = arith.constant dense<0.000000e+00> : vector<128x32xf32>
      %26 = tpu.matmul %23, %25, %cst_20 {dimension_numbers = #tpu.dot_dimension_numbers<[1], [0], [0], [1], [0, 0, 1, 1], [], []>} : vector<128x32xbf16>, vector<32x32xbf16>, vector<128x32xf32> -> vector<128x32xf32>
      %27 = arith.addf %21, %26 : vector<128x32xf32>
      %c0_21 = arith.constant 0 : index
      %c0_22 = arith.constant 0 : index
      %c18 = arith.constant 18 : index
      %c0_23 = arith.constant 0 : index
      %28 = vector.load %arg3[%c0_21, %c0_22, %c18, %c0_23] : memref<1x1x176x32xbf16, #tpu.memory_space<vmem>>, vector<1x1x128x32xbf16>
      %29 = vector.shape_cast %28 : vector<1x1x128x32xbf16> to vector<128x32xbf16>
      %c0_24 = arith.constant 0 : index
      %c2 = arith.constant 2 : index
      %c0_25 = arith.constant 0 : index
      %c0_26 = arith.constant 0 : index
      %30 = vector.load %arg4[%c0_24, %c2, %c0_25, %c0_26] : memref<1x3x32x32xbf16, #tpu.memory_space<vmem>>, vector<1x1x32x32xbf16>
      %31 = vector.shape_cast %30 : vector<1x1x32x32xbf16> to vector<32x32xbf16>
      %cst_27 = arith.constant dense<0.000000e+00> : vector<128x32xf32>
      %32 = tpu.matmul %29, %31, %cst_27 {dimension_numbers = #tpu.dot_dimension_numbers<[1], [0], [0], [1], [0, 0, 1, 1], [], []>} : vector<128x32xbf16>, vector<32x32xbf16>, vector<128x32xf32> -> vector<128x32xf32>
      %33 = arith.addf %27, %32 : vector<128x32xf32>
      %c0_28 = arith.constant 0 : index
      %c0_29 = arith.constant 0 : index
      %34 = vector.load %arg10[%c0_28, %c0_29] : memref<128x32xf32, #tpu.memory_space<vmem>>, vector<128x32xf32>
      %35 = arith.addf %34, %33 : vector<128x32xf32>
      %c0_30 = arith.constant 0 : index
      %c0_31 = arith.constant 0 : index
      %36 = vector.load %arg10[%c0_30, %c0_31] : memref<128x32xf32, #tpu.memory_space<vmem>>, vector<128x32xf32>
      tpu.vector_store %arg10[%c0_30, %c0_31], %35 {strides = array<i32>} : memref<128x32xf32, #tpu.memory_space<vmem>>, vector<128x32xf32>,
    } else {
    }
    %c2_i32 = arith.constant 2 : i32
    %9 = arith.cmpi eq, %arg2, %c2_i32 : i32
    %10 = arith.extui %9 : i1 to i32
    %c0_i32_4 = arith.constant 0 : i32
    %11 = arith.cmpi ne, %10, %c0_i32_4 : i32
    scf.if %11 {
      %cst = arith.constant 0.000000e+00 : f32
      %15 = vector.broadcast %cst : f32 to vector<128x32xf32>
      %c0 = arith.constant 0 : index
      %c0_7 = arith.constant 0 : index
      %c32 = arith.constant 32 : index
      %c0_8 = arith.constant 0 : index
      %16 = vector.load %arg3[%c0, %c0_7, %c32, %c0_8] : memref<1x1x176x32xbf16, #tpu.memory_space<vmem>>, vector<1x1x128x32xbf16>
      %17 = vector.shape_cast %16 : vector<1x1x128x32xbf16> to vector<128x32xbf16>
      %c0_9 = arith.constant 0 : index
      %c0_10 = arith.constant 0 : index
      %c0_11 = arith.constant 0 : index
      %c0_12 = arith.constant 0 : index
      %18 = vector.load %arg4[%c0_9, %c0_10, %c0_11, %c0_12] : memref<1x3x32x32xbf16, #tpu.memory_space<vmem>>, vector<1x1x32x32xbf16>
      %19 = vector.shape_cast %18 : vector<1x1x32x32xbf16> to vector<32x32xbf16>
      %cst_13 = arith.constant dense<0.000000e+00> : vector<128x32xf32>
      %20 = tpu.matmul %17, %19, %cst_13 {dimension_numbers = #tpu.dot_dimension_numbers<[1], [0], [0], [1], [0, 0, 1, 1], [], []>} : vector<128x32xbf16>, vector<32x32xbf16>, vector<128x32xf32> -> vector<128x32xf32>
      %21 = arith.addf %15, %20 : vector<128x32xf32>
      %c0_14 = arith.constant 0 : index
      %c0_15 = arith.constant 0 : index
      %c33 = arith.constant 33 : index
      %c0_16 = arith.constant 0 : index
      %22 = vector.load %arg3[%c0_14, %c0_15, %c33, %c0_16] : memref<1x1x176x32xbf16, #tpu.memory_space<vmem>>, vector<1x1x128x32xbf16>
      %23 = vector.shape_cast %22 : vector<1x1x128x32xbf16> to vector<128x32xbf16>
      %c0_17 = arith.constant 0 : index
      %c1 = arith.constant 1 : index
      %c0_18 = arith.constant 0 : index
      %c0_19 = arith.constant 0 : index
      %24 = vector.load %arg4[%c0_17, %c1, %c0_18, %c0_19] : memref<1x3x32x32xbf16, #tpu.memory_space<vmem>>, vector<1x1x32x32xbf16>
      %25 = vector.shape_cast %24 : vector<1x1x32x32xbf16> to vector<32x32xbf16>
      %cst_20 = arith.constant dense<0.000000e+00> : vector<128x32xf32>
      %26 = tpu.matmul %23, %25, %cst_20 {dimension_numbers = #tpu.dot_dimension_numbers<[1], [0], [0], [1], [0, 0, 1, 1], [], []>} : vector<128x32xbf16>, vector<32x32xbf16>, vector<128x32xf32> -> vector<128x32xf32>
      %27 = arith.addf %21, %26 : vector<128x32xf32>
      %c0_21 = arith.constant 0 : index
      %c0_22 = arith.constant 0 : index
      %c34 = arith.constant 34 : index
      %c0_23 = arith.constant 0 : index
      %28 = vector.load %arg3[%c0_21, %c0_22, %c34, %c0_23] : memref<1x1x176x32xbf16, #tpu.memory_space<vmem>>, vector<1x1x128x32xbf16>
      %29 = vector.shape_cast %28 : vector<1x1x128x32xbf16> to vector<128x32xbf16>
      %c0_24 = arith.constant 0 : index
      %c2 = arith.constant 2 : index
      %c0_25 = arith.constant 0 : index
      %c0_26 = arith.constant 0 : index
      %30 = vector.load %arg4[%c0_24, %c2, %c0_25, %c0_26] : memref<1x3x32x32xbf16, #tpu.memory_space<vmem>>, vector<1x1x32x32xbf16>
      %31 = vector.shape_cast %30 : vector<1x1x32x32xbf16> to vector<32x32xbf16>
      %cst_27 = arith.constant dense<0.000000e+00> : vector<128x32xf32>
      %32 = tpu.matmul %29, %31, %cst_27 {dimension_numbers = #tpu.dot_dimension_numbers<[1], [0], [0], [1], [0, 0, 1, 1], [], []>} : vector<128x32xbf16>, vector<32x32xbf16>, vector<128x32xf32> -> vector<128x32xf32>
      %33 = arith.addf %27, %32 : vector<128x32xf32>
      %c0_28 = arith.constant 0 : index
      %c0_29 = arith.constant 0 : index
      %34 = vector.load %arg10[%c0_28, %c0_29] : memref<128x32xf32, #tpu.memory_space<vmem>>, vector<128x32xf32>
      %35 = arith.addf %34, %33 : vector<128x32xf32>
      %c0_30 = arith.constant 0 : index
      %c0_31 = arith.constant 0 : index
      %36 = vector.load %arg10[%c0_30, %c0_31] : memref<128x32xf32, #tpu.memory_space<vmem>>, vector<128x32xf32>
      tpu.vector_store %arg10[%c0_30, %c0_31], %35 {strides = array<i32>} : memref<128x32xf32, #tpu.memory_space<vmem>>, vector<128x32xf32>,
    } else {
    }
    %c2_i32_5 = arith.constant 2 : i32
    %12 = arith.cmpi eq, %arg2, %c2_i32_5 : i32
    %13 = arith.extui %12 : i1 to i32
    %c0_i32_6 = arith.constant 0 : i32
    %14 = arith.cmpi ne, %13, %c0_i32_6 : i32
    scf.if %14 {
      %c0 = arith.constant 0 : index
      %c0_7 = arith.constant 0 : index
      %15 = vector.load %arg10[%c0, %c0_7] : memref<128x32xf32, #tpu.memory_space<vmem>>, vector<128x32xf32>
      %c0_8 = arith.constant 0 : index
      %c0_9 = arith.constant 0 : index
      %16 = vector.load %arg5[%c0_8, %c0_9] : memref<1x32xf32, #tpu.memory_space<vmem>>, vector<1x32xf32>
      %17 = vector.broadcast %16 : vector<1x32xf32> to vector<128x32xf32>
      %18 = arith.addf %15, %17 : vector<128x32xf32>
      %cst = arith.constant 0.000000e+00 : f32
      %19 = vector.broadcast %cst : f32 to vector<128x32xf32>
      %20 = arith.maximumf %18, %19 : vector<128x32xf32>
      %21 = arith.truncf %20 : vector<128x32xf32> to vector<128x32xbf16>
      %c0_10 = arith.constant 0 : index
      %c0_11 = arith.constant 0 : index
      %22 = vector.load %arg6[%c0_10, %c0_11] : memref<32x64xbf16, #tpu.memory_space<vmem>>, vector<32x64xbf16>
      %cst_12 = arith.constant dense<0.000000e+00> : vector<128x64xf32>
      %23 = tpu.matmul %21, %22, %cst_12 {dimension_numbers = #tpu.dot_dimension_numbers<[1], [0], [0], [1], [0, 0, 1, 1], [], []>} : vector<128x32xbf16>, vector<32x64xbf16>, vector<128x64xf32> -> vector<128x64xf32>
      %c0_13 = arith.constant 0 : index
      %c0_14 = arith.constant 0 : index
      %24 = vector.load %arg7[%c0_13, %c0_14] : memref<1x64xf32, #tpu.memory_space<vmem>>, vector<1x64xf32>
      %25 = vector.broadcast %24 : vector<1x64xf32> to vector<128x64xf32>
      %26 = arith.addf %23, %25 : vector<128x64xf32>
      %cst_15 = arith.constant 0.000000e+00 : f32
      %27 = vector.broadcast %cst_15 : f32 to vector<128x64xf32>
      %28 = arith.maximumf %26, %27 : vector<128x64xf32>
      %c0_16 = arith.constant 0 : index
      %c0_17 = arith.constant 0 : index
      %c0_18 = arith.constant 0 : index
      %c0_19 = arith.constant 0 : index
      %29 = vector.load %arg8[%c0_16, %c0_17, %c0_18, %c0_19] : memref<1x1x128x64xbf16, #tpu.memory_space<vmem>>, vector<1x1x128x64xbf16>
      %30 = vector.shape_cast %29 : vector<1x1x128x64xbf16> to vector<128x64xbf16>
      %31 = arith.extf %30 : vector<128x64xbf16> to vector<128x64xf32>
      %32 = arith.addf %28, %31 : vector<128x64xf32>
      %33 = arith.truncf %32 : vector<128x64xf32> to vector<128x64xbf16>
      %c0_20 = arith.constant 0 : index
      %c0_21 = arith.constant 0 : index
      %c0_22 = arith.constant 0 : index
      %c0_23 = arith.constant 0 : index
      %34 = vector.load %arg9[%c0_20, %c0_21, %c0_22, %c0_23] : memref<1x1x128x64xbf16, #tpu.memory_space<vmem>>, vector<1x1x128x64xbf16>
      %35 = vector.shape_cast %34 : vector<1x1x128x64xbf16> to vector<128x64xbf16>
      %36 = vector.shape_cast %33 : vector<128x64xbf16> to vector<1x1x128x64xbf16>
      tpu.vector_store %arg9[%c0_20, %c0_21, %c0_22, %c0_23], %36 {strides = array<i32>} : memref<1x1x128x64xbf16, #tpu.memory_space<vmem>>, vector<1x1x128x64xbf16>,
    } else {
    }
    return
  }
  func.func @transform_0(%arg0: i32, %arg1: i32, %arg2: i32) -> (i32, i32, i32, i32) {
    %c0_i32 = arith.constant 0 : i32
    %c0_i32_0 = arith.constant 0 : i32
    %c0_i32_1 = arith.constant 0 : i32
    return %arg0, %arg1, %c0_i32, %c0_i32_0 : i32, i32, i32, i32
  }
  func.func @transform_1(%arg0: i32, %arg1: i32, %arg2: i32) -> (i32, i32, i32, i32) {
    %c0_i32 = arith.constant 0 : i32
    %c0_i32_0 = arith.constant 0 : i32
    %c0_i32_1 = arith.constant 0 : i32
    %c0_i32_2 = arith.constant 0 : i32
    return %arg2, %c0_i32, %c0_i32_0, %c0_i32_1 : i32, i32, i32, i32
  }
  func.func @transform_2(%arg0: i32, %arg1: i32, %arg2: i32) -> (i32, i32) {
    %c0_i32 = arith.constant 0 : i32
    %c0_i32_0 = arith.constant 0 : i32
    %c0_i32_1 = arith.constant 0 : i32
    return %c0_i32, %c0_i32_0 : i32, i32
  }
  func.func @transform_3(%arg0: i32, %arg1: i32, %arg2: i32) -> (i32, i32) {
    %c0_i32 = arith.constant 0 : i32
    %c0_i32_0 = arith.constant 0 : i32
    %c0_i32_1 = arith.constant 0 : i32
    return %c0_i32, %c0_i32_0 : i32, i32
  }
  func.func @transform_4(%arg0: i32, %arg1: i32, %arg2: i32) -> (i32, i32) {
    %c0_i32 = arith.constant 0 : i32
    %c0_i32_0 = arith.constant 0 : i32
    %c0_i32_1 = arith.constant 0 : i32
    return %c0_i32, %c0_i32_0 : i32, i32
  }
  func.func @transform_5(%arg0: i32, %arg1: i32, %arg2: i32) -> (i32, i32, i32, i32) {
    %c0_i32 = arith.constant 0 : i32
    %c0_i32_0 = arith.constant 0 : i32
    %c0_i32_1 = arith.constant 0 : i32
    return %arg0, %arg1, %c0_i32, %c0_i32_0 : i32, i32, i32, i32
  }
  func.func @transform_6(%arg0: i32, %arg1: i32, %arg2: i32) -> (i32, i32, i32, i32) {
    %c0_i32 = arith.constant 0 : i32
    %c0_i32_0 = arith.constant 0 : i32
    %c0_i32_1 = arith.constant 0 : i32
    return %arg0, %arg1, %c0_i32, %c0_i32_0 : i32, i32, i32, i32
  }
}

module attributes {stable_mosaic.version = 11 : i64} {
  func.func @_localup_kernel(%arg0: i32, %arg1: i32, %arg2: i32, %arg3: memref<1x1x264x16xbf16, #tpu.memory_space<vmem>>, %arg4: memref<1x3x16x16xbf16, #tpu.memory_space<vmem>>, %arg5: memref<1x16xf32, #tpu.memory_space<vmem>>, %arg6: memref<16x64xbf16, #tpu.memory_space<vmem>>, %arg7: memref<1x64xf32, #tpu.memory_space<vmem>>, %arg8: memref<1x1x192x64xbf16, #tpu.memory_space<vmem>>, %arg9: memref<1x1x192x64xbf16, #tpu.memory_space<vmem>>, %arg10: memref<192x16xf32, #tpu.memory_space<vmem>>) attributes {dimension_semantics = [#tpu.dimension_semantics<parallel>, #tpu.dimension_semantics<parallel>, #tpu.dimension_semantics<arbitrary>], iteration_bounds = array<i64: 2, 2, 3>, scalar_prefetch = 0 : i64, scratch_operands = 1 : i64, tpu.core_type = #tpu.core_type<tc>, window_params = [{transform_indices = @transform_0, window_bounds = array<i64: 1, 1, 264, 16>}, {transform_indices = @transform_1, window_bounds = array<i64: 1, 3, 16, 16>}, {pipeline_mode = #tpu.pipeline_mode<synchronous>, transform_indices = @transform_2, window_bounds = array<i64: 1, 16>}, {pipeline_mode = #tpu.pipeline_mode<synchronous>, transform_indices = @transform_3, window_bounds = array<i64: 16, 64>}, {pipeline_mode = #tpu.pipeline_mode<synchronous>, transform_indices = @transform_4, window_bounds = array<i64: 1, 64>}, {transform_indices = @transform_5, window_bounds = array<i64: 1, 1, 192, 64>}, {transform_indices = @transform_6, window_bounds = array<i64: 1, 1, 192, 64>}]} {
    %c0_i32 = arith.constant 0 : i32
    %0 = arith.cmpi eq, %arg2, %c0_i32 : i32
    %1 = arith.extui %0 : i1 to i32
    %c0_i32_0 = arith.constant 0 : i32
    %2 = arith.cmpi ne, %1, %c0_i32_0 : i32
    scf.if %2 {
      %cst = arith.constant 0.000000e+00 : f32
      %15 = vector.broadcast %cst : f32 to vector<192x16xf32>
      %c0 = arith.constant 0 : index
      %c0_7 = arith.constant 0 : index
      %16 = vector.load %arg10[%c0, %c0_7] : memref<192x16xf32, #tpu.memory_space<vmem>>, vector<192x16xf32>
      tpu.vector_store %arg10[%c0, %c0_7], %15 {strides = array<i32>} : memref<192x16xf32, #tpu.memory_space<vmem>>, vector<192x16xf32>,
    } else {
    }
    %c0_i32_1 = arith.constant 0 : i32
    %3 = arith.cmpi eq, %arg2, %c0_i32_1 : i32
    %4 = arith.extui %3 : i1 to i32
    %c0_i32_2 = arith.constant 0 : i32
    %5 = arith.cmpi ne, %4, %c0_i32_2 : i32
    scf.if %5 {
      %cst = arith.constant 0.000000e+00 : f32
      %15 = vector.broadcast %cst : f32 to vector<192x16xf32>
      %c0 = arith.constant 0 : index
      %c0_7 = arith.constant 0 : index
      %c0_8 = arith.constant 0 : index
      %c0_9 = arith.constant 0 : index
      %16 = vector.load %arg3[%c0, %c0_7, %c0_8, %c0_9] : memref<1x1x264x16xbf16, #tpu.memory_space<vmem>>, vector<1x1x192x16xbf16>
      %17 = vector.shape_cast %16 : vector<1x1x192x16xbf16> to vector<192x16xbf16>
      %c0_10 = arith.constant 0 : index
      %c0_11 = arith.constant 0 : index
      %c0_12 = arith.constant 0 : index
      %c0_13 = arith.constant 0 : index
      %18 = vector.load %arg4[%c0_10, %c0_11, %c0_12, %c0_13] : memref<1x3x16x16xbf16, #tpu.memory_space<vmem>>, vector<1x1x16x16xbf16>
      %19 = vector.shape_cast %18 : vector<1x1x16x16xbf16> to vector<16x16xbf16>
      %cst_14 = arith.constant dense<0.000000e+00> : vector<192x16xf32>
      %20 = tpu.matmul %17, %19, %cst_14 {dimension_numbers = #tpu.dot_dimension_numbers<[1], [0], [0], [1], [0, 0, 1, 1], [], []>} : vector<192x16xbf16>, vector<16x16xbf16>, vector<192x16xf32> -> vector<192x16xf32>
      %21 = arith.addf %15, %20 : vector<192x16xf32>
      %c0_15 = arith.constant 0 : index
      %c0_16 = arith.constant 0 : index
      %c1 = arith.constant 1 : index
      %c0_17 = arith.constant 0 : index
      %22 = vector.load %arg3[%c0_15, %c0_16, %c1, %c0_17] : memref<1x1x264x16xbf16, #tpu.memory_space<vmem>>, vector<1x1x192x16xbf16>
      %23 = vector.shape_cast %22 : vector<1x1x192x16xbf16> to vector<192x16xbf16>
      %c0_18 = arith.constant 0 : index
      %c1_19 = arith.constant 1 : index
      %c0_20 = arith.constant 0 : index
      %c0_21 = arith.constant 0 : index
      %24 = vector.load %arg4[%c0_18, %c1_19, %c0_20, %c0_21] : memref<1x3x16x16xbf16, #tpu.memory_space<vmem>>, vector<1x1x16x16xbf16>
      %25 = vector.shape_cast %24 : vector<1x1x16x16xbf16> to vector<16x16xbf16>
      %cst_22 = arith.constant dense<0.000000e+00> : vector<192x16xf32>
      %26 = tpu.matmul %23, %25, %cst_22 {dimension_numbers = #tpu.dot_dimension_numbers<[1], [0], [0], [1], [0, 0, 1, 1], [], []>} : vector<192x16xbf16>, vector<16x16xbf16>, vector<192x16xf32> -> vector<192x16xf32>
      %27 = arith.addf %21, %26 : vector<192x16xf32>
      %c0_23 = arith.constant 0 : index
      %c0_24 = arith.constant 0 : index
      %c2 = arith.constant 2 : index
      %c0_25 = arith.constant 0 : index
      %28 = vector.load %arg3[%c0_23, %c0_24, %c2, %c0_25] : memref<1x1x264x16xbf16, #tpu.memory_space<vmem>>, vector<1x1x192x16xbf16>
      %29 = vector.shape_cast %28 : vector<1x1x192x16xbf16> to vector<192x16xbf16>
      %c0_26 = arith.constant 0 : index
      %c2_27 = arith.constant 2 : index
      %c0_28 = arith.constant 0 : index
      %c0_29 = arith.constant 0 : index
      %30 = vector.load %arg4[%c0_26, %c2_27, %c0_28, %c0_29] : memref<1x3x16x16xbf16, #tpu.memory_space<vmem>>, vector<1x1x16x16xbf16>
      %31 = vector.shape_cast %30 : vector<1x1x16x16xbf16> to vector<16x16xbf16>
      %cst_30 = arith.constant dense<0.000000e+00> : vector<192x16xf32>
      %32 = tpu.matmul %29, %31, %cst_30 {dimension_numbers = #tpu.dot_dimension_numbers<[1], [0], [0], [1], [0, 0, 1, 1], [], []>} : vector<192x16xbf16>, vector<16x16xbf16>, vector<192x16xf32> -> vector<192x16xf32>
      %33 = arith.addf %27, %32 : vector<192x16xf32>
      %c0_31 = arith.constant 0 : index
      %c0_32 = arith.constant 0 : index
      %34 = vector.load %arg10[%c0_31, %c0_32] : memref<192x16xf32, #tpu.memory_space<vmem>>, vector<192x16xf32>
      %35 = arith.addf %34, %33 : vector<192x16xf32>
      %c0_33 = arith.constant 0 : index
      %c0_34 = arith.constant 0 : index
      %36 = vector.load %arg10[%c0_33, %c0_34] : memref<192x16xf32, #tpu.memory_space<vmem>>, vector<192x16xf32>
      tpu.vector_store %arg10[%c0_33, %c0_34], %35 {strides = array<i32>} : memref<192x16xf32, #tpu.memory_space<vmem>>, vector<192x16xf32>,
    } else {
    }
    %c1_i32 = arith.constant 1 : i32
    %6 = arith.cmpi eq, %arg2, %c1_i32 : i32
    %7 = arith.extui %6 : i1 to i32
    %c0_i32_3 = arith.constant 0 : i32
    %8 = arith.cmpi ne, %7, %c0_i32_3 : i32
    scf.if %8 {
      %cst = arith.constant 0.000000e+00 : f32
      %15 = vector.broadcast %cst : f32 to vector<192x16xf32>
      %c0 = arith.constant 0 : index
      %c0_7 = arith.constant 0 : index
      %c24 = arith.constant 24 : index
      %c0_8 = arith.constant 0 : index
      %16 = vector.load %arg3[%c0, %c0_7, %c24, %c0_8] : memref<1x1x264x16xbf16, #tpu.memory_space<vmem>>, vector<1x1x192x16xbf16>
      %17 = vector.shape_cast %16 : vector<1x1x192x16xbf16> to vector<192x16xbf16>
      %c0_9 = arith.constant 0 : index
      %c0_10 = arith.constant 0 : index
      %c0_11 = arith.constant 0 : index
      %c0_12 = arith.constant 0 : index
      %18 = vector.load %arg4[%c0_9, %c0_10, %c0_11, %c0_12] : memref<1x3x16x16xbf16, #tpu.memory_space<vmem>>, vector<1x1x16x16xbf16>
      %19 = vector.shape_cast %18 : vector<1x1x16x16xbf16> to vector<16x16xbf16>
      %cst_13 = arith.constant dense<0.000000e+00> : vector<192x16xf32>
      %20 = tpu.matmul %17, %19, %cst_13 {dimension_numbers = #tpu.dot_dimension_numbers<[1], [0], [0], [1], [0, 0, 1, 1], [], []>} : vector<192x16xbf16>, vector<16x16xbf16>, vector<192x16xf32> -> vector<192x16xf32>
      %21 = arith.addf %15, %20 : vector<192x16xf32>
      %c0_14 = arith.constant 0 : index
      %c0_15 = arith.constant 0 : index
      %c25 = arith.constant 25 : index
      %c0_16 = arith.constant 0 : index
      %22 = vector.load %arg3[%c0_14, %c0_15, %c25, %c0_16] : memref<1x1x264x16xbf16, #tpu.memory_space<vmem>>, vector<1x1x192x16xbf16>
      %23 = vector.shape_cast %22 : vector<1x1x192x16xbf16> to vector<192x16xbf16>
      %c0_17 = arith.constant 0 : index
      %c1 = arith.constant 1 : index
      %c0_18 = arith.constant 0 : index
      %c0_19 = arith.constant 0 : index
      %24 = vector.load %arg4[%c0_17, %c1, %c0_18, %c0_19] : memref<1x3x16x16xbf16, #tpu.memory_space<vmem>>, vector<1x1x16x16xbf16>
      %25 = vector.shape_cast %24 : vector<1x1x16x16xbf16> to vector<16x16xbf16>
      %cst_20 = arith.constant dense<0.000000e+00> : vector<192x16xf32>
      %26 = tpu.matmul %23, %25, %cst_20 {dimension_numbers = #tpu.dot_dimension_numbers<[1], [0], [0], [1], [0, 0, 1, 1], [], []>} : vector<192x16xbf16>, vector<16x16xbf16>, vector<192x16xf32> -> vector<192x16xf32>
      %27 = arith.addf %21, %26 : vector<192x16xf32>
      %c0_21 = arith.constant 0 : index
      %c0_22 = arith.constant 0 : index
      %c26 = arith.constant 26 : index
      %c0_23 = arith.constant 0 : index
      %28 = vector.load %arg3[%c0_21, %c0_22, %c26, %c0_23] : memref<1x1x264x16xbf16, #tpu.memory_space<vmem>>, vector<1x1x192x16xbf16>
      %29 = vector.shape_cast %28 : vector<1x1x192x16xbf16> to vector<192x16xbf16>
      %c0_24 = arith.constant 0 : index
      %c2 = arith.constant 2 : index
      %c0_25 = arith.constant 0 : index
      %c0_26 = arith.constant 0 : index
      %30 = vector.load %arg4[%c0_24, %c2, %c0_25, %c0_26] : memref<1x3x16x16xbf16, #tpu.memory_space<vmem>>, vector<1x1x16x16xbf16>
      %31 = vector.shape_cast %30 : vector<1x1x16x16xbf16> to vector<16x16xbf16>
      %cst_27 = arith.constant dense<0.000000e+00> : vector<192x16xf32>
      %32 = tpu.matmul %29, %31, %cst_27 {dimension_numbers = #tpu.dot_dimension_numbers<[1], [0], [0], [1], [0, 0, 1, 1], [], []>} : vector<192x16xbf16>, vector<16x16xbf16>, vector<192x16xf32> -> vector<192x16xf32>
      %33 = arith.addf %27, %32 : vector<192x16xf32>
      %c0_28 = arith.constant 0 : index
      %c0_29 = arith.constant 0 : index
      %34 = vector.load %arg10[%c0_28, %c0_29] : memref<192x16xf32, #tpu.memory_space<vmem>>, vector<192x16xf32>
      %35 = arith.addf %34, %33 : vector<192x16xf32>
      %c0_30 = arith.constant 0 : index
      %c0_31 = arith.constant 0 : index
      %36 = vector.load %arg10[%c0_30, %c0_31] : memref<192x16xf32, #tpu.memory_space<vmem>>, vector<192x16xf32>
      tpu.vector_store %arg10[%c0_30, %c0_31], %35 {strides = array<i32>} : memref<192x16xf32, #tpu.memory_space<vmem>>, vector<192x16xf32>,
    } else {
    }
    %c2_i32 = arith.constant 2 : i32
    %9 = arith.cmpi eq, %arg2, %c2_i32 : i32
    %10 = arith.extui %9 : i1 to i32
    %c0_i32_4 = arith.constant 0 : i32
    %11 = arith.cmpi ne, %10, %c0_i32_4 : i32
    scf.if %11 {
      %cst = arith.constant 0.000000e+00 : f32
      %15 = vector.broadcast %cst : f32 to vector<192x16xf32>
      %c0 = arith.constant 0 : index
      %c0_7 = arith.constant 0 : index
      %c48 = arith.constant 48 : index
      %c0_8 = arith.constant 0 : index
      %16 = vector.load %arg3[%c0, %c0_7, %c48, %c0_8] : memref<1x1x264x16xbf16, #tpu.memory_space<vmem>>, vector<1x1x192x16xbf16>
      %17 = vector.shape_cast %16 : vector<1x1x192x16xbf16> to vector<192x16xbf16>
      %c0_9 = arith.constant 0 : index
      %c0_10 = arith.constant 0 : index
      %c0_11 = arith.constant 0 : index
      %c0_12 = arith.constant 0 : index
      %18 = vector.load %arg4[%c0_9, %c0_10, %c0_11, %c0_12] : memref<1x3x16x16xbf16, #tpu.memory_space<vmem>>, vector<1x1x16x16xbf16>
      %19 = vector.shape_cast %18 : vector<1x1x16x16xbf16> to vector<16x16xbf16>
      %cst_13 = arith.constant dense<0.000000e+00> : vector<192x16xf32>
      %20 = tpu.matmul %17, %19, %cst_13 {dimension_numbers = #tpu.dot_dimension_numbers<[1], [0], [0], [1], [0, 0, 1, 1], [], []>} : vector<192x16xbf16>, vector<16x16xbf16>, vector<192x16xf32> -> vector<192x16xf32>
      %21 = arith.addf %15, %20 : vector<192x16xf32>
      %c0_14 = arith.constant 0 : index
      %c0_15 = arith.constant 0 : index
      %c49 = arith.constant 49 : index
      %c0_16 = arith.constant 0 : index
      %22 = vector.load %arg3[%c0_14, %c0_15, %c49, %c0_16] : memref<1x1x264x16xbf16, #tpu.memory_space<vmem>>, vector<1x1x192x16xbf16>
      %23 = vector.shape_cast %22 : vector<1x1x192x16xbf16> to vector<192x16xbf16>
      %c0_17 = arith.constant 0 : index
      %c1 = arith.constant 1 : index
      %c0_18 = arith.constant 0 : index
      %c0_19 = arith.constant 0 : index
      %24 = vector.load %arg4[%c0_17, %c1, %c0_18, %c0_19] : memref<1x3x16x16xbf16, #tpu.memory_space<vmem>>, vector<1x1x16x16xbf16>
      %25 = vector.shape_cast %24 : vector<1x1x16x16xbf16> to vector<16x16xbf16>
      %cst_20 = arith.constant dense<0.000000e+00> : vector<192x16xf32>
      %26 = tpu.matmul %23, %25, %cst_20 {dimension_numbers = #tpu.dot_dimension_numbers<[1], [0], [0], [1], [0, 0, 1, 1], [], []>} : vector<192x16xbf16>, vector<16x16xbf16>, vector<192x16xf32> -> vector<192x16xf32>
      %27 = arith.addf %21, %26 : vector<192x16xf32>
      %c0_21 = arith.constant 0 : index
      %c0_22 = arith.constant 0 : index
      %c50 = arith.constant 50 : index
      %c0_23 = arith.constant 0 : index
      %28 = vector.load %arg3[%c0_21, %c0_22, %c50, %c0_23] : memref<1x1x264x16xbf16, #tpu.memory_space<vmem>>, vector<1x1x192x16xbf16>
      %29 = vector.shape_cast %28 : vector<1x1x192x16xbf16> to vector<192x16xbf16>
      %c0_24 = arith.constant 0 : index
      %c2 = arith.constant 2 : index
      %c0_25 = arith.constant 0 : index
      %c0_26 = arith.constant 0 : index
      %30 = vector.load %arg4[%c0_24, %c2, %c0_25, %c0_26] : memref<1x3x16x16xbf16, #tpu.memory_space<vmem>>, vector<1x1x16x16xbf16>
      %31 = vector.shape_cast %30 : vector<1x1x16x16xbf16> to vector<16x16xbf16>
      %cst_27 = arith.constant dense<0.000000e+00> : vector<192x16xf32>
      %32 = tpu.matmul %29, %31, %cst_27 {dimension_numbers = #tpu.dot_dimension_numbers<[1], [0], [0], [1], [0, 0, 1, 1], [], []>} : vector<192x16xbf16>, vector<16x16xbf16>, vector<192x16xf32> -> vector<192x16xf32>
      %33 = arith.addf %27, %32 : vector<192x16xf32>
      %c0_28 = arith.constant 0 : index
      %c0_29 = arith.constant 0 : index
      %34 = vector.load %arg10[%c0_28, %c0_29] : memref<192x16xf32, #tpu.memory_space<vmem>>, vector<192x16xf32>
      %35 = arith.addf %34, %33 : vector<192x16xf32>
      %c0_30 = arith.constant 0 : index
      %c0_31 = arith.constant 0 : index
      %36 = vector.load %arg10[%c0_30, %c0_31] : memref<192x16xf32, #tpu.memory_space<vmem>>, vector<192x16xf32>
      tpu.vector_store %arg10[%c0_30, %c0_31], %35 {strides = array<i32>} : memref<192x16xf32, #tpu.memory_space<vmem>>, vector<192x16xf32>,
    } else {
    }
    %c2_i32_5 = arith.constant 2 : i32
    %12 = arith.cmpi eq, %arg2, %c2_i32_5 : i32
    %13 = arith.extui %12 : i1 to i32
    %c0_i32_6 = arith.constant 0 : i32
    %14 = arith.cmpi ne, %13, %c0_i32_6 : i32
    scf.if %14 {
      %c0 = arith.constant 0 : index
      %c0_7 = arith.constant 0 : index
      %15 = vector.load %arg10[%c0, %c0_7] : memref<192x16xf32, #tpu.memory_space<vmem>>, vector<192x16xf32>
      %c0_8 = arith.constant 0 : index
      %c0_9 = arith.constant 0 : index
      %16 = vector.load %arg5[%c0_8, %c0_9] : memref<1x16xf32, #tpu.memory_space<vmem>>, vector<1x16xf32>
      %17 = vector.broadcast %16 : vector<1x16xf32> to vector<192x16xf32>
      %18 = arith.addf %15, %17 : vector<192x16xf32>
      %cst = arith.constant 0.000000e+00 : f32
      %19 = vector.broadcast %cst : f32 to vector<192x16xf32>
      %20 = arith.maximumf %18, %19 : vector<192x16xf32>
      %21 = arith.truncf %20 : vector<192x16xf32> to vector<192x16xbf16>
      %c0_10 = arith.constant 0 : index
      %c0_11 = arith.constant 0 : index
      %22 = vector.load %arg6[%c0_10, %c0_11] : memref<16x64xbf16, #tpu.memory_space<vmem>>, vector<16x64xbf16>
      %cst_12 = arith.constant dense<0.000000e+00> : vector<192x64xf32>
      %23 = tpu.matmul %21, %22, %cst_12 {dimension_numbers = #tpu.dot_dimension_numbers<[1], [0], [0], [1], [0, 0, 1, 1], [], []>} : vector<192x16xbf16>, vector<16x64xbf16>, vector<192x64xf32> -> vector<192x64xf32>
      %c0_13 = arith.constant 0 : index
      %c0_14 = arith.constant 0 : index
      %24 = vector.load %arg7[%c0_13, %c0_14] : memref<1x64xf32, #tpu.memory_space<vmem>>, vector<1x64xf32>
      %25 = vector.broadcast %24 : vector<1x64xf32> to vector<192x64xf32>
      %26 = arith.addf %23, %25 : vector<192x64xf32>
      %cst_15 = arith.constant 0.000000e+00 : f32
      %27 = vector.broadcast %cst_15 : f32 to vector<192x64xf32>
      %28 = arith.maximumf %26, %27 : vector<192x64xf32>
      %c0_16 = arith.constant 0 : index
      %c0_17 = arith.constant 0 : index
      %c0_18 = arith.constant 0 : index
      %c0_19 = arith.constant 0 : index
      %29 = vector.load %arg8[%c0_16, %c0_17, %c0_18, %c0_19] : memref<1x1x192x64xbf16, #tpu.memory_space<vmem>>, vector<1x1x192x64xbf16>
      %30 = vector.shape_cast %29 : vector<1x1x192x64xbf16> to vector<192x64xbf16>
      %31 = arith.extf %30 : vector<192x64xbf16> to vector<192x64xf32>
      %32 = arith.addf %28, %31 : vector<192x64xf32>
      %33 = arith.truncf %32 : vector<192x64xf32> to vector<192x64xbf16>
      %c0_20 = arith.constant 0 : index
      %c0_21 = arith.constant 0 : index
      %c0_22 = arith.constant 0 : index
      %c0_23 = arith.constant 0 : index
      %34 = vector.load %arg9[%c0_20, %c0_21, %c0_22, %c0_23] : memref<1x1x192x64xbf16, #tpu.memory_space<vmem>>, vector<1x1x192x64xbf16>
      %35 = vector.shape_cast %34 : vector<1x1x192x64xbf16> to vector<192x64xbf16>
      %36 = vector.shape_cast %33 : vector<192x64xbf16> to vector<1x1x192x64xbf16>
      tpu.vector_store %arg9[%c0_20, %c0_21, %c0_22, %c0_23], %36 {strides = array<i32>} : memref<1x1x192x64xbf16, #tpu.memory_space<vmem>>, vector<1x1x192x64xbf16>,
    } else {
    }
    return
  }
  func.func @transform_0(%arg0: i32, %arg1: i32, %arg2: i32) -> (i32, i32, i32, i32) {
    %c0_i32 = arith.constant 0 : i32
    %c0_i32_0 = arith.constant 0 : i32
    %c0_i32_1 = arith.constant 0 : i32
    return %arg0, %arg1, %c0_i32, %c0_i32_0 : i32, i32, i32, i32
  }
  func.func @transform_1(%arg0: i32, %arg1: i32, %arg2: i32) -> (i32, i32, i32, i32) {
    %c0_i32 = arith.constant 0 : i32
    %c0_i32_0 = arith.constant 0 : i32
    %c0_i32_1 = arith.constant 0 : i32
    %c0_i32_2 = arith.constant 0 : i32
    return %arg2, %c0_i32, %c0_i32_0, %c0_i32_1 : i32, i32, i32, i32
  }
  func.func @transform_2(%arg0: i32, %arg1: i32, %arg2: i32) -> (i32, i32) {
    %c0_i32 = arith.constant 0 : i32
    %c0_i32_0 = arith.constant 0 : i32
    %c0_i32_1 = arith.constant 0 : i32
    return %c0_i32, %c0_i32_0 : i32, i32
  }
  func.func @transform_3(%arg0: i32, %arg1: i32, %arg2: i32) -> (i32, i32) {
    %c0_i32 = arith.constant 0 : i32
    %c0_i32_0 = arith.constant 0 : i32
    %c0_i32_1 = arith.constant 0 : i32
    return %c0_i32, %c0_i32_0 : i32, i32
  }
  func.func @transform_4(%arg0: i32, %arg1: i32, %arg2: i32) -> (i32, i32) {
    %c0_i32 = arith.constant 0 : i32
    %c0_i32_0 = arith.constant 0 : i32
    %c0_i32_1 = arith.constant 0 : i32
    return %c0_i32, %c0_i32_0 : i32, i32
  }
  func.func @transform_5(%arg0: i32, %arg1: i32, %arg2: i32) -> (i32, i32, i32, i32) {
    %c0_i32 = arith.constant 0 : i32
    %c0_i32_0 = arith.constant 0 : i32
    %c0_i32_1 = arith.constant 0 : i32
    return %arg0, %arg1, %c0_i32, %c0_i32_0 : i32, i32, i32, i32
  }
  func.func @transform_6(%arg0: i32, %arg1: i32, %arg2: i32) -> (i32, i32, i32, i32) {
    %c0_i32 = arith.constant 0 : i32
    %c0_i32_0 = arith.constant 0 : i32
    %c0_i32_1 = arith.constant 0 : i32
    return %arg0, %arg1, %c0_i32, %c0_i32_0 : i32, i32, i32, i32
  }
}

module attributes {stable_mosaic.version = 11 : i64} {
  func.func @_psp_pool_mm_kernel(%arg0: i32, %arg1: memref<1x72x64xbf16, #tpu.memory_space<vmem>>, %arg2: memref<1x64x16xbf16, #tpu.memory_space<vmem>>, %arg3: memref<1x1x16xf32, #tpu.memory_space<vmem>>, %arg4: memref<1x72x16xbf16, #tpu.memory_space<vmem>>) attributes {dimension_semantics = [#tpu.dimension_semantics<parallel>], iteration_bounds = array<i64: 4>, scalar_prefetch = 0 : i64, scratch_operands = 0 : i64, tpu.core_type = #tpu.core_type<tc>, window_params = [{transform_indices = @transform_0, window_bounds = array<i64: 1, 72, 64>}, {transform_indices = @transform_1, window_bounds = array<i64: 1, 64, 16>}, {transform_indices = @transform_2, window_bounds = array<i64: 1, 1, 16>}, {transform_indices = @transform_3, window_bounds = array<i64: 1, 72, 16>}]} {
    %c0 = arith.constant 0 : index
    %c0_0 = arith.constant 0 : index
    %c0_1 = arith.constant 0 : index
    %0 = vector.load %arg1[%c0, %c0_0, %c0_1] : memref<1x72x64xbf16, #tpu.memory_space<vmem>>, vector<1x72x64xbf16>
    %1 = vector.shape_cast %0 : vector<1x72x64xbf16> to vector<72x64xbf16>
    %c0_2 = arith.constant 0 : index
    %c0_3 = arith.constant 0 : index
    %c0_4 = arith.constant 0 : index
    %2 = vector.load %arg2[%c0_2, %c0_3, %c0_4] : memref<1x64x16xbf16, #tpu.memory_space<vmem>>, vector<1x64x16xbf16>
    %3 = vector.shape_cast %2 : vector<1x64x16xbf16> to vector<64x16xbf16>
    %cst = arith.constant dense<0.000000e+00> : vector<72x16xf32>
    %4 = tpu.matmul %1, %3, %cst {dimension_numbers = #tpu.dot_dimension_numbers<[1], [0], [0], [1], [0, 0, 1, 1], [], []>} : vector<72x64xbf16>, vector<64x16xbf16>, vector<72x16xf32> -> vector<72x16xf32>
    %c0_5 = arith.constant 0 : index
    %c0_6 = arith.constant 0 : index
    %c0_7 = arith.constant 0 : index
    %5 = vector.load %arg3[%c0_5, %c0_6, %c0_7] : memref<1x1x16xf32, #tpu.memory_space<vmem>>, vector<1x1x16xf32>
    %6 = vector.shape_cast %5 : vector<1x1x16xf32> to vector<1x16xf32>
    %7 = vector.broadcast %6 : vector<1x16xf32> to vector<72x16xf32>
    %8 = arith.addf %4, %7 : vector<72x16xf32>
    %cst_8 = arith.constant 0.000000e+00 : f32
    %9 = vector.broadcast %cst_8 : f32 to vector<72x16xf32>
    %10 = arith.maximumf %8, %9 : vector<72x16xf32>
    %11 = arith.truncf %10 : vector<72x16xf32> to vector<72x16xbf16>
    %c0_9 = arith.constant 0 : index
    %c0_10 = arith.constant 0 : index
    %c0_11 = arith.constant 0 : index
    %12 = vector.load %arg4[%c0_9, %c0_10, %c0_11] : memref<1x72x16xbf16, #tpu.memory_space<vmem>>, vector<1x72x16xbf16>
    %13 = vector.shape_cast %12 : vector<1x72x16xbf16> to vector<72x16xbf16>
    %14 = vector.shape_cast %11 : vector<72x16xbf16> to vector<1x72x16xbf16>
    tpu.vector_store %arg4[%c0_9, %c0_10, %c0_11], %14 {strides = array<i32>} : memref<1x72x16xbf16, #tpu.memory_space<vmem>>, vector<1x72x16xbf16>,
    return
  }
  func.func @transform_0(%arg0: i32) -> (i32, i32, i32) {
    %c0_i32 = arith.constant 0 : i32
    %c0_i32_0 = arith.constant 0 : i32
    %c0_i32_1 = arith.constant 0 : i32
    return %arg0, %c0_i32, %c0_i32_0 : i32, i32, i32
  }
  func.func @transform_1(%arg0: i32) -> (i32, i32, i32) {
    %c0_i32 = arith.constant 0 : i32
    %c0_i32_0 = arith.constant 0 : i32
    %c0_i32_1 = arith.constant 0 : i32
    return %arg0, %c0_i32, %c0_i32_0 : i32, i32, i32
  }
  func.func @transform_2(%arg0: i32) -> (i32, i32, i32) {
    %c0_i32 = arith.constant 0 : i32
    %c0_i32_0 = arith.constant 0 : i32
    %c0_i32_1 = arith.constant 0 : i32
    return %arg0, %c0_i32, %c0_i32_0 : i32, i32, i32
  }
  func.func @transform_3(%arg0: i32) -> (i32, i32, i32) {
    %c0_i32 = arith.constant 0 : i32
    %c0_i32_0 = arith.constant 0 : i32
    %c0_i32_1 = arith.constant 0 : i32
    return %arg0, %c0_i32, %c0_i32_0 : i32, i32, i32
  }
}

module attributes {stable_mosaic.version = 11 : i64} {
  func.func @_conv3x3_kernel(%arg0: i32, %arg1: i32, %arg2: i32, %arg3: memref<1x1x264x128xbf16, #tpu.memory_space<vmem>>, %arg4: memref<1x3x128x16xbf16, #tpu.memory_space<vmem>>, %arg5: memref<1x16xf32, #tpu.memory_space<vmem>>, %arg6: memref<1x1x192x16xbf16, #tpu.memory_space<vmem>>, %arg7: memref<192x16xf32, #tpu.memory_space<vmem>>) attributes {dimension_semantics = [#tpu.dimension_semantics<parallel>, #tpu.dimension_semantics<parallel>, #tpu.dimension_semantics<arbitrary>], iteration_bounds = array<i64: 2, 2, 3>, scalar_prefetch = 0 : i64, scratch_operands = 1 : i64, tpu.core_type = #tpu.core_type<tc>, window_params = [{transform_indices = @transform_0, window_bounds = array<i64: 1, 1, 264, 128>}, {transform_indices = @transform_1, window_bounds = array<i64: 1, 3, 128, 16>}, {pipeline_mode = #tpu.pipeline_mode<synchronous>, transform_indices = @transform_2, window_bounds = array<i64: 1, 16>}, {transform_indices = @transform_3, window_bounds = array<i64: 1, 1, 192, 16>}]} {
    %c0_i32 = arith.constant 0 : i32
    %0 = arith.cmpi eq, %arg2, %c0_i32 : i32
    %1 = arith.extui %0 : i1 to i32
    %c0_i32_0 = arith.constant 0 : i32
    %2 = arith.cmpi ne, %1, %c0_i32_0 : i32
    scf.if %2 {
      %cst = arith.constant 0.000000e+00 : f32
      %15 = vector.broadcast %cst : f32 to vector<192x16xf32>
      %c0 = arith.constant 0 : index
      %c0_7 = arith.constant 0 : index
      %16 = vector.load %arg7[%c0, %c0_7] : memref<192x16xf32, #tpu.memory_space<vmem>>, vector<192x16xf32>
      tpu.vector_store %arg7[%c0, %c0_7], %15 {strides = array<i32>} : memref<192x16xf32, #tpu.memory_space<vmem>>, vector<192x16xf32>,
    } else {
    }
    %c0_i32_1 = arith.constant 0 : i32
    %3 = arith.cmpi eq, %arg2, %c0_i32_1 : i32
    %4 = arith.extui %3 : i1 to i32
    %c0_i32_2 = arith.constant 0 : i32
    %5 = arith.cmpi ne, %4, %c0_i32_2 : i32
    scf.if %5 {
      %cst = arith.constant 0.000000e+00 : f32
      %15 = vector.broadcast %cst : f32 to vector<192x16xf32>
      %c0 = arith.constant 0 : index
      %c0_7 = arith.constant 0 : index
      %c0_8 = arith.constant 0 : index
      %c0_9 = arith.constant 0 : index
      %16 = vector.load %arg3[%c0, %c0_7, %c0_8, %c0_9] : memref<1x1x264x128xbf16, #tpu.memory_space<vmem>>, vector<1x1x192x128xbf16>
      %17 = vector.shape_cast %16 : vector<1x1x192x128xbf16> to vector<192x128xbf16>
      %c0_10 = arith.constant 0 : index
      %c0_11 = arith.constant 0 : index
      %c0_12 = arith.constant 0 : index
      %c0_13 = arith.constant 0 : index
      %18 = vector.load %arg4[%c0_10, %c0_11, %c0_12, %c0_13] : memref<1x3x128x16xbf16, #tpu.memory_space<vmem>>, vector<1x1x128x16xbf16>
      %19 = vector.shape_cast %18 : vector<1x1x128x16xbf16> to vector<128x16xbf16>
      %cst_14 = arith.constant dense<0.000000e+00> : vector<192x16xf32>
      %20 = tpu.matmul %17, %19, %cst_14 {dimension_numbers = #tpu.dot_dimension_numbers<[1], [0], [0], [1], [0, 0, 1, 1], [], []>} : vector<192x128xbf16>, vector<128x16xbf16>, vector<192x16xf32> -> vector<192x16xf32>
      %21 = arith.addf %15, %20 : vector<192x16xf32>
      %c0_15 = arith.constant 0 : index
      %c0_16 = arith.constant 0 : index
      %c1 = arith.constant 1 : index
      %c0_17 = arith.constant 0 : index
      %22 = vector.load %arg3[%c0_15, %c0_16, %c1, %c0_17] : memref<1x1x264x128xbf16, #tpu.memory_space<vmem>>, vector<1x1x192x128xbf16>
      %23 = vector.shape_cast %22 : vector<1x1x192x128xbf16> to vector<192x128xbf16>
      %c0_18 = arith.constant 0 : index
      %c1_19 = arith.constant 1 : index
      %c0_20 = arith.constant 0 : index
      %c0_21 = arith.constant 0 : index
      %24 = vector.load %arg4[%c0_18, %c1_19, %c0_20, %c0_21] : memref<1x3x128x16xbf16, #tpu.memory_space<vmem>>, vector<1x1x128x16xbf16>
      %25 = vector.shape_cast %24 : vector<1x1x128x16xbf16> to vector<128x16xbf16>
      %cst_22 = arith.constant dense<0.000000e+00> : vector<192x16xf32>
      %26 = tpu.matmul %23, %25, %cst_22 {dimension_numbers = #tpu.dot_dimension_numbers<[1], [0], [0], [1], [0, 0, 1, 1], [], []>} : vector<192x128xbf16>, vector<128x16xbf16>, vector<192x16xf32> -> vector<192x16xf32>
      %27 = arith.addf %21, %26 : vector<192x16xf32>
      %c0_23 = arith.constant 0 : index
      %c0_24 = arith.constant 0 : index
      %c2 = arith.constant 2 : index
      %c0_25 = arith.constant 0 : index
      %28 = vector.load %arg3[%c0_23, %c0_24, %c2, %c0_25] : memref<1x1x264x128xbf16, #tpu.memory_space<vmem>>, vector<1x1x192x128xbf16>
      %29 = vector.shape_cast %28 : vector<1x1x192x128xbf16> to vector<192x128xbf16>
      %c0_26 = arith.constant 0 : index
      %c2_27 = arith.constant 2 : index
      %c0_28 = arith.constant 0 : index
      %c0_29 = arith.constant 0 : index
      %30 = vector.load %arg4[%c0_26, %c2_27, %c0_28, %c0_29] : memref<1x3x128x16xbf16, #tpu.memory_space<vmem>>, vector<1x1x128x16xbf16>
      %31 = vector.shape_cast %30 : vector<1x1x128x16xbf16> to vector<128x16xbf16>
      %cst_30 = arith.constant dense<0.000000e+00> : vector<192x16xf32>
      %32 = tpu.matmul %29, %31, %cst_30 {dimension_numbers = #tpu.dot_dimension_numbers<[1], [0], [0], [1], [0, 0, 1, 1], [], []>} : vector<192x128xbf16>, vector<128x16xbf16>, vector<192x16xf32> -> vector<192x16xf32>
      %33 = arith.addf %27, %32 : vector<192x16xf32>
      %c0_31 = arith.constant 0 : index
      %c0_32 = arith.constant 0 : index
      %34 = vector.load %arg7[%c0_31, %c0_32] : memref<192x16xf32, #tpu.memory_space<vmem>>, vector<192x16xf32>
      %35 = arith.addf %34, %33 : vector<192x16xf32>
      %c0_33 = arith.constant 0 : index
      %c0_34 = arith.constant 0 : index
      %36 = vector.load %arg7[%c0_33, %c0_34] : memref<192x16xf32, #tpu.memory_space<vmem>>, vector<192x16xf32>
      tpu.vector_store %arg7[%c0_33, %c0_34], %35 {strides = array<i32>} : memref<192x16xf32, #tpu.memory_space<vmem>>, vector<192x16xf32>,
    } else {
    }
    %c1_i32 = arith.constant 1 : i32
    %6 = arith.cmpi eq, %arg2, %c1_i32 : i32
    %7 = arith.extui %6 : i1 to i32
    %c0_i32_3 = arith.constant 0 : i32
    %8 = arith.cmpi ne, %7, %c0_i32_3 : i32
    scf.if %8 {
      %cst = arith.constant 0.000000e+00 : f32
      %15 = vector.broadcast %cst : f32 to vector<192x16xf32>
      %c0 = arith.constant 0 : index
      %c0_7 = arith.constant 0 : index
      %c24 = arith.constant 24 : index
      %c0_8 = arith.constant 0 : index
      %16 = vector.load %arg3[%c0, %c0_7, %c24, %c0_8] : memref<1x1x264x128xbf16, #tpu.memory_space<vmem>>, vector<1x1x192x128xbf16>
      %17 = vector.shape_cast %16 : vector<1x1x192x128xbf16> to vector<192x128xbf16>
      %c0_9 = arith.constant 0 : index
      %c0_10 = arith.constant 0 : index
      %c0_11 = arith.constant 0 : index
      %c0_12 = arith.constant 0 : index
      %18 = vector.load %arg4[%c0_9, %c0_10, %c0_11, %c0_12] : memref<1x3x128x16xbf16, #tpu.memory_space<vmem>>, vector<1x1x128x16xbf16>
      %19 = vector.shape_cast %18 : vector<1x1x128x16xbf16> to vector<128x16xbf16>
      %cst_13 = arith.constant dense<0.000000e+00> : vector<192x16xf32>
      %20 = tpu.matmul %17, %19, %cst_13 {dimension_numbers = #tpu.dot_dimension_numbers<[1], [0], [0], [1], [0, 0, 1, 1], [], []>} : vector<192x128xbf16>, vector<128x16xbf16>, vector<192x16xf32> -> vector<192x16xf32>
      %21 = arith.addf %15, %20 : vector<192x16xf32>
      %c0_14 = arith.constant 0 : index
      %c0_15 = arith.constant 0 : index
      %c25 = arith.constant 25 : index
      %c0_16 = arith.constant 0 : index
      %22 = vector.load %arg3[%c0_14, %c0_15, %c25, %c0_16] : memref<1x1x264x128xbf16, #tpu.memory_space<vmem>>, vector<1x1x192x128xbf16>
      %23 = vector.shape_cast %22 : vector<1x1x192x128xbf16> to vector<192x128xbf16>
      %c0_17 = arith.constant 0 : index
      %c1 = arith.constant 1 : index
      %c0_18 = arith.constant 0 : index
      %c0_19 = arith.constant 0 : index
      %24 = vector.load %arg4[%c0_17, %c1, %c0_18, %c0_19] : memref<1x3x128x16xbf16, #tpu.memory_space<vmem>>, vector<1x1x128x16xbf16>
      %25 = vector.shape_cast %24 : vector<1x1x128x16xbf16> to vector<128x16xbf16>
      %cst_20 = arith.constant dense<0.000000e+00> : vector<192x16xf32>
      %26 = tpu.matmul %23, %25, %cst_20 {dimension_numbers = #tpu.dot_dimension_numbers<[1], [0], [0], [1], [0, 0, 1, 1], [], []>} : vector<192x128xbf16>, vector<128x16xbf16>, vector<192x16xf32> -> vector<192x16xf32>
      %27 = arith.addf %21, %26 : vector<192x16xf32>
      %c0_21 = arith.constant 0 : index
      %c0_22 = arith.constant 0 : index
      %c26 = arith.constant 26 : index
      %c0_23 = arith.constant 0 : index
      %28 = vector.load %arg3[%c0_21, %c0_22, %c26, %c0_23] : memref<1x1x264x128xbf16, #tpu.memory_space<vmem>>, vector<1x1x192x128xbf16>
      %29 = vector.shape_cast %28 : vector<1x1x192x128xbf16> to vector<192x128xbf16>
      %c0_24 = arith.constant 0 : index
      %c2 = arith.constant 2 : index
      %c0_25 = arith.constant 0 : index
      %c0_26 = arith.constant 0 : index
      %30 = vector.load %arg4[%c0_24, %c2, %c0_25, %c0_26] : memref<1x3x128x16xbf16, #tpu.memory_space<vmem>>, vector<1x1x128x16xbf16>
      %31 = vector.shape_cast %30 : vector<1x1x128x16xbf16> to vector<128x16xbf16>
      %cst_27 = arith.constant dense<0.000000e+00> : vector<192x16xf32>
      %32 = tpu.matmul %29, %31, %cst_27 {dimension_numbers = #tpu.dot_dimension_numbers<[1], [0], [0], [1], [0, 0, 1, 1], [], []>} : vector<192x128xbf16>, vector<128x16xbf16>, vector<192x16xf32> -> vector<192x16xf32>
      %33 = arith.addf %27, %32 : vector<192x16xf32>
      %c0_28 = arith.constant 0 : index
      %c0_29 = arith.constant 0 : index
      %34 = vector.load %arg7[%c0_28, %c0_29] : memref<192x16xf32, #tpu.memory_space<vmem>>, vector<192x16xf32>
      %35 = arith.addf %34, %33 : vector<192x16xf32>
      %c0_30 = arith.constant 0 : index
      %c0_31 = arith.constant 0 : index
      %36 = vector.load %arg7[%c0_30, %c0_31] : memref<192x16xf32, #tpu.memory_space<vmem>>, vector<192x16xf32>
      tpu.vector_store %arg7[%c0_30, %c0_31], %35 {strides = array<i32>} : memref<192x16xf32, #tpu.memory_space<vmem>>, vector<192x16xf32>,
    } else {
    }
    %c2_i32 = arith.constant 2 : i32
    %9 = arith.cmpi eq, %arg2, %c2_i32 : i32
    %10 = arith.extui %9 : i1 to i32
    %c0_i32_4 = arith.constant 0 : i32
    %11 = arith.cmpi ne, %10, %c0_i32_4 : i32
    scf.if %11 {
      %cst = arith.constant 0.000000e+00 : f32
      %15 = vector.broadcast %cst : f32 to vector<192x16xf32>
      %c0 = arith.constant 0 : index
      %c0_7 = arith.constant 0 : index
      %c48 = arith.constant 48 : index
      %c0_8 = arith.constant 0 : index
      %16 = vector.load %arg3[%c0, %c0_7, %c48, %c0_8] : memref<1x1x264x128xbf16, #tpu.memory_space<vmem>>, vector<1x1x192x128xbf16>
      %17 = vector.shape_cast %16 : vector<1x1x192x128xbf16> to vector<192x128xbf16>
      %c0_9 = arith.constant 0 : index
      %c0_10 = arith.constant 0 : index
      %c0_11 = arith.constant 0 : index
      %c0_12 = arith.constant 0 : index
      %18 = vector.load %arg4[%c0_9, %c0_10, %c0_11, %c0_12] : memref<1x3x128x16xbf16, #tpu.memory_space<vmem>>, vector<1x1x128x16xbf16>
      %19 = vector.shape_cast %18 : vector<1x1x128x16xbf16> to vector<128x16xbf16>
      %cst_13 = arith.constant dense<0.000000e+00> : vector<192x16xf32>
      %20 = tpu.matmul %17, %19, %cst_13 {dimension_numbers = #tpu.dot_dimension_numbers<[1], [0], [0], [1], [0, 0, 1, 1], [], []>} : vector<192x128xbf16>, vector<128x16xbf16>, vector<192x16xf32> -> vector<192x16xf32>
      %21 = arith.addf %15, %20 : vector<192x16xf32>
      %c0_14 = arith.constant 0 : index
      %c0_15 = arith.constant 0 : index
      %c49 = arith.constant 49 : index
      %c0_16 = arith.constant 0 : index
      %22 = vector.load %arg3[%c0_14, %c0_15, %c49, %c0_16] : memref<1x1x264x128xbf16, #tpu.memory_space<vmem>>, vector<1x1x192x128xbf16>
      %23 = vector.shape_cast %22 : vector<1x1x192x128xbf16> to vector<192x128xbf16>
      %c0_17 = arith.constant 0 : index
      %c1 = arith.constant 1 : index
      %c0_18 = arith.constant 0 : index
      %c0_19 = arith.constant 0 : index
      %24 = vector.load %arg4[%c0_17, %c1, %c0_18, %c0_19] : memref<1x3x128x16xbf16, #tpu.memory_space<vmem>>, vector<1x1x128x16xbf16>
      %25 = vector.shape_cast %24 : vector<1x1x128x16xbf16> to vector<128x16xbf16>
      %cst_20 = arith.constant dense<0.000000e+00> : vector<192x16xf32>
      %26 = tpu.matmul %23, %25, %cst_20 {dimension_numbers = #tpu.dot_dimension_numbers<[1], [0], [0], [1], [0, 0, 1, 1], [], []>} : vector<192x128xbf16>, vector<128x16xbf16>, vector<192x16xf32> -> vector<192x16xf32>
      %27 = arith.addf %21, %26 : vector<192x16xf32>
      %c0_21 = arith.constant 0 : index
      %c0_22 = arith.constant 0 : index
      %c50 = arith.constant 50 : index
      %c0_23 = arith.constant 0 : index
      %28 = vector.load %arg3[%c0_21, %c0_22, %c50, %c0_23] : memref<1x1x264x128xbf16, #tpu.memory_space<vmem>>, vector<1x1x192x128xbf16>
      %29 = vector.shape_cast %28 : vector<1x1x192x128xbf16> to vector<192x128xbf16>
      %c0_24 = arith.constant 0 : index
      %c2 = arith.constant 2 : index
      %c0_25 = arith.constant 0 : index
      %c0_26 = arith.constant 0 : index
      %30 = vector.load %arg4[%c0_24, %c2, %c0_25, %c0_26] : memref<1x3x128x16xbf16, #tpu.memory_space<vmem>>, vector<1x1x128x16xbf16>
      %31 = vector.shape_cast %30 : vector<1x1x128x16xbf16> to vector<128x16xbf16>
      %cst_27 = arith.constant dense<0.000000e+00> : vector<192x16xf32>
      %32 = tpu.matmul %29, %31, %cst_27 {dimension_numbers = #tpu.dot_dimension_numbers<[1], [0], [0], [1], [0, 0, 1, 1], [], []>} : vector<192x128xbf16>, vector<128x16xbf16>, vector<192x16xf32> -> vector<192x16xf32>
      %33 = arith.addf %27, %32 : vector<192x16xf32>
      %c0_28 = arith.constant 0 : index
      %c0_29 = arith.constant 0 : index
      %34 = vector.load %arg7[%c0_28, %c0_29] : memref<192x16xf32, #tpu.memory_space<vmem>>, vector<192x16xf32>
      %35 = arith.addf %34, %33 : vector<192x16xf32>
      %c0_30 = arith.constant 0 : index
      %c0_31 = arith.constant 0 : index
      %36 = vector.load %arg7[%c0_30, %c0_31] : memref<192x16xf32, #tpu.memory_space<vmem>>, vector<192x16xf32>
      tpu.vector_store %arg7[%c0_30, %c0_31], %35 {strides = array<i32>} : memref<192x16xf32, #tpu.memory_space<vmem>>, vector<192x16xf32>,
    } else {
    }
    %c2_i32_5 = arith.constant 2 : i32
    %12 = arith.cmpi eq, %arg2, %c2_i32_5 : i32
    %13 = arith.extui %12 : i1 to i32
    %c0_i32_6 = arith.constant 0 : i32
    %14 = arith.cmpi ne, %13, %c0_i32_6 : i32
    scf.if %14 {
      %c0 = arith.constant 0 : index
      %c0_7 = arith.constant 0 : index
      %15 = vector.load %arg7[%c0, %c0_7] : memref<192x16xf32, #tpu.memory_space<vmem>>, vector<192x16xf32>
      %c0_8 = arith.constant 0 : index
      %c0_9 = arith.constant 0 : index
      %16 = vector.load %arg5[%c0_8, %c0_9] : memref<1x16xf32, #tpu.memory_space<vmem>>, vector<1x16xf32>
      %17 = vector.broadcast %16 : vector<1x16xf32> to vector<192x16xf32>
      %18 = arith.addf %15, %17 : vector<192x16xf32>
      %cst = arith.constant 0.000000e+00 : f32
      %19 = vector.broadcast %cst : f32 to vector<192x16xf32>
      %20 = arith.maximumf %18, %19 : vector<192x16xf32>
      %21 = arith.truncf %20 : vector<192x16xf32> to vector<192x16xbf16>
      %c0_10 = arith.constant 0 : index
      %c0_11 = arith.constant 0 : index
      %c0_12 = arith.constant 0 : index
      %c0_13 = arith.constant 0 : index
      %22 = vector.load %arg6[%c0_10, %c0_11, %c0_12, %c0_13] : memref<1x1x192x16xbf16, #tpu.memory_space<vmem>>, vector<1x1x192x16xbf16>
      %23 = vector.shape_cast %22 : vector<1x1x192x16xbf16> to vector<192x16xbf16>
      %24 = vector.shape_cast %21 : vector<192x16xbf16> to vector<1x1x192x16xbf16>
      tpu.vector_store %arg6[%c0_10, %c0_11, %c0_12, %c0_13], %24 {strides = array<i32>} : memref<1x1x192x16xbf16, #tpu.memory_space<vmem>>, vector<1x1x192x16xbf16>,
    } else {
    }
    return
  }
  func.func @transform_0(%arg0: i32, %arg1: i32, %arg2: i32) -> (i32, i32, i32, i32) {
    %c0_i32 = arith.constant 0 : i32
    %c0_i32_0 = arith.constant 0 : i32
    %c0_i32_1 = arith.constant 0 : i32
    return %arg0, %arg1, %c0_i32, %c0_i32_0 : i32, i32, i32, i32
  }
  func.func @transform_1(%arg0: i32, %arg1: i32, %arg2: i32) -> (i32, i32, i32, i32) {
    %c0_i32 = arith.constant 0 : i32
    %c0_i32_0 = arith.constant 0 : i32
    %c0_i32_1 = arith.constant 0 : i32
    %c0_i32_2 = arith.constant 0 : i32
    return %arg2, %c0_i32, %c0_i32_0, %c0_i32_1 : i32, i32, i32, i32
  }
  func.func @transform_2(%arg0: i32, %arg1: i32, %arg2: i32) -> (i32, i32) {
    %c0_i32 = arith.constant 0 : i32
    %c0_i32_0 = arith.constant 0 : i32
    %c0_i32_1 = arith.constant 0 : i32
    return %c0_i32, %c0_i32_0 : i32, i32
  }
  func.func @transform_3(%arg0: i32, %arg1: i32, %arg2: i32) -> (i32, i32, i32, i32) {
    %c0_i32 = arith.constant 0 : i32
    %c0_i32_0 = arith.constant 0 : i32
    %c0_i32_1 = arith.constant 0 : i32
    return %arg0, %arg1, %c0_i32, %c0_i32_0 : i32, i32, i32, i32
  }
}

module attributes {stable_mosaic.version = 11 : i64} {
  func.func @_mm_bias_kernel(%arg0: i32, %arg1: memref<512x16xbf16, #tpu.memory_space<vmem>>, %arg2: memref<16x128xbf16, #tpu.memory_space<vmem>>, %arg3: memref<1x128xf32, #tpu.memory_space<vmem>>, %arg4: memref<512x128xf32, #tpu.memory_space<vmem>>) attributes {dimension_semantics = [#tpu.dimension_semantics<parallel>], iteration_bounds = array<i64: 1>, scalar_prefetch = 0 : i64, scratch_operands = 0 : i64, tpu.core_type = #tpu.core_type<tc>, window_params = [{transform_indices = @transform_0, window_bounds = array<i64: 512, 16>}, {pipeline_mode = #tpu.pipeline_mode<synchronous>, transform_indices = @transform_1, window_bounds = array<i64: 16, 128>}, {pipeline_mode = #tpu.pipeline_mode<synchronous>, transform_indices = @transform_2, window_bounds = array<i64: 1, 128>}, {transform_indices = @transform_3, window_bounds = array<i64: 512, 128>}]} {
    %c0 = arith.constant 0 : index
    %c0_0 = arith.constant 0 : index
    %0 = vector.load %arg1[%c0, %c0_0] : memref<512x16xbf16, #tpu.memory_space<vmem>>, vector<512x16xbf16>
    %c0_1 = arith.constant 0 : index
    %c0_2 = arith.constant 0 : index
    %1 = vector.load %arg2[%c0_1, %c0_2] : memref<16x128xbf16, #tpu.memory_space<vmem>>, vector<16x128xbf16>
    %cst = arith.constant dense<0.000000e+00> : vector<512x128xf32>
    %2 = tpu.matmul %0, %1, %cst {dimension_numbers = #tpu.dot_dimension_numbers<[1], [0], [0], [1], [0, 0, 1, 1], [], []>} : vector<512x16xbf16>, vector<16x128xbf16>, vector<512x128xf32> -> vector<512x128xf32>
    %c0_3 = arith.constant 0 : index
    %c0_4 = arith.constant 0 : index
    %3 = vector.load %arg3[%c0_3, %c0_4] : memref<1x128xf32, #tpu.memory_space<vmem>>, vector<1x128xf32>
    %4 = vector.broadcast %3 : vector<1x128xf32> to vector<512x128xf32>
    %5 = arith.addf %2, %4 : vector<512x128xf32>
    %c0_5 = arith.constant 0 : index
    %c0_6 = arith.constant 0 : index
    %6 = vector.load %arg4[%c0_5, %c0_6] : memref<512x128xf32, #tpu.memory_space<vmem>>, vector<512x128xf32>
    tpu.vector_store %arg4[%c0_5, %c0_6], %5 {strides = array<i32>} : memref<512x128xf32, #tpu.memory_space<vmem>>, vector<512x128xf32>,
    return
  }
  func.func @transform_0(%arg0: i32) -> (i32, i32) {
    %c0_i32 = arith.constant 0 : i32
    %c0_i32_0 = arith.constant 0 : i32
    return %arg0, %c0_i32 : i32, i32
  }
  func.func @transform_1(%arg0: i32) -> (i32, i32) {
    %c0_i32 = arith.constant 0 : i32
    %c0_i32_0 = arith.constant 0 : i32
    %c0_i32_1 = arith.constant 0 : i32
    return %c0_i32, %c0_i32_0 : i32, i32
  }
  func.func @transform_2(%arg0: i32) -> (i32, i32) {
    %c0_i32 = arith.constant 0 : i32
    %c0_i32_0 = arith.constant 0 : i32
    %c0_i32_1 = arith.constant 0 : i32
    return %c0_i32, %c0_i32_0 : i32, i32
  }
  func.func @transform_3(%arg0: i32) -> (i32, i32) {
    %c0_i32 = arith.constant 0 : i32
    %c0_i32_0 = arith.constant 0 : i32
    return %arg0, %c0_i32 : i32, i32
  }
}

</mosaic_0001>

<llo_original>
// kernel: fpn_psp_head_forward.5
$region0: #{fpn_psp_head_forward.5}
  #allocation0 [shape = 'u32[]', space=smem, size = 0x4, offset = 0x4, fixed_abs, tag = 'smem constant byte address 0x4 - core index']
  #allocation1 [shape = 'u32[144,128]{1,0:T(1,128)}', space=vmem, size = 0x12000, scoped, tag = 'internal scratch']
  #allocation2 [shape = 'f32[128,32]{1,0:T(8,128)}', space=vmem, size = 0x10000, scoped, tag = 'scratch operand']
  %s0 = inlined_call_operand.vmem [shape: bf16[2,1,176,32], index: 0, kind: input, shape index: {}]
  %s1 = inlined_call_operand.vmem [shape: bf16[3,3,32,32], index: 1, kind: input, shape index: {}]
  %s2 = inlined_call_operand.vmem [shape: f32[1,32], index: 2, kind: input, shape index: {}]
  %s3 = inlined_call_operand.vmem [shape: bf16[32,64], index: 3, kind: input, shape index: {}]
  %s4 = inlined_call_operand.vmem [shape: f32[1,64], index: 4, kind: input, shape index: {}]
  %s5 = inlined_call_operand.vmem [shape: bf16[2,1,128,64], index: 5, kind: input, shape index: {}]
  %s6 = inlined_call_operand.vmem [shape: bf16[2,1,128,64], index: 6, kind: output, shape index: {}]
  %s7 = sld [smem:[#allocation0]]
  $region69: #{fpn_psp_head_forward.5} parent=0
    _
  %s9 = ssub.s32 1, %s7
  %s10 = scalar_select 0, %s9, %s7
  loop: start=0, step=1, limit=8
  $region2: #{fpn_psp_head_forward.5} parent=0 // loop_pre_header
    _
  $region3: #{fpn_psp_head_forward.5} parent=0 // loop_header
    %s12 = sphi 0, %s16
    %p13 = scmp.ge.s32.totalorder %s12, 8
    %s19 = sphi 0, %s38
    %s20 = sphi 0, %s34
    %s21 = sphi 0, %s30
    %s22 = sphi 0, %s19
    %s23 = sphi 0, %s20
    %s24 = sphi 0, %s21
    %s25 = sphi 0, %s22
    %s26 = sphi 0, %s23
    %s27 = sphi 0, %s24
    %s43 = sphi 0, %s45
    %s46 = sphi 0, %s43
    %s47 = sphi 0, %s46
    %s63 = sphi 0, %s47
    %s69 = sphi 0, %s71
    %s72 = sphi 0, %s69
    %s73 = sphi 0, %s72
    %s89 = sphi 0, %s73
    %s93 = sphi 0, %s93
    %s95 = sphi 0, %s93
    %s96 = sphi 0, %s95
    %s110 = sphi 0, %s96
    %s114 = sphi 0, %s114
    %s116 = sphi 0, %s114
    %s117 = sphi 0, %s116
    %s131 = sphi 0, %s117
    %s135 = sphi 0, %s135
    %s137 = sphi 0, %s135
    %s138 = sphi 0, %s137
    %s152 = sphi 0, %s138
    %s160 = sphi 0, %s162
    %s163 = sphi 0, %s160
    %s164 = sphi 0, %s163
    %s180 = sphi 0, %s164
    %s188 = sphi 0, %s190
    %s191 = sphi 0, %s188
    %s192 = sphi 0, %s191
    %s208 = sphi 0, %s192
  $region4: #{fpn_psp_head_forward.5} parent=0 // loop_header_branch
    %15 = sbr.rel (%p13) target = $region8
  $region5: #{fpn_psp_head_forward.5} parent=0 // loop_body
    %s17 = ssub.s32 %s12, 1
    %s18 = ssub.s32 %s12, 2
    %s28 = sadd.s32 1, %s21
    %p29 = scmp.ge.s32.totalorder %s28, 3
    %s30 = scalar_select %p29, 0, %s28
    %s31 = sadd.s32 1, %s20
    %s32 = scalar_select %p29, %s31, %s20
    %p33 = scmp.ge.s32.totalorder %s32, 1
    %s34 = scalar_select %p33, 0, %s32
    %s35 = sadd.s32 1, %s19
    %s36 = scalar_select %p33, %s35, %s19
    %p37 = scmp.ge.s32.totalorder %s36, 2
    %s38 = scalar_select %p37, 0, %s36
    %s39 = ssub.s32 %s19, %s38
    %s40 = ssub.s32 %s20, %s34
    %s41 = sor.u32 %s39, %s40
    %p42 = scmp.eq.s32.totalorder %s41, 0
    %s44 = sadd.s32 %s43, 1
    %s45 = scalar_select %p42, %s43, %s44
    %p48 = pneg %p42
    %p49 = scmp.eq.s32.totalorder %s12, 5
    %p50 = por %p48, %p49
    %p51 = scmp.ne.s32.totalorder %s43, %s46
    %p52 = scmp.eq.s32.totalorder %s12, 0
    %p53 = por %p51, %p52
    %p54 = scmp.ne.s32.totalorder %s43, %s46
    %p55 = scmp.eq.s32.totalorder %s17, 5
    %p56 = por %p54, %p55
    %p57 = scmp.ne.s32.totalorder %s46, %s47
    %p58 = scmp.eq.s32.totalorder %s17, 0
    %p59 = por %p57, %p58
    %p60 = scmp.ne.s32.totalorder %s46, %s47
    %p61 = scmp.eq.s32.totalorder %s18, 5
    %p62 = por %p60, %p61
    %p64 = scmp.ne.s32.totalorder %s47, %s63
    %p65 = scmp.eq.s32.totalorder %s18, 0
    %p66 = por %p64, %p65
    %s67 = ssub.s32 %s21, %s30
    %p68 = scmp.eq.s32.totalorder %s67, 0
    %s70 = sadd.s32 %s69, 1
    %s71 = scalar_select %p68, %s69, %s70
    %p74 = pneg %p68
    %p75 = scmp.eq.s32.totalorder %s12, 5
    %p76 = por %p74, %p75
    %p77 = scmp.ne.s32.totalorder %s69, %s72
    %p78 = scmp.eq.s32.totalorder %s12, 0
    %p79 = por %p77, %p78
    %p80 = scmp.ne.s32.totalorder %s69, %s72
    %p81 = scmp.eq.s32.totalorder %s17, 5
    %p82 = por %p80, %p81
    %p83 = scmp.ne.s32.totalorder %s72, %s73
    %p84 = scmp.eq.s32.totalorder %s17, 0
    %p85 = por %p83, %p84
    %p86 = scmp.ne.s32.totalorder %s72, %s73
    %p87 = scmp.eq.s32.totalorder %s18, 5
    %p88 = por %p86, %p87
    %p90 = scmp.ne.s32.totalorder %s73, %s89
    %p91 = scmp.eq.s32.totalorder %s18, 0
    %p92 = por %p90, %p91
    %s94 = sadd.s32 %s93, 1
    %p97 = scmp.eq.s32.totalorder %s12, 5
    %p98 = scmp.ne.s32.totalorder %s93, %s95
    %p99 = scmp.eq.s32.totalorder %s12, 0
    %p100 = por %p98, %p99
    %p101 = scmp.ne.s32.totalorder %s93, %s95
    %p102 = scmp.eq.s32.totalorder %s17, 5
    %p103 = por %p101, %p102
    %p104 = scmp.ne.s32.totalorder %s95, %s96
    %p105 = scmp.eq.s32.totalorder %s17, 0
    %p106 = por %p104, %p105
    %p107 = scmp.ne.s32.totalorder %s95, %s96
    %p108 = scmp.eq.s32.totalorder %s18, 5
    %p109 = por %p107, %p108
    %p111 = scmp.ne.s32.totalorder %s96, %s110
    %p112 = scmp.eq.s32.totalorder %s18, 0
    %p113 = por %p111, %p112
    %s115 = sadd.s32 %s114, 1
    %p118 = scmp.eq.s32.totalorder %s12, 5
    %p119 = scmp.ne.s32.totalorder %s114, %s116
    %p120 = scmp.eq.s32.totalorder %s12, 0
    %p121 = por %p119, %p120
    %p122 = scmp.ne.s32.totalorder %s114, %s116
    %p123 = scmp.eq.s32.totalorder %s17, 5
    %p124 = por %p122, %p123
    %p125 = scmp.ne.s32.totalorder %s116, %s117
    %p126 = scmp.eq.s32.totalorder %s17, 0
    %p127 = por %p125, %p126
    %p128 = scmp.ne.s32.totalorder %s116, %s117
    %p129 = scmp.eq.s32.totalorder %s18, 5
    %p130 = por %p128, %p129
    %p132 = scmp.ne.s32.totalorder %s117, %s131
    %p133 = scmp.eq.s32.totalorder %s18, 0
    %p134 = por %p132, %p133
    %s136 = sadd.s32 %s135, 1
    %p139 = scmp.eq.s32.totalorder %s12, 5
    %p140 = scmp.ne.s32.totalorder %s135, %s137
    %p141 = scmp.eq.s32.totalorder %s12, 0
    %p142 = por %p140, %p141
    %p143 = scmp.ne.s32.totalorder %s135, %s137
    %p144 = scmp.eq.s32.totalorder %s17, 5
    %p145 = por %p143, %p144
    %p146 = scmp.ne.s32.totalorder %s137, %s138
    %p147 = scmp.eq.s32.totalorder %s17, 0
    %p148 = por %p146, %p147
    %p149 = scmp.ne.s32.totalorder %s137, %s138
    %p150 = scmp.eq.s32.totalorder %s18, 5
    %p151 = por %p149, %p150
    %p153 = scmp.ne.s32.totalorder %s138, %s152
    %p154 = scmp.eq.s32.totalorder %s18, 0
    %p155 = por %p153, %p154
    %s156 = ssub.s32 %s19, %s38
    %s157 = ssub.s32 %s20, %s34
    %s158 = sor.u32 %s156, %s157
    %p159 = scmp.eq.s32.totalorder %s158, 0
    %s161 = sadd.s32 %s160, 1
    %s162 = scalar_select %p159, %s160, %s161
    %p165 = pneg %p159
    %p166 = scmp.eq.s32.totalorder %s12, 5
    %p167 = por %p165, %p166
    %p168 = scmp.ne.s32.totalorder %s160, %s163
    %p169 = scmp.eq.s32.totalorder %s12, 0
    %p170 = por %p168, %p169
    %p171 = scmp.ne.s32.totalorder %s160, %s163
    %p172 = scmp.eq.s32.totalorder %s17, 5
    %p173 = por %p171, %p172
    %p174 = scmp.ne.s32.totalorder %s163, %s164
    %p175 = scmp.eq.s32.totalorder %s17, 0
    %p176 = por %p174, %p175
    %p177 = scmp.ne.s32.totalorder %s163, %s164
    %p178 = scmp.eq.s32.totalorder %s18, 5
    %p179 = por %p177, %p178
    %p181 = scmp.ne.s32.totalorder %s164, %s180
    %p182 = scmp.eq.s32.totalorder %s18, 0
    %p183 = por %p181, %p182
    %s184 = ssub.s32 %s19, %s38
    %s185 = ssub.s32 %s20, %s34
    %s186 = sor.u32 %s184, %s185
    %p187 = scmp.eq.s32.totalorder %s186, 0
    %s189 = sadd.s32 %s188, 1
    %s190 = scalar_select %p187, %s188, %s189
    %p193 = pneg %p187
    %p194 = scmp.eq.s32.totalorder %s12, 5
    %p195 = por %p193, %p194
    %p196 = scmp.ne.s32.totalorder %s188, %s191
    %p197 = scmp.eq.s32.totalorder %s12, 0
    %p198 = por %p196, %p197
    %p199 = scmp.ne.s32.totalorder %s188, %s191
    %p200 = scmp.eq.s32.totalorder %s17, 5
    %p201 = por %p199, %p200
    %p202 = scmp.ne.s32.totalorder %s191, %s192
    %p203 = scmp.eq.s32.totalorder %s17, 0
    %p204 = por %p202, %p203
    %p205 = scmp.ne.s32.totalorder %s191, %s192
    %p206 = scmp.eq.s32.totalorder %s18, 5
    %p207 = por %p205, %p206
    %p209 = scmp.ne.s32.totalorder %s192, %s208
    %p210 = scmp.eq.s32.totalorder %s18, 0
    %p211 = por %p209, %p210
    %p212 = scmp.le.s32.totalorder 1, %s12
    %p213 = scmp.lt.s32.totalorder %s12, 7
    %p214 = pnand %p212, %p213
    %p215 = pneg %p214
    // Predicated region
    $region9: #{fpn_psp_head_forward.5} parent=5 // pred_check
      _
    $region10: #{fpn_psp_head_forward.5} parent=5 // pred_check_branch
      %217 = sbr.rel (%p214) target = $region12
    $region11: #{fpn_psp_head_forward.5} parent=5 // pred_region
      %s218 = ssub.s32 %s12, 1
      // Predicated region
      $region13: #{fpn_psp_head_forward.5} parent=11 // pred_check
        %p219 = pneg %p106
      $region14: #{fpn_psp_head_forward.5} parent=11 // pred_check_branch
        %221 = sbr.rel (%p219) target = $region16
      $region15: #{fpn_psp_head_forward.5} parent=11 // pred_region
        _
      $region16: #{fpn_psp_head_forward.5} parent=11 // pred_fallthru
        _
      // Predicated region
      $region17: #{fpn_psp_head_forward.5} parent=11 // pred_check
        %p222 = pneg %p127
      $region18: #{fpn_psp_head_forward.5} parent=11 // pred_check_branch
        %224 = sbr.rel (%p222) target = $region20
      $region19: #{fpn_psp_head_forward.5} parent=11 // pred_region
        _
      $region20: #{fpn_psp_head_forward.5} parent=11 // pred_fallthru
        _
      // Predicated region
      $region21: #{fpn_psp_head_forward.5} parent=11 // pred_check
        %p225 = pneg %p148
      $region22: #{fpn_psp_head_forward.5} parent=11 // pred_check_branch
        %227 = sbr.rel (%p225) target = $region24
      $region23: #{fpn_psp_head_forward.5} parent=11 // pred_region
        _
      $region24: #{fpn_psp_head_forward.5} parent=11 // pred_fallthru
        _
    $region12: #{fpn_psp_head_forward.5} parent=5 // pred_fallthru
      _
    %p228 = scmp.lt.s32.totalorder %s12, 6
    // Predicated region
    $region25: #{fpn_psp_head_forward.5} parent=5 // pred_check
      %p229 = pneg %p228
    $region26: #{fpn_psp_head_forward.5} parent=5 // pred_check_branch
      %231 = sbr.rel (%p229) target = $region28
    $region27: #{fpn_psp_head_forward.5} parent=5 // pred_region
      // Predicated region
      $region29: #{fpn_psp_head_forward.5} parent=27 // pred_check
        %p232 = pneg %p53
      $region30: #{fpn_psp_head_forward.5} parent=27 // pred_check_branch
        %234 = sbr.rel (%p232) target = $region32
      $region31: #{fpn_psp_head_forward.5} parent=27 // pred_region
        %p235 = scmp.lt.s32.totalorder %s19, 1
        %s236 = scalar_select %p235, %s19, 1
        %p237 = scmp.lt.s32.totalorder %s20, 0
        %s238 = scalar_select %p237, %s20, 0
        %s239 = smul.addr %s238, 22
        %s240 = smul.addr %s236, 22
        %s241 = sadd.s32 %s239, %s240
        %s242 = smul.addr %s241, 4
        %s243 = scalar_lea.vmem %s0, %s242
      $region32: #{fpn_psp_head_forward.5} parent=27 // pred_fallthru
        _
      // Predicated region
      $region33: #{fpn_psp_head_forward.5} parent=27 // pred_check
        %p244 = pneg %p79
      $region34: #{fpn_psp_head_forward.5} parent=27 // pred_check_branch
        %246 = sbr.rel (%p244) target = $region36
      $region35: #{fpn_psp_head_forward.5} parent=27 // pred_region
        %p247 = scmp.lt.s32.totalorder %s21, 2
        %s248 = scalar_select %p247, %s21, 2
        %s249 = smul.addr %s248, 12
        %s250 = smul.addr %s249, 4
        %s251 = scalar_lea.vmem %s1, %s250
      $region36: #{fpn_psp_head_forward.5} parent=27 // pred_fallthru
        _
      // Predicated region
      $region37: #{fpn_psp_head_forward.5} parent=27 // pred_check
        %p252 = pneg %p170
      $region38: #{fpn_psp_head_forward.5} parent=27 // pred_check_branch
        %254 = sbr.rel (%p252) target = $region40
      $region39: #{fpn_psp_head_forward.5} parent=27 // pred_region
        %p255 = scmp.lt.s32.totalorder %s19, 1
        %s256 = scalar_select %p255, %s19, 1
        %p257 = scmp.lt.s32.totalorder %s20, 0
        %s258 = scalar_select %p257, %s20, 0
        %s259 = smul.addr %s258, 16
        %s260 = smul.addr %s256, 16
        %s261 = sadd.s32 %s259, %s260
        %s262 = smul.addr %s261, 4
        %s263 = scalar_lea.vmem %s5, %s262
      $region40: #{fpn_psp_head_forward.5} parent=27 // pred_fallthru
        _
    $region28: #{fpn_psp_head_forward.5} parent=5 // pred_fallthru
      _
    %p264 = scmp.le.s32.totalorder 1, %s12
    %p265 = scmp.lt.s32.totalorder %s12, 7
    %p266 = pnand %p264, %p265
    %p267 = pneg %p266
    // Predicated region
    $region41: #{fpn_psp_head_forward.5} parent=5 // pred_check
      _
    $region42: #{fpn_psp_head_forward.5} parent=5 // pred_check_branch
      %269 = sbr.rel (%p266) target = $region44
    $region43: #{fpn_psp_head_forward.5} parent=5 // pred_region
      %s270 = ssub.s32 %s12, 1
      %p271 = scmp.lt.s32.totalorder %s22, 1
      %s272 = scalar_select %p271, %s22, 1
      %p273 = scmp.lt.s32.totalorder %s23, 0
      %s274 = scalar_select %p273, %s23, 0
      %s275 = smul.addr %s274, 22
      %s276 = smul.addr %s272, 22
      %s277 = sadd.s32 %s275, %s276
      %s278 = smul.addr %s277, 4
      %s279 = scalar_lea.vmem %s0, %s278
      %p280 = pneg %p59
      %p281 = pneg %p56
      %p282 = scmp.lt.s32.totalorder %s24, 2
      %s283 = scalar_select %p282, %s24, 2
      %s284 = smul.addr %s283, 12
      %s285 = smul.addr %s284, 4
      %s286 = scalar_lea.vmem %s1, %s285
      %p287 = pneg %p85
      %p288 = pneg %p82
      %p289 = pneg %p106
      %p290 = pneg %p103
      %p291 = pneg %p127
      %p292 = pneg %p124
      %p293 = pneg %p148
      %p294 = pneg %p145
      %p295 = scmp.lt.s32.totalorder %s22, 1
      %s296 = scalar_select %p295, %s22, 1
      %p297 = scmp.lt.s32.totalorder %s23, 0
      %s298 = scalar_select %p297, %s23, 0
      %s299 = smul.addr %s298, 16
      %s300 = smul.addr %s296, 16
      %s301 = sadd.s32 %s299, %s300
      %s302 = smul.addr %s301, 4
      %s303 = scalar_lea.vmem %s5, %s302
      %p304 = pneg %p176
      %p305 = pneg %p173
      %p306 = pneg %p204
      %p307 = pneg %p201
      %p308 = scmp.lt.s32.totalorder %s22, 1
      %s309 = scalar_select %p308, %s22, 1
      %p310 = scmp.lt.s32.totalorder %s23, 0
      %s311 = scalar_select %p310, %s23, 0
      %s312 = smul.addr %s311, 16
      %s313 = smul.addr %s309, 16
      %s314 = sadd.s32 %s312, %s313
      %s315 = smul.addr %s314, 4
      %s316 = scalar_lea.vmem %s6, %s315
      %p317 = scmp.lt.s32.totalorder %s22, 1
      %s318 = scalar_select %p317, %s22, 1
      %p319 = scmp.lt.s32.totalorder %s23, 0
      %s320 = scalar_select %p319, %s23, 0
      %s321 = smul.addr %s320, 22
      %s322 = smul.addr %s318, 22
      %s323 = sadd.s32 %s321, %s322
      %s324 = smul.addr %s323, 4
      %s325 = scalar_lea.vmem %s0, %s324
      %p326 = scmp.lt.s32.totalorder %s24, 2
      %s327 = scalar_select %p326, %s24, 2
      %s328 = smul.addr %s327, 12
      %s329 = smul.addr %s328, 4
      %s330 = scalar_lea.vmem %s1, %s329
      %p331 = scmp.lt.s32.totalorder %s22, 1
      %s332 = scalar_select %p331, %s22, 1
      %p333 = scmp.lt.s32.totalorder %s23, 0
      %s334 = scalar_select %p333, %s23, 0
      %s335 = smul.addr %s334, 16
      %s336 = smul.addr %s332, 16
      %s337 = sadd.s32 %s335, %s336
      %s338 = smul.addr %s337, 4
      %s339 = scalar_lea.vmem %s5, %s338
      %p340 = scmp.lt.s32.totalorder %s22, 1
      %s341 = scalar_select %p340, %s22, 1
      %p342 = scmp.lt.s32.totalorder %s23, 0
      %s343 = scalar_select %p342, %s23, 0
      %s344 = smul.addr %s343, 16
      %s345 = smul.addr %s341, 16
      %s346 = sadd.s32 %s344, %s345
      %s347 = smul.addr %s346, 4
      %s348 = scalar_lea.vmem %s6, %s347
      %p350 = scmp.eq.s32.totalorder %s24, 0
      // Predicated region
      $region45: #{fpn_psp_head_forward.5} parent=43 // pred_check
        %p351 = pneg %p350
      $region46: #{fpn_psp_head_forward.5} parent=43 // pred_check_branch
        %353 = sbr.rel (%p351) target = $region48
      $region47: #{fpn_psp_head_forward.5} parent=43 // pred_region
        %vm354 = vcmask 261120
        %355 = vst.msk [vmem:[#allocation2] sm:$0xff] %vm354, 0.0
        %356 = vst.msk [vmem:[#allocation2 + $0x8] sm:$0xff] %vm354, 0.0
        %357 = vst.msk [vmem:[#allocation2 + $0x10] sm:$0xff] %vm354, 0.0
        %358 = vst.msk [vmem:[#allocation2 + $0x18] sm:$0xff] %vm354, 0.0
        %359 = vst.msk [vmem:[#allocation2 + $0x20] sm:$0xff] %vm354, 0.0
        %360 = vst.msk [vmem:[#allocation2 + $0x28] sm:$0xff] %vm354, 0.0
        %361 = vst.msk [vmem:[#allocation2 + $0x30] sm:$0xff] %vm354, 0.0
        %362 = vst.msk [vmem:[#allocation2 + $0x38] sm:$0xff] %vm354, 0.0
        %363 = vst.msk [vmem:[#allocation2 + $0x40] sm:$0xff] %vm354, 0.0
        %364 = vst.msk [vmem:[#allocation2 + $0x48] sm:$0xff] %vm354, 0.0
        %365 = vst.msk [vmem:[#allocation2 + $0x50] sm:$0xff] %vm354, 0.0
        %366 = vst.msk [vmem:[#allocation2 + $0x58] sm:$0xff] %vm354, 0.0
        %367 = vst.msk [vmem:[#allocation2 + $0x60] sm:$0xff] %vm354, 0.0
        %368 = vst.msk [vmem:[#allocation2 + $0x68] sm:$0xff] %vm354, 0.0
        %369 = vst.msk [vmem:[#allocation2 + $0x70] sm:$0xff] %vm354, 0.0
        %370 = vst.msk [vmem:[#allocation2 + $0x78] sm:$0xff] %vm354, 0.0
        %v371 = vld [vmem:[%s325] sm:$0xf]
        %v372 = vld [vmem:[%s325 + $0x4] sm:$0xf]
        %v373 = vld [vmem:[%s325 + $0x8] sm:$0xf]
        %v374 = vld [vmem:[%s325 + $0xc] sm:$0xf]
        %v375 = vld [vmem:[%s325 + $0x10] sm:$0xf]
        %v376 = vld [vmem:[%s325 + $0x14] sm:$0xf]
        %v377 = vld [vmem:[%s325 + $0x18] sm:$0xf]
        %v378 = vld [vmem:[%s325 + $0x1c] sm:$0xf]
        %v379 = vld [vmem:[%s325 + $0x20] sm:$0xf]
        %v380 = vld [vmem:[%s325 + $0x24] sm:$0xf]
        %v381 = vld [vmem:[%s325 + $0x28] sm:$0xf]
        %v382 = vld [vmem:[%s325 + $0x2c] sm:$0xf]
        %v383 = vld [vmem:[%s325 + $0x30] sm:$0xf]
        %v384 = vld [vmem:[%s325 + $0x34] sm:$0xf]
        %v385 = vld [vmem:[%s325 + $0x38] sm:$0xf]
        %v386 = vld [vmem:[%s325 + $0x3c] sm:$0xf]
        %v387 = vld [vmem:[%s330] sm:$0xf]
        %v388 = vld [vmem:[%s330 + $0x4] sm:$0xf]
        %v389 = vld [vmem:[%s330 + $0x8] sm:$0xf]
        %v390 = vld [vmem:[%s330 + $0xc] sm:$0xf]
        %v391 = vld [vmem:[%s325 + $0x40] sm:$0x1]
        %s392 = scalar_lea.vmem %s330, 16
        %v393 = vld [vmem:[%s392] sm:$0xf]
        %v394 = vld [vmem:[%s392 + $0x4] sm:$0xf]
        %v395 = vld [vmem:[%s392 + $0x8] sm:$0xf]
        %v396 = vld [vmem:[%s392 + $0xc] sm:$0xf]
        %v414 = vunpack.c.l.b16 %v371
        %v415 = vunpack.c.l.b16 %v372
        %v416 = vunpack.c.l.b16 %v373
        %v417 = vunpack.c.l.b16 %v374
        %v418 = vunpack.c.l.b16 %v375
        %v419 = vunpack.c.l.b16 %v376
        %v420 = vunpack.c.l.b16 %v377
        %v421 = vunpack.c.l.b16 %v378
        %v422 = vunpack.c.l.b16 %v379
        %v423 = vunpack.c.l.b16 %v380
        %v424 = vunpack.c.l.b16 %v381
        %v425 = vunpack.c.l.b16 %v382
        %v426 = vunpack.c.l.b16 %v383
        %v427 = vunpack.c.l.b16 %v384
        %v428 = vunpack.c.l.b16 %v385
        %v429 = vunpack.c.l.b16 %v386
        %v430 = vunpack.c.l.b16 %v391
        %v431 = vpack.c.b16 %v415, %v414
        %v432 = vpack.c.b16 %v417, %v416
        %v433 = vpack.c.b16 %v419, %v418
        %v434 = vpack.c.b16 %v421, %v420
        %v435 = vpack.c.b16 %v423, %v422
        %v436 = vpack.c.b16 %v425, %v424
        %v437 = vpack.c.b16 %v427, %v426
        %v438 = vpack.c.b16 %v429, %v428
        %v439 = vpack.c.b16 %v430, %v430
        %vm440 = vsmask.f32 7424
        %v442 = vshrl.u32 %v431, 16
        %v444 = vshll.u32 %v431, 16
        %v446 = vrot.slane %v444, 1
        %v447 = vor.u32 %v442, %v446
        %v449 = vshll.u32 %v432, 16
        %v451 = vrot.slane %v449, 1
        %v452 = vsel %vm440, %v447, %v451
        %v453 = vshrl.u32 %v432, 16
        %v455 = vor.u32 %v453, %v451
        %v457 = vshll.u32 %v433, 16
        %v459 = vrot.slane %v457, 1
        %v460 = vsel %vm440, %v455, %v459
        %v461 = vshrl.u32 %v433, 16
        %v463 = vor.u32 %v461, %v459
        %v465 = vshll.u32 %v434, 16
        %v467 = vrot.slane %v465, 1
        %v468 = vsel %vm440, %v463, %v467
        %v469 = vshrl.u32 %v434, 16
        %v471 = vor.u32 %v469, %v467
        %v473 = vshll.u32 %v435, 16
        %v475 = vrot.slane %v473, 1
        %v476 = vsel %vm440, %v471, %v475
        %v477 = vshrl.u32 %v435, 16
        %v479 = vor.u32 %v477, %v475
        %v481 = vshll.u32 %v436, 16
        %v483 = vrot.slane %v481, 1
        %v484 = vsel %vm440, %v479, %v483
        %v485 = vshrl.u32 %v436, 16
        %v487 = vor.u32 %v485, %v483
        %v489 = vshll.u32 %v437, 16
        %v491 = vrot.slane %v489, 1
        %v492 = vsel %vm440, %v487, %v491
        %v493 = vshrl.u32 %v437, 16
        %v495 = vor.u32 %v493, %v491
        %v497 = vshll.u32 %v438, 16
        %v499 = vrot.slane %v497, 1
        %v500 = vsel %vm440, %v495, %v499
        %v501 = vshrl.u32 %v438, 16
        %v503 = vor.u32 %v501, %v499
        %v505 = vshll.u32 %v439, 16
        %v507 = vrot.slane %v505, 1
        %v508 = vsel %vm440, %v503, %v507
        %v513 = vunpack.c.l.b16 %v393
        %v514 = vunpack.c.l.b16 %v394
        %v515 = vunpack.c.l.b16 %v395
        %v516 = vunpack.c.l.b16 %v396
        %v517 = vpack.c.b16 %v514, %v513
        %v518 = vpack.c.b16 %v516, %v515
        %v522 = vsel %vm354, %v452, 0
        %v525 = vsel %vm354, %v460, 0
        %v528 = vsel %vm354, %v468, 0
        %v531 = vsel %vm354, %v476, 0
        %v534 = vsel %vm354, %v484, 0
        %v537 = vsel %vm354, %v492, 0
        %v540 = vsel %vm354, %v500, 0
        %v543 = vsel %vm354, %v508, 0
        %545 = vmatprep.subr.bf16.mxu0 0
        %546 = vmatpush1.bf16.msra.mxu0 %v517
        %547 = vmatprep.subr.bf16.mxu0 0
        %548 = vmatpush1.bf16.msra.mxu0 %v518
        %549 = vmatprep.subr.bf16.mxu0 0
        %550 = vmatpush1.bf16.msra.mxu0 0
        %551 = vmatprep.subr.bf16.mxu0 0
        %552 = vmatpush1.bf16.msra.mxu0 0
        %553 = vmatprep.subr.bf16.mxu0 0
        %554 = vmatpush1.bf16.msra.mxu0 0
        %555 = vmatprep.subr.bf16.mxu0 0
        %556 = vmatpush1.bf16.msra.mxu0 0
        %557 = vmatprep.subr.bf16.mxu0 0
        %558 = vmatpush1.bf16.msra.mxu0 0
        %559 = vmatprep.subr.bf16.mxu0 0
        %560 = vmatpush1.bf16.msra.mxu0 0
        %561 = vmatprep.subr.bf16.mxu0 0
        %562 = vmatpush1.bf16.msra.mxu0 0
        %563 = vmatprep.subr.bf16.mxu0 0
        %564 = vmatpush1.bf16.msra.mxu0 0
        %565 = vmatprep.subr.bf16.mxu0 0
        %566 = vmatpush1.bf16.msra.mxu0 0
        %567 = vmatprep.subr.bf16.mxu0 0
        %568 = vmatpush1.bf16.msra.mxu0 0
        %569 = vmatprep.subr.bf16.mxu0 0
        %570 = vmatpush1.bf16.msra.mxu0 0
        %571 = vmatprep.subr.bf16.mxu0 0
        %572 = vmatpush1.bf16.msra.mxu0 0
        %573 = vmatprep.subr.bf16.mxu0 0
        %574 = vmatpush1.bf16.msra.mxu0 0
        %575 = vmatprep.subr.bf16.mxu0 0
        %576 = vmatpush1.bf16.msra.mxu0 0
        %577 = vmatprep.mubr.bf16.mxu0 0
        %578 = vmatmul.mubr.bf16.gmra.mrb[0].mxu0 %v522
        %v579 = vpop.f32.mrb[0].mxu0
        %v580 = vadd.f32 0.0, %v579
        %v581 = vpop.f32.mrb[0].mxu0
        %v582 = vpop.f32.mrb[0].mxu0
        %v583 = vadd.f32 0.0, %v582
        %v584 = vpop.f32.mrb[0].mxu0
        %585 = vmatprep.mubr.bf16.mxu0 0
        %586 = vmatmul.mubr.bf16.gmra.mrb[0].mxu0 %v525
        %v587 = vpop.f32.mrb[0].mxu0
        %v588 = vadd.f32 0.0, %v587
        %v589 = vpop.f32.mrb[0].mxu0
        %v590 = vpop.f32.mrb[0].mxu0
        %v591 = vadd.f32 0.0, %v590
        %v592 = vpop.f32.mrb[0].mxu0
        %593 = vmatprep.mubr.bf16.mxu0 0
        %594 = vmatmul.mubr.bf16.gmra.mrb[0].mxu0 %v528
        %v595 = vpop.f32.mrb[0].mxu0
        %v596 = vadd.f32 0.0, %v595
        %v597 = vpop.f32.mrb[0].mxu0
        %v598 = vpop.f32.mrb[0].mxu0
        %v599 = vadd.f32 0.0, %v598
        %v600 = vpop.f32.mrb[0].mxu0
        %601 = vmatprep.mubr.bf16.mxu0 0
        %602 = vmatmul.mubr.bf16.gmra.mrb[0].mxu0 %v531
        %v603 = vpop.f32.mrb[0].mxu0
        %v604 = vadd.f32 0.0, %v603
        %v605 = vpop.f32.mrb[0].mxu0
        %v606 = vpop.f32.mrb[0].mxu0
        %v607 = vadd.f32 0.0, %v606
        %v608 = vpop.f32.mrb[0].mxu0
        %609 = vmatprep.mubr.bf16.mxu0 0
        %610 = vmatmul.mubr.bf16.gmra.mrb[0].mxu0 %v534
        %v611 = vpop.f32.mrb[0].mxu0
        %v612 = vadd.f32 0.0, %v611
        %v613 = vpop.f32.mrb[0].mxu0
        %v614 = vpop.f32.mrb[0].mxu0
        %v615 = vadd.f32 0.0, %v614
        %v616 = vpop.f32.mrb[0].mxu0
        %617 = vmatprep.mubr.bf16.mxu0 0
        %618 = vmatmul.mubr.bf16.gmra.mrb[0].mxu0 %v537
        %v619 = vpop.f32.mrb[0].mxu0
        %v620 = vadd.f32 0.0, %v619
        %v621 = vpop.f32.mrb[0].mxu0
        %v622 = vpop.f32.mrb[0].mxu0
        %v623 = vadd.f32 0.0, %v622
        %v624 = vpop.f32.mrb[0].mxu0
        %625 = vmatprep.mubr.bf16.mxu0 0
        %626 = vmatmul.mubr.bf16.gmra.mrb[0].mxu0 %v540
        %v627 = vpop.f32.mrb[0].mxu0
        %v628 = vadd.f32 0.0, %v627
        %v629 = vpop.f32.mrb[0].mxu0
        %v630 = vpop.f32.mrb[0].mxu0
        %v631 = vadd.f32 0.0, %v630
        %v632 = vpop.f32.mrb[0].mxu0
        %633 = vmatprep.mubr.bf16.mxu0 0
        %634 = vmatmul.mubr.bf16.gmra.mrb[0].mxu0 %v543
        %v635 = vpop.f32.mrb[0].mxu0
        %v636 = vadd.f32 0.0, %v635
        %v637 = vpop.f32.mrb[0].mxu0
        %v638 = vpop.f32.mrb[0].mxu0
        %v639 = vadd.f32 0.0, %v638
        %v640 = vpop.f32.mrb[0].mxu0
        %641 = vdwg.mxu0
        %v646 = vunpack.c.l.b16 %v387
        %v647 = vunpack.c.l.b16 %v388
        %v648 = vunpack.c.l.b16 %v389
        %v649 = vunpack.c.l.b16 %v390
        %v650 = vpack.c.b16 %v647, %v646
        %v651 = vpack.c.b16 %v649, %v648
        %v654 = vsel %vm354, %v431, 0
        %v656 = vsel %vm354, %v432, 0
        %v658 = vsel %vm354, %v433, 0
        %v660 = vsel %vm354, %v434, 0
        %v662 = vsel %vm354, %v435, 0
        %v664 = vsel %vm354, %v436, 0
        %v666 = vsel %vm354, %v437, 0
        %v668 = vsel %vm354, %v438, 0
        %670 = vmatprep.subr.bf16.mxu0 0
        %671 = vmatpush1.bf16.msra.mxu0 %v650
        %672 = vmatprep.subr.bf16.mxu0 0
        %673 = vmatpush1.bf16.msra.mxu0 %v651
        %674 = vmatprep.subr.bf16.mxu0 0
        %675 = vmatpush1.bf16.msra.mxu0 0
        %676 = vmatprep.subr.bf16.mxu0 0
        %677 = vmatpush1.bf16.msra.mxu0 0
        %678 = vmatprep.subr.bf16.mxu0 0
        %679 = vmatpush1.bf16.msra.mxu0 0
        %680 = vmatprep.subr.bf16.mxu0 0
        %681 = vmatpush1.bf16.msra.mxu0 0
        %682 = vmatprep.subr.bf16.mxu0 0
        %683 = vmatpush1.bf16.msra.mxu0 0
        %684 = vmatprep.subr.bf16.mxu0 0
        %685 = vmatpush1.bf16.msra.mxu0 0
        %686 = vmatprep.subr.bf16.mxu0 0
        %687 = vmatpush1.bf16.msra.mxu0 0
        %688 = vmatprep.subr.bf16.mxu0 0
        %689 = vmatpush1.bf16.msra.mxu0 0
        %690 = vmatprep.subr.bf16.mxu0 0
        %691 = vmatpush1.bf16.msra.mxu0 0
        %692 = vmatprep.subr.bf16.mxu0 0
        %693 = vmatpush1.bf16.msra.mxu0 0
        %694 = vmatprep.subr.bf16.mxu0 0
        %695 = vmatpush1.bf16.msra.mxu0 0
        %696 = vmatprep.subr.bf16.mxu0 0
        %697 = vmatpush1.bf16.msra.mxu0 0
        %698 = vmatprep.subr.bf16.mxu0 0
        %699 = vmatpush1.bf16.msra.mxu0 0
        %700 = vmatprep.subr.bf16.mxu0 0
        %701 = vmatpush1.bf16.msra.mxu0 0
        %702 = vmatprep.mubr.bf16.mxu0 0
        %703 = vmatmul.mubr.bf16.gmra.mrb[0].mxu0 %v654
        %v704 = vpop.f32.mrb[0].mxu0
        %v705 = vadd.f32 %v580, %v704
        %v706 = vpop.f32.mrb[0].mxu0
        %v707 = vpop.f32.mrb[0].mxu0
        %v708 = vadd.f32 %v583, %v707
        %v709 = vpop.f32.mrb[0].mxu0
        %710 = vmatprep.mubr.bf16.mxu0 0
        %711 = vmatmul.mubr.bf16.gmra.mrb[0].mxu0 %v656
        %v712 = vpop.f32.mrb[0].mxu0
        %v713 = vadd.f32 %v588, %v712
        %v714 = vpop.f32.mrb[0].mxu0
        %v715 = vpop.f32.mrb[0].mxu0
        %v716 = vadd.f32 %v591, %v715
        %v717 = vpop.f32.mrb[0].mxu0
        %718 = vmatprep.mubr.bf16.mxu0 0
        %719 = vmatmul.mubr.bf16.gmra.mrb[0].mxu0 %v658
        %v720 = vpop.f32.mrb[0].mxu0
        %v721 = vadd.f32 %v596, %v720
        %v722 = vpop.f32.mrb[0].mxu0
        %v723 = vpop.f32.mrb[0].mxu0
        %v724 = vadd.f32 %v599, %v723
        %v725 = vpop.f32.mrb[0].mxu0
        %726 = vmatprep.mubr.bf16.mxu0 0
        %727 = vmatmul.mubr.bf16.gmra.mrb[0].mxu0 %v660
        %v728 = vpop.f32.mrb[0].mxu0
        %v729 = vadd.f32 %v604, %v728
        %v730 = vpop.f32.mrb[0].mxu0
        %v731 = vpop.f32.mrb[0].mxu0
        %v732 = vadd.f32 %v607, %v731
        %v733 = vpop.f32.mrb[0].mxu0
        %734 = vmatprep.mubr.bf16.mxu0 0
        %735 = vmatmul.mubr.bf16.gmra.mrb[0].mxu0 %v662
        %v736 = vpop.f32.mrb[0].mxu0
        %v737 = vadd.f32 %v612, %v736
        %v738 = vpop.f32.mrb[0].mxu0
        %v739 = vpop.f32.mrb[0].mxu0
        %v740 = vadd.f32 %v615, %v739
        %v741 = vpop.f32.mrb[0].mxu0
        %742 = vmatprep.mubr.bf16.mxu0 0
        %743 = vmatmul.mubr.bf16.gmra.mrb[0].mxu0 %v664
        %v744 = vpop.f32.mrb[0].mxu0
        %v745 = vadd.f32 %v620, %v744
        %v746 = vpop.f32.mrb[0].mxu0
        %v747 = vpop.f32.mrb[0].mxu0
        %v748 = vadd.f32 %v623, %v747
        %v749 = vpop.f32.mrb[0].mxu0
        %750 = vmatprep.mubr.bf16.mxu0 0
        %751 = vmatmul.mubr.bf16.gmra.mrb[0].mxu0 %v666
        %v752 = vpop.f32.mrb[0].mxu0
        %v753 = vadd.f32 %v628, %v752
        %v754 = vpop.f32.mrb[0].mxu0
        %v755 = vpop.f32.mrb[0].mxu0
        %v756 = vadd.f32 %v631, %v755
        %v757 = vpop.f32.mrb[0].mxu0
        %758 = vmatprep.mubr.bf16.mxu0 0
        %759 = vmatmul.mubr.bf16.gmra.mrb[0].mxu0 %v668
        %v760 = vpop.f32.mrb[0].mxu0
        %v761 = vadd.f32 %v636, %v760
        %v762 = vpop.f32.mrb[0].mxu0
        %v763 = vpop.f32.mrb[0].mxu0
        %v764 = vadd.f32 %v639, %v763
        %v765 = vpop.f32.mrb[0].mxu0
        %766 = vdwg.mxu0
        %v767 = vld [vmem:[%s325] sm:$0xe]
        %s768 = scalar_lea.vmem %s330, 32
        %v769 = vld [vmem:[%s768] sm:$0xf]
        %v770 = vld [vmem:[%s768 + $0x4] sm:$0xf]
        %v771 = vld [vmem:[%s768 + $0x8] sm:$0xf]
        %v772 = vld [vmem:[%s768 + $0xc] sm:$0xf]
        %v774 = vunpack.c.l.b16 %v767
        %v775 = vpack.c.b16 %v415, %v774
        %vm776 = vcmask 1046528
        %v777 = vrot.slane %v775, 1
        %v778 = vrot.slane %v432, 1
        %v779 = vsel %vm776, %v777, %v778
        %v780 = vrot.slane %v433, 1
        %v781 = vsel %vm776, %v778, %v780
        %v782 = vrot.slane %v434, 1
        %v783 = vsel %vm776, %v780, %v782
        %v784 = vrot.slane %v435, 1
        %v785 = vsel %vm776, %v782, %v784
        %v786 = vrot.slane %v436, 1
        %v787 = vsel %vm776, %v784, %v786
        %v788 = vrot.slane %v437, 1
        %v789 = vsel %vm776, %v786, %v788
        %v790 = vrot.slane %v438, 1
        %v791 = vsel %vm776, %v788, %v790
        %v792 = vrot.slane %v439, 1
        %v793 = vsel %vm776, %v790, %v792
        %v798 = vunpack.c.l.b16 %v769
        %v799 = vunpack.c.l.b16 %v770
        %v800 = vunpack.c.l.b16 %v771
        %v801 = vunpack.c.l.b16 %v772
        %v802 = vpack.c.b16 %v799, %v798
        %v803 = vpack.c.b16 %v801, %v800
        %v807 = vsel %vm354, %v779, 0
        %v810 = vsel %vm354, %v781, 0
        %v813 = vsel %vm354, %v783, 0
        %v816 = vsel %vm354, %v785, 0
        %v819 = vsel %vm354, %v787, 0
        %v822 = vsel %vm354, %v789, 0
        %v825 = vsel %vm354, %v791, 0
        %v828 = vsel %vm354, %v793, 0
        %830 = vmatprep.subr.bf16.mxu0 0
        %831 = vmatpush1.bf16.msra.mxu0 %v802
        %832 = vmatprep.subr.bf16.mxu0 0
        %833 = vmatpush1.bf16.msra.mxu0 %v803
        %834 = vmatprep.subr.bf16.mxu0 0
        %835 = vmatpush1.bf16.msra.mxu0 0
        %836 = vmatprep.subr.bf16.mxu0 0
        %837 = vmatpush1.bf16.msra.mxu0 0
        %838 = vmatprep.subr.bf16.mxu0 0
        %839 = vmatpush1.bf16.msra.mxu0 0
        %840 = vmatprep.subr.bf16.mxu0 0
        %841 = vmatpush1.bf16.msra.mxu0 0
        %842 = vmatprep.subr.bf16.mxu0 0
        %843 = vmatpush1.bf16.msra.mxu0 0
        %844 = vmatprep.subr.bf16.mxu0 0
        %845 = vmatpush1.bf16.msra.mxu0 0
        %846 = vmatprep.subr.bf16.mxu0 0
        %847 = vmatpush1.bf16.msra.mxu0 0
        %848 = vmatprep.subr.bf16.mxu0 0
        %849 = vmatpush1.bf16.msra.mxu0 0
        %850 = vmatprep.subr.bf16.mxu0 0
        %851 = vmatpush1.bf16.msra.mxu0 0
        %852 = vmatprep.subr.bf16.mxu0 0
        %853 = vmatpush1.bf16.msra.mxu0 0
        %854 = vmatprep.subr.bf16.mxu0 0
        %855 = vmatpush1.bf16.msra.mxu0 0
        %856 = vmatprep.subr.bf16.mxu0 0
        %857 = vmatpush1.bf16.msra.mxu0 0
        %858 = vmatprep.subr.bf16.mxu0 0
        %859 = vmatpush1.bf16.msra.mxu0 0
        %860 = vmatprep.subr.bf16.mxu0 0
        %861 = vmatpush1.bf16.msra.mxu0 0
        %862 = vmatprep.mubr.bf16.mxu0 0
        %863 = vmatmul.mubr.bf16.gmra.mrb[0].mxu0 %v807
        %v864 = vpop.f32.mrb[0].mxu0
        %v865 = vadd.f32 0.0, %v864
        %v866 = vpop.f32.mrb[0].mxu0
        %v867 = vpop.f32.mrb[0].mxu0
        %v868 = vadd.f32 0.0, %v867
        %v869 = vpop.f32.mrb[0].mxu0
        %870 = vmatprep.mubr.bf16.mxu0 0
        %871 = vmatmul.mubr.bf16.gmra.mrb[0].mxu0 %v810
        %v872 = vpop.f32.mrb[0].mxu0
        %v873 = vadd.f32 0.0, %v872
        %v874 = vpop.f32.mrb[0].mxu0
        %v875 = vpop.f32.mrb[0].mxu0
        %v876 = vadd.f32 0.0, %v875
        %v877 = vpop.f32.mrb[0].mxu0
        %878 = vmatprep.mubr.bf16.mxu0 0
        %879 = vmatmul.mubr.bf16.gmra.mrb[0].mxu0 %v813
        %v880 = vpop.f32.mrb[0].mxu0
        %v881 = vadd.f32 0.0, %v880
        %v882 = vpop.f32.mrb[0].mxu0
        %v883 = vpop.f32.mrb[0].mxu0
        %v884 = vadd.f32 0.0, %v883
        %v885 = vpop.f32.mrb[0].mxu0
        %886 = vmatprep.mubr.bf16.mxu0 0
        %887 = vmatmul.mubr.bf16.gmra.mrb[0].mxu0 %v816
        %v888 = vpop.f32.mrb[0].mxu0
        %v889 = vadd.f32 0.0, %v888
        %v890 = vpop.f32.mrb[0].mxu0
        %v891 = vpop.f32.mrb[0].mxu0
        %v892 = vadd.f32 0.0, %v891
        %v893 = vpop.f32.mrb[0].mxu0
        %894 = vmatprep.mubr.bf16.mxu0 0
        %895 = vmatmul.mubr.bf16.gmra.mrb[0].mxu0 %v819
        %v896 = vpop.f32.mrb[0].mxu0
        %v897 = vadd.f32 0.0, %v896
        %v898 = vpop.f32.mrb[0].mxu0
        %v899 = vpop.f32.mrb[0].mxu0
        %v900 = vadd.f32 0.0, %v899
        %v901 = vpop.f32.mrb[0].mxu0
        %902 = vmatprep.mubr.bf16.mxu0 0
        %903 = vmatmul.mubr.bf16.gmra.mrb[0].mxu0 %v822
        %v904 = vpop.f32.mrb[0].mxu0
        %v905 = vadd.f32 0.0, %v904
        %v906 = vpop.f32.mrb[0].mxu0
        %v907 = vpop.f32.mrb[0].mxu0
        %v908 = vadd.f32 0.0, %v907
        %v909 = vpop.f32.mrb[0].mxu0
        %910 = vmatprep.mubr.bf16.mxu0 0
        %911 = vmatmul.mubr.bf16.gmra.mrb[0].mxu0 %v825
        %v912 = vpop.f32.mrb[0].mxu0
        %v913 = vadd.f32 0.0, %v912
        %v914 = vpop.f32.mrb[0].mxu0
        %v915 = vpop.f32.mrb[0].mxu0
        %v916 = vadd.f32 0.0, %v915
        %v917 = vpop.f32.mrb[0].mxu0
        %918 = vmatprep.mubr.bf16.mxu0 0
        %919 = vmatmul.mubr.bf16.gmra.mrb[0].mxu0 %v828
        %v920 = vpop.f32.mrb[0].mxu0
        %v921 = vadd.f32 0.0, %v920
        %v922 = vpop.f32.mrb[0].mxu0
        %v923 = vpop.f32.mrb[0].mxu0
        %v924 = vadd.f32 0.0, %v923
        %v925 = vpop.f32.mrb[0].mxu0
        %926 = vdwg.mxu0
        %v927 = vadd.f32 %v705, %v865
        %v928 = vadd.f32 %v708, %v868
        %v929 = vadd.f32 %v713, %v873
        %v930 = vadd.f32 %v716, %v876
        %v931 = vadd.f32 %v721, %v881
        %v932 = vadd.f32 %v724, %v884
        %v933 = vadd.f32 %v729, %v889
        %v934 = vadd.f32 %v732, %v892
        %v935 = vadd.f32 %v737, %v897
        %v936 = vadd.f32 %v740, %v900
        %v937 = vadd.f32 %v745, %v905
        %v938 = vadd.f32 %v748, %v908
        %v939 = vadd.f32 %v753, %v913
        %v940 = vadd.f32 %v756, %v916
        %v941 = vadd.f32 %v761, %v921
        %v942 = vadd.f32 %v764, %v924
        %v943 = vld [vmem:[#allocation2] sm:$0xff]
        %v944 = vld [vmem:[#allocation2 + $0x8] sm:$0xff]
        %v945 = vld [vmem:[#allocation2 + $0x10] sm:$0xff]
        %v946 = vld [vmem:[#allocation2 + $0x18] sm:$0xff]
        %v947 = vld [vmem:[#allocation2 + $0x20] sm:$0xff]
        %v948 = vld [vmem:[#allocation2 + $0x28] sm:$0xff]
        %v949 = vld [vmem:[#allocation2 + $0x30] sm:$0xff]
        %v950 = vld [vmem:[#allocation2 + $0x38] sm:$0xff]
        %v951 = vld [vmem:[#allocation2 + $0x40] sm:$0xff]
        %v952 = vld [vmem:[#allocation2 + $0x48] sm:$0xff]
        %v953 = vld [vmem:[#allocation2 + $0x50] sm:$0xff]
        %v954 = vld [vmem:[#allocation2 + $0x58] sm:$0xff]
        %v955 = vld [vmem:[#allocation2 + $0x60] sm:$0xff]
        %v956 = vld [vmem:[#allocation2 + $0x68] sm:$0xff]
        %v957 = vld [vmem:[#allocation2 + $0x70] sm:$0xff]
        %v958 = vld [vmem:[#allocation2 + $0x78] sm:$0xff]
        %v959 = vadd.f32 %v943, %v927
        %v960 = vadd.f32 %v944, %v928
        %v961 = vadd.f32 %v945, %v929
        %v962 = vadd.f32 %v946, %v930
        %v963 = vadd.f32 %v947, %v931
        %v964 = vadd.f32 %v948, %v932
        %v965 = vadd.f32 %v949, %v933
        %v966 = vadd.f32 %v950, %v934
        %v967 = vadd.f32 %v951, %v935
        %v968 = vadd.f32 %v952, %v936
        %v969 = vadd.f32 %v953, %v937
        %v970 = vadd.f32 %v954, %v938
        %v971 = vadd.f32 %v955, %v939
        %v972 = vadd.f32 %v956, %v940
        %v973 = vadd.f32 %v957, %v941
        %v974 = vadd.f32 %v958, %v942
        %975 = vst.msk [vmem:[#allocation2] sm:$0xff] %vm354, %v959
        %976 = vst.msk [vmem:[#allocation2 + $0x8] sm:$0xff] %vm354, %v960
        %977 = vst.msk [vmem:[#allocation2 + $0x10] sm:$0xff] %vm354, %v961
        %978 = vst.msk [vmem:[#allocation2 + $0x18] sm:$0xff] %vm354, %v962
        %979 = vst.msk [vmem:[#allocation2 + $0x20] sm:$0xff] %vm354, %v963
        %980 = vst.msk [vmem:[#allocation2 + $0x28] sm:$0xff] %vm354, %v964
        %981 = vst.msk [vmem:[#allocation2 + $0x30] sm:$0xff] %vm354, %v965
        %982 = vst.msk [vmem:[#allocation2 + $0x38] sm:$0xff] %vm354, %v966
        %983 = vst.msk [vmem:[#allocation2 + $0x40] sm:$0xff] %vm354, %v967
        %984 = vst.msk [vmem:[#allocation2 + $0x48] sm:$0xff] %vm354, %v968
        %985 = vst.msk [vmem:[#allocation2 + $0x50] sm:$0xff] %vm354, %v969
        %986 = vst.msk [vmem:[#allocation2 + $0x58] sm:$0xff] %vm354, %v970
        %987 = vst.msk [vmem:[#allocation2 + $0x60] sm:$0xff] %vm354, %v971
        %988 = vst.msk [vmem:[#allocation2 + $0x68] sm:$0xff] %vm354, %v972
        %989 = vst.msk [vmem:[#allocation2 + $0x70] sm:$0xff] %vm354, %v973
        %990 = vst.msk [vmem:[#allocation2 + $0x78] sm:$0xff] %vm354, %v974
      $region48: #{fpn_psp_head_forward.5} parent=43 // pred_fallthru
        _
      %p991 = scmp.eq.s32.totalorder %s24, 1
      // Predicated region
      $region49: #{fpn_psp_head_forward.5} parent=43 // pred_check
        %p992 = pneg %p991
      $region50: #{fpn_psp_head_forward.5} parent=43 // pred_check_branch
        %994 = sbr.rel (%p992) target = $region52
      $region51: #{fpn_psp_head_forward.5} parent=43 // pred_region
        %v995 = vld [vmem:[%s325 + $0x8] sm:$0xf]
        %v996 = vld [vmem:[%s325 + $0xc] sm:$0xf]
        %v997 = vld [vmem:[%s325 + $0x10] sm:$0xf]
        %v998 = vld [vmem:[%s325 + $0x14] sm:$0xf]
        %v999 = vld [vmem:[%s325 + $0x18] sm:$0xf]
        %v1000 = vld [vmem:[%s325 + $0x1c] sm:$0xf]
        %v1001 = vld [vmem:[%s325 + $0x20] sm:$0xf]
        %v1002 = vld [vmem:[%s325 + $0x24] sm:$0xf]
        %v1003 = vld [vmem:[%s325 + $0x28] sm:$0xf]
        %v1004 = vld [vmem:[%s325 + $0x2c] sm:$0xf]
        %v1005 = vld [vmem:[%s325 + $0x30] sm:$0xf]
        %v1006 = vld [vmem:[%s325 + $0x34] sm:$0xf]
        %v1007 = vld [vmem:[%s325 + $0x38] sm:$0xf]
        %v1008 = vld [vmem:[%s325 + $0x3c] sm:$0xf]
        %v1009 = vld [vmem:[%s325 + $0x40] sm:$0xf]
        %v1010 = vld [vmem:[%s325 + $0x44] sm:$0xf]
        %v1011 = vld [vmem:[%s330] sm:$0xf]
        %v1012 = vld [vmem:[%s330 + $0x4] sm:$0xf]
        %v1013 = vld [vmem:[%s330 + $0x8] sm:$0xf]
        %v1014 = vld [vmem:[%s330 + $0xc] sm:$0xf]
        %v1015 = vld [vmem:[%s325 + $0x48] sm:$0x1]
        %s1016 = scalar_lea.vmem %s330, 16
        %v1017 = vld [vmem:[%s1016] sm:$0xf]
        %v1018 = vld [vmem:[%s1016 + $0x4] sm:$0xf]
        %v1019 = vld [vmem:[%s1016 + $0x8] sm:$0xf]
        %v1020 = vld [vmem:[%s1016 + $0xc] sm:$0xf]
        %v1038 = vunpack.c.l.b16 %v995
        %v1039 = vunpack.c.l.b16 %v996
        %v1040 = vunpack.c.l.b16 %v997
        %v1041 = vunpack.c.l.b16 %v998
        %v1042 = vunpack.c.l.b16 %v999
        %v1043 = vunpack.c.l.b16 %v1000
        %v1044 = vunpack.c.l.b16 %v1001
        %v1045 = vunpack.c.l.b16 %v1002
        %v1046 = vunpack.c.l.b16 %v1003
        %v1047 = vunpack.c.l.b16 %v1004
        %v1048 = vunpack.c.l.b16 %v1005
        %v1049 = vunpack.c.l.b16 %v1006
        %v1050 = vunpack.c.l.b16 %v1007
        %v1051 = vunpack.c.l.b16 %v1008
        %v1052 = vunpack.c.l.b16 %v1009
        %v1053 = vunpack.c.l.b16 %v1010
        %v1054 = vunpack.c.l.b16 %v1015
        %v1055 = vpack.c.b16 %v1039, %v1038
        %v1056 = vpack.c.b16 %v1041, %v1040
        %v1057 = vpack.c.b16 %v1043, %v1042
        %v1058 = vpack.c.b16 %v1045, %v1044
        %v1059 = vpack.c.b16 %v1047, %v1046
        %v1060 = vpack.c.b16 %v1049, %v1048
        %v1061 = vpack.c.b16 %v1051, %v1050
        %v1062 = vpack.c.b16 %v1053, %v1052
        %v1063 = vpack.c.b16 %v1054, %v1054
        %vm1064 = vsmask.f32 7424
        %v1066 = vshrl.u32 %v1055, 16
        %v1068 = vshll.u32 %v1055, 16
        %v1070 = vrot.slane %v1068, 1
        %v1071 = vor.u32 %v1066, %v1070
        %v1073 = vshll.u32 %v1056, 16
        %v1075 = vrot.slane %v1073, 1
        %v1076 = vsel %vm1064, %v1071, %v1075
        %v1077 = vshrl.u32 %v1056, 16
        %v1079 = vor.u32 %v1077, %v1075
        %v1081 = vshll.u32 %v1057, 16
        %v1083 = vrot.slane %v1081, 1
        %v1084 = vsel %vm1064, %v1079, %v1083
        %v1085 = vshrl.u32 %v1057, 16
        %v1087 = vor.u32 %v1085, %v1083
        %v1089 = vshll.u32 %v1058, 16
        %v1091 = vrot.slane %v1089, 1
        %v1092 = vsel %vm1064, %v1087, %v1091
        %v1093 = vshrl.u32 %v1058, 16
        %v1095 = vor.u32 %v1093, %v1091
        %v1097 = vshll.u32 %v1059, 16
        %v1099 = vrot.slane %v1097, 1
        %v1100 = vsel %vm1064, %v1095, %v1099
        %v1101 = vshrl.u32 %v1059, 16
        %v1103 = vor.u32 %v1101, %v1099
        %v1105 = vshll.u32 %v1060, 16
        %v1107 = vrot.slane %v1105, 1
        %v1108 = vsel %vm1064, %v1103, %v1107
        %v1109 = vshrl.u32 %v1060, 16
        %v1111 = vor.u32 %v1109, %v1107
        %v1113 = vshll.u32 %v1061, 16
        %v1115 = vrot.slane %v1113, 1
        %v1116 = vsel %vm1064, %v1111, %v1115
        %v1117 = vshrl.u32 %v1061, 16
        %v1119 = vor.u32 %v1117, %v1115
        %v1121 = vshll.u32 %v1062, 16
        %v1123 = vrot.slane %v1121, 1
        %v1124 = vsel %vm1064, %v1119, %v1123
        %v1125 = vshrl.u32 %v1062, 16
        %v1127 = vor.u32 %v1125, %v1123
        %v1129 = vshll.u32 %v1063, 16
        %v1131 = vrot.slane %v1129, 1
        %v1132 = vsel %vm1064, %v1127, %v1131
        %v1137 = vunpack.c.l.b16 %v1017
        %v1138 = vunpack.c.l.b16 %v1018
        %v1139 = vunpack.c.l.b16 %v1019
        %v1140 = vunpack.c.l.b16 %v1020
        %v1141 = vpack.c.b16 %v1138, %v1137
        %v1142 = vpack.c.b16 %v1140, %v1139
        %vm1145 = vcmask 261120
        %v1147 = vsel %vm1145, %v1076, 0
        %v1150 = vsel %vm1145, %v1084, 0
        %v1153 = vsel %vm1145, %v1092, 0
        %v1156 = vsel %vm1145, %v1100, 0
        %v1159 = vsel %vm1145, %v1108, 0
        %v1162 = vsel %vm1145, %v1116, 0
        %v1165 = vsel %vm1145, %v1124, 0
        %v1168 = vsel %vm1145, %v1132, 0
        %1170 = vmatprep.subr.bf16.mxu0 0
        %1171 = vmatpush1.bf16.msra.mxu0 %v1141
        %1172 = vmatprep.subr.bf16.mxu0 0
        %1173 = vmatpush1.bf16.msra.mxu0 %v1142
        %1174 = vmatprep.subr.bf16.mxu0 0
        %1175 = vmatpush1.bf16.msra.mxu0 0
        %1176 = vmatprep.subr.bf16.mxu0 0
        %1177 = vmatpush1.bf16.msra.mxu0 0
        %1178 = vmatprep.subr.bf16.mxu0 0
        %1179 = vmatpush1.bf16.msra.mxu0 0
        %1180 = vmatprep.subr.bf16.mxu0 0
        %1181 = vmatpush1.bf16.msra.mxu0 0
        %1182 = vmatprep.subr.bf16.mxu0 0
        %1183 = vmatpush1.bf16.msra.mxu0 0
        %1184 = vmatprep.subr.bf16.mxu0 0
        %1185 = vmatpush1.bf16.msra.mxu0 0
        %1186 = vmatprep.subr.bf16.mxu0 0
        %1187 = vmatpush1.bf16.msra.mxu0 0
        %1188 = vmatprep.subr.bf16.mxu0 0
        %1189 = vmatpush1.bf16.msra.mxu0 0
        %1190 = vmatprep.subr.bf16.mxu0 0
        %1191 = vmatpush1.bf16.msra.mxu0 0
        %1192 = vmatprep.subr.bf16.mxu0 0
        %1193 = vmatpush1.bf16.msra.mxu0 0
        %1194 = vmatprep.subr.bf16.mxu0 0
        %1195 = vmatpush1.bf16.msra.mxu0 0
        %1196 = vmatprep.subr.bf16.mxu0 0
        %1197 = vmatpush1.bf16.msra.mxu0 0
        %1198 = vmatprep.subr.bf16.mxu0 0
        %1199 = vmatpush1.bf16.msra.mxu0 0
        %1200 = vmatprep.subr.bf16.mxu0 0
        %1201 = vmatpush1.bf16.msra.mxu0 0
        %1202 = vmatprep.mubr.bf16.mxu0 0
        %1203 = vmatmul.mubr.bf16.gmra.mrb[0].mxu0 %v1147
        %v1204 = vpop.f32.mrb[0].mxu0
        %v1205 = vadd.f32 0.0, %v1204
        %v1206 = vpop.f32.mrb[0].mxu0
        %v1207 = vpop.f32.mrb[0].mxu0
        %v1208 = vadd.f32 0.0, %v1207
        %v1209 = vpop.f32.mrb[0].mxu0
        %1210 = vmatprep.mubr.bf16.mxu0 0
        %1211 = vmatmul.mubr.bf16.gmra.mrb[0].mxu0 %v1150
        %v1212 = vpop.f32.mrb[0].mxu0
        %v1213 = vadd.f32 0.0, %v1212
        %v1214 = vpop.f32.mrb[0].mxu0
        %v1215 = vpop.f32.mrb[0].mxu0
        %v1216 = vadd.f32 0.0, %v1215
        %v1217 = vpop.f32.mrb[0].mxu0
        %1218 = vmatprep.mubr.bf16.mxu0 0
        %1219 = vmatmul.mubr.bf16.gmra.mrb[0].mxu0 %v1153
        %v1220 = vpop.f32.mrb[0].mxu0
        %v1221 = vadd.f32 0.0, %v1220
        %v1222 = vpop.f32.mrb[0].mxu0
        %v1223 = vpop.f32.mrb[0].mxu0
        %v1224 = vadd.f32 0.0, %v1223
        %v1225 = vpop.f32.mrb[0].mxu0
        %1226 = vmatprep.mubr.bf16.mxu0 0
        %1227 = vmatmul.mubr.bf16.gmra.mrb[0].mxu0 %v1156
        %v1228 = vpop.f32.mrb[0].mxu0
        %v1229 = vadd.f32 0.0, %v1228
        %v1230 = vpop.f32.mrb[0].mxu0
        %v1231 = vpop.f32.mrb[0].mxu0
        %v1232 = vadd.f32 0.0, %v1231
        %v1233 = vpop.f32.mrb[0].mxu0
        %1234 = vmatprep.mubr.bf16.mxu0 0
        %1235 = vmatmul.mubr.bf16.gmra.mrb[0].mxu0 %v1159
        %v1236 = vpop.f32.mrb[0].mxu0
        %v1237 = vadd.f32 0.0, %v1236
        %v1238 = vpop.f32.mrb[0].mxu0
        %v1239 = vpop.f32.mrb[0].mxu0
        %v1240 = vadd.f32 0.0, %v1239
        %v1241 = vpop.f32.mrb[0].mxu0
        %1242 = vmatprep.mubr.bf16.mxu0 0
        %1243 = vmatmul.mubr.bf16.gmra.mrb[0].mxu0 %v1162
        %v1244 = vpop.f32.mrb[0].mxu0
        %v1245 = vadd.f32 0.0, %v1244
        %v1246 = vpop.f32.mrb[0].mxu0
        %v1247 = vpop.f32.mrb[0].mxu0
        %v1248 = vadd.f32 0.0, %v1247
        %v1249 = vpop.f32.mrb[0].mxu0
        %1250 = vmatprep.mubr.bf16.mxu0 0
        %1251 = vmatmul.mubr.bf16.gmra.mrb[0].mxu0 %v1165
        %v1252 = vpop.f32.mrb[0].mxu0
        %v1253 = vadd.f32 0.0, %v1252
        %v1254 = vpop.f32.mrb[0].mxu0
        %v1255 = vpop.f32.mrb[0].mxu0
        %v1256 = vadd.f32 0.0, %v1255
        %v1257 = vpop.f32.mrb[0].mxu0
        %1258 = vmatprep.mubr.bf16.mxu0 0
        %1259 = vmatmul.mubr.bf16.gmra.mrb[0].mxu0 %v1168
        %v1260 = vpop.f32.mrb[0].mxu0
        %v1261 = vadd.f32 0.0, %v1260
        %v1262 = vpop.f32.mrb[0].mxu0
        %v1263 = vpop.f32.mrb[0].mxu0
        %v1264 = vadd.f32 0.0, %v1263
        %v1265 = vpop.f32.mrb[0].mxu0
        %1266 = vdwg.mxu0
        %v1271 = vunpack.c.l.b16 %v1011
        %v1272 = vunpack.c.l.b16 %v1012
        %v1273 = vunpack.c.l.b16 %v1013
        %v1274 = vunpack.c.l.b16 %v1014
        %v1275 = vpack.c.b16 %v1272, %v1271
        %v1276 = vpack.c.b16 %v1274, %v1273
        %v1279 = vsel %vm1145, %v1055, 0
        %v1281 = vsel %vm1145, %v1056, 0
        %v1283 = vsel %vm1145, %v1057, 0
        %v1285 = vsel %vm1145, %v1058, 0
        %v1287 = vsel %vm1145, %v1059, 0
        %v1289 = vsel %vm1145, %v1060, 0
        %v1291 = vsel %vm1145, %v1061, 0
        %v1293 = vsel %vm1145, %v1062, 0
        %1295 = vmatprep.subr.bf16.mxu0 0
        %1296 = vmatpush1.bf16.msra.mxu0 %v1275
        %1297 = vmatprep.subr.bf16.mxu0 0
        %1298 = vmatpush1.bf16.msra.mxu0 %v1276
        %1299 = vmatprep.subr.bf16.mxu0 0
        %1300 = vmatpush1.bf16.msra.mxu0 0
        %1301 = vmatprep.subr.bf16.mxu0 0
        %1302 = vmatpush1.bf16.msra.mxu0 0
        %1303 = vmatprep.subr.bf16.mxu0 0
        %1304 = vmatpush1.bf16.msra.mxu0 0
        %1305 = vmatprep.subr.bf16.mxu0 0
        %1306 = vmatpush1.bf16.msra.mxu0 0
        %1307 = vmatprep.subr.bf16.mxu0 0
        %1308 = vmatpush1.bf16.msra.mxu0 0
        %1309 = vmatprep.subr.bf16.mxu0 0
        %1310 = vmatpush1.bf16.msra.mxu0 0
        %1311 = vmatprep.subr.bf16.mxu0 0
        %1312 = vmatpush1.bf16.msra.mxu0 0
        %1313 = vmatprep.subr.bf16.mxu0 0
        %1314 = vmatpush1.bf16.msra.mxu0 0
        %1315 = vmatprep.subr.bf16.mxu0 0
        %1316 = vmatpush1.bf16.msra.mxu0 0
        %1317 = vmatprep.subr.bf16.mxu0 0
        %1318 = vmatpush1.bf16.msra.mxu0 0
        %1319 = vmatprep.subr.bf16.mxu0 0
        %1320 = vmatpush1.bf16.msra.mxu0 0
        %1321 = vmatprep.subr.bf16.mxu0 0
        %1322 = vmatpush1.bf16.msra.mxu0 0
        %1323 = vmatprep.subr.bf16.mxu0 0
        %1324 = vmatpush1.bf16.msra.mxu0 0
        %1325 = vmatprep.subr.bf16.mxu0 0
        %1326 = vmatpush1.bf16.msra.mxu0 0
        %1327 = vmatprep.mubr.bf16.mxu0 0
        %1328 = vmatmul.mubr.bf16.gmra.mrb[0].mxu0 %v1279
        %v1329 = vpop.f32.mrb[0].mxu0
        %v1330 = vadd.f32 %v1205, %v1329
        %v1331 = vpop.f32.mrb[0].mxu0
        %v1332 = vpop.f32.mrb[0].mxu0
        %v1333 = vadd.f32 %v1208, %v1332
        %v1334 = vpop.f32.mrb[0].mxu0
        %1335 = vmatprep.mubr.bf16.mxu0 0
        %1336 = vmatmul.mubr.bf16.gmra.mrb[0].mxu0 %v1281
        %v1337 = vpop.f32.mrb[0].mxu0
        %v1338 = vadd.f32 %v1213, %v1337
        %v1339 = vpop.f32.mrb[0].mxu0
        %v1340 = vpop.f32.mrb[0].mxu0
        %v1341 = vadd.f32 %v1216, %v1340
        %v1342 = vpop.f32.mrb[0].mxu0
        %1343 = vmatprep.mubr.bf16.mxu0 0
        %1344 = vmatmul.mubr.bf16.gmra.mrb[0].mxu0 %v1283
        %v1345 = vpop.f32.mrb[0].mxu0
        %v1346 = vadd.f32 %v1221, %v1345
        %v1347 = vpop.f32.mrb[0].mxu0
        %v1348 = vpop.f32.mrb[0].mxu0
        %v1349 = vadd.f32 %v1224, %v1348
        %v1350 = vpop.f32.mrb[0].mxu0
        %1351 = vmatprep.mubr.bf16.mxu0 0
        %1352 = vmatmul.mubr.bf16.gmra.mrb[0].mxu0 %v1285
        %v1353 = vpop.f32.mrb[0].mxu0
        %v1354 = vadd.f32 %v1229, %v1353
        %v1355 = vpop.f32.mrb[0].mxu0
        %v1356 = vpop.f32.mrb[0].mxu0
        %v1357 = vadd.f32 %v1232, %v1356
        %v1358 = vpop.f32.mrb[0].mxu0
        %1359 = vmatprep.mubr.bf16.mxu0 0
        %1360 = vmatmul.mubr.bf16.gmra.mrb[0].mxu0 %v1287
        %v1361 = vpop.f32.mrb[0].mxu0
        %v1362 = vadd.f32 %v1237, %v1361
        %v1363 = vpop.f32.mrb[0].mxu0
        %v1364 = vpop.f32.mrb[0].mxu0
        %v1365 = vadd.f32 %v1240, %v1364
        %v1366 = vpop.f32.mrb[0].mxu0
        %1367 = vmatprep.mubr.bf16.mxu0 0
        %1368 = vmatmul.mubr.bf16.gmra.mrb[0].mxu0 %v1289
        %v1369 = vpop.f32.mrb[0].mxu0
        %v1370 = vadd.f32 %v1245, %v1369
        %v1371 = vpop.f32.mrb[0].mxu0
        %v1372 = vpop.f32.mrb[0].mxu0
        %v1373 = vadd.f32 %v1248, %v1372
        %v1374 = vpop.f32.mrb[0].mxu0
        %1375 = vmatprep.mubr.bf16.mxu0 0
        %1376 = vmatmul.mubr.bf16.gmra.mrb[0].mxu0 %v1291
        %v1377 = vpop.f32.mrb[0].mxu0
        %v1378 = vadd.f32 %v1253, %v1377
        %v1379 = vpop.f32.mrb[0].mxu0
        %v1380 = vpop.f32.mrb[0].mxu0
        %v1381 = vadd.f32 %v1256, %v1380
        %v1382 = vpop.f32.mrb[0].mxu0
        %1383 = vmatprep.mubr.bf16.mxu0 0
        %1384 = vmatmul.mubr.bf16.gmra.mrb[0].mxu0 %v1293
        %v1385 = vpop.f32.mrb[0].mxu0
        %v1386 = vadd.f32 %v1261, %v1385
        %v1387 = vpop.f32.mrb[0].mxu0
        %v1388 = vpop.f32.mrb[0].mxu0
        %v1389 = vadd.f32 %v1264, %v1388
        %v1390 = vpop.f32.mrb[0].mxu0
        %1391 = vdwg.mxu0
        %v1392 = vld [vmem:[%s325 + $0x8] sm:$0xe]
        %s1393 = scalar_lea.vmem %s330, 32
        %v1394 = vld [vmem:[%s1393] sm:$0xf]
        %v1395 = vld [vmem:[%s1393 + $0x4] sm:$0xf]
        %v1396 = vld [vmem:[%s1393 + $0x8] sm:$0xf]
        %v1397 = vld [vmem:[%s1393 + $0xc] sm:$0xf]
        %v1399 = vunpack.c.l.b16 %v1392
        %v1400 = vpack.c.b16 %v1039, %v1399
        %vm1401 = vcmask 1046528
        %v1402 = vrot.slane %v1400, 1
        %v1403 = vrot.slane %v1056, 1
        %v1404 = vsel %vm1401, %v1402, %v1403
        %v1405 = vrot.slane %v1057, 1
        %v1406 = vsel %vm1401, %v1403, %v1405
        %v1407 = vrot.slane %v1058, 1
        %v1408 = vsel %vm1401, %v1405, %v1407
        %v1409 = vrot.slane %v1059, 1
        %v1410 = vsel %vm1401, %v1407, %v1409
        %v1411 = vrot.slane %v1060, 1
        %v1412 = vsel %vm1401, %v1409, %v1411
        %v1413 = vrot.slane %v1061, 1
        %v1414 = vsel %vm1401, %v1411, %v1413
        %v1415 = vrot.slane %v1062, 1
        %v1416 = vsel %vm1401, %v1413, %v1415
        %v1417 = vrot.slane %v1063, 1
        %v1418 = vsel %vm1401, %v1415, %v1417
        %v1423 = vunpack.c.l.b16 %v1394
        %v1424 = vunpack.c.l.b16 %v1395
        %v1425 = vunpack.c.l.b16 %v1396
        %v1426 = vunpack.c.l.b16 %v1397
        %v1427 = vpack.c.b16 %v1424, %v1423
        %v1428 = vpack.c.b16 %v1426, %v1425
        %v1432 = vsel %vm1145, %v1404, 0
        %v1435 = vsel %vm1145, %v1406, 0
        %v1438 = vsel %vm1145, %v1408, 0
        %v1441 = vsel %vm1145, %v1410, 0
        %v1444 = vsel %vm1145, %v1412, 0
        %v1447 = vsel %vm1145, %v1414, 0
        %v1450 = vsel %vm1145, %v1416, 0
        %v1453 = vsel %vm1145, %v1418, 0
        %1455 = vmatprep.subr.bf16.mxu0 0
        %1456 = vmatpush1.bf16.msra.mxu0 %v1427
        %1457 = vmatprep.subr.bf16.mxu0 0
        %1458 = vmatpush1.bf16.msra.mxu0 %v1428
        %1459 = vmatprep.subr.bf16.mxu0 0
        %1460 = vmatpush1.bf16.msra.mxu0 0
        %1461 = vmatprep.subr.bf16.mxu0 0
        %1462 = vmatpush1.bf16.msra.mxu0 0
        %1463 = vmatprep.subr.bf16.mxu0 0
        %1464 = vmatpush1.bf16.msra.mxu0 0
        %1465 = vmatprep.subr.bf16.mxu0 0
        %1466 = vmatpush1.bf16.msra.mxu0 0
        %1467 = vmatprep.subr.bf16.mxu0 0
        %1468 = vmatpush1.bf16.msra.mxu0 0
        %1469 = vmatprep.subr.bf16.mxu0 0
        %1470 = vmatpush1.bf16.msra.mxu0 0
        %1471 = vmatprep.subr.bf16.mxu0 0
        %1472 = vmatpush1.bf16.msra.mxu0 0
        %1473 = vmatprep.subr.bf16.mxu0 0
        %1474 = vmatpush1.bf16.msra.mxu0 0
        %1475 = vmatprep.subr.bf16.mxu0 0
        %1476 = vmatpush1.bf16.msra.mxu0 0
        %1477 = vmatprep.subr.bf16.mxu0 0
        %1478 = vmatpush1.bf16.msra.mxu0 0
        %1479 = vmatprep.subr.bf16.mxu0 0
        %1480 = vmatpush1.bf16.msra.mxu0 0
        %1481 = vmatprep.subr.bf16.mxu0 0
        %1482 = vmatpush1.bf16.msra.mxu0 0
        %1483 = vmatprep.subr.bf16.mxu0 0
        %1484 = vmatpush1.bf16.msra.mxu0 0
        %1485 = vmatprep.subr.bf16.mxu0 0
        %1486 = vmatpush1.bf16.msra.mxu0 0
        %1487 = vmatprep.mubr.bf16.mxu0 0
        %1488 = vmatmul.mubr.bf16.gmra.mrb[0].mxu0 %v1432
        %v1489 = vpop.f32.mrb[0].mxu0
        %v1490 = vadd.f32 0.0, %v1489
        %v1491 = vpop.f32.mrb[0].mxu0
        %v1492 = vpop.f32.mrb[0].mxu0
        %v1493 = vadd.f32 0.0, %v1492
        %v1494 = vpop.f32.mrb[0].mxu0
        %1495 = vmatprep.mubr.bf16.mxu0 0
        %1496 = vmatmul.mubr.bf16.gmra.mrb[0].mxu0 %v1435
        %v1497 = vpop.f32.mrb[0].mxu0
        %v1498 = vadd.f32 0.0, %v1497
        %v1499 = vpop.f32.mrb[0].mxu0
        %v1500 = vpop.f32.mrb[0].mxu0
        %v1501 = vadd.f32 0.0, %v1500
        %v1502 = vpop.f32.mrb[0].mxu0
        %1503 = vmatprep.mubr.bf16.mxu0 0
        %1504 = vmatmul.mubr.bf16.gmra.mrb[0].mxu0 %v1438
        %v1505 = vpop.f32.mrb[0].mxu0
        %v1506 = vadd.f32 0.0, %v1505
        %v1507 = vpop.f32.mrb[0].mxu0
        %v1508 = vpop.f32.mrb[0].mxu0
        %v1509 = vadd.f32 0.0, %v1508
        %v1510 = vpop.f32.mrb[0].mxu0
        %1511 = vmatprep.mubr.bf16.mxu0 0
        %1512 = vmatmul.mubr.bf16.gmra.mrb[0].mxu0 %v1441
        %v1513 = vpop.f32.mrb[0].mxu0
        %v1514 = vadd.f32 0.0, %v1513
        %v1515 = vpop.f32.mrb[0].mxu0
        %v1516 = vpop.f32.mrb[0].mxu0
        %v1517 = vadd.f32 0.0, %v1516
        %v1518 = vpop.f32.mrb[0].mxu0
        %1519 = vmatprep.mubr.bf16.mxu0 0
        %1520 = vmatmul.mubr.bf16.gmra.mrb[0].mxu0 %v1444
        %v1521 = vpop.f32.mrb[0].mxu0
        %v1522 = vadd.f32 0.0, %v1521
        %v1523 = vpop.f32.mrb[0].mxu0
        %v1524 = vpop.f32.mrb[0].mxu0
        %v1525 = vadd.f32 0.0, %v1524
        %v1526 = vpop.f32.mrb[0].mxu0
        %1527 = vmatprep.mubr.bf16.mxu0 0
        %1528 = vmatmul.mubr.bf16.gmra.mrb[0].mxu0 %v1447
        %v1529 = vpop.f32.mrb[0].mxu0
        %v1530 = vadd.f32 0.0, %v1529
        %v1531 = vpop.f32.mrb[0].mxu0
        %v1532 = vpop.f32.mrb[0].mxu0
        %v1533 = vadd.f32 0.0, %v1532
        %v1534 = vpop.f32.mrb[0].mxu0
        %1535 = vmatprep.mubr.bf16.mxu0 0
        %1536 = vmatmul.mubr.bf16.gmra.mrb[0].mxu0 %v1450
        %v1537 = vpop.f32.mrb[0].mxu0
        %v1538 = vadd.f32 0.0, %v1537
        %v1539 = vpop.f32.mrb[0].mxu0
        %v1540 = vpop.f32.mrb[0].mxu0
        %v1541 = vadd.f32 0.0, %v1540
        %v1542 = vpop.f32.mrb[0].mxu0
        %1543 = vmatprep.mubr.bf16.mxu0 0
        %1544 = vmatmul.mubr.bf16.gmra.mrb[0].mxu0 %v1453
        %v1545 = vpop.f32.mrb[0].mxu0
        %v1546 = vadd.f32 0.0, %v1545
        %v1547 = vpop.f32.mrb[0].mxu0
        %v1548 = vpop.f32.mrb[0].mxu0
        %v1549 = vadd.f32 0.0, %v1548
        %v1550 = vpop.f32.mrb[0].mxu0
        %1551 = vdwg.mxu0
        %v1552 = vadd.f32 %v1330, %v1490
        %v1553 = vadd.f32 %v1333, %v1493
        %v1554 = vadd.f32 %v1338, %v1498
        %v1555 = vadd.f32 %v1341, %v1501
        %v1556 = vadd.f32 %v1346, %v1506
        %v1557 = vadd.f32 %v1349, %v1509
        %v1558 = vadd.f32 %v1354, %v1514
        %v1559 = vadd.f32 %v1357, %v1517
        %v1560 = vadd.f32 %v1362, %v1522
        %v1561 = vadd.f32 %v1365, %v1525
        %v1562 = vadd.f32 %v1370, %v1530
        %v1563 = vadd.f32 %v1373, %v1533
        %v1564 = vadd.f32 %v1378, %v1538
        %v1565 = vadd.f32 %v1381, %v1541
        %v1566 = vadd.f32 %v1386, %v1546
        %v1567 = vadd.f32 %v1389, %v1549
        %v1568 = vld [vmem:[#allocation2] sm:$0xff]
        %v1569 = vld [vmem:[#allocation2 + $0x8] sm:$0xff]
        %v1570 = vld [vmem:[#allocation2 + $0x10] sm:$0xff]
        %v1571 = vld [vmem:[#allocation2 + $0x18] sm:$0xff]
        %v1572 = vld [vmem:[#allocation2 + $0x20] sm:$0xff]
        %v1573 = vld [vmem:[#allocation2 + $0x28] sm:$0xff]
        %v1574 = vld [vmem:[#allocation2 + $0x30] sm:$0xff]
        %v1575 = vld [vmem:[#allocation2 + $0x38] sm:$0xff]
        %v1576 = vld [vmem:[#allocation2 + $0x40] sm:$0xff]
        %v1577 = vld [vmem:[#allocation2 + $0x48] sm:$0xff]
        %v1578 = vld [vmem:[#allocation2 + $0x50] sm:$0xff]
        %v1579 = vld [vmem:[#allocation2 + $0x58] sm:$0xff]
        %v1580 = vld [vmem:[#allocation2 + $0x60] sm:$0xff]
        %v1581 = vld [vmem:[#allocation2 + $0x68] sm:$0xff]
        %v1582 = vld [vmem:[#allocation2 + $0x70] sm:$0xff]
        %v1583 = vld [vmem:[#allocation2 + $0x78] sm:$0xff]
        %v1584 = vadd.f32 %v1568, %v1552
        %v1585 = vadd.f32 %v1569, %v1553
        %v1586 = vadd.f32 %v1570, %v1554
        %v1587 = vadd.f32 %v1571, %v1555
        %v1588 = vadd.f32 %v1572, %v1556
        %v1589 = vadd.f32 %v1573, %v1557
        %v1590 = vadd.f32 %v1574, %v1558
        %v1591 = vadd.f32 %v1575, %v1559
        %v1592 = vadd.f32 %v1576, %v1560
        %v1593 = vadd.f32 %v1577, %v1561
        %v1594 = vadd.f32 %v1578, %v1562
        %v1595 = vadd.f32 %v1579, %v1563
        %v1596 = vadd.f32 %v1580, %v1564
        %v1597 = vadd.f32 %v1581, %v1565
        %v1598 = vadd.f32 %v1582, %v1566
        %v1599 = vadd.f32 %v1583, %v1567
        %1600 = vst.msk [vmem:[#allocation2] sm:$0xff] %vm1145, %v1584
        %1601 = vst.msk [vmem:[#allocation2 + $0x8] sm:$0xff] %vm1145, %v1585
        %1602 = vst.msk [vmem:[#allocation2 + $0x10] sm:$0xff] %vm1145, %v1586
        %1603 = vst.msk [vmem:[#allocation2 + $0x18] sm:$0xff] %vm1145, %v1587
        %1604 = vst.msk [vmem:[#allocation2 + $0x20] sm:$0xff] %vm1145, %v1588
        %1605 = vst.msk [vmem:[#allocation2 + $0x28] sm:$0xff] %vm1145, %v1589
        %1606 = vst.msk [vmem:[#allocation2 + $0x30] sm:$0xff] %vm1145, %v1590
        %1607 = vst.msk [vmem:[#allocation2 + $0x38] sm:$0xff] %vm1145, %v1591
        %1608 = vst.msk [vmem:[#allocation2 + $0x40] sm:$0xff] %vm1145, %v1592
        %1609 = vst.msk [vmem:[#allocation2 + $0x48] sm:$0xff] %vm1145, %v1593
        %1610 = vst.msk [vmem:[#allocation2 + $0x50] sm:$0xff] %vm1145, %v1594
        %1611 = vst.msk [vmem:[#allocation2 + $0x58] sm:$0xff] %vm1145, %v1595
        %1612 = vst.msk [vmem:[#allocation2 + $0x60] sm:$0xff] %vm1145, %v1596
        %1613 = vst.msk [vmem:[#allocation2 + $0x68] sm:$0xff] %vm1145, %v1597
        %1614 = vst.msk [vmem:[#allocation2 + $0x70] sm:$0xff] %vm1145, %v1598
        %1615 = vst.msk [vmem:[#allocation2 + $0x78] sm:$0xff] %vm1145, %v1599
      $region52: #{fpn_psp_head_forward.5} parent=43 // pred_fallthru
        _
      %p1616 = scmp.eq.s32.totalorder %s24, 2
      // Predicated region
      $region53: #{fpn_psp_head_forward.5} parent=43 // pred_check
        %p1617 = pneg %p1616
      $region54: #{fpn_psp_head_forward.5} parent=43 // pred_check_branch
        %1619 = sbr.rel (%p1617) target = $region56
      $region55: #{fpn_psp_head_forward.5} parent=43 // pred_region
        %v1620 = vld [vmem:[%s325 + $0x10] sm:$0xf]
        %v1621 = vld [vmem:[%s325 + $0x14] sm:$0xf]
        %v1622 = vld [vmem:[%s325 + $0x18] sm:$0xf]
        %v1623 = vld [vmem:[%s325 + $0x1c] sm:$0xf]
        %v1624 = vld [vmem:[%s325 + $0x20] sm:$0xf]
        %v1625 = vld [vmem:[%s325 + $0x24] sm:$0xf]
        %v1626 = vld [vmem:[%s325 + $0x28] sm:$0xf]
        %v1627 = vld [vmem:[%s325 + $0x2c] sm:$0xf]
        %v1628 = vld [vmem:[%s325 + $0x30] sm:$0xf]
        %v1629 = vld [vmem:[%s325 + $0x34] sm:$0xf]
        %v1630 = vld [vmem:[%s325 + $0x38] sm:$0xf]
        %v1631 = vld [vmem:[%s325 + $0x3c] sm:$0xf]
        %v1632 = vld [vmem:[%s325 + $0x40] sm:$0xf]
        %v1633 = vld [vmem:[%s325 + $0x44] sm:$0xf]
        %v1634 = vld [vmem:[%s325 + $0x48] sm:$0xf]
        %v1635 = vld [vmem:[%s325 + $0x4c] sm:$0xf]
        %v1636 = vld [vmem:[%s330] sm:$0xf]
        %v1637 = vld [vmem:[%s330 + $0x4] sm:$0xf]
        %v1638 = vld [vmem:[%s330 + $0x8] sm:$0xf]
        %v1639 = vld [vmem:[%s330 + $0xc] sm:$0xf]
        %v1640 = vld [vmem:[%s325 + $0x50] sm:$0x1]
        %s1641 = scalar_lea.vmem %s330, 16
        %v1642 = vld [vmem:[%s1641] sm:$0xf]
        %v1643 = vld [vmem:[%s1641 + $0x4] sm:$0xf]
        %v1644 = vld [vmem:[%s1641 + $0x8] sm:$0xf]
        %v1645 = vld [vmem:[%s1641 + $0xc] sm:$0xf]
        %v1663 = vunpack.c.l.b16 %v1620
        %v1664 = vunpack.c.l.b16 %v1621
        %v1665 = vunpack.c.l.b16 %v1622
        %v1666 = vunpack.c.l.b16 %v1623
        %v1667 = vunpack.c.l.b16 %v1624
        %v1668 = vunpack.c.l.b16 %v1625
        %v1669 = vunpack.c.l.b16 %v1626
        %v1670 = vunpack.c.l.b16 %v1627
        %v1671 = vunpack.c.l.b16 %v1628
        %v1672 = vunpack.c.l.b16 %v1629
        %v1673 = vunpack.c.l.b16 %v1630
        %v1674 = vunpack.c.l.b16 %v1631
        %v1675 = vunpack.c.l.b16 %v1632
        %v1676 = vunpack.c.l.b16 %v1633
        %v1677 = vunpack.c.l.b16 %v1634
        %v1678 = vunpack.c.l.b16 %v1635
        %v1679 = vunpack.c.l.b16 %v1640
        %v1680 = vpack.c.b16 %v1664, %v1663
        %v1681 = vpack.c.b16 %v1666, %v1665
        %v1682 = vpack.c.b16 %v1668, %v1667
        %v1683 = vpack.c.b16 %v1670, %v1669
        %v1684 = vpack.c.b16 %v1672, %v1671
        %v1685 = vpack.c.b16 %v1674, %v1673
        %v1686 = vpack.c.b16 %v1676, %v1675
        %v1687 = vpack.c.b16 %v1678, %v1677
        %v1688 = vpack.c.b16 %v1679, %v1679
        %vm1689 = vsmask.f32 7424
        %v1691 = vshrl.u32 %v1680, 16
        %v1693 = vshll.u32 %v1680, 16
        %v1695 = vrot.slane %v1693, 1
        %v1696 = vor.u32 %v1691, %v1695
        %v1698 = vshll.u32 %v1681, 16
        %v1700 = vrot.slane %v1698, 1
        %v1701 = vsel %vm1689, %v1696, %v1700
        %v1702 = vshrl.u32 %v1681, 16
        %v1704 = vor.u32 %v1702, %v1700
        %v1706 = vshll.u32 %v1682, 16
        %v1708 = vrot.slane %v1706, 1
        %v1709 = vsel %vm1689, %v1704, %v1708
        %v1710 = vshrl.u32 %v1682, 16
        %v1712 = vor.u32 %v1710, %v1708
        %v1714 = vshll.u32 %v1683, 16
        %v1716 = vrot.slane %v1714, 1
        %v1717 = vsel %vm1689, %v1712, %v1716
        %v1718 = vshrl.u32 %v1683, 16
        %v1720 = vor.u32 %v1718, %v1716
        %v1722 = vshll.u32 %v1684, 16
        %v1724 = vrot.slane %v1722, 1
        %v1725 = vsel %vm1689, %v1720, %v1724
        %v1726 = vshrl.u32 %v1684, 16
        %v1728 = vor.u32 %v1726, %v1724
        %v1730 = vshll.u32 %v1685, 16
        %v1732 = vrot.slane %v1730, 1
        %v1733 = vsel %vm1689, %v1728, %v1732
        %v1734 = vshrl.u32 %v1685, 16
        %v1736 = vor.u32 %v1734, %v1732
        %v1738 = vshll.u32 %v1686, 16
        %v1740 = vrot.slane %v1738, 1
        %v1741 = vsel %vm1689, %v1736, %v1740
        %v1742 = vshrl.u32 %v1686, 16
        %v1744 = vor.u32 %v1742, %v1740
        %v1746 = vshll.u32 %v1687, 16
        %v1748 = vrot.slane %v1746, 1
        %v1749 = vsel %vm1689, %v1744, %v1748
        %v1750 = vshrl.u32 %v1687, 16
        %v1752 = vor.u32 %v1750, %v1748
        %v1754 = vshll.u32 %v1688, 16
        %v1756 = vrot.slane %v1754, 1
        %v1757 = vsel %vm1689, %v1752, %v1756
        %v1762 = vunpack.c.l.b16 %v1642
        %v1763 = vunpack.c.l.b16 %v1643
        %v1764 = vunpack.c.l.b16 %v1644
        %v1765 = vunpack.c.l.b16 %v1645
        %v1766 = vpack.c.b16 %v1763, %v1762
        %v1767 = vpack.c.b16 %v1765, %v1764
        %vm1770 = vcmask 261120
        %v1772 = vsel %vm1770, %v1701, 0
        %v1775 = vsel %vm1770, %v1709, 0
        %v1778 = vsel %vm1770, %v1717, 0
        %v1781 = vsel %vm1770, %v1725, 0
        %v1784 = vsel %vm1770, %v1733, 0
        %v1787 = vsel %vm1770, %v1741, 0
        %v1790 = vsel %vm1770, %v1749, 0
        %v1793 = vsel %vm1770, %v1757, 0
        %1795 = vmatprep.subr.bf16.mxu0 0
        %1796 = vmatpush1.bf16.msra.mxu0 %v1766
        %1797 = vmatprep.subr.bf16.mxu0 0
        %1798 = vmatpush1.bf16.msra.mxu0 %v1767
        %1799 = vmatprep.subr.bf16.mxu0 0
        %1800 = vmatpush1.bf16.msra.mxu0 0
        %1801 = vmatprep.subr.bf16.mxu0 0
        %1802 = vmatpush1.bf16.msra.mxu0 0
        %1803 = vmatprep.subr.bf16.mxu0 0
        %1804 = vmatpush1.bf16.msra.mxu0 0
        %1805 = vmatprep.subr.bf16.mxu0 0
        %1806 = vmatpush1.bf16.msra.mxu0 0
        %1807 = vmatprep.subr.bf16.mxu0 0
        %1808 = vmatpush1.bf16.msra.mxu0 0
        %1809 = vmatprep.subr.bf16.mxu0 0
        %1810 = vmatpush1.bf16.msra.mxu0 0
        %1811 = vmatprep.subr.bf16.mxu0 0
        %1812 = vmatpush1.bf16.msra.mxu0 0
        %1813 = vmatprep.subr.bf16.mxu0 0
        %1814 = vmatpush1.bf16.msra.mxu0 0
        %1815 = vmatprep.subr.bf16.mxu0 0
        %1816 = vmatpush1.bf16.msra.mxu0 0
        %1817 = vmatprep.subr.bf16.mxu0 0
        %1818 = vmatpush1.bf16.msra.mxu0 0
        %1819 = vmatprep.subr.bf16.mxu0 0
        %1820 = vmatpush1.bf16.msra.mxu0 0
        %1821 = vmatprep.subr.bf16.mxu0 0
        %1822 = vmatpush1.bf16.msra.mxu0 0
        %1823 = vmatprep.subr.bf16.mxu0 0
        %1824 = vmatpush1.bf16.msra.mxu0 0
        %1825 = vmatprep.subr.bf16.mxu0 0
        %1826 = vmatpush1.bf16.msra.mxu0 0
        %1827 = vmatprep.mubr.bf16.mxu0 0
        %1828 = vmatmul.mubr.bf16.gmra.mrb[0].mxu0 %v1772
        %v1829 = vpop.f32.mrb[0].mxu0
        %v1830 = vadd.f32 0.0, %v1829
        %v1831 = vpop.f32.mrb[0].mxu0
        %v1832 = vpop.f32.mrb[0].mxu0
        %v1833 = vadd.f32 0.0, %v1832
        %v1834 = vpop.f32.mrb[0].mxu0
        %1835 = vmatprep.mubr.bf16.mxu0 0
        %1836 = vmatmul.mubr.bf16.gmra.mrb[0].mxu0 %v1775
        %v1837 = vpop.f32.mrb[0].mxu0
        %v1838 = vadd.f32 0.0, %v1837
        %v1839 = vpop.f32.mrb[0].mxu0
        %v1840 = vpop.f32.mrb[0].mxu0
        %v1841 = vadd.f32 0.0, %v1840
        %v1842 = vpop.f32.mrb[0].mxu0
        %1843 = vmatprep.mubr.bf16.mxu0 0
        %1844 = vmatmul.mubr.bf16.gmra.mrb[0].mxu0 %v1778
        %v1845 = vpop.f32.mrb[0].mxu0
        %v1846 = vadd.f32 0.0, %v1845
        %v1847 = vpop.f32.mrb[0].mxu0
        %v1848 = vpop.f32.mrb[0].mxu0
        %v1849 = vadd.f32 0.0, %v1848
        %v1850 = vpop.f32.mrb[0].mxu0
        %1851 = vmatprep.mubr.bf16.mxu0 0
        %1852 = vmatmul.mubr.bf16.gmra.mrb[0].mxu0 %v1781
        %v1853 = vpop.f32.mrb[0].mxu0
        %v1854 = vadd.f32 0.0, %v1853
        %v1855 = vpop.f32.mrb[0].mxu0
        %v1856 = vpop.f32.mrb[0].mxu0
        %v1857 = vadd.f32 0.0, %v1856
        %v1858 = vpop.f32.mrb[0].mxu0
        %1859 = vmatprep.mubr.bf16.mxu0 0
        %1860 = vmatmul.mubr.bf16.gmra.mrb[0].mxu0 %v1784
        %v1861 = vpop.f32.mrb[0].mxu0
        %v1862 = vadd.f32 0.0, %v1861
        %v1863 = vpop.f32.mrb[0].mxu0
        %v1864 = vpop.f32.mrb[0].mxu0
        %v1865 = vadd.f32 0.0, %v1864
        %v1866 = vpop.f32.mrb[0].mxu0
        %1867 = vmatprep.mubr.bf16.mxu0 0
        %1868 = vmatmul.mubr.bf16.gmra.mrb[0].mxu0 %v1787
        %v1869 = vpop.f32.mrb[0].mxu0
        %v1870 = vadd.f32 0.0, %v1869
        %v1871 = vpop.f32.mrb[0].mxu0
        %v1872 = vpop.f32.mrb[0].mxu0
        %v1873 = vadd.f32 0.0, %v1872
        %v1874 = vpop.f32.mrb[0].mxu0
        %1875 = vmatprep.mubr.bf16.mxu0 0
        %1876 = vmatmul.mubr.bf16.gmra.mrb[0].mxu0 %v1790
        %v1877 = vpop.f32.mrb[0].mxu0
        %v1878 = vadd.f32 0.0, %v1877
        %v1879 = vpop.f32.mrb[0].mxu0
        %v1880 = vpop.f32.mrb[0].mxu0
        %v1881 = vadd.f32 0.0, %v1880
        %v1882 = vpop.f32.mrb[0].mxu0
        %1883 = vmatprep.mubr.bf16.mxu0 0
        %1884 = vmatmul.mubr.bf16.gmra.mrb[0].mxu0 %v1793
        %v1885 = vpop.f32.mrb[0].mxu0
        %v1886 = vadd.f32 0.0, %v1885
        %v1887 = vpop.f32.mrb[0].mxu0
        %v1888 = vpop.f32.mrb[0].mxu0
        %v1889 = vadd.f32 0.0, %v1888
        %v1890 = vpop.f32.mrb[0].mxu0
        %1891 = vdwg.mxu0
        %v1896 = vunpack.c.l.b16 %v1636
        %v1897 = vunpack.c.l.b16 %v1637
        %v1898 = vunpack.c.l.b16 %v1638
        %v1899 = vunpack.c.l.b16 %v1639
        %v1900 = vpack.c.b16 %v1897, %v1896
        %v1901 = vpack.c.b16 %v1899, %v1898
        %v1904 = vsel %vm1770, %v1680, 0
        %v1906 = vsel %vm1770, %v1681, 0
        %v1908 = vsel %vm1770, %v1682, 0
        %v1910 = vsel %vm1770, %v1683, 0
        %v1912 = vsel %vm1770, %v1684, 0
        %v1914 = vsel %vm1770, %v1685, 0
        %v1916 = vsel %vm1770, %v1686, 0
        %v1918 = vsel %vm1770, %v1687, 0
        %1920 = vmatprep.subr.bf16.mxu0 0
        %1921 = vmatpush1.bf16.msra.mxu0 %v1900
        %1922 = vmatprep.subr.bf16.mxu0 0
        %1923 = vmatpush1.bf16.msra.mxu0 %v1901
        %1924 = vmatprep.subr.bf16.mxu0 0
        %1925 = vmatpush1.bf16.msra.mxu0 0
        %1926 = vmatprep.subr.bf16.mxu0 0
        %1927 = vmatpush1.bf16.msra.mxu0 0
        %1928 = vmatprep.subr.bf16.mxu0 0
        %1929 = vmatpush1.bf16.msra.mxu0 0
        %1930 = vmatprep.subr.bf16.mxu0 0
        %1931 = vmatpush1.bf16.msra.mxu0 0
        %1932 = vmatprep.subr.bf16.mxu0 0
        %1933 = vmatpush1.bf16.msra.mxu0 0
        %1934 = vmatprep.subr.bf16.mxu0 0
        %1935 = vmatpush1.bf16.msra.mxu0 0
        %1936 = vmatprep.subr.bf16.mxu0 0
        %1937 = vmatpush1.bf16.msra.mxu0 0
        %1938 = vmatprep.subr.bf16.mxu0 0
        %1939 = vmatpush1.bf16.msra.mxu0 0
        %1940 = vmatprep.subr.bf16.mxu0 0
        %1941 = vmatpush1.bf16.msra.mxu0 0
        %1942 = vmatprep.subr.bf16.mxu0 0
        %1943 = vmatpush1.bf16.msra.mxu0 0
        %1944 = vmatprep.subr.bf16.mxu0 0
        %1945 = vmatpush1.bf16.msra.mxu0 0
        %1946 = vmatprep.subr.bf16.mxu0 0
        %1947 = vmatpush1.bf16.msra.mxu0 0
        %1948 = vmatprep.subr.bf16.mxu0 0
        %1949 = vmatpush1.bf16.msra.mxu0 0
        %1950 = vmatprep.subr.bf16.mxu0 0
        %1951 = vmatpush1.bf16.msra.mxu0 0
        %1952 = vmatprep.mubr.bf16.mxu0 0
        %1953 = vmatmul.mubr.bf16.gmra.mrb[0].mxu0 %v1904
        %v1954 = vpop.f32.mrb[0].mxu0
        %v1955 = vadd.f32 %v1830, %v1954
        %v1956 = vpop.f32.mrb[0].mxu0
        %v1957 = vpop.f32.mrb[0].mxu0
        %v1958 = vadd.f32 %v1833, %v1957
        %v1959 = vpop.f32.mrb[0].mxu0
        %1960 = vmatprep.mubr.bf16.mxu0 0
        %1961 = vmatmul.mubr.bf16.gmra.mrb[0].mxu0 %v1906
        %v1962 = vpop.f32.mrb[0].mxu0
        %v1963 = vadd.f32 %v1838, %v1962
        %v1964 = vpop.f32.mrb[0].mxu0
        %v1965 = vpop.f32.mrb[0].mxu0
        %v1966 = vadd.f32 %v1841, %v1965
        %v1967 = vpop.f32.mrb[0].mxu0
        %1968 = vmatprep.mubr.bf16.mxu0 0
        %1969 = vmatmul.mubr.bf16.gmra.mrb[0].mxu0 %v1908
        %v1970 = vpop.f32.mrb[0].mxu0
        %v1971 = vadd.f32 %v1846, %v1970
        %v1972 = vpop.f32.mrb[0].mxu0
        %v1973 = vpop.f32.mrb[0].mxu0
        %v1974 = vadd.f32 %v1849, %v1973
        %v1975 = vpop.f32.mrb[0].mxu0
        %1976 = vmatprep.mubr.bf16.mxu0 0
        %1977 = vmatmul.mubr.bf16.gmra.mrb[0].mxu0 %v1910
        %v1978 = vpop.f32.mrb[0].mxu0
        %v1979 = vadd.f32 %v1854, %v1978
        %v1980 = vpop.f32.mrb[0].mxu0
        %v1981 = vpop.f32.mrb[0].mxu0
        %v1982 = vadd.f32 %v1857, %v1981
        %v1983 = vpop.f32.mrb[0].mxu0
        %1984 = vmatprep.mubr.bf16.mxu0 0
        %1985 = vmatmul.mubr.bf16.gmra.mrb[0].mxu0 %v1912
        %v1986 = vpop.f32.mrb[0].mxu0
        %v1987 = vadd.f32 %v1862, %v1986
        %v1988 = vpop.f32.mrb[0].mxu0
        %v1989 = vpop.f32.mrb[0].mxu0
        %v1990 = vadd.f32 %v1865, %v1989
        %v1991 = vpop.f32.mrb[0].mxu0
        %1992 = vmatprep.mubr.bf16.mxu0 0
        %1993 = vmatmul.mubr.bf16.gmra.mrb[0].mxu0 %v1914
        %v1994 = vpop.f32.mrb[0].mxu0
        %v1995 = vadd.f32 %v1870, %v1994
        %v1996 = vpop.f32.mrb[0].mxu0
        %v1997 = vpop.f32.mrb[0].mxu0
        %v1998 = vadd.f32 %v1873, %v1997
        %v1999 = vpop.f32.mrb[0].mxu0
        %2000 = vmatprep.mubr.bf16.mxu0 0
        %2001 = vmatmul.mubr.bf16.gmra.mrb[0].mxu0 %v1916
        %v2002 = vpop.f32.mrb[0].mxu0
        %v2003 = vadd.f32 %v1878, %v2002
        %v2004 = vpop.f32.mrb[0].mxu0
        %v2005 = vpop.f32.mrb[0].mxu0
        %v2006 = vadd.f32 %v1881, %v2005
        %v2007 = vpop.f32.mrb[0].mxu0
        %2008 = vmatprep.mubr.bf16.mxu0 0
        %2009 = vmatmul.mubr.bf16.gmra.mrb[0].mxu0 %v1918
        %v2010 = vpop.f32.mrb[0].mxu0
        %v2011 = vadd.f32 %v1886, %v2010
        %v2012 = vpop.f32.mrb[0].mxu0
        %v2013 = vpop.f32.mrb[0].mxu0
        %v2014 = vadd.f32 %v1889, %v2013
        %v2015 = vpop.f32.mrb[0].mxu0
        %2016 = vdwg.mxu0
        %v2017 = vld [vmem:[%s325 + $0x10] sm:$0xe]
        %s2018 = scalar_lea.vmem %s330, 32
        %v2019 = vld [vmem:[%s2018] sm:$0xf]
        %v2020 = vld [vmem:[%s2018 + $0x4] sm:$0xf]
        %v2021 = vld [vmem:[%s2018 + $0x8] sm:$0xf]
        %v2022 = vld [vmem:[%s2018 + $0xc] sm:$0xf]
        %v2024 = vunpack.c.l.b16 %v2017
        %v2025 = vpack.c.b16 %v1664, %v2024
        %vm2026 = vcmask 1046528
        %v2027 = vrot.slane %v2025, 1
        %v2028 = vrot.slane %v1681, 1
        %v2029 = vsel %vm2026, %v2027, %v2028
        %v2030 = vrot.slane %v1682, 1
        %v2031 = vsel %vm2026, %v2028, %v2030
        %v2032 = vrot.slane %v1683, 1
        %v2033 = vsel %vm2026, %v2030, %v2032
        %v2034 = vrot.slane %v1684, 1
        %v2035 = vsel %vm2026, %v2032, %v2034
        %v2036 = vrot.slane %v1685, 1
        %v2037 = vsel %vm2026, %v2034, %v2036
        %v2038 = vrot.slane %v1686, 1
        %v2039 = vsel %vm2026, %v2036, %v2038
        %v2040 = vrot.slane %v1687, 1
        %v2041 = vsel %vm2026, %v2038, %v2040
        %v2042 = vrot.slane %v1688, 1
        %v2043 = vsel %vm2026, %v2040, %v2042
        %v2048 = vunpack.c.l.b16 %v2019
        %v2049 = vunpack.c.l.b16 %v2020
        %v2050 = vunpack.c.l.b16 %v2021
        %v2051 = vunpack.c.l.b16 %v2022
        %v2052 = vpack.c.b16 %v2049, %v2048
        %v2053 = vpack.c.b16 %v2051, %v2050
        %v2057 = vsel %vm1770, %v2029, 0
        %v2060 = vsel %vm1770, %v2031, 0
        %v2063 = vsel %vm1770, %v2033, 0
        %v2066 = vsel %vm1770, %v2035, 0
        %v2069 = vsel %vm1770, %v2037, 0
        %v2072 = vsel %vm1770, %v2039, 0
        %v2075 = vsel %vm1770, %v2041, 0
        %v2078 = vsel %vm1770, %v2043, 0
        %2080 = vmatprep.subr.bf16.mxu0 0
        %2081 = vmatpush1.bf16.msra.mxu0 %v2052
        %2082 = vmatprep.subr.bf16.mxu0 0
        %2083 = vmatpush1.bf16.msra.mxu0 %v2053
        %2084 = vmatprep.subr.bf16.mxu0 0
        %2085 = vmatpush1.bf16.msra.mxu0 0
        %2086 = vmatprep.subr.bf16.mxu0 0
        %2087 = vmatpush1.bf16.msra.mxu0 0
        %2088 = vmatprep.subr.bf16.mxu0 0
        %2089 = vmatpush1.bf16.msra.mxu0 0
        %2090 = vmatprep.subr.bf16.mxu0 0
        %2091 = vmatpush1.bf16.msra.mxu0 0
        %2092 = vmatprep.subr.bf16.mxu0 0
        %2093 = vmatpush1.bf16.msra.mxu0 0
        %2094 = vmatprep.subr.bf16.mxu0 0
        %2095 = vmatpush1.bf16.msra.mxu0 0
        %2096 = vmatprep.subr.bf16.mxu0 0
        %2097 = vmatpush1.bf16.msra.mxu0 0
        %2098 = vmatprep.subr.bf16.mxu0 0
        %2099 = vmatpush1.bf16.msra.mxu0 0
        %2100 = vmatprep.subr.bf16.mxu0 0
        %2101 = vmatpush1.bf16.msra.mxu0 0
        %2102 = vmatprep.subr.bf16.mxu0 0
        %2103 = vmatpush1.bf16.msra.mxu0 0
        %2104 = vmatprep.subr.bf16.mxu0 0
        %2105 = vmatpush1.bf16.msra.mxu0 0
        %2106 = vmatprep.subr.bf16.mxu0 0
        %2107 = vmatpush1.bf16.msra.mxu0 0
        %2108 = vmatprep.subr.bf16.mxu0 0
        %2109 = vmatpush1.bf16.msra.mxu0 0
        %2110 = vmatprep.subr.bf16.mxu0 0
        %2111 = vmatpush1.bf16.msra.mxu0 0
        %2112 = vmatprep.mubr.bf16.mxu0 0
        %2113 = vmatmul.mubr.bf16.gmra.mrb[0].mxu0 %v2057
        %v2114 = vpop.f32.mrb[0].mxu0
        %v2115 = vadd.f32 0.0, %v2114
        %v2116 = vpop.f32.mrb[0].mxu0
        %v2117 = vpop.f32.mrb[0].mxu0
        %v2118 = vadd.f32 0.0, %v2117
        %v2119 = vpop.f32.mrb[0].mxu0
        %2120 = vmatprep.mubr.bf16.mxu0 0
        %2121 = vmatmul.mubr.bf16.gmra.mrb[0].mxu0 %v2060
        %v2122 = vpop.f32.mrb[0].mxu0
        %v2123 = vadd.f32 0.0, %v2122
        %v2124 = vpop.f32.mrb[0].mxu0
        %v2125 = vpop.f32.mrb[0].mxu0
        %v2126 = vadd.f32 0.0, %v2125
        %v2127 = vpop.f32.mrb[0].mxu0
        %2128 = vmatprep.mubr.bf16.mxu0 0
        %2129 = vmatmul.mubr.bf16.gmra.mrb[0].mxu0 %v2063
        %v2130 = vpop.f32.mrb[0].mxu0
        %v2131 = vadd.f32 0.0, %v2130
        %v2132 = vpop.f32.mrb[0].mxu0
        %v2133 = vpop.f32.mrb[0].mxu0
        %v2134 = vadd.f32 0.0, %v2133
        %v2135 = vpop.f32.mrb[0].mxu0
        %2136 = vmatprep.mubr.bf16.mxu0 0
        %2137 = vmatmul.mubr.bf16.gmra.mrb[0].mxu0 %v2066
        %v2138 = vpop.f32.mrb[0].mxu0
        %v2139 = vadd.f32 0.0, %v2138
        %v2140 = vpop.f32.mrb[0].mxu0
        %v2141 = vpop.f32.mrb[0].mxu0
        %v2142 = vadd.f32 0.0, %v2141
        %v2143 = vpop.f32.mrb[0].mxu0
        %2144 = vmatprep.mubr.bf16.mxu0 0
        %2145 = vmatmul.mubr.bf16.gmra.mrb[0].mxu0 %v2069
        %v2146 = vpop.f32.mrb[0].mxu0
        %v2147 = vadd.f32 0.0, %v2146
        %v2148 = vpop.f32.mrb[0].mxu0
        %v2149 = vpop.f32.mrb[0].mxu0
        %v2150 = vadd.f32 0.0, %v2149
        %v2151 = vpop.f32.mrb[0].mxu0
        %2152 = vmatprep.mubr.bf16.mxu0 0
        %2153 = vmatmul.mubr.bf16.gmra.mrb[0].mxu0 %v2072
        %v2154 = vpop.f32.mrb[0].mxu0
        %v2155 = vadd.f32 0.0, %v2154
        %v2156 = vpop.f32.mrb[0].mxu0
        %v2157 = vpop.f32.mrb[0].mxu0
        %v2158 = vadd.f32 0.0, %v2157
        %v2159 = vpop.f32.mrb[0].mxu0
        %2160 = vmatprep.mubr.bf16.mxu0 0
        %2161 = vmatmul.mubr.bf16.gmra.mrb[0].mxu0 %v2075
        %v2162 = vpop.f32.mrb[0].mxu0
        %v2163 = vadd.f32 0.0, %v2162
        %v2164 = vpop.f32.mrb[0].mxu0
        %v2165 = vpop.f32.mrb[0].mxu0
        %v2166 = vadd.f32 0.0, %v2165
        %v2167 = vpop.f32.mrb[0].mxu0
        %2168 = vmatprep.mubr.bf16.mxu0 0
        %2169 = vmatmul.mubr.bf16.gmra.mrb[0].mxu0 %v2078
        %v2170 = vpop.f32.mrb[0].mxu0
        %v2171 = vadd.f32 0.0, %v2170
        %v2172 = vpop.f32.mrb[0].mxu0
        %v2173 = vpop.f32.mrb[0].mxu0
        %v2174 = vadd.f32 0.0, %v2173
        %v2175 = vpop.f32.mrb[0].mxu0
        %2176 = vdwg.mxu0
        %v2177 = vadd.f32 %v1955, %v2115
        %v2178 = vadd.f32 %v1958, %v2118
        %v2179 = vadd.f32 %v1963, %v2123
        %v2180 = vadd.f32 %v1966, %v2126
        %v2181 = vadd.f32 %v1971, %v2131
        %v2182 = vadd.f32 %v1974, %v2134
        %v2183 = vadd.f32 %v1979, %v2139
        %v2184 = vadd.f32 %v1982, %v2142
        %v2185 = vadd.f32 %v1987, %v2147
        %v2186 = vadd.f32 %v1990, %v2150
        %v2187 = vadd.f32 %v1995, %v2155
        %v2188 = vadd.f32 %v1998, %v2158
        %v2189 = vadd.f32 %v2003, %v2163
        %v2190 = vadd.f32 %v2006, %v2166
        %v2191 = vadd.f32 %v2011, %v2171
        %v2192 = vadd.f32 %v2014, %v2174
        %v2193 = vld [vmem:[#allocation2] sm:$0xff]
        %v2194 = vld [vmem:[#allocation2 + $0x8] sm:$0xff]
        %v2195 = vld [vmem:[#allocation2 + $0x10] sm:$0xff]
        %v2196 = vld [vmem:[#allocation2 + $0x18] sm:$0xff]
        %v2197 = vld [vmem:[#allocation2 + $0x20] sm:$0xff]
        %v2198 = vld [vmem:[#allocation2 + $0x28] sm:$0xff]
        %v2199 = vld [vmem:[#allocation2 + $0x30] sm:$0xff]
        %v2200 = vld [vmem:[#allocation2 + $0x38] sm:$0xff]
        %v2201 = vld [vmem:[#allocation2 + $0x40] sm:$0xff]
        %v2202 = vld [vmem:[#allocation2 + $0x48] sm:$0xff]
        %v2203 = vld [vmem:[#allocation2 + $0x50] sm:$0xff]
        %v2204 = vld [vmem:[#allocation2 + $0x58] sm:$0xff]
        %v2205 = vld [vmem:[#allocation2 + $0x60] sm:$0xff]
        %v2206 = vld [vmem:[#allocation2 + $0x68] sm:$0xff]
        %v2207 = vld [vmem:[#allocation2 + $0x70] sm:$0xff]
        %v2208 = vld [vmem:[#allocation2 + $0x78] sm:$0xff]
        %v2209 = vadd.f32 %v2193, %v2177
        %v2210 = vadd.f32 %v2194, %v2178
        %v2211 = vadd.f32 %v2195, %v2179
        %v2212 = vadd.f32 %v2196, %v2180
        %v2213 = vadd.f32 %v2197, %v2181
        %v2214 = vadd.f32 %v2198, %v2182
        %v2215 = vadd.f32 %v2199, %v2183
        %v2216 = vadd.f32 %v2200, %v2184
        %v2217 = vadd.f32 %v2201, %v2185
        %v2218 = vadd.f32 %v2202, %v2186
        %v2219 = vadd.f32 %v2203, %v2187
        %v2220 = vadd.f32 %v2204, %v2188
        %v2221 = vadd.f32 %v2205, %v2189
        %v2222 = vadd.f32 %v2206, %v2190
        %v2223 = vadd.f32 %v2207, %v2191
        %v2224 = vadd.f32 %v2208, %v2192
        %2225 = vst.msk [vmem:[#allocation2] sm:$0xff] %vm1770, %v2209
        %2226 = vst.msk [vmem:[#allocation2 + $0x8] sm:$0xff] %vm1770, %v2210
        %2227 = vst.msk [vmem:[#allocation2 + $0x10] sm:$0xff] %vm1770, %v2211
        %2228 = vst.msk [vmem:[#allocation2 + $0x18] sm:$0xff] %vm1770, %v2212
        %2229 = vst.msk [vmem:[#allocation2 + $0x20] sm:$0xff] %vm1770, %v2213
        %2230 = vst.msk [vmem:[#allocation2 + $0x28] sm:$0xff] %vm1770, %v2214
        %2231 = vst.msk [vmem:[#allocation2 + $0x30] sm:$0xff] %vm1770, %v2215
        %2232 = vst.msk [vmem:[#allocation2 + $0x38] sm:$0xff] %vm1770, %v2216
        %2233 = vst.msk [vmem:[#allocation2 + $0x40] sm:$0xff] %vm1770, %v2217
        %2234 = vst.msk [vmem:[#allocation2 + $0x48] sm:$0xff] %vm1770, %v2218
        %2235 = vst.msk [vmem:[#allocation2 + $0x50] sm:$0xff] %vm1770, %v2219
        %2236 = vst.msk [vmem:[#allocation2 + $0x58] sm:$0xff] %vm1770, %v2220
        %2237 = vst.msk [vmem:[#allocation2 + $0x60] sm:$0xff] %vm1770, %v2221
        %2238 = vst.msk [vmem:[#allocation2 + $0x68] sm:$0xff] %vm1770, %v2222
        %2239 = vst.msk [vmem:[#allocation2 + $0x70] sm:$0xff] %vm1770, %v2223
        %2240 = vst.msk [vmem:[#allocation2 + $0x78] sm:$0xff] %vm1770, %v2224
        %v2241 = vld [vmem:[#allocation2] sm:$0xff]
        %v2242 = vld [vmem:[#allocation2 + $0x8] sm:$0xff]
        %v2243 = vld [vmem:[#allocation2 + $0x10] sm:$0xff]
        %v2244 = vld [vmem:[#allocation2 + $0x18] sm:$0xff]
        %v2245 = vld [vmem:[#allocation2 + $0x20] sm:$0xff]
        %v2246 = vld [vmem:[#allocation2 + $0x28] sm:$0xff]
        %v2247 = vld [vmem:[#allocation2 + $0x30] sm:$0xff]
        %v2248 = vld [vmem:[#allocation2 + $0x38] sm:$0xff]
        %v2249 = vld [vmem:[#allocation2 + $0x40] sm:$0xff]
        %v2250 = vld [vmem:[#allocation2 + $0x48] sm:$0xff]
        %v2251 = vld [vmem:[#allocation2 + $0x50] sm:$0xff]
        %v2252 = vld [vmem:[#allocation2 + $0x58] sm:$0xff]
        %v2253 = vld [vmem:[#allocation2 + $0x60] sm:$0xff]
        %v2254 = vld [vmem:[#allocation2 + $0x68] sm:$0xff]
        %v2255 = vld [vmem:[#allocation2 + $0x70] sm:$0xff]
        %v2256 = vld [vmem:[#allocation2 + $0x78] sm:$0xff]
        %v2257 = vld [vmem:[%s2] sm:$0x1]
        %v2259 = vlaneseq
        %v2260 = vshrl.u32 %v2259, 7
        %v2261 = vsub.s32 0, %v2260
        %v2262 = vrot.slane %v2257, %v2261
        %v2264 = vadd.f32 %v2241, %v2262
        %v2265 = vadd.f32 %v2242, %v2262
        %v2266 = vadd.f32 %v2243, %v2262
        %v2267 = vadd.f32 %v2244, %v2262
        %v2268 = vadd.f32 %v2245, %v2262
        %v2269 = vadd.f32 %v2246, %v2262
        %v2270 = vadd.f32 %v2247, %v2262
        %v2271 = vadd.f32 %v2248, %v2262
        %v2272 = vadd.f32 %v2249, %v2262
        %v2273 = vadd.f32 %v2250, %v2262
        %v2274 = vadd.f32 %v2251, %v2262
        %v2275 = vadd.f32 %v2252, %v2262
        %v2276 = vadd.f32 %v2253, %v2262
        %v2277 = vadd.f32 %v2254, %v2262
        %v2278 = vadd.f32 %v2255, %v2262
        %v2279 = vadd.f32 %v2256, %v2262
        %v2280 = vmax.f32 %v2264, 0.0
        %v2281 = vmax.f32 %v2265, 0.0
        %v2282 = vmax.f32 %v2266, 0.0
        %v2283 = vmax.f32 %v2267, 0.0
        %v2284 = vmax.f32 %v2268, 0.0
        %v2285 = vmax.f32 %v2269, 0.0
        %v2286 = vmax.f32 %v2270, 0.0
        %v2287 = vmax.f32 %v2271, 0.0
        %v2288 = vmax.f32 %v2272, 0.0
        %v2289 = vmax.f32 %v2273, 0.0
        %v2290 = vmax.f32 %v2274, 0.0
        %v2291 = vmax.f32 %v2275, 0.0
        %v2292 = vmax.f32 %v2276, 0.0
        %v2293 = vmax.f32 %v2277, 0.0
        %v2294 = vmax.f32 %v2278, 0.0
        %v2295 = vmax.f32 %v2279, 0.0
        %v2296 = vpack.c.bf16 %v2281, %v2280
        %v2297 = vpack.c.bf16 %v2283, %v2282
        %v2298 = vpack.c.bf16 %v2285, %v2284
        %v2299 = vpack.c.bf16 %v2287, %v2286
        %v2300 = vpack.c.bf16 %v2289, %v2288
        %v2301 = vpack.c.bf16 %v2291, %v2290
        %v2302 = vpack.c.bf16 %v2293, %v2292
        %v2303 = vpack.c.bf16 %v2295, %v2294
        %v2304 = vld [vmem:[%s3] sm:$0xf]
        %v2305 = vld [vmem:[%s3 + $0x4] sm:$0xf]
        %v2306 = vld [vmem:[%s3 + $0x8] sm:$0xf]
        %v2307 = vld [vmem:[%s3 + $0xc] sm:$0xf]
        %v2308 = vld [vmem:[%s4] sm:$0x1]
        %v2310 = vlaneseq
        %v2311 = vshrl.u32 %v2310, 7
        %v2312 = vsub.s32 0, %v2311
        %v2313 = vrot.slane %v2308, %v2312
        %v2319 = vunpack.c.l.b16 %v2304
        %v2320 = vunpack.c.l.b16 %v2305
        %v2321 = vunpack.c.l.b16 %v2306
        %v2322 = vunpack.c.l.b16 %v2307
        %v2323 = vpack.c.b16 %v2320, %v2319
        %v2324 = vpack.c.b16 %v2322, %v2321
        %v2328 = vsel %vm1770, %v2296, 0
        %v2331 = vsel %vm1770, %v2297, 0
        %v2334 = vsel %vm1770, %v2298, 0
        %v2337 = vsel %vm1770, %v2299, 0
        %v2340 = vsel %vm1770, %v2300, 0
        %v2343 = vsel %vm1770, %v2301, 0
        %v2346 = vsel %vm1770, %v2302, 0
        %v2349 = vsel %vm1770, %v2303, 0
        %2351 = vmatprep.subr.bf16.mxu0 0
        %2352 = vmatpush1.bf16.msra.mxu0 %v2323
        %2353 = vmatprep.subr.bf16.mxu0 0
        %2354 = vmatpush1.bf16.msra.mxu0 %v2324
        %2355 = vmatprep.subr.bf16.mxu0 0
        %2356 = vmatpush1.bf16.msra.mxu0 0
        %2357 = vmatprep.subr.bf16.mxu0 0
        %2358 = vmatpush1.bf16.msra.mxu0 0
        %2359 = vmatprep.subr.bf16.mxu0 0
        %2360 = vmatpush1.bf16.msra.mxu0 0
        %2361 = vmatprep.subr.bf16.mxu0 0
        %2362 = vmatpush1.bf16.msra.mxu0 0
        %2363 = vmatprep.subr.bf16.mxu0 0
        %2364 = vmatpush1.bf16.msra.mxu0 0
        %2365 = vmatprep.subr.bf16.mxu0 0
        %2366 = vmatpush1.bf16.msra.mxu0 0
        %2367 = vmatprep.subr.bf16.mxu0 0
        %2368 = vmatpush1.bf16.msra.mxu0 0
        %2369 = vmatprep.subr.bf16.mxu0 0
        %2370 = vmatpush1.bf16.msra.mxu0 0
        %2371 = vmatprep.subr.bf16.mxu0 0
        %2372 = vmatpush1.bf16.msra.mxu0 0
        %2373 = vmatprep.subr.bf16.mxu0 0
        %2374 = vmatpush1.bf16.msra.mxu0 0
        %2375 = vmatprep.subr.bf16.mxu0 0
        %2376 = vmatpush1.bf16.msra.mxu0 0
        %2377 = vmatprep.subr.bf16.mxu0 0
        %2378 = vmatpush1.bf16.msra.mxu0 0
        %2379 = vmatprep.subr.bf16.mxu0 0
        %2380 = vmatpush1.bf16.msra.mxu0 0
        %2381 = vmatprep.subr.bf16.mxu0 0
        %2382 = vmatpush1.bf16.msra.mxu0 0
        %2383 = vmatprep.mubr.bf16.mxu0 0
        %2384 = vmatmul.mubr.bf16.gmra.mrb[0].mxu0 %v2328
        %v2385 = vpop.f32.mrb[0].mxu0
        %v2386 = vadd.f32 %v2313, %v2385
        %v2387 = vpop.f32.mrb[0].mxu0
        %v2388 = vpop.f32.mrb[0].mxu0
        %v2389 = vadd.f32 %v2313, %v2388
        %v2390 = vpop.f32.mrb[0].mxu0
        %2391 = vmatprep.mubr.bf16.mxu0 0
        %2392 = vmatmul.mubr.bf16.gmra.mrb[0].mxu0 %v2331
        %v2393 = vpop.f32.mrb[0].mxu0
        %v2394 = vadd.f32 %v2313, %v2393
        %v2395 = vpop.f32.mrb[0].mxu0
        %v2396 = vpop.f32.mrb[0].mxu0
        %v2397 = vadd.f32 %v2313, %v2396
        %v2398 = vpop.f32.mrb[0].mxu0
        %2399 = vmatprep.mubr.bf16.mxu0 0
        %2400 = vmatmul.mubr.bf16.gmra.mrb[0].mxu0 %v2334
        %v2401 = vpop.f32.mrb[0].mxu0
        %v2402 = vadd.f32 %v2313, %v2401
        %v2403 = vpop.f32.mrb[0].mxu0
        %v2404 = vpop.f32.mrb[0].mxu0
        %v2405 = vadd.f32 %v2313, %v2404
        %v2406 = vpop.f32.mrb[0].mxu0
        %2407 = vmatprep.mubr.bf16.mxu0 0
        %2408 = vmatmul.mubr.bf16.gmra.mrb[0].mxu0 %v2337
        %v2409 = vpop.f32.mrb[0].mxu0
        %v2410 = vadd.f32 %v2313, %v2409
        %v2411 = vpop.f32.mrb[0].mxu0
        %v2412 = vpop.f32.mrb[0].mxu0
        %v2413 = vadd.f32 %v2313, %v2412
        %v2414 = vpop.f32.mrb[0].mxu0
        %2415 = vmatprep.mubr.bf16.mxu0 0
        %2416 = vmatmul.mubr.bf16.gmra.mrb[0].mxu0 %v2340
        %v2417 = vpop.f32.mrb[0].mxu0
        %v2418 = vadd.f32 %v2313, %v2417
        %v2419 = vpop.f32.mrb[0].mxu0
        %v2420 = vpop.f32.mrb[0].mxu0
        %v2421 = vadd.f32 %v2313, %v2420
        %v2422 = vpop.f32.mrb[0].mxu0
        %2423 = vmatprep.mubr.bf16.mxu0 0
        %2424 = vmatmul.mubr.bf16.gmra.mrb[0].mxu0 %v2343
        %v2425 = vpop.f32.mrb[0].mxu0
        %v2426 = vadd.f32 %v2313, %v2425
        %v2427 = vpop.f32.mrb[0].mxu0
        %v2428 = vpop.f32.mrb[0].mxu0
        %v2429 = vadd.f32 %v2313, %v2428
        %v2430 = vpop.f32.mrb[0].mxu0
        %2431 = vmatprep.mubr.bf16.mxu0 0
        %2432 = vmatmul.mubr.bf16.gmra.mrb[0].mxu0 %v2346
        %v2433 = vpop.f32.mrb[0].mxu0
        %v2434 = vadd.f32 %v2313, %v2433
        %v2435 = vpop.f32.mrb[0].mxu0
        %v2436 = vpop.f32.mrb[0].mxu0
        %v2437 = vadd.f32 %v2313, %v2436
        %v2438 = vpop.f32.mrb[0].mxu0
        %2439 = vmatprep.mubr.bf16.mxu0 0
        %2440 = vmatmul.mubr.bf16.gmra.mrb[0].mxu0 %v2349
        %v2441 = vpop.f32.mrb[0].mxu0
        %v2442 = vadd.f32 %v2313, %v2441
        %v2443 = vpop.f32.mrb[0].mxu0
        %v2444 = vpop.f32.mrb[0].mxu0
        %v2445 = vadd.f32 %v2313, %v2444
        %v2446 = vpop.f32.mrb[0].mxu0
        %2447 = vdwg.mxu0
        %v2448 = vmax.f32 %v2386, 0.0
        %v2449 = vmax.f32 %v2389, 0.0
        %v2450 = vmax.f32 %v2394, 0.0
        %v2451 = vmax.f32 %v2397, 0.0
        %v2452 = vmax.f32 %v2402, 0.0
        %v2453 = vmax.f32 %v2405, 0.0
        %v2454 = vmax.f32 %v2410, 0.0
        %v2455 = vmax.f32 %v2413, 0.0
        %v2456 = vmax.f32 %v2418, 0.0
        %v2457 = vmax.f32 %v2421, 0.0
        %v2458 = vmax.f32 %v2426, 0.0
        %v2459 = vmax.f32 %v2429, 0.0
        %v2460 = vmax.f32 %v2434, 0.0
        %v2461 = vmax.f32 %v2437, 0.0
        %v2462 = vmax.f32 %v2442, 0.0
        %v2463 = vmax.f32 %v2445, 0.0
        %v2464 = vld [vmem:[%s339] sm:$0xf]
        %v2465 = vld [vmem:[%s339 + $0x4] sm:$0xf]
        %v2466 = vld [vmem:[%s339 + $0x8] sm:$0xf]
        %v2467 = vld [vmem:[%s339 + $0xc] sm:$0xf]
        %v2468 = vld [vmem:[%s339 + $0x10] sm:$0xf]
        %v2469 = vld [vmem:[%s339 + $0x14] sm:$0xf]
        %v2470 = vld [vmem:[%s339 + $0x18] sm:$0xf]
        %v2471 = vld [vmem:[%s339 + $0x1c] sm:$0xf]
        %v2472 = vld [vmem:[%s339 + $0x20] sm:$0xf]
        %v2473 = vld [vmem:[%s339 + $0x24] sm:$0xf]
        %v2474 = vld [vmem:[%s339 + $0x28] sm:$0xf]
        %v2475 = vld [vmem:[%s339 + $0x2c] sm:$0xf]
        %v2476 = vld [vmem:[%s339 + $0x30] sm:$0xf]
        %v2477 = vld [vmem:[%s339 + $0x34] sm:$0xf]
        %v2478 = vld [vmem:[%s339 + $0x38] sm:$0xf]
        %v2479 = vld [vmem:[%s339 + $0x3c] sm:$0xf]
        %v2480 = vunpack.c.l.bf16 %v2464
        %v2481 = vunpack.c.l.bf16 %v2465
        %v2482 = vunpack.c.l.bf16 %v2466
        %v2483 = vunpack.c.l.bf16 %v2467
        %v2484 = vunpack.c.l.bf16 %v2468
        %v2485 = vunpack.c.l.bf16 %v2469
        %v2486 = vunpack.c.l.bf16 %v2470
        %v2487 = vunpack.c.l.bf16 %v2471
        %v2488 = vunpack.c.l.bf16 %v2472
        %v2489 = vunpack.c.l.bf16 %v2473
        %v2490 = vunpack.c.l.bf16 %v2474
        %v2491 = vunpack.c.l.bf16 %v2475
        %v2492 = vunpack.c.l.bf16 %v2476
        %v2493 = vunpack.c.l.bf16 %v2477
        %v2494 = vunpack.c.l.bf16 %v2478
        %v2495 = vunpack.c.l.bf16 %v2479
        %v2496 = vadd.f32 %v2448, %v2480
        %v2497 = vadd.f32 %v2449, %v2481
        %v2498 = vadd.f32 %v2450, %v2482
        %v2499 = vadd.f32 %v2451, %v2483
        %v2500 = vadd.f32 %v2452, %v2484
        %v2501 = vadd.f32 %v2453, %v2485
        %v2502 = vadd.f32 %v2454, %v2486
        %v2503 = vadd.f32 %v2455, %v2487
        %v2504 = vadd.f32 %v2456, %v2488
        %v2505 = vadd.f32 %v2457, %v2489
        %v2506 = vadd.f32 %v2458, %v2490
        %v2507 = vadd.f32 %v2459, %v2491
        %v2508 = vadd.f32 %v2460, %v2492
        %v2509 = vadd.f32 %v2461, %v2493
        %v2510 = vadd.f32 %v2462, %v2494
        %v2511 = vadd.f32 %v2463, %v2495
        %v2512 = vpack.c.bf16 %v2497, %v2496
        %v2513 = vpack.c.bf16 %v2499, %v2498
        %v2514 = vpack.c.bf16 %v2501, %v2500
        %v2515 = vpack.c.bf16 %v2503, %v2502
        %v2516 = vpack.c.bf16 %v2505, %v2504
        %v2517 = vpack.c.bf16 %v2507, %v2506
        %v2518 = vpack.c.bf16 %v2509, %v2508
        %v2519 = vpack.c.bf16 %v2511, %v2510
        %v2528 = vunpack.c.l.b16 %v2512
        %v2529 = vunpack.c.h.b16 %v2512
        %v2530 = vunpack.c.l.b16 %v2513
        %v2531 = vunpack.c.h.b16 %v2513
        %v2532 = vunpack.c.l.b16 %v2514
        %v2533 = vunpack.c.h.b16 %v2514
        %v2534 = vunpack.c.l.b16 %v2515
        %v2535 = vunpack.c.h.b16 %v2515
        %v2536 = vunpack.c.l.b16 %v2516
        %v2537 = vunpack.c.h.b16 %v2516
        %v2538 = vunpack.c.l.b16 %v2517
        %v2539 = vunpack.c.h.b16 %v2517
        %v2540 = vunpack.c.l.b16 %v2518
        %v2541 = vunpack.c.h.b16 %v2518
        %v2542 = vunpack.c.l.b16 %v2519
        %v2543 = vunpack.c.h.b16 %v2519
        %v2544 = vpack.c.b16 %v2528, %v2528
        %v2545 = vpack.c.b16 %v2529, %v2529
        %v2546 = vpack.c.b16 %v2530, %v2530
        %v2547 = vpack.c.b16 %v2531, %v2531
        %v2548 = vpack.c.b16 %v2532, %v2532
        %v2549 = vpack.c.b16 %v2533, %v2533
        %v2550 = vpack.c.b16 %v2534, %v2534
        %v2551 = vpack.c.b16 %v2535, %v2535
        %v2552 = vpack.c.b16 %v2536, %v2536
        %v2553 = vpack.c.b16 %v2537, %v2537
        %v2554 = vpack.c.b16 %v2538, %v2538
        %v2555 = vpack.c.b16 %v2539, %v2539
        %v2556 = vpack.c.b16 %v2540, %v2540
        %v2557 = vpack.c.b16 %v2541, %v2541
        %v2558 = vpack.c.b16 %v2542, %v2542
        %v2559 = vpack.c.b16 %v2543, %v2543
        %vm2576 = vcmask 519168
        %2577 = vst.msk [vmem:[%s348] sm:$0xf] %vm2576, %v2544
        %2578 = vst.msk [vmem:[%s348 + $0x4] sm:$0xf] %vm2576, %v2545
        %2579 = vst.msk [vmem:[%s348 + $0x8] sm:$0xf] %vm2576, %v2546
        %2580 = vst.msk [vmem:[%s348 + $0xc] sm:$0xf] %vm2576, %v2547
        %2581 = vst.msk [vmem:[%s348 + $0x10] sm:$0xf] %vm2576, %v2548
        %2582 = vst.msk [vmem:[%s348 + $0x14] sm:$0xf] %vm2576, %v2549
        %2583 = vst.msk [vmem:[%s348 + $0x18] sm:$0xf] %vm2576, %v2550
        %2584 = vst.msk [vmem:[%s348 + $0x1c] sm:$0xf] %vm2576, %v2551
        %2585 = vst.msk [vmem:[%s348 + $0x20] sm:$0xf] %vm2576, %v2552
        %2586 = vst.msk [vmem:[%s348 + $0x24] sm:$0xf] %vm2576, %v2553
        %2587 = vst.msk [vmem:[%s348 + $0x28] sm:$0xf] %vm2576, %v2554
        %2588 = vst.msk [vmem:[%s348 + $0x2c] sm:$0xf] %vm2576, %v2555
        %2589 = vst.msk [vmem:[%s348 + $0x30] sm:$0xf] %vm2576, %v2556
        %2590 = vst.msk [vmem:[%s348 + $0x34] sm:$0xf] %vm2576, %v2557
        %2591 = vst.msk [vmem:[%s348 + $0x38] sm:$0xf] %vm2576, %v2558
        %2592 = vst.msk [vmem:[%s348 + $0x3c] sm:$0xf] %vm2576, %v2559
      $region56: #{fpn_psp_head_forward.5} parent=43 // pred_fallthru
        _
      %p2593 = scmp.lt.s32.totalorder %s22, 1
      %s2594 = scalar_select %p2593, %s22, 1
      %p2595 = scmp.lt.s32.totalorder %s23, 0
      %s2596 = scalar_select %p2595, %s23, 0
      %s2597 = smul.addr %s2596, 16
      %s2598 = smul.addr %s2594, 16
      %s2599 = sadd.s32 %s2597, %s2598
      %s2600 = smul.addr %s2599, 4
      %s2601 = scalar_lea.vmem %s6, %s2600
      // Predicated region
      $region57: #{fpn_psp_head_forward.5} parent=43 // pred_check
        %p2602 = pneg %p201
      $region58: #{fpn_psp_head_forward.5} parent=43 // pred_check_branch
        %2604 = sbr.rel (%p2602) target = $region60
      $region59: #{fpn_psp_head_forward.5} parent=43 // pred_region
        _
      $region60: #{fpn_psp_head_forward.5} parent=43 // pred_fallthru
        _
    $region44: #{fpn_psp_head_forward.5} parent=5 // pred_fallthru
      _
    %p2605 = scmp.le.s32.totalorder 2, %s12
    // Predicated region
    $region61: #{fpn_psp_head_forward.5} parent=5 // pred_check
      %p2606 = pneg %p2605
    $region62: #{fpn_psp_head_forward.5} parent=5 // pred_check_branch
      %2608 = sbr.rel (%p2606) target = $region64
    $region63: #{fpn_psp_head_forward.5} parent=5 // pred_region
      %s2609 = ssub.s32 %s12, 2
      // Predicated region
      $region65: #{fpn_psp_head_forward.5} parent=63 // pred_check
        %p2610 = pneg %p207
      $region66: #{fpn_psp_head_forward.5} parent=63 // pred_check_branch
        %2612 = sbr.rel (%p2610) target = $region68
      $region67: #{fpn_psp_head_forward.5} parent=63 // pred_region
        %p2613 = scmp.lt.s32.totalorder %s25, 1
        %s2614 = scalar_select %p2613, %s25, 1
        %p2615 = scmp.lt.s32.totalorder %s26, 0
        %s2616 = scalar_select %p2615, %s26, 0
        %s2617 = smul.addr %s2616, 16
        %s2618 = smul.addr %s2614, 16
        %s2619 = sadd.s32 %s2617, %s2618
        %s2620 = smul.addr %s2619, 4
        %s2621 = scalar_lea.vmem %s6, %s2620
      $region68: #{fpn_psp_head_forward.5} parent=63 // pred_fallthru
        _
    $region64: #{fpn_psp_head_forward.5} parent=5 // pred_fallthru
      _
  $region6: #{fpn_psp_head_forward.5} parent=0 // loop_footer
    %s16 = sadd.s32 1, %s12
  $region7: #{fpn_psp_head_forward.5} parent=0 // loop_footer_branch
    %11 = sbr.rel target = $region3
  $region8: #{fpn_psp_head_forward.5} parent=0 // loop_exit
    _

// kernel: squeeze.7
$region0: #{squeeze.7}
  %s0 = inlined_call_operand.vmem [shape: bf16[1,72,16], index: 0, kind: input, shape index: {}]
  %s1 = inlined_call_operand.vmem [shape: bf16[2,6,6,16], index: 1, kind: output, shape index: {}]
  $region1: #{squeeze.7} parent=0
    #allocation0 [shape = 'u8[49152]{0}', space=vmem, size = 0xc000, scoped, tag = 'scoped mem for output reshape']
    #allocation1 [shape = 'u8[36864]{0}', space=vmem, size = 0x9000, scoped, tag = 'scoped mem for input reshape']
    %s3 = smul.u32 4, 2
    %s4 = sshllo.u32 0, %s3
    %s5 = smul.addr 4, 8
    %s6 = scalar_lea.vmem %s0, %s5
    %s7 = sshrl.u32 %s4, 1
    %s8 = sor.u32 %s4, %s7
    %s9 = sand.u32 %s8, 85
    %s10 = sshrl.u32 %s9, 1
    %s11 = sor.u32 %s9, %s10
    %s12 = sand.u32 51, %s11
    %s13 = sshrl.u32 %s12, 2
    %s14 = sor.u32 %s12, %s13
    %s15 = sand.u32 15, %s14
    %v16 = vld [vmem:[%s6] sm:%s15]
    %v17 = vunpack.c.l.bf16 %v16
    %v18 = vunpack.c.h.bf16 %v16
    %s19 = scalar_lea.vmem [#allocation1], 64
    %20 = vst [vmem:[%s19] sm:%s4] %v17
    %s21 = smul.addr 4, 7
    %s22 = scalar_lea.vmem %s0, %s21
    %s23 = sshrl.u32 %s4, 1
    %s24 = sor.u32 %s4, %s23
    %s25 = sand.u32 %s24, 85
    %s26 = sshrl.u32 %s25, 1
    %s27 = sor.u32 %s25, %s26
    %s28 = sand.u32 51, %s27
    %s29 = sshrl.u32 %s28, 2
    %s30 = sor.u32 %s28, %s29
    %s31 = sand.u32 15, %s30
    %v32 = vld [vmem:[%s22] sm:%s31]
    %v33 = vunpack.c.l.bf16 %v32
    %v34 = vunpack.c.h.bf16 %v32
    %s35 = scalar_lea.vmem [#allocation1], 56
    %36 = vst [vmem:[%s35] sm:%s4] %v33
    %s37 = smul.addr 4, 6
    %s38 = scalar_lea.vmem %s0, %s37
    %s39 = sshrl.u32 %s4, 1
    %s40 = sor.u32 %s4, %s39
    %s41 = sand.u32 %s40, 85
    %s42 = sshrl.u32 %s41, 1
    %s43 = sor.u32 %s41, %s42
    %s44 = sand.u32 51, %s43
    %s45 = sshrl.u32 %s44, 2
    %s46 = sor.u32 %s44, %s45
    %s47 = sand.u32 15, %s46
    %v48 = vld [vmem:[%s38] sm:%s47]
    %v49 = vunpack.c.l.bf16 %v48
    %v50 = vunpack.c.h.bf16 %v48
    %s51 = scalar_lea.vmem [#allocation1], 48
    %52 = vst [vmem:[%s51] sm:%s4] %v49
    %s53 = smul.addr 4, 5
    %s54 = scalar_lea.vmem %s0, %s53
    %s55 = sshrl.u32 %s4, 1
    %s56 = sor.u32 %s4, %s55
    %s57 = sand.u32 %s56, 85
    %s58 = sshrl.u32 %s57, 1
    %s59 = sor.u32 %s57, %s58
    %s60 = sand.u32 51, %s59
    %s61 = sshrl.u32 %s60, 2
    %s62 = sor.u32 %s60, %s61
    %s63 = sand.u32 15, %s62
    %v64 = vld [vmem:[%s54] sm:%s63]
    %v65 = vunpack.c.l.bf16 %v64
    %v66 = vunpack.c.h.bf16 %v64
    %s67 = scalar_lea.vmem [#allocation1], 40
    %68 = vst [vmem:[%s67] sm:%s4] %v65
    %s69 = smul.addr 4, 4
    %s70 = scalar_lea.vmem %s0, %s69
    %s71 = sshrl.u32 %s4, 1
    %s72 = sor.u32 %s4, %s71
    %s73 = sand.u32 %s72, 85
    %s74 = sshrl.u32 %s73, 1
    %s75 = sor.u32 %s73, %s74
    %s76 = sand.u32 51, %s75
    %s77 = sshrl.u32 %s76, 2
    %s78 = sor.u32 %s76, %s77
    %s79 = sand.u32 15, %s78
    %v80 = vld [vmem:[%s70] sm:%s79]
    %v81 = vunpack.c.l.bf16 %v80
    %v82 = vunpack.c.h.bf16 %v80
    %s83 = scalar_lea.vmem [#allocation1], 32
    %84 = vst [vmem:[%s83] sm:%s4] %v81
    %s85 = smul.addr 4, 3
    %s86 = scalar_lea.vmem %s0, %s85
    %s87 = sshrl.u32 %s4, 1
    %s88 = sor.u32 %s4, %s87
    %s89 = sand.u32 %s88, 85
    %s90 = sshrl.u32 %s89, 1
    %s91 = sor.u32 %s89, %s90
    %s92 = sand.u32 51, %s91
    %s93 = sshrl.u32 %s92, 2
    %s94 = sor.u32 %s92, %s93
    %s95 = sand.u32 15, %s94
    %v96 = vld [vmem:[%s86] sm:%s95]
    %v97 = vunpack.c.l.bf16 %v96
    %v98 = vunpack.c.h.bf16 %v96
    %s99 = scalar_lea.vmem [#allocation1], 24
    %100 = vst [vmem:[%s99] sm:%s4] %v97
    %s101 = smul.addr 4, 2
    %s102 = scalar_lea.vmem %s0, %s101
    %s103 = sshrl.u32 %s4, 1
    %s104 = sor.u32 %s4, %s103
    %s105 = sand.u32 %s104, 85
    %s106 = sshrl.u32 %s105, 1
    %s107 = sor.u32 %s105, %s106
    %s108 = sand.u32 51, %s107
    %s109 = sshrl.u32 %s108, 2
    %s110 = sor.u32 %s108, %s109
    %s111 = sand.u32 15, %s110
    %v112 = vld [vmem:[%s102] sm:%s111]
    %v113 = vunpack.c.l.bf16 %v112
    %v114 = vunpack.c.h.bf16 %v112
    %s115 = scalar_lea.vmem [#allocation1], 16
    %116 = vst [vmem:[%s115] sm:%s4] %v113
    %s117 = scalar_lea.vmem %s0, 4
    %s118 = sshrl.u32 %s4, 1
    %s119 = sor.u32 %s4, %s118
    %s120 = sand.u32 %s119, 85
    %s121 = sshrl.u32 %s120, 1
    %s122 = sor.u32 %s120, %s121
    %s123 = sand.u32 51, %s122
    %s124 = sshrl.u32 %s123, 2
    %s125 = sor.u32 %s123, %s124
    %s126 = sand.u32 15, %s125
    %v127 = vld [vmem:[%s117] sm:%s126]
    %v128 = vunpack.c.l.bf16 %v127
    %v129 = vunpack.c.h.bf16 %v127
    %s130 = scalar_lea.vmem [#allocation1], 8
    %131 = vst [vmem:[%s130] sm:%s4] %v128
    %s132 = sshrl.u32 %s4, 1
    %s133 = sor.u32 %s4, %s132
    %s134 = sand.u32 %s133, 85
    %s135 = sshrl.u32 %s134, 1
    %s136 = sor.u32 %s134, %s135
    %s137 = sand.u32 51, %s136
    %s138 = sshrl.u32 %s137, 2
    %s139 = sor.u32 %s137, %s138
    %s140 = sand.u32 15, %s139
    %v141 = vld [vmem:[%s0] sm:%s140]
    %v142 = vunpack.c.l.bf16 %v141
    %v143 = vunpack.c.h.bf16 %v141
    %144 = vst [vmem:[#allocation1] sm:%s4] %v142
    %v145 = vld [vmem:[#allocation1] sm:$0xff]
    %vm146 = vcmask 130048
    %147 = vst.msk [vmem:[#allocation0] sm:$0x3f] %vm146, %v145
    %s148 = scalar_lea.vmem [#allocation0], 2
    %149 = vst.msk [vmem:[%s148] sm:$0xc0] %vm146, %v145
    %s150 = scalar_lea.vmem [#allocation1], 8
    %v151 = vld [vmem:[%s150] sm:$0xff]
    %vm152 = vcmask 130048
    %s153 = scalar_lea.vmem [#allocation0], 10
    %154 = vst.msk [vmem:[%s153] sm:$0xf] %vm152, %v151
    %s155 = scalar_lea.vmem [#allocation0], 12
    %156 = vst.msk [vmem:[%s155] sm:$0xf0] %vm152, %v151
    %s157 = scalar_lea.vmem [#allocation1], 16
    %v158 = vld [vmem:[%s157] sm:$0xff]
    %vm159 = vcmask 130048
    %s160 = scalar_lea.vmem [#allocation0], 20
    %161 = vst.msk [vmem:[%s160] sm:$0x3] %vm159, %v158
    %s162 = scalar_lea.vmem [#allocation0], 22
    %163 = vst.msk [vmem:[%s162] sm:$0xfc] %vm159, %v158
    %s164 = scalar_lea.vmem [#allocation1], 24
    %v165 = vld [vmem:[%s164] sm:$0xff]
    %vm166 = vcmask 130048
    %s167 = scalar_lea.vmem [#allocation0], 32
    %168 = vst.msk [vmem:[%s167] sm:$0x3f] %vm166, %v165
    %s169 = scalar_lea.vmem [#allocation0], 34
    %170 = vst.msk [vmem:[%s169] sm:$0xc0] %vm166, %v165
    %s171 = scalar_lea.vmem [#allocation1], 32
    %v172 = vld [vmem:[%s171] sm:$0xff]
    %vm173 = vcmask 130048
    %s174 = scalar_lea.vmem [#allocation0], 42
    %175 = vst.msk [vmem:[%s174] sm:$0xf] %vm173, %v172
    %s176 = scalar_lea.vmem [#allocation0], 44
    %177 = vst.msk [vmem:[%s176] sm:$0xf0] %vm173, %v172
    %s178 = scalar_lea.vmem [#allocation1], 40
    %v179 = vld [vmem:[%s178] sm:$0xff]
    %vm180 = vcmask 130048
    %s181 = scalar_lea.vmem [#allocation0], 52
    %182 = vst.msk [vmem:[%s181] sm:$0x3] %vm180, %v179
    %s183 = scalar_lea.vmem [#allocation0], 54
    %184 = vst.msk [vmem:[%s183] sm:$0xfc] %vm180, %v179
    %s185 = scalar_lea.vmem [#allocation1], 48
    %v186 = vld [vmem:[%s185] sm:$0xff]
    %vm187 = vcmask 130048
    %s188 = scalar_lea.vmem [#allocation0], 64
    %189 = vst.msk [vmem:[%s188] sm:$0x3f] %vm187, %v186
    %s190 = scalar_lea.vmem [#allocation0], 66
    %191 = vst.msk [vmem:[%s190] sm:$0xc0] %vm187, %v186
    %s192 = scalar_lea.vmem [#allocation1], 56
    %v193 = vld [vmem:[%s192] sm:$0xff]
    %vm194 = vcmask 130048
    %s195 = scalar_lea.vmem [#allocation0], 74
    %196 = vst.msk [vmem:[%s195] sm:$0xf] %vm194, %v193
    %s197 = scalar_lea.vmem [#allocation0], 76
    %198 = vst.msk [vmem:[%s197] sm:$0xf0] %vm194, %v193
    %s199 = scalar_lea.vmem [#allocation1], 64
    %v200 = vld [vmem:[%s199] sm:$0xff]
    %vm201 = vcmask 130048
    %s202 = scalar_lea.vmem [#allocation0], 84
    %203 = vst.msk [vmem:[%s202] sm:$0x3] %vm201, %v200
    %s204 = scalar_lea.vmem [#allocation0], 86
    %205 = vst.msk [vmem:[%s204] sm:$0xfc] %vm201, %v200
    %s207 = smul.u32 4, 2
    %s208 = sshllo.u32 0, %s207
    %s209 = sshrl.u32 %s207, 1
    %v210 = vld [vmem:[#allocation0] sm:%s208]
    %v211 = vpack.c.bf16 0.0, %v210
    %s212 = sshllo.u32 0, %s209
    %213 = vst [vmem:[%s1] sm:%s212] %v211
    %s214 = scalar_lea.vmem [#allocation0], 8
    %v215 = vld [vmem:[%s214] sm:%s208]
    %v216 = vpack.c.bf16 0.0, %v215
    %s217 = sshllo.u32 0, %s209
    %s218 = scalar_lea.vmem %s1, 4
    %219 = vst [vmem:[%s218] sm:%s217] %v216
    %s220 = scalar_lea.vmem [#allocation0], 16
    %v221 = vld [vmem:[%s220] sm:%s208]
    %v222 = vpack.c.bf16 0.0, %v221
    %s223 = sshllo.u32 0, %s209
    %s224 = smul.addr 4, 2
    %s225 = scalar_lea.vmem %s1, %s224
    %226 = vst [vmem:[%s225] sm:%s223] %v222
    %s227 = scalar_lea.vmem [#allocation0], 24
    %v228 = vld [vmem:[%s227] sm:%s208]
    %v229 = vpack.c.bf16 0.0, %v228
    %s230 = sshllo.u32 0, %s209
    %s231 = smul.addr 4, 3
    %s232 = scalar_lea.vmem %s1, %s231
    %233 = vst [vmem:[%s232] sm:%s230] %v229
    %s234 = scalar_lea.vmem [#allocation0], 32
    %v235 = vld [vmem:[%s234] sm:%s208]
    %v236 = vpack.c.bf16 0.0, %v235
    %s237 = sshllo.u32 0, %s209
    %s238 = smul.addr 4, 4
    %s239 = scalar_lea.vmem %s1, %s238
    %240 = vst [vmem:[%s239] sm:%s237] %v236
    %s241 = scalar_lea.vmem [#allocation0], 40
    %v242 = vld [vmem:[%s241] sm:%s208]
    %v243 = vpack.c.bf16 0.0, %v242
    %s244 = sshllo.u32 0, %s209
    %s245 = smul.addr 4, 5
    %s246 = scalar_lea.vmem %s1, %s245
    %247 = vst [vmem:[%s246] sm:%s244] %v243
    %s248 = scalar_lea.vmem [#allocation0], 48
    %v249 = vld [vmem:[%s248] sm:%s208]
    %v250 = vpack.c.bf16 0.0, %v249
    %s251 = sshllo.u32 0, %s209
    %s252 = smul.addr 4, 6
    %s253 = scalar_lea.vmem %s1, %s252
    %254 = vst [vmem:[%s253] sm:%s251] %v250
    %s255 = scalar_lea.vmem [#allocation0], 56
    %v256 = vld [vmem:[%s255] sm:%s208]
    %v257 = vpack.c.bf16 0.0, %v256
    %s258 = sshllo.u32 0, %s209
    %s259 = smul.addr 4, 7
    %s260 = scalar_lea.vmem %s1, %s259
    %261 = vst [vmem:[%s260] sm:%s258] %v257
    %s262 = scalar_lea.vmem [#allocation0], 64
    %v263 = vld [vmem:[%s262] sm:%s208]
    %v264 = vpack.c.bf16 0.0, %v263
    %s265 = sshllo.u32 0, %s209
    %s266 = smul.addr 4, 8
    %s267 = scalar_lea.vmem %s1, %s266
    %268 = vst [vmem:[%s267] sm:%s265] %v264
    %s269 = scalar_lea.vmem [#allocation0], 72
    %v270 = vld [vmem:[%s269] sm:%s208]
    %v271 = vpack.c.bf16 0.0, %v270
    %s272 = sshllo.u32 0, %s209
    %s273 = smul.addr 4, 9
    %s274 = scalar_lea.vmem %s1, %s273
    %275 = vst [vmem:[%s274] sm:%s272] %v271
    %s276 = scalar_lea.vmem [#allocation0], 80
    %v277 = vld [vmem:[%s276] sm:%s208]
    %v278 = vpack.c.bf16 0.0, %v277
    %s279 = sshllo.u32 0, %s209
    %s280 = smul.addr 4, 10
    %s281 = scalar_lea.vmem %s1, %s280
    %282 = vst [vmem:[%s281] sm:%s279] %v278
    %s283 = scalar_lea.vmem [#allocation0], 88
    %v284 = vld [vmem:[%s283] sm:%s208]
    %v285 = vpack.c.bf16 0.0, %v284
    %s286 = sshllo.u32 0, %s209
    %s287 = smul.addr 4, 11
    %s288 = scalar_lea.vmem %s1, %s287
    %289 = vst [vmem:[%s288] sm:%s286] %v285

// kernel: fpn_psp_head_forward.6
$region0: #{fpn_psp_head_forward.6}
  #allocation0 [shape = 'u32[]', space=smem, size = 0x4, offset = 0x4, fixed_abs, tag = 'smem constant byte address 0x4 - core index']
  #allocation1 [shape = 'u32[144,128]{1,0:T(1,128)}', space=vmem, size = 0x12000, scoped, tag = 'internal scratch']
  #allocation2 [shape = 'f32[192,16]{1,0:T(8,128)}', space=vmem, size = 0x18000, scoped, tag = 'scratch operand']
  %s0 = inlined_call_operand.vmem [shape: bf16[2,2,264,16], index: 0, kind: input, shape index: {}]
  %s1 = inlined_call_operand.vmem [shape: bf16[3,3,16,16], index: 1, kind: input, shape index: {}]
  %s2 = inlined_call_operand.vmem [shape: f32[1,16], index: 2, kind: input, shape index: {}]
  %s3 = inlined_call_operand.vmem [shape: bf16[16,64], index: 3, kind: input, shape index: {}]
  %s4 = inlined_call_operand.vmem [shape: f32[1,64], index: 4, kind: input, shape index: {}]
  %s5 = inlined_call_operand.vmem [shape: bf16[2,2,192,64], index: 5, kind: input, shape index: {}]
  %s6 = inlined_call_operand.vmem [shape: bf16[2,2,192,64], index: 6, kind: output, shape index: {}]
  %s7 = sld [smem:[#allocation0]]
  $region69: #{fpn_psp_head_forward.6} parent=0
    _
  %s9 = ssub.s32 1, %s7
  %s10 = scalar_select 0, %s9, %s7
  loop: start=0, step=1, limit=14
  $region2: #{fpn_psp_head_forward.6} parent=0 // loop_pre_header
    _
  $region3: #{fpn_psp_head_forward.6} parent=0 // loop_header
    %s12 = sphi 0, %s16
    %p13 = scmp.ge.s32.totalorder %s12, 14
    %s19 = sphi 0, %s38
    %s20 = sphi 0, %s34
    %s21 = sphi 0, %s30
    %s22 = sphi 0, %s19
    %s23 = sphi 0, %s20
    %s24 = sphi 0, %s21
    %s25 = sphi 0, %s22
    %s26 = sphi 0, %s23
    %s27 = sphi 0, %s24
    %s43 = sphi 0, %s45
    %s46 = sphi 0, %s43
    %s47 = sphi 0, %s46
    %s63 = sphi 0, %s47
    %s69 = sphi 0, %s71
    %s72 = sphi 0, %s69
    %s73 = sphi 0, %s72
    %s89 = sphi 0, %s73
    %s93 = sphi 0, %s93
    %s95 = sphi 0, %s93
    %s96 = sphi 0, %s95
    %s110 = sphi 0, %s96
    %s114 = sphi 0, %s114
    %s116 = sphi 0, %s114
    %s117 = sphi 0, %s116
    %s131 = sphi 0, %s117
    %s135 = sphi 0, %s135
    %s137 = sphi 0, %s135
    %s138 = sphi 0, %s137
    %s152 = sphi 0, %s138
    %s160 = sphi 0, %s162
    %s163 = sphi 0, %s160
    %s164 = sphi 0, %s163
    %s180 = sphi 0, %s164
    %s188 = sphi 0, %s190
    %s191 = sphi 0, %s188
    %s192 = sphi 0, %s191
    %s208 = sphi 0, %s192
  $region4: #{fpn_psp_head_forward.6} parent=0 // loop_header_branch
    %15 = sbr.rel (%p13) target = $region8
  $region5: #{fpn_psp_head_forward.6} parent=0 // loop_body
    %s17 = ssub.s32 %s12, 1
    %s18 = ssub.s32 %s12, 2
    %s28 = sadd.s32 1, %s21
    %p29 = scmp.ge.s32.totalorder %s28, 3
    %s30 = scalar_select %p29, 0, %s28
    %s31 = sadd.s32 1, %s20
    %s32 = scalar_select %p29, %s31, %s20
    %p33 = scmp.ge.s32.totalorder %s32, 2
    %s34 = scalar_select %p33, 0, %s32
    %s35 = sadd.s32 1, %s19
    %s36 = scalar_select %p33, %s35, %s19
    %p37 = scmp.ge.s32.totalorder %s36, 2
    %s38 = scalar_select %p37, 0, %s36
    %s39 = ssub.s32 %s19, %s38
    %s40 = ssub.s32 %s20, %s34
    %s41 = sor.u32 %s39, %s40
    %p42 = scmp.eq.s32.totalorder %s41, 0
    %s44 = sadd.s32 %s43, 1
    %s45 = scalar_select %p42, %s43, %s44
    %p48 = pneg %p42
    %p49 = scmp.eq.s32.totalorder %s12, 11
    %p50 = por %p48, %p49
    %p51 = scmp.ne.s32.totalorder %s43, %s46
    %p52 = scmp.eq.s32.totalorder %s12, 0
    %p53 = por %p51, %p52
    %p54 = scmp.ne.s32.totalorder %s43, %s46
    %p55 = scmp.eq.s32.totalorder %s17, 11
    %p56 = por %p54, %p55
    %p57 = scmp.ne.s32.totalorder %s46, %s47
    %p58 = scmp.eq.s32.totalorder %s17, 0
    %p59 = por %p57, %p58
    %p60 = scmp.ne.s32.totalorder %s46, %s47
    %p61 = scmp.eq.s32.totalorder %s18, 11
    %p62 = por %p60, %p61
    %p64 = scmp.ne.s32.totalorder %s47, %s63
    %p65 = scmp.eq.s32.totalorder %s18, 0
    %p66 = por %p64, %p65
    %s67 = ssub.s32 %s21, %s30
    %p68 = scmp.eq.s32.totalorder %s67, 0
    %s70 = sadd.s32 %s69, 1
    %s71 = scalar_select %p68, %s69, %s70
    %p74 = pneg %p68
    %p75 = scmp.eq.s32.totalorder %s12, 11
    %p76 = por %p74, %p75
    %p77 = scmp.ne.s32.totalorder %s69, %s72
    %p78 = scmp.eq.s32.totalorder %s12, 0
    %p79 = por %p77, %p78
    %p80 = scmp.ne.s32.totalorder %s69, %s72
    %p81 = scmp.eq.s32.totalorder %s17, 11
    %p82 = por %p80, %p81
    %p83 = scmp.ne.s32.totalorder %s72, %s73
    %p84 = scmp.eq.s32.totalorder %s17, 0
    %p85 = por %p83, %p84
    %p86 = scmp.ne.s32.totalorder %s72, %s73
    %p87 = scmp.eq.s32.totalorder %s18, 11
    %p88 = por %p86, %p87
    %p90 = scmp.ne.s32.totalorder %s73, %s89
    %p91 = scmp.eq.s32.totalorder %s18, 0
    %p92 = por %p90, %p91
    %s94 = sadd.s32 %s93, 1
    %p97 = scmp.eq.s32.totalorder %s12, 11
    %p98 = scmp.ne.s32.totalorder %s93, %s95
    %p99 = scmp.eq.s32.totalorder %s12, 0
    %p100 = por %p98, %p99
    %p101 = scmp.ne.s32.totalorder %s93, %s95
    %p102 = scmp.eq.s32.totalorder %s17, 11
    %p103 = por %p101, %p102
    %p104 = scmp.ne.s32.totalorder %s95, %s96
    %p105 = scmp.eq.s32.totalorder %s17, 0
    %p106 = por %p104, %p105
    %p107 = scmp.ne.s32.totalorder %s95, %s96
    %p108 = scmp.eq.s32.totalorder %s18, 11
    %p109 = por %p107, %p108
    %p111 = scmp.ne.s32.totalorder %s96, %s110
    %p112 = scmp.eq.s32.totalorder %s18, 0
    %p113 = por %p111, %p112
    %s115 = sadd.s32 %s114, 1
    %p118 = scmp.eq.s32.totalorder %s12, 11
    %p119 = scmp.ne.s32.totalorder %s114, %s116
    %p120 = scmp.eq.s32.totalorder %s12, 0
    %p121 = por %p119, %p120
    %p122 = scmp.ne.s32.totalorder %s114, %s116
    %p123 = scmp.eq.s32.totalorder %s17, 11
    %p124 = por %p122, %p123
    %p125 = scmp.ne.s32.totalorder %s116, %s117
    %p126 = scmp.eq.s32.totalorder %s17, 0
    %p127 = por %p125, %p126
    %p128 = scmp.ne.s32.totalorder %s116, %s117
    %p129 = scmp.eq.s32.totalorder %s18, 11
    %p130 = por %p128, %p129
    %p132 = scmp.ne.s32.totalorder %s117, %s131
    %p133 = scmp.eq.s32.totalorder %s18, 0
    %p134 = por %p132, %p133
    %s136 = sadd.s32 %s135, 1
    %p139 = scmp.eq.s32.totalorder %s12, 11
    %p140 = scmp.ne.s32.totalorder %s135, %s137
    %p141 = scmp.eq.s32.totalorder %s12, 0
    %p142 = por %p140, %p141
    %p143 = scmp.ne.s32.totalorder %s135, %s137
    %p144 = scmp.eq.s32.totalorder %s17, 11
    %p145 = por %p143, %p144
    %p146 = scmp.ne.s32.totalorder %s137, %s138
    %p147 = scmp.eq.s32.totalorder %s17, 0
    %p148 = por %p146, %p147
    %p149 = scmp.ne.s32.totalorder %s137, %s138
    %p150 = scmp.eq.s32.totalorder %s18, 11
    %p151 = por %p149, %p150
    %p153 = scmp.ne.s32.totalorder %s138, %s152
    %p154 = scmp.eq.s32.totalorder %s18, 0
    %p155 = por %p153, %p154
    %s156 = ssub.s32 %s19, %s38
    %s157 = ssub.s32 %s20, %s34
    %s158 = sor.u32 %s156, %s157
    %p159 = scmp.eq.s32.totalorder %s158, 0
    %s161 = sadd.s32 %s160, 1
    %s162 = scalar_select %p159, %s160, %s161
    %p165 = pneg %p159
    %p166 = scmp.eq.s32.totalorder %s12, 11
    %p167 = por %p165, %p166
    %p168 = scmp.ne.s32.totalorder %s160, %s163
    %p169 = scmp.eq.s32.totalorder %s12, 0
    %p170 = por %p168, %p169
    %p171 = scmp.ne.s32.totalorder %s160, %s163
    %p172 = scmp.eq.s32.totalorder %s17, 11
    %p173 = por %p171, %p172
    %p174 = scmp.ne.s32.totalorder %s163, %s164
    %p175 = scmp.eq.s32.totalorder %s17, 0
    %p176 = por %p174, %p175
    %p177 = scmp.ne.s32.totalorder %s163, %s164
    %p178 = scmp.eq.s32.totalorder %s18, 11
    %p179 = por %p177, %p178
    %p181 = scmp.ne.s32.totalorder %s164, %s180
    %p182 = scmp.eq.s32.totalorder %s18, 0
    %p183 = por %p181, %p182
    %s184 = ssub.s32 %s19, %s38
    %s185 = ssub.s32 %s20, %s34
    %s186 = sor.u32 %s184, %s185
    %p187 = scmp.eq.s32.totalorder %s186, 0
    %s189 = sadd.s32 %s188, 1
    %s190 = scalar_select %p187, %s188, %s189
    %p193 = pneg %p187
    %p194 = scmp.eq.s32.totalorder %s12, 11
    %p195 = por %p193, %p194
    %p196 = scmp.ne.s32.totalorder %s188, %s191
    %p197 = scmp.eq.s32.totalorder %s12, 0
    %p198 = por %p196, %p197
    %p199 = scmp.ne.s32.totalorder %s188, %s191
    %p200 = scmp.eq.s32.totalorder %s17, 11
    %p201 = por %p199, %p200
    %p202 = scmp.ne.s32.totalorder %s191, %s192
    %p203 = scmp.eq.s32.totalorder %s17, 0
    %p204 = por %p202, %p203
    %p205 = scmp.ne.s32.totalorder %s191, %s192
    %p206 = scmp.eq.s32.totalorder %s18, 11
    %p207 = por %p205, %p206
    %p209 = scmp.ne.s32.totalorder %s192, %s208
    %p210 = scmp.eq.s32.totalorder %s18, 0
    %p211 = por %p209, %p210
    %p212 = scmp.le.s32.totalorder 1, %s12
    %p213 = scmp.lt.s32.totalorder %s12, 13
    %p214 = pnand %p212, %p213
    %p215 = pneg %p214
    // Predicated region
    $region9: #{fpn_psp_head_forward.6} parent=5 // pred_check
      _
    $region10: #{fpn_psp_head_forward.6} parent=5 // pred_check_branch
      %217 = sbr.rel (%p214) target = $region12
    $region11: #{fpn_psp_head_forward.6} parent=5 // pred_region
      %s218 = ssub.s32 %s12, 1
      // Predicated region
      $region13: #{fpn_psp_head_forward.6} parent=11 // pred_check
        %p219 = pneg %p106
      $region14: #{fpn_psp_head_forward.6} parent=11 // pred_check_branch
        %221 = sbr.rel (%p219) target = $region16
      $region15: #{fpn_psp_head_forward.6} parent=11 // pred_region
        _
      $region16: #{fpn_psp_head_forward.6} parent=11 // pred_fallthru
        _
      // Predicated region
      $region17: #{fpn_psp_head_forward.6} parent=11 // pred_check
        %p222 = pneg %p127
      $region18: #{fpn_psp_head_forward.6} parent=11 // pred_check_branch
        %224 = sbr.rel (%p222) target = $region20
      $region19: #{fpn_psp_head_forward.6} parent=11 // pred_region
        _
      $region20: #{fpn_psp_head_forward.6} parent=11 // pred_fallthru
        _
      // Predicated region
      $region21: #{fpn_psp_head_forward.6} parent=11 // pred_check
        %p225 = pneg %p148
      $region22: #{fpn_psp_head_forward.6} parent=11 // pred_check_branch
        %227 = sbr.rel (%p225) target = $region24
      $region23: #{fpn_psp_head_forward.6} parent=11 // pred_region
        _
      $region24: #{fpn_psp_head_forward.6} parent=11 // pred_fallthru
        _
    $region12: #{fpn_psp_head_forward.6} parent=5 // pred_fallthru
      _
    %p228 = scmp.lt.s32.totalorder %s12, 12
    // Predicated region
    $region25: #{fpn_psp_head_forward.6} parent=5 // pred_check
      %p229 = pneg %p228
    $region26: #{fpn_psp_head_forward.6} parent=5 // pred_check_branch
      %231 = sbr.rel (%p229) target = $region28
    $region27: #{fpn_psp_head_forward.6} parent=5 // pred_region
      // Predicated region
      $region29: #{fpn_psp_head_forward.6} parent=27 // pred_check
        %p232 = pneg %p53
      $region30: #{fpn_psp_head_forward.6} parent=27 // pred_check_branch
        %234 = sbr.rel (%p232) target = $region32
      $region31: #{fpn_psp_head_forward.6} parent=27 // pred_region
        %p235 = scmp.lt.s32.totalorder %s19, 1
        %s236 = scalar_select %p235, %s19, 1
        %p237 = scmp.lt.s32.totalorder %s20, 1
        %s238 = scalar_select %p237, %s20, 1
        %s239 = smul.addr %s238, 33
        %s240 = smul.addr %s236, 66
        %s241 = sadd.s32 %s239, %s240
        %s242 = smul.addr %s241, 4
        %s243 = scalar_lea.vmem %s0, %s242
      $region32: #{fpn_psp_head_forward.6} parent=27 // pred_fallthru
        _
      // Predicated region
      $region33: #{fpn_psp_head_forward.6} parent=27 // pred_check
        %p244 = pneg %p79
      $region34: #{fpn_psp_head_forward.6} parent=27 // pred_check_branch
        %246 = sbr.rel (%p244) target = $region36
      $region35: #{fpn_psp_head_forward.6} parent=27 // pred_region
        %p247 = scmp.lt.s32.totalorder %s21, 2
        %s248 = scalar_select %p247, %s21, 2
        %s249 = smul.addr %s248, 6
        %s250 = smul.addr %s249, 4
        %s251 = scalar_lea.vmem %s1, %s250
      $region36: #{fpn_psp_head_forward.6} parent=27 // pred_fallthru
        _
      // Predicated region
      $region37: #{fpn_psp_head_forward.6} parent=27 // pred_check
        %p252 = pneg %p170
      $region38: #{fpn_psp_head_forward.6} parent=27 // pred_check_branch
        %254 = sbr.rel (%p252) target = $region40
      $region39: #{fpn_psp_head_forward.6} parent=27 // pred_region
        %p255 = scmp.lt.s32.totalorder %s19, 1
        %s256 = scalar_select %p255, %s19, 1
        %p257 = scmp.lt.s32.totalorder %s20, 1
        %s258 = scalar_select %p257, %s20, 1
        %s259 = smul.addr %s258, 24
        %s260 = smul.addr %s256, 48
        %s261 = sadd.s32 %s259, %s260
        %s262 = smul.addr %s261, 4
        %s263 = scalar_lea.vmem %s5, %s262
      $region40: #{fpn_psp_head_forward.6} parent=27 // pred_fallthru
        _
    $region28: #{fpn_psp_head_forward.6} parent=5 // pred_fallthru
      _
    %p264 = scmp.le.s32.totalorder 1, %s12
    %p265 = scmp.lt.s32.totalorder %s12, 13
    %p266 = pnand %p264, %p265
    %p267 = pneg %p266
    // Predicated region
    $region41: #{fpn_psp_head_forward.6} parent=5 // pred_check
      _
    $region42: #{fpn_psp_head_forward.6} parent=5 // pred_check_branch
      %269 = sbr.rel (%p266) target = $region44
    $region43: #{fpn_psp_head_forward.6} parent=5 // pred_region
      %s270 = ssub.s32 %s12, 1
      %p271 = scmp.lt.s32.totalorder %s22, 1
      %s272 = scalar_select %p271, %s22, 1
      %p273 = scmp.lt.s32.totalorder %s23, 1
      %s274 = scalar_select %p273, %s23, 1
      %s275 = smul.addr %s274, 33
      %s276 = smul.addr %s272, 66
      %s277 = sadd.s32 %s275, %s276
      %s278 = smul.addr %s277, 4
      %s279 = scalar_lea.vmem %s0, %s278
      %p280 = pneg %p59
      %p281 = pneg %p56
      %p282 = scmp.lt.s32.totalorder %s24, 2
      %s283 = scalar_select %p282, %s24, 2
      %s284 = smul.addr %s283, 6
      %s285 = smul.addr %s284, 4
      %s286 = scalar_lea.vmem %s1, %s285
      %p287 = pneg %p85
      %p288 = pneg %p82
      %p289 = pneg %p106
      %p290 = pneg %p103
      %p291 = pneg %p127
      %p292 = pneg %p124
      %p293 = pneg %p148
      %p294 = pneg %p145
      %p295 = scmp.lt.s32.totalorder %s22, 1
      %s296 = scalar_select %p295, %s22, 1
      %p297 = scmp.lt.s32.totalorder %s23, 1
      %s298 = scalar_select %p297, %s23, 1
      %s299 = smul.addr %s298, 24
      %s300 = smul.addr %s296, 48
      %s301 = sadd.s32 %s299, %s300
      %s302 = smul.addr %s301, 4
      %s303 = scalar_lea.vmem %s5, %s302
      %p304 = pneg %p176
      %p305 = pneg %p173
      %p306 = pneg %p204
      %p307 = pneg %p201
      %p308 = scmp.lt.s32.totalorder %s22, 1
      %s309 = scalar_select %p308, %s22, 1
      %p310 = scmp.lt.s32.totalorder %s23, 1
      %s311 = scalar_select %p310, %s23, 1
      %s312 = smul.addr %s311, 24
      %s313 = smul.addr %s309, 48
      %s314 = sadd.s32 %s312, %s313
      %s315 = smul.addr %s314, 4
      %s316 = scalar_lea.vmem %s6, %s315
      %p317 = scmp.lt.s32.totalorder %s22, 1
      %s318 = scalar_select %p317, %s22, 1
      %p319 = scmp.lt.s32.totalorder %s23, 1
      %s320 = scalar_select %p319, %s23, 1
      %s321 = smul.addr %s320, 33
      %s322 = smul.addr %s318, 66
      %s323 = sadd.s32 %s321, %s322
      %s324 = smul.addr %s323, 4
      %s325 = scalar_lea.vmem %s0, %s324
      %p326 = scmp.lt.s32.totalorder %s24, 2
      %s327 = scalar_select %p326, %s24, 2
      %s328 = smul.addr %s327, 6
      %s329 = smul.addr %s328, 4
      %s330 = scalar_lea.vmem %s1, %s329
      %p331 = scmp.lt.s32.totalorder %s22, 1
      %s332 = scalar_select %p331, %s22, 1
      %p333 = scmp.lt.s32.totalorder %s23, 1
      %s334 = scalar_select %p333, %s23, 1
      %s335 = smul.addr %s334, 24
      %s336 = smul.addr %s332, 48
      %s337 = sadd.s32 %s335, %s336
      %s338 = smul.addr %s337, 4
      %s339 = scalar_lea.vmem %s5, %s338
      %p340 = scmp.lt.s32.totalorder %s22, 1
      %s341 = scalar_select %p340, %s22, 1
      %p342 = scmp.lt.s32.totalorder %s23, 1
      %s343 = scalar_select %p342, %s23, 1
      %s344 = smul.addr %s343, 24
      %s345 = smul.addr %s341, 48
      %s346 = sadd.s32 %s344, %s345
      %s347 = smul.addr %s346, 4
      %s348 = scalar_lea.vmem %s6, %s347
      %p350 = scmp.eq.s32.totalorder %s24, 0
      // Predicated region
      $region45: #{fpn_psp_head_forward.6} parent=43 // pred_check
        %p351 = pneg %p350
      $region46: #{fpn_psp_head_forward.6} parent=43 // pred_check_branch
        %353 = sbr.rel (%p351) target = $region48
      $region47: #{fpn_psp_head_forward.6} parent=43 // pred_region
        %vm354 = vcmask 130048
        %355 = vst.msk [vmem:[#allocation2] sm:$0xff] %vm354, 0.0
        %356 = vst.msk [vmem:[#allocation2 + $0x8] sm:$0xff] %vm354, 0.0
        %357 = vst.msk [vmem:[#allocation2 + $0x10] sm:$0xff] %vm354, 0.0
        %358 = vst.msk [vmem:[#allocation2 + $0x18] sm:$0xff] %vm354, 0.0
        %359 = vst.msk [vmem:[#allocation2 + $0x20] sm:$0xff] %vm354, 0.0
        %360 = vst.msk [vmem:[#allocation2 + $0x28] sm:$0xff] %vm354, 0.0
        %361 = vst.msk [vmem:[#allocation2 + $0x30] sm:$0xff] %vm354, 0.0
        %362 = vst.msk [vmem:[#allocation2 + $0x38] sm:$0xff] %vm354, 0.0
        %363 = vst.msk [vmem:[#allocation2 + $0x40] sm:$0xff] %vm354, 0.0
        %364 = vst.msk [vmem:[#allocation2 + $0x48] sm:$0xff] %vm354, 0.0
        %365 = vst.msk [vmem:[#allocation2 + $0x50] sm:$0xff] %vm354, 0.0
        %366 = vst.msk [vmem:[#allocation2 + $0x58] sm:$0xff] %vm354, 0.0
        %367 = vst.msk [vmem:[#allocation2 + $0x60] sm:$0xff] %vm354, 0.0
        %368 = vst.msk [vmem:[#allocation2 + $0x68] sm:$0xff] %vm354, 0.0
        %369 = vst.msk [vmem:[#allocation2 + $0x70] sm:$0xff] %vm354, 0.0
        %370 = vst.msk [vmem:[#allocation2 + $0x78] sm:$0xff] %vm354, 0.0
        %371 = vst.msk [vmem:[#allocation2 + $0x80] sm:$0xff] %vm354, 0.0
        %372 = vst.msk [vmem:[#allocation2 + $0x88] sm:$0xff] %vm354, 0.0
        %373 = vst.msk [vmem:[#allocation2 + $0x90] sm:$0xff] %vm354, 0.0
        %374 = vst.msk [vmem:[#allocation2 + $0x98] sm:$0xff] %vm354, 0.0
        %375 = vst.msk [vmem:[#allocation2 + $0xa0] sm:$0xff] %vm354, 0.0
        %376 = vst.msk [vmem:[#allocation2 + $0xa8] sm:$0xff] %vm354, 0.0
        %377 = vst.msk [vmem:[#allocation2 + $0xb0] sm:$0xff] %vm354, 0.0
        %378 = vst.msk [vmem:[#allocation2 + $0xb8] sm:$0xff] %vm354, 0.0
        %v379 = vld [vmem:[%s325] sm:$0xf]
        %v380 = vld [vmem:[%s325 + $0x4] sm:$0xf]
        %v381 = vld [vmem:[%s325 + $0x8] sm:$0xf]
        %v382 = vld [vmem:[%s325 + $0xc] sm:$0xf]
        %v383 = vld [vmem:[%s325 + $0x10] sm:$0xf]
        %v384 = vld [vmem:[%s325 + $0x14] sm:$0xf]
        %v385 = vld [vmem:[%s325 + $0x18] sm:$0xf]
        %v386 = vld [vmem:[%s325 + $0x1c] sm:$0xf]
        %v387 = vld [vmem:[%s325 + $0x20] sm:$0xf]
        %v388 = vld [vmem:[%s325 + $0x24] sm:$0xf]
        %v389 = vld [vmem:[%s325 + $0x28] sm:$0xf]
        %v390 = vld [vmem:[%s325 + $0x2c] sm:$0xf]
        %v391 = vld [vmem:[%s325 + $0x30] sm:$0xf]
        %v392 = vld [vmem:[%s325 + $0x34] sm:$0xf]
        %v393 = vld [vmem:[%s325 + $0x38] sm:$0xf]
        %v394 = vld [vmem:[%s325 + $0x3c] sm:$0xf]
        %v395 = vld [vmem:[%s325 + $0x40] sm:$0xf]
        %v396 = vld [vmem:[%s325 + $0x44] sm:$0xf]
        %v397 = vld [vmem:[%s325 + $0x48] sm:$0xf]
        %v398 = vld [vmem:[%s325 + $0x4c] sm:$0xf]
        %v399 = vld [vmem:[%s325 + $0x50] sm:$0xf]
        %v400 = vld [vmem:[%s325 + $0x54] sm:$0xf]
        %v401 = vld [vmem:[%s325 + $0x58] sm:$0xf]
        %v402 = vld [vmem:[%s325 + $0x5c] sm:$0xf]
        %v403 = vld [vmem:[%s330] sm:$0xf]
        %v404 = vld [vmem:[%s330 + $0x4] sm:$0xf]
        %v405 = vld [vmem:[%s325 + $0x60] sm:$0x1]
        %s406 = scalar_lea.vmem %s330, 8
        %v407 = vld [vmem:[%s406] sm:$0xf]
        %v408 = vld [vmem:[%s406 + $0x4] sm:$0xf]
        %v434 = vunpack.c.l.b16 %v379
        %v435 = vunpack.c.l.b16 %v380
        %v436 = vunpack.c.l.b16 %v381
        %v437 = vunpack.c.l.b16 %v382
        %v438 = vunpack.c.l.b16 %v383
        %v439 = vunpack.c.l.b16 %v384
        %v440 = vunpack.c.l.b16 %v385
        %v441 = vunpack.c.l.b16 %v386
        %v442 = vunpack.c.l.b16 %v387
        %v443 = vunpack.c.l.b16 %v388
        %v444 = vunpack.c.l.b16 %v389
        %v445 = vunpack.c.l.b16 %v390
        %v446 = vunpack.c.l.b16 %v391
        %v447 = vunpack.c.l.b16 %v392
        %v448 = vunpack.c.l.b16 %v393
        %v449 = vunpack.c.l.b16 %v394
        %v450 = vunpack.c.l.b16 %v395
        %v451 = vunpack.c.l.b16 %v396
        %v452 = vunpack.c.l.b16 %v397
        %v453 = vunpack.c.l.b16 %v398
        %v454 = vunpack.c.l.b16 %v399
        %v455 = vunpack.c.l.b16 %v400
        %v456 = vunpack.c.l.b16 %v401
        %v457 = vunpack.c.l.b16 %v402
        %v458 = vunpack.c.l.b16 %v405
        %v459 = vpack.c.b16 %v435, %v434
        %v460 = vpack.c.b16 %v437, %v436
        %v461 = vpack.c.b16 %v439, %v438
        %v462 = vpack.c.b16 %v441, %v440
        %v463 = vpack.c.b16 %v443, %v442
        %v464 = vpack.c.b16 %v445, %v444
        %v465 = vpack.c.b16 %v447, %v446
        %v466 = vpack.c.b16 %v449, %v448
        %v467 = vpack.c.b16 %v451, %v450
        %v468 = vpack.c.b16 %v453, %v452
        %v469 = vpack.c.b16 %v455, %v454
        %v470 = vpack.c.b16 %v457, %v456
        %v471 = vpack.c.b16 %v458, %v458
        %vm472 = vsmask.f32 7424
        %v474 = vshrl.u32 %v459, 16
        %v476 = vshll.u32 %v459, 16
        %v478 = vrot.slane %v476, 1
        %v479 = vor.u32 %v474, %v478
        %v481 = vshll.u32 %v460, 16
        %v483 = vrot.slane %v481, 1
        %v484 = vsel %vm472, %v479, %v483
        %v485 = vshrl.u32 %v460, 16
        %v487 = vor.u32 %v485, %v483
        %v489 = vshll.u32 %v461, 16
        %v491 = vrot.slane %v489, 1
        %v492 = vsel %vm472, %v487, %v491
        %v493 = vshrl.u32 %v461, 16
        %v495 = vor.u32 %v493, %v491
        %v497 = vshll.u32 %v462, 16
        %v499 = vrot.slane %v497, 1
        %v500 = vsel %vm472, %v495, %v499
        %v501 = vshrl.u32 %v462, 16
        %v503 = vor.u32 %v501, %v499
        %v505 = vshll.u32 %v463, 16
        %v507 = vrot.slane %v505, 1
        %v508 = vsel %vm472, %v503, %v507
        %v509 = vshrl.u32 %v463, 16
        %v511 = vor.u32 %v509, %v507
        %v513 = vshll.u32 %v464, 16
        %v515 = vrot.slane %v513, 1
        %v516 = vsel %vm472, %v511, %v515
        %v517 = vshrl.u32 %v464, 16
        %v519 = vor.u32 %v517, %v515
        %v521 = vshll.u32 %v465, 16
        %v523 = vrot.slane %v521, 1
        %v524 = vsel %vm472, %v519, %v523
        %v525 = vshrl.u32 %v465, 16
        %v527 = vor.u32 %v525, %v523
        %v529 = vshll.u32 %v466, 16
        %v531 = vrot.slane %v529, 1
        %v532 = vsel %vm472, %v527, %v531
        %v533 = vshrl.u32 %v466, 16
        %v535 = vor.u32 %v533, %v531
        %v537 = vshll.u32 %v467, 16
        %v539 = vrot.slane %v537, 1
        %v540 = vsel %vm472, %v535, %v539
        %v541 = vshrl.u32 %v467, 16
        %v543 = vor.u32 %v541, %v539
        %v545 = vshll.u32 %v468, 16
        %v547 = vrot.slane %v545, 1
        %v548 = vsel %vm472, %v543, %v547
        %v549 = vshrl.u32 %v468, 16
        %v551 = vor.u32 %v549, %v547
        %v553 = vshll.u32 %v469, 16
        %v555 = vrot.slane %v553, 1
        %v556 = vsel %vm472, %v551, %v555
        %v557 = vshrl.u32 %v469, 16
        %v559 = vor.u32 %v557, %v555
        %v561 = vshll.u32 %v470, 16
        %v563 = vrot.slane %v561, 1
        %v564 = vsel %vm472, %v559, %v563
        %v565 = vshrl.u32 %v470, 16
        %v567 = vor.u32 %v565, %v563
        %v569 = vshll.u32 %v471, 16
        %v571 = vrot.slane %v569, 1
        %v572 = vsel %vm472, %v567, %v571
        %v575 = vunpack.c.l.b16 %v407
        %v576 = vunpack.c.l.b16 %v408
        %v577 = vpack.c.b16 %v576, %v575
        %v580 = vsel %vm354, %v484, 0
        %v583 = vsel %vm354, %v492, 0
        %v586 = vsel %vm354, %v500, 0
        %v589 = vsel %vm354, %v508, 0
        %v592 = vsel %vm354, %v516, 0
        %v595 = vsel %vm354, %v524, 0
        %v598 = vsel %vm354, %v532, 0
        %v601 = vsel %vm354, %v540, 0
        %v604 = vsel %vm354, %v548, 0
        %v607 = vsel %vm354, %v556, 0
        %v610 = vsel %vm354, %v564, 0
        %v613 = vsel %vm354, %v572, 0
        %615 = vmatprep.subr.bf16.mxu0 0
        %616 = vmatpush1.bf16.msra.mxu0 %v577
        %617 = vmatprep.subr.bf16.mxu0 0
        %618 = vmatpush1.bf16.msra.mxu0 0
        %619 = vmatprep.subr.bf16.mxu0 0
        %620 = vmatpush1.bf16.msra.mxu0 0
        %621 = vmatprep.subr.bf16.mxu0 0
        %622 = vmatpush1.bf16.msra.mxu0 0
        %623 = vmatprep.subr.bf16.mxu0 0
        %624 = vmatpush1.bf16.msra.mxu0 0
        %625 = vmatprep.subr.bf16.mxu0 0
        %626 = vmatpush1.bf16.msra.mxu0 0
        %627 = vmatprep.subr.bf16.mxu0 0
        %628 = vmatpush1.bf16.msra.mxu0 0
        %629 = vmatprep.subr.bf16.mxu0 0
        %630 = vmatpush1.bf16.msra.mxu0 0
        %631 = vmatprep.subr.bf16.mxu0 0
        %632 = vmatpush1.bf16.msra.mxu0 0
        %633 = vmatprep.subr.bf16.mxu0 0
        %634 = vmatpush1.bf16.msra.mxu0 0
        %635 = vmatprep.subr.bf16.mxu0 0
        %636 = vmatpush1.bf16.msra.mxu0 0
        %637 = vmatprep.subr.bf16.mxu0 0
        %638 = vmatpush1.bf16.msra.mxu0 0
        %639 = vmatprep.subr.bf16.mxu0 0
        %640 = vmatpush1.bf16.msra.mxu0 0
        %641 = vmatprep.subr.bf16.mxu0 0
        %642 = vmatpush1.bf16.msra.mxu0 0
        %643 = vmatprep.subr.bf16.mxu0 0
        %644 = vmatpush1.bf16.msra.mxu0 0
        %645 = vmatprep.subr.bf16.mxu0 0
        %646 = vmatpush1.bf16.msra.mxu0 0
        %647 = vmatprep.mubr.bf16.mxu0 0
        %648 = vmatmul.mubr.bf16.gmra.mrb[0].mxu0 %v580
        %v649 = vpop.f32.mrb[0].mxu0
        %v650 = vadd.f32 0.0, %v649
        %v651 = vpop.f32.mrb[0].mxu0
        %v652 = vpop.f32.mrb[0].mxu0
        %v653 = vadd.f32 0.0, %v652
        %v654 = vpop.f32.mrb[0].mxu0
        %655 = vmatprep.mubr.bf16.mxu0 0
        %656 = vmatmul.mubr.bf16.gmra.mrb[0].mxu0 %v583
        %v657 = vpop.f32.mrb[0].mxu0
        %v658 = vadd.f32 0.0, %v657
        %v659 = vpop.f32.mrb[0].mxu0
        %v660 = vpop.f32.mrb[0].mxu0
        %v661 = vadd.f32 0.0, %v660
        %v662 = vpop.f32.mrb[0].mxu0
        %663 = vmatprep.mubr.bf16.mxu0 0
        %664 = vmatmul.mubr.bf16.gmra.mrb[0].mxu0 %v586
        %v665 = vpop.f32.mrb[0].mxu0
        %v666 = vadd.f32 0.0, %v665
        %v667 = vpop.f32.mrb[0].mxu0
        %v668 = vpop.f32.mrb[0].mxu0
        %v669 = vadd.f32 0.0, %v668
        %v670 = vpop.f32.mrb[0].mxu0
        %671 = vmatprep.mubr.bf16.mxu0 0
        %672 = vmatmul.mubr.bf16.gmra.mrb[0].mxu0 %v589
        %v673 = vpop.f32.mrb[0].mxu0
        %v674 = vadd.f32 0.0, %v673
        %v675 = vpop.f32.mrb[0].mxu0
        %v676 = vpop.f32.mrb[0].mxu0
        %v677 = vadd.f32 0.0, %v676
        %v678 = vpop.f32.mrb[0].mxu0
        %679 = vmatprep.mubr.bf16.mxu0 0
        %680 = vmatmul.mubr.bf16.gmra.mrb[0].mxu0 %v592
        %v681 = vpop.f32.mrb[0].mxu0
        %v682 = vadd.f32 0.0, %v681
        %v683 = vpop.f32.mrb[0].mxu0
        %v684 = vpop.f32.mrb[0].mxu0
        %v685 = vadd.f32 0.0, %v684
        %v686 = vpop.f32.mrb[0].mxu0
        %687 = vmatprep.mubr.bf16.mxu0 0
        %688 = vmatmul.mubr.bf16.gmra.mrb[0].mxu0 %v595
        %v689 = vpop.f32.mrb[0].mxu0
        %v690 = vadd.f32 0.0, %v689
        %v691 = vpop.f32.mrb[0].mxu0
        %v692 = vpop.f32.mrb[0].mxu0
        %v693 = vadd.f32 0.0, %v692
        %v694 = vpop.f32.mrb[0].mxu0
        %695 = vmatprep.mubr.bf16.mxu0 0
        %696 = vmatmul.mubr.bf16.gmra.mrb[0].mxu0 %v598
        %v697 = vpop.f32.mrb[0].mxu0
        %v698 = vadd.f32 0.0, %v697
        %v699 = vpop.f32.mrb[0].mxu0
        %v700 = vpop.f32.mrb[0].mxu0
        %v701 = vadd.f32 0.0, %v700
        %v702 = vpop.f32.mrb[0].mxu0
        %703 = vmatprep.mubr.bf16.mxu0 0
        %704 = vmatmul.mubr.bf16.gmra.mrb[0].mxu0 %v601
        %v705 = vpop.f32.mrb[0].mxu0
        %v706 = vadd.f32 0.0, %v705
        %v707 = vpop.f32.mrb[0].mxu0
        %v708 = vpop.f32.mrb[0].mxu0
        %v709 = vadd.f32 0.0, %v708
        %v710 = vpop.f32.mrb[0].mxu0
        %711 = vmatprep.mubr.bf16.mxu0 0
        %712 = vmatmul.mubr.bf16.gmra.mrb[0].mxu0 %v604
        %v713 = vpop.f32.mrb[0].mxu0
        %v714 = vadd.f32 0.0, %v713
        %v715 = vpop.f32.mrb[0].mxu0
        %v716 = vpop.f32.mrb[0].mxu0
        %v717 = vadd.f32 0.0, %v716
        %v718 = vpop.f32.mrb[0].mxu0
        %719 = vmatprep.mubr.bf16.mxu0 0
        %720 = vmatmul.mubr.bf16.gmra.mrb[0].mxu0 %v607
        %v721 = vpop.f32.mrb[0].mxu0
        %v722 = vadd.f32 0.0, %v721
        %v723 = vpop.f32.mrb[0].mxu0
        %v724 = vpop.f32.mrb[0].mxu0
        %v725 = vadd.f32 0.0, %v724
        %v726 = vpop.f32.mrb[0].mxu0
        %727 = vmatprep.mubr.bf16.mxu0 0
        %728 = vmatmul.mubr.bf16.gmra.mrb[0].mxu0 %v610
        %v729 = vpop.f32.mrb[0].mxu0
        %v730 = vadd.f32 0.0, %v729
        %v731 = vpop.f32.mrb[0].mxu0
        %v732 = vpop.f32.mrb[0].mxu0
        %v733 = vadd.f32 0.0, %v732
        %v734 = vpop.f32.mrb[0].mxu0
        %735 = vmatprep.mubr.bf16.mxu0 0
        %736 = vmatmul.mubr.bf16.gmra.mrb[0].mxu0 %v613
        %v737 = vpop.f32.mrb[0].mxu0
        %v738 = vadd.f32 0.0, %v737
        %v739 = vpop.f32.mrb[0].mxu0
        %v740 = vpop.f32.mrb[0].mxu0
        %v741 = vadd.f32 0.0, %v740
        %v742 = vpop.f32.mrb[0].mxu0
        %743 = vdwg.mxu0
        %v746 = vunpack.c.l.b16 %v403
        %v747 = vunpack.c.l.b16 %v404
        %v748 = vpack.c.b16 %v747, %v746
        %v750 = vsel %vm354, %v459, 0
        %v752 = vsel %vm354, %v460, 0
        %v754 = vsel %vm354, %v461, 0
        %v756 = vsel %vm354, %v462, 0
        %v758 = vsel %vm354, %v463, 0
        %v760 = vsel %vm354, %v464, 0
        %v762 = vsel %vm354, %v465, 0
        %v764 = vsel %vm354, %v466, 0
        %v766 = vsel %vm354, %v467, 0
        %v768 = vsel %vm354, %v468, 0
        %v770 = vsel %vm354, %v469, 0
        %v772 = vsel %vm354, %v470, 0
        %774 = vmatprep.subr.bf16.mxu0 0
        %775 = vmatpush1.bf16.msra.mxu0 %v748
        %776 = vmatprep.subr.bf16.mxu0 0
        %777 = vmatpush1.bf16.msra.mxu0 0
        %778 = vmatprep.subr.bf16.mxu0 0
        %779 = vmatpush1.bf16.msra.mxu0 0
        %780 = vmatprep.subr.bf16.mxu0 0
        %781 = vmatpush1.bf16.msra.mxu0 0
        %782 = vmatprep.subr.bf16.mxu0 0
        %783 = vmatpush1.bf16.msra.mxu0 0
        %784 = vmatprep.subr.bf16.mxu0 0
        %785 = vmatpush1.bf16.msra.mxu0 0
        %786 = vmatprep.subr.bf16.mxu0 0
        %787 = vmatpush1.bf16.msra.mxu0 0
        %788 = vmatprep.subr.bf16.mxu0 0
        %789 = vmatpush1.bf16.msra.mxu0 0
        %790 = vmatprep.subr.bf16.mxu0 0
        %791 = vmatpush1.bf16.msra.mxu0 0
        %792 = vmatprep.subr.bf16.mxu0 0
        %793 = vmatpush1.bf16.msra.mxu0 0
        %794 = vmatprep.subr.bf16.mxu0 0
        %795 = vmatpush1.bf16.msra.mxu0 0
        %796 = vmatprep.subr.bf16.mxu0 0
        %797 = vmatpush1.bf16.msra.mxu0 0
        %798 = vmatprep.subr.bf16.mxu0 0
        %799 = vmatpush1.bf16.msra.mxu0 0
        %800 = vmatprep.subr.bf16.mxu0 0
        %801 = vmatpush1.bf16.msra.mxu0 0
        %802 = vmatprep.subr.bf16.mxu0 0
        %803 = vmatpush1.bf16.msra.mxu0 0
        %804 = vmatprep.subr.bf16.mxu0 0
        %805 = vmatpush1.bf16.msra.mxu0 0
        %806 = vmatprep.mubr.bf16.mxu0 0
        %807 = vmatmul.mubr.bf16.gmra.mrb[0].mxu0 %v750
        %v808 = vpop.f32.mrb[0].mxu0
        %v809 = vadd.f32 %v650, %v808
        %v810 = vpop.f32.mrb[0].mxu0
        %v811 = vpop.f32.mrb[0].mxu0
        %v812 = vadd.f32 %v653, %v811
        %v813 = vpop.f32.mrb[0].mxu0
        %814 = vmatprep.mubr.bf16.mxu0 0
        %815 = vmatmul.mubr.bf16.gmra.mrb[0].mxu0 %v752
        %v816 = vpop.f32.mrb[0].mxu0
        %v817 = vadd.f32 %v658, %v816
        %v818 = vpop.f32.mrb[0].mxu0
        %v819 = vpop.f32.mrb[0].mxu0
        %v820 = vadd.f32 %v661, %v819
        %v821 = vpop.f32.mrb[0].mxu0
        %822 = vmatprep.mubr.bf16.mxu0 0
        %823 = vmatmul.mubr.bf16.gmra.mrb[0].mxu0 %v754
        %v824 = vpop.f32.mrb[0].mxu0
        %v825 = vadd.f32 %v666, %v824
        %v826 = vpop.f32.mrb[0].mxu0
        %v827 = vpop.f32.mrb[0].mxu0
        %v828 = vadd.f32 %v669, %v827
        %v829 = vpop.f32.mrb[0].mxu0
        %830 = vmatprep.mubr.bf16.mxu0 0
        %831 = vmatmul.mubr.bf16.gmra.mrb[0].mxu0 %v756
        %v832 = vpop.f32.mrb[0].mxu0
        %v833 = vadd.f32 %v674, %v832
        %v834 = vpop.f32.mrb[0].mxu0
        %v835 = vpop.f32.mrb[0].mxu0
        %v836 = vadd.f32 %v677, %v835
        %v837 = vpop.f32.mrb[0].mxu0
        %838 = vmatprep.mubr.bf16.mxu0 0
        %839 = vmatmul.mubr.bf16.gmra.mrb[0].mxu0 %v758
        %v840 = vpop.f32.mrb[0].mxu0
        %v841 = vadd.f32 %v682, %v840
        %v842 = vpop.f32.mrb[0].mxu0
        %v843 = vpop.f32.mrb[0].mxu0
        %v844 = vadd.f32 %v685, %v843
        %v845 = vpop.f32.mrb[0].mxu0
        %846 = vmatprep.mubr.bf16.mxu0 0
        %847 = vmatmul.mubr.bf16.gmra.mrb[0].mxu0 %v760
        %v848 = vpop.f32.mrb[0].mxu0
        %v849 = vadd.f32 %v690, %v848
        %v850 = vpop.f32.mrb[0].mxu0
        %v851 = vpop.f32.mrb[0].mxu0
        %v852 = vadd.f32 %v693, %v851
        %v853 = vpop.f32.mrb[0].mxu0
        %854 = vmatprep.mubr.bf16.mxu0 0
        %855 = vmatmul.mubr.bf16.gmra.mrb[0].mxu0 %v762
        %v856 = vpop.f32.mrb[0].mxu0
        %v857 = vadd.f32 %v698, %v856
        %v858 = vpop.f32.mrb[0].mxu0
        %v859 = vpop.f32.mrb[0].mxu0
        %v860 = vadd.f32 %v701, %v859
        %v861 = vpop.f32.mrb[0].mxu0
        %862 = vmatprep.mubr.bf16.mxu0 0
        %863 = vmatmul.mubr.bf16.gmra.mrb[0].mxu0 %v764
        %v864 = vpop.f32.mrb[0].mxu0
        %v865 = vadd.f32 %v706, %v864
        %v866 = vpop.f32.mrb[0].mxu0
        %v867 = vpop.f32.mrb[0].mxu0
        %v868 = vadd.f32 %v709, %v867
        %v869 = vpop.f32.mrb[0].mxu0
        %870 = vmatprep.mubr.bf16.mxu0 0
        %871 = vmatmul.mubr.bf16.gmra.mrb[0].mxu0 %v766
        %v872 = vpop.f32.mrb[0].mxu0
        %v873 = vadd.f32 %v714, %v872
        %v874 = vpop.f32.mrb[0].mxu0
        %v875 = vpop.f32.mrb[0].mxu0
        %v876 = vadd.f32 %v717, %v875
        %v877 = vpop.f32.mrb[0].mxu0
        %878 = vmatprep.mubr.bf16.mxu0 0
        %879 = vmatmul.mubr.bf16.gmra.mrb[0].mxu0 %v768
        %v880 = vpop.f32.mrb[0].mxu0
        %v881 = vadd.f32 %v722, %v880
        %v882 = vpop.f32.mrb[0].mxu0
        %v883 = vpop.f32.mrb[0].mxu0
        %v884 = vadd.f32 %v725, %v883
        %v885 = vpop.f32.mrb[0].mxu0
        %886 = vmatprep.mubr.bf16.mxu0 0
        %887 = vmatmul.mubr.bf16.gmra.mrb[0].mxu0 %v770
        %v888 = vpop.f32.mrb[0].mxu0
        %v889 = vadd.f32 %v730, %v888
        %v890 = vpop.f32.mrb[0].mxu0
        %v891 = vpop.f32.mrb[0].mxu0
        %v892 = vadd.f32 %v733, %v891
        %v893 = vpop.f32.mrb[0].mxu0
        %894 = vmatprep.mubr.bf16.mxu0 0
        %895 = vmatmul.mubr.bf16.gmra.mrb[0].mxu0 %v772
        %v896 = vpop.f32.mrb[0].mxu0
        %v897 = vadd.f32 %v738, %v896
        %v898 = vpop.f32.mrb[0].mxu0
        %v899 = vpop.f32.mrb[0].mxu0
        %v900 = vadd.f32 %v741, %v899
        %v901 = vpop.f32.mrb[0].mxu0
        %902 = vdwg.mxu0
        %v903 = vld [vmem:[%s325] sm:$0xe]
        %s904 = scalar_lea.vmem %s330, 16
        %v905 = vld [vmem:[%s904] sm:$0xf]
        %v906 = vld [vmem:[%s904 + $0x4] sm:$0xf]
        %v908 = vunpack.c.l.b16 %v903
        %v909 = vpack.c.b16 %v435, %v908
        %vm910 = vcmask 1046528
        %v911 = vrot.slane %v909, 1
        %v912 = vrot.slane %v460, 1
        %v913 = vsel %vm910, %v911, %v912
        %v914 = vrot.slane %v461, 1
        %v915 = vsel %vm910, %v912, %v914
        %v916 = vrot.slane %v462, 1
        %v917 = vsel %vm910, %v914, %v916
        %v918 = vrot.slane %v463, 1
        %v919 = vsel %vm910, %v916, %v918
        %v920 = vrot.slane %v464, 1
        %v921 = vsel %vm910, %v918, %v920
        %v922 = vrot.slane %v465, 1
        %v923 = vsel %vm910, %v920, %v922
        %v924 = vrot.slane %v466, 1
        %v925 = vsel %vm910, %v922, %v924
        %v926 = vrot.slane %v467, 1
        %v927 = vsel %vm910, %v924, %v926
        %v928 = vrot.slane %v468, 1
        %v929 = vsel %vm910, %v926, %v928
        %v930 = vrot.slane %v469, 1
        %v931 = vsel %vm910, %v928, %v930
        %v932 = vrot.slane %v470, 1
        %v933 = vsel %vm910, %v930, %v932
        %v934 = vrot.slane %v471, 1
        %v935 = vsel %vm910, %v932, %v934
        %v938 = vunpack.c.l.b16 %v905
        %v939 = vunpack.c.l.b16 %v906
        %v940 = vpack.c.b16 %v939, %v938
        %v943 = vsel %vm354, %v913, 0
        %v946 = vsel %vm354, %v915, 0
        %v949 = vsel %vm354, %v917, 0
        %v952 = vsel %vm354, %v919, 0
        %v955 = vsel %vm354, %v921, 0
        %v958 = vsel %vm354, %v923, 0
        %v961 = vsel %vm354, %v925, 0
        %v964 = vsel %vm354, %v927, 0
        %v967 = vsel %vm354, %v929, 0
        %v970 = vsel %vm354, %v931, 0
        %v973 = vsel %vm354, %v933, 0
        %v976 = vsel %vm354, %v935, 0
        %978 = vmatprep.subr.bf16.mxu0 0
        %979 = vmatpush1.bf16.msra.mxu0 %v940
        %980 = vmatprep.subr.bf16.mxu0 0
        %981 = vmatpush1.bf16.msra.mxu0 0
        %982 = vmatprep.subr.bf16.mxu0 0
        %983 = vmatpush1.bf16.msra.mxu0 0
        %984 = vmatprep.subr.bf16.mxu0 0
        %985 = vmatpush1.bf16.msra.mxu0 0
        %986 = vmatprep.subr.bf16.mxu0 0
        %987 = vmatpush1.bf16.msra.mxu0 0
        %988 = vmatprep.subr.bf16.mxu0 0
        %989 = vmatpush1.bf16.msra.mxu0 0
        %990 = vmatprep.subr.bf16.mxu0 0
        %991 = vmatpush1.bf16.msra.mxu0 0
        %992 = vmatprep.subr.bf16.mxu0 0
        %993 = vmatpush1.bf16.msra.mxu0 0
        %994 = vmatprep.subr.bf16.mxu0 0
        %995 = vmatpush1.bf16.msra.mxu0 0
        %996 = vmatprep.subr.bf16.mxu0 0
        %997 = vmatpush1.bf16.msra.mxu0 0
        %998 = vmatprep.subr.bf16.mxu0 0
        %999 = vmatpush1.bf16.msra.mxu0 0
        %1000 = vmatprep.subr.bf16.mxu0 0
        %1001 = vmatpush1.bf16.msra.mxu0 0
        %1002 = vmatprep.subr.bf16.mxu0 0
        %1003 = vmatpush1.bf16.msra.mxu0 0
        %1004 = vmatprep.subr.bf16.mxu0 0
        %1005 = vmatpush1.bf16.msra.mxu0 0
        %1006 = vmatprep.subr.bf16.mxu0 0
        %1007 = vmatpush1.bf16.msra.mxu0 0
        %1008 = vmatprep.subr.bf16.mxu0 0
        %1009 = vmatpush1.bf16.msra.mxu0 0
        %1010 = vmatprep.mubr.bf16.mxu0 0
        %1011 = vmatmul.mubr.bf16.gmra.mrb[0].mxu0 %v943
        %v1012 = vpop.f32.mrb[0].mxu0
        %v1013 = vadd.f32 0.0, %v1012
        %v1014 = vpop.f32.mrb[0].mxu0
        %v1015 = vpop.f32.mrb[0].mxu0
        %v1016 = vadd.f32 0.0, %v1015
        %v1017 = vpop.f32.mrb[0].mxu0
        %1018 = vmatprep.mubr.bf16.mxu0 0
        %1019 = vmatmul.mubr.bf16.gmra.mrb[0].mxu0 %v946
        %v1020 = vpop.f32.mrb[0].mxu0
        %v1021 = vadd.f32 0.0, %v1020
        %v1022 = vpop.f32.mrb[0].mxu0
        %v1023 = vpop.f32.mrb[0].mxu0
        %v1024 = vadd.f32 0.0, %v1023
        %v1025 = vpop.f32.mrb[0].mxu0
        %1026 = vmatprep.mubr.bf16.mxu0 0
        %1027 = vmatmul.mubr.bf16.gmra.mrb[0].mxu0 %v949
        %v1028 = vpop.f32.mrb[0].mxu0
        %v1029 = vadd.f32 0.0, %v1028
        %v1030 = vpop.f32.mrb[0].mxu0
        %v1031 = vpop.f32.mrb[0].mxu0
        %v1032 = vadd.f32 0.0, %v1031
        %v1033 = vpop.f32.mrb[0].mxu0
        %1034 = vmatprep.mubr.bf16.mxu0 0
        %1035 = vmatmul.mubr.bf16.gmra.mrb[0].mxu0 %v952
        %v1036 = vpop.f32.mrb[0].mxu0
        %v1037 = vadd.f32 0.0, %v1036
        %v1038 = vpop.f32.mrb[0].mxu0
        %v1039 = vpop.f32.mrb[0].mxu0
        %v1040 = vadd.f32 0.0, %v1039
        %v1041 = vpop.f32.mrb[0].mxu0
        %1042 = vmatprep.mubr.bf16.mxu0 0
        %1043 = vmatmul.mubr.bf16.gmra.mrb[0].mxu0 %v955
        %v1044 = vpop.f32.mrb[0].mxu0
        %v1045 = vadd.f32 0.0, %v1044
        %v1046 = vpop.f32.mrb[0].mxu0
        %v1047 = vpop.f32.mrb[0].mxu0
        %v1048 = vadd.f32 0.0, %v1047
        %v1049 = vpop.f32.mrb[0].mxu0
        %1050 = vmatprep.mubr.bf16.mxu0 0
        %1051 = vmatmul.mubr.bf16.gmra.mrb[0].mxu0 %v958
        %v1052 = vpop.f32.mrb[0].mxu0
        %v1053 = vadd.f32 0.0, %v1052
        %v1054 = vpop.f32.mrb[0].mxu0
        %v1055 = vpop.f32.mrb[0].mxu0
        %v1056 = vadd.f32 0.0, %v1055
        %v1057 = vpop.f32.mrb[0].mxu0
        %1058 = vmatprep.mubr.bf16.mxu0 0
        %1059 = vmatmul.mubr.bf16.gmra.mrb[0].mxu0 %v961
        %v1060 = vpop.f32.mrb[0].mxu0
        %v1061 = vadd.f32 0.0, %v1060
        %v1062 = vpop.f32.mrb[0].mxu0
        %v1063 = vpop.f32.mrb[0].mxu0
        %v1064 = vadd.f32 0.0, %v1063
        %v1065 = vpop.f32.mrb[0].mxu0
        %1066 = vmatprep.mubr.bf16.mxu0 0
        %1067 = vmatmul.mubr.bf16.gmra.mrb[0].mxu0 %v964
        %v1068 = vpop.f32.mrb[0].mxu0
        %v1069 = vadd.f32 0.0, %v1068
        %v1070 = vpop.f32.mrb[0].mxu0
        %v1071 = vpop.f32.mrb[0].mxu0
        %v1072 = vadd.f32 0.0, %v1071
        %v1073 = vpop.f32.mrb[0].mxu0
        %1074 = vmatprep.mubr.bf16.mxu0 0
        %1075 = vmatmul.mubr.bf16.gmra.mrb[0].mxu0 %v967
        %v1076 = vpop.f32.mrb[0].mxu0
        %v1077 = vadd.f32 0.0, %v1076
        %v1078 = vpop.f32.mrb[0].mxu0
        %v1079 = vpop.f32.mrb[0].mxu0
        %v1080 = vadd.f32 0.0, %v1079
        %v1081 = vpop.f32.mrb[0].mxu0
        %1082 = vmatprep.mubr.bf16.mxu0 0
        %1083 = vmatmul.mubr.bf16.gmra.mrb[0].mxu0 %v970
        %v1084 = vpop.f32.mrb[0].mxu0
        %v1085 = vadd.f32 0.0, %v1084
        %v1086 = vpop.f32.mrb[0].mxu0
        %v1087 = vpop.f32.mrb[0].mxu0
        %v1088 = vadd.f32 0.0, %v1087
        %v1089 = vpop.f32.mrb[0].mxu0
        %1090 = vmatprep.mubr.bf16.mxu0 0
        %1091 = vmatmul.mubr.bf16.gmra.mrb[0].mxu0 %v973
        %v1092 = vpop.f32.mrb[0].mxu0
        %v1093 = vadd.f32 0.0, %v1092
        %v1094 = vpop.f32.mrb[0].mxu0
        %v1095 = vpop.f32.mrb[0].mxu0
        %v1096 = vadd.f32 0.0, %v1095
        %v1097 = vpop.f32.mrb[0].mxu0
        %1098 = vmatprep.mubr.bf16.mxu0 0
        %1099 = vmatmul.mubr.bf16.gmra.mrb[0].mxu0 %v976
        %v1100 = vpop.f32.mrb[0].mxu0
        %v1101 = vadd.f32 0.0, %v1100
        %v1102 = vpop.f32.mrb[0].mxu0
        %v1103 = vpop.f32.mrb[0].mxu0
        %v1104 = vadd.f32 0.0, %v1103
        %v1105 = vpop.f32.mrb[0].mxu0
        %1106 = vdwg.mxu0
        %v1107 = vadd.f32 %v809, %v1013
        %v1108 = vadd.f32 %v812, %v1016
        %v1109 = vadd.f32 %v817, %v1021
        %v1110 = vadd.f32 %v820, %v1024
        %v1111 = vadd.f32 %v825, %v1029
        %v1112 = vadd.f32 %v828, %v1032
        %v1113 = vadd.f32 %v833, %v1037
        %v1114 = vadd.f32 %v836, %v1040
        %v1115 = vadd.f32 %v841, %v1045
        %v1116 = vadd.f32 %v844, %v1048
        %v1117 = vadd.f32 %v849, %v1053
        %v1118 = vadd.f32 %v852, %v1056
        %v1119 = vadd.f32 %v857, %v1061
        %v1120 = vadd.f32 %v860, %v1064
        %v1121 = vadd.f32 %v865, %v1069
        %v1122 = vadd.f32 %v868, %v1072
        %v1123 = vadd.f32 %v873, %v1077
        %v1124 = vadd.f32 %v876, %v1080
        %v1125 = vadd.f32 %v881, %v1085
        %v1126 = vadd.f32 %v884, %v1088
        %v1127 = vadd.f32 %v889, %v1093
        %v1128 = vadd.f32 %v892, %v1096
        %v1129 = vadd.f32 %v897, %v1101
        %v1130 = vadd.f32 %v900, %v1104
        %v1131 = vld [vmem:[#allocation2] sm:$0xff]
        %v1132 = vld [vmem:[#allocation2 + $0x8] sm:$0xff]
        %v1133 = vld [vmem:[#allocation2 + $0x10] sm:$0xff]
        %v1134 = vld [vmem:[#allocation2 + $0x18] sm:$0xff]
        %v1135 = vld [vmem:[#allocation2 + $0x20] sm:$0xff]
        %v1136 = vld [vmem:[#allocation2 + $0x28] sm:$0xff]
        %v1137 = vld [vmem:[#allocation2 + $0x30] sm:$0xff]
        %v1138 = vld [vmem:[#allocation2 + $0x38] sm:$0xff]
        %v1139 = vld [vmem:[#allocation2 + $0x40] sm:$0xff]
        %v1140 = vld [vmem:[#allocation2 + $0x48] sm:$0xff]
        %v1141 = vld [vmem:[#allocation2 + $0x50] sm:$0xff]
        %v1142 = vld [vmem:[#allocation2 + $0x58] sm:$0xff]
        %v1143 = vld [vmem:[#allocation2 + $0x60] sm:$0xff]
        %v1144 = vld [vmem:[#allocation2 + $0x68] sm:$0xff]
        %v1145 = vld [vmem:[#allocation2 + $0x70] sm:$0xff]
        %v1146 = vld [vmem:[#allocation2 + $0x78] sm:$0xff]
        %v1147 = vld [vmem:[#allocation2 + $0x80] sm:$0xff]
        %v1148 = vld [vmem:[#allocation2 + $0x88] sm:$0xff]
        %v1149 = vld [vmem:[#allocation2 + $0x90] sm:$0xff]
        %v1150 = vld [vmem:[#allocation2 + $0x98] sm:$0xff]
        %v1151 = vld [vmem:[#allocation2 + $0xa0] sm:$0xff]
        %v1152 = vld [vmem:[#allocation2 + $0xa8] sm:$0xff]
        %v1153 = vld [vmem:[#allocation2 + $0xb0] sm:$0xff]
        %v1154 = vld [vmem:[#allocation2 + $0xb8] sm:$0xff]
        %v1155 = vadd.f32 %v1131, %v1107
        %v1156 = vadd.f32 %v1132, %v1108
        %v1157 = vadd.f32 %v1133, %v1109
        %v1158 = vadd.f32 %v1134, %v1110
        %v1159 = vadd.f32 %v1135, %v1111
        %v1160 = vadd.f32 %v1136, %v1112
        %v1161 = vadd.f32 %v1137, %v1113
        %v1162 = vadd.f32 %v1138, %v1114
        %v1163 = vadd.f32 %v1139, %v1115
        %v1164 = vadd.f32 %v1140, %v1116
        %v1165 = vadd.f32 %v1141, %v1117
        %v1166 = vadd.f32 %v1142, %v1118
        %v1167 = vadd.f32 %v1143, %v1119
        %v1168 = vadd.f32 %v1144, %v1120
        %v1169 = vadd.f32 %v1145, %v1121
        %v1170 = vadd.f32 %v1146, %v1122
        %v1171 = vadd.f32 %v1147, %v1123
        %v1172 = vadd.f32 %v1148, %v1124
        %v1173 = vadd.f32 %v1149, %v1125
        %v1174 = vadd.f32 %v1150, %v1126
        %v1175 = vadd.f32 %v1151, %v1127
        %v1176 = vadd.f32 %v1152, %v1128
        %v1177 = vadd.f32 %v1153, %v1129
        %v1178 = vadd.f32 %v1154, %v1130
        %1179 = vst.msk [vmem:[#allocation2] sm:$0xff] %vm354, %v1155
        %1180 = vst.msk [vmem:[#allocation2 + $0x8] sm:$0xff] %vm354, %v1156
        %1181 = vst.msk [vmem:[#allocation2 + $0x10] sm:$0xff] %vm354, %v1157
        %1182 = vst.msk [vmem:[#allocation2 + $0x18] sm:$0xff] %vm354, %v1158
        %1183 = vst.msk [vmem:[#allocation2 + $0x20] sm:$0xff] %vm354, %v1159
        %1184 = vst.msk [vmem:[#allocation2 + $0x28] sm:$0xff] %vm354, %v1160
        %1185 = vst.msk [vmem:[#allocation2 + $0x30] sm:$0xff] %vm354, %v1161
        %1186 = vst.msk [vmem:[#allocation2 + $0x38] sm:$0xff] %vm354, %v1162
        %1187 = vst.msk [vmem:[#allocation2 + $0x40] sm:$0xff] %vm354, %v1163
        %1188 = vst.msk [vmem:[#allocation2 + $0x48] sm:$0xff] %vm354, %v1164
        %1189 = vst.msk [vmem:[#allocation2 + $0x50] sm:$0xff] %vm354, %v1165
        %1190 = vst.msk [vmem:[#allocation2 + $0x58] sm:$0xff] %vm354, %v1166
        %1191 = vst.msk [vmem:[#allocation2 + $0x60] sm:$0xff] %vm354, %v1167
        %1192 = vst.msk [vmem:[#allocation2 + $0x68] sm:$0xff] %vm354, %v1168
        %1193 = vst.msk [vmem:[#allocation2 + $0x70] sm:$0xff] %vm354, %v1169
        %1194 = vst.msk [vmem:[#allocation2 + $0x78] sm:$0xff] %vm354, %v1170
        %1195 = vst.msk [vmem:[#allocation2 + $0x80] sm:$0xff] %vm354, %v1171
        %1196 = vst.msk [vmem:[#allocation2 + $0x88] sm:$0xff] %vm354, %v1172
        %1197 = vst.msk [vmem:[#allocation2 + $0x90] sm:$0xff] %vm354, %v1173
        %1198 = vst.msk [vmem:[#allocation2 + $0x98] sm:$0xff] %vm354, %v1174
        %1199 = vst.msk [vmem:[#allocation2 + $0xa0] sm:$0xff] %vm354, %v1175
        %1200 = vst.msk [vmem:[#allocation2 + $0xa8] sm:$0xff] %vm354, %v1176
        %1201 = vst.msk [vmem:[#allocation2 + $0xb0] sm:$0xff] %vm354, %v1177
        %1202 = vst.msk [vmem:[#allocation2 + $0xb8] sm:$0xff] %vm354, %v1178
      $region48: #{fpn_psp_head_forward.6} parent=43 // pred_fallthru
        _
      %p1203 = scmp.eq.s32.totalorder %s24, 1
      // Predicated region
      $region49: #{fpn_psp_head_forward.6} parent=43 // pred_check
        %p1204 = pneg %p1203
      $region50: #{fpn_psp_head_forward.6} parent=43 // pred_check_branch
        %1206 = sbr.rel (%p1204) target = $region52
      $region51: #{fpn_psp_head_forward.6} parent=43 // pred_region
        %v1207 = vld [vmem:[%s325 + $0xc] sm:$0xf]
        %v1208 = vld [vmem:[%s325 + $0x10] sm:$0xf]
        %v1209 = vld [vmem:[%s325 + $0x14] sm:$0xf]
        %v1210 = vld [vmem:[%s325 + $0x18] sm:$0xf]
        %v1211 = vld [vmem:[%s325 + $0x1c] sm:$0xf]
        %v1212 = vld [vmem:[%s325 + $0x20] sm:$0xf]
        %v1213 = vld [vmem:[%s325 + $0x24] sm:$0xf]
        %v1214 = vld [vmem:[%s325 + $0x28] sm:$0xf]
        %v1215 = vld [vmem:[%s325 + $0x2c] sm:$0xf]
        %v1216 = vld [vmem:[%s325 + $0x30] sm:$0xf]
        %v1217 = vld [vmem:[%s325 + $0x34] sm:$0xf]
        %v1218 = vld [vmem:[%s325 + $0x38] sm:$0xf]
        %v1219 = vld [vmem:[%s325 + $0x3c] sm:$0xf]
        %v1220 = vld [vmem:[%s325 + $0x40] sm:$0xf]
        %v1221 = vld [vmem:[%s325 + $0x44] sm:$0xf]
        %v1222 = vld [vmem:[%s325 + $0x48] sm:$0xf]
        %v1223 = vld [vmem:[%s325 + $0x4c] sm:$0xf]
        %v1224 = vld [vmem:[%s325 + $0x50] sm:$0xf]
        %v1225 = vld [vmem:[%s325 + $0x54] sm:$0xf]
        %v1226 = vld [vmem:[%s325 + $0x58] sm:$0xf]
        %v1227 = vld [vmem:[%s325 + $0x5c] sm:$0xf]
        %v1228 = vld [vmem:[%s325 + $0x60] sm:$0xf]
        %v1229 = vld [vmem:[%s325 + $0x64] sm:$0xf]
        %v1230 = vld [vmem:[%s325 + $0x68] sm:$0xf]
        %v1231 = vld [vmem:[%s330] sm:$0xf]
        %v1232 = vld [vmem:[%s330 + $0x4] sm:$0xf]
        %v1233 = vld [vmem:[%s325 + $0x6c] sm:$0x1]
        %s1234 = scalar_lea.vmem %s330, 8
        %v1235 = vld [vmem:[%s1234] sm:$0xf]
        %v1236 = vld [vmem:[%s1234 + $0x4] sm:$0xf]
        %v1262 = vunpack.c.l.b16 %v1207
        %v1263 = vunpack.c.l.b16 %v1208
        %v1264 = vunpack.c.l.b16 %v1209
        %v1265 = vunpack.c.l.b16 %v1210
        %v1266 = vunpack.c.l.b16 %v1211
        %v1267 = vunpack.c.l.b16 %v1212
        %v1268 = vunpack.c.l.b16 %v1213
        %v1269 = vunpack.c.l.b16 %v1214
        %v1270 = vunpack.c.l.b16 %v1215
        %v1271 = vunpack.c.l.b16 %v1216
        %v1272 = vunpack.c.l.b16 %v1217
        %v1273 = vunpack.c.l.b16 %v1218
        %v1274 = vunpack.c.l.b16 %v1219
        %v1275 = vunpack.c.l.b16 %v1220
        %v1276 = vunpack.c.l.b16 %v1221
        %v1277 = vunpack.c.l.b16 %v1222
        %v1278 = vunpack.c.l.b16 %v1223
        %v1279 = vunpack.c.l.b16 %v1224
        %v1280 = vunpack.c.l.b16 %v1225
        %v1281 = vunpack.c.l.b16 %v1226
        %v1282 = vunpack.c.l.b16 %v1227
        %v1283 = vunpack.c.l.b16 %v1228
        %v1284 = vunpack.c.l.b16 %v1229
        %v1285 = vunpack.c.l.b16 %v1230
        %v1286 = vunpack.c.l.b16 %v1233
        %v1287 = vpack.c.b16 %v1263, %v1262
        %v1288 = vpack.c.b16 %v1265, %v1264
        %v1289 = vpack.c.b16 %v1267, %v1266
        %v1290 = vpack.c.b16 %v1269, %v1268
        %v1291 = vpack.c.b16 %v1271, %v1270
        %v1292 = vpack.c.b16 %v1273, %v1272
        %v1293 = vpack.c.b16 %v1275, %v1274
        %v1294 = vpack.c.b16 %v1277, %v1276
        %v1295 = vpack.c.b16 %v1279, %v1278
        %v1296 = vpack.c.b16 %v1281, %v1280
        %v1297 = vpack.c.b16 %v1283, %v1282
        %v1298 = vpack.c.b16 %v1285, %v1284
        %v1299 = vpack.c.b16 %v1286, %v1286
        %vm1300 = vsmask.f32 7424
        %v1302 = vshrl.u32 %v1287, 16
        %v1304 = vshll.u32 %v1287, 16
        %v1306 = vrot.slane %v1304, 1
        %v1307 = vor.u32 %v1302, %v1306
        %v1309 = vshll.u32 %v1288, 16
        %v1311 = vrot.slane %v1309, 1
        %v1312 = vsel %vm1300, %v1307, %v1311
        %v1313 = vshrl.u32 %v1288, 16
        %v1315 = vor.u32 %v1313, %v1311
        %v1317 = vshll.u32 %v1289, 16
        %v1319 = vrot.slane %v1317, 1
        %v1320 = vsel %vm1300, %v1315, %v1319
        %v1321 = vshrl.u32 %v1289, 16
        %v1323 = vor.u32 %v1321, %v1319
        %v1325 = vshll.u32 %v1290, 16
        %v1327 = vrot.slane %v1325, 1
        %v1328 = vsel %vm1300, %v1323, %v1327
        %v1329 = vshrl.u32 %v1290, 16
        %v1331 = vor.u32 %v1329, %v1327
        %v1333 = vshll.u32 %v1291, 16
        %v1335 = vrot.slane %v1333, 1
        %v1336 = vsel %vm1300, %v1331, %v1335
        %v1337 = vshrl.u32 %v1291, 16
        %v1339 = vor.u32 %v1337, %v1335
        %v1341 = vshll.u32 %v1292, 16
        %v1343 = vrot.slane %v1341, 1
        %v1344 = vsel %vm1300, %v1339, %v1343
        %v1345 = vshrl.u32 %v1292, 16
        %v1347 = vor.u32 %v1345, %v1343
        %v1349 = vshll.u32 %v1293, 16
        %v1351 = vrot.slane %v1349, 1
        %v1352 = vsel %vm1300, %v1347, %v1351
        %v1353 = vshrl.u32 %v1293, 16
        %v1355 = vor.u32 %v1353, %v1351
        %v1357 = vshll.u32 %v1294, 16
        %v1359 = vrot.slane %v1357, 1
        %v1360 = vsel %vm1300, %v1355, %v1359
        %v1361 = vshrl.u32 %v1294, 16
        %v1363 = vor.u32 %v1361, %v1359
        %v1365 = vshll.u32 %v1295, 16
        %v1367 = vrot.slane %v1365, 1
        %v1368 = vsel %vm1300, %v1363, %v1367
        %v1369 = vshrl.u32 %v1295, 16
        %v1371 = vor.u32 %v1369, %v1367
        %v1373 = vshll.u32 %v1296, 16
        %v1375 = vrot.slane %v1373, 1
        %v1376 = vsel %vm1300, %v1371, %v1375
        %v1377 = vshrl.u32 %v1296, 16
        %v1379 = vor.u32 %v1377, %v1375
        %v1381 = vshll.u32 %v1297, 16
        %v1383 = vrot.slane %v1381, 1
        %v1384 = vsel %vm1300, %v1379, %v1383
        %v1385 = vshrl.u32 %v1297, 16
        %v1387 = vor.u32 %v1385, %v1383
        %v1389 = vshll.u32 %v1298, 16
        %v1391 = vrot.slane %v1389, 1
        %v1392 = vsel %vm1300, %v1387, %v1391
        %v1393 = vshrl.u32 %v1298, 16
        %v1395 = vor.u32 %v1393, %v1391
        %v1397 = vshll.u32 %v1299, 16
        %v1399 = vrot.slane %v1397, 1
        %v1400 = vsel %vm1300, %v1395, %v1399
        %v1403 = vunpack.c.l.b16 %v1235
        %v1404 = vunpack.c.l.b16 %v1236
        %v1405 = vpack.c.b16 %v1404, %v1403
        %vm1407 = vcmask 130048
        %v1409 = vsel %vm1407, %v1312, 0
        %v1412 = vsel %vm1407, %v1320, 0
        %v1415 = vsel %vm1407, %v1328, 0
        %v1418 = vsel %vm1407, %v1336, 0
        %v1421 = vsel %vm1407, %v1344, 0
        %v1424 = vsel %vm1407, %v1352, 0
        %v1427 = vsel %vm1407, %v1360, 0
        %v1430 = vsel %vm1407, %v1368, 0
        %v1433 = vsel %vm1407, %v1376, 0
        %v1436 = vsel %vm1407, %v1384, 0
        %v1439 = vsel %vm1407, %v1392, 0
        %v1442 = vsel %vm1407, %v1400, 0
        %1444 = vmatprep.subr.bf16.mxu0 0
        %1445 = vmatpush1.bf16.msra.mxu0 %v1405
        %1446 = vmatprep.subr.bf16.mxu0 0
        %1447 = vmatpush1.bf16.msra.mxu0 0
        %1448 = vmatprep.subr.bf16.mxu0 0
        %1449 = vmatpush1.bf16.msra.mxu0 0
        %1450 = vmatprep.subr.bf16.mxu0 0
        %1451 = vmatpush1.bf16.msra.mxu0 0
        %1452 = vmatprep.subr.bf16.mxu0 0
        %1453 = vmatpush1.bf16.msra.mxu0 0
        %1454 = vmatprep.subr.bf16.mxu0 0
        %1455 = vmatpush1.bf16.msra.mxu0 0
        %1456 = vmatprep.subr.bf16.mxu0 0
        %1457 = vmatpush1.bf16.msra.mxu0 0
        %1458 = vmatprep.subr.bf16.mxu0 0
        %1459 = vmatpush1.bf16.msra.mxu0 0
        %1460 = vmatprep.subr.bf16.mxu0 0
        %1461 = vmatpush1.bf16.msra.mxu0 0
        %1462 = vmatprep.subr.bf16.mxu0 0
        %1463 = vmatpush1.bf16.msra.mxu0 0
        %1464 = vmatprep.subr.bf16.mxu0 0
        %1465 = vmatpush1.bf16.msra.mxu0 0
        %1466 = vmatprep.subr.bf16.mxu0 0
        %1467 = vmatpush1.bf16.msra.mxu0 0
        %1468 = vmatprep.subr.bf16.mxu0 0
        %1469 = vmatpush1.bf16.msra.mxu0 0
        %1470 = vmatprep.subr.bf16.mxu0 0
        %1471 = vmatpush1.bf16.msra.mxu0 0
        %1472 = vmatprep.subr.bf16.mxu0 0
        %1473 = vmatpush1.bf16.msra.mxu0 0
        %1474 = vmatprep.subr.bf16.mxu0 0
        %1475 = vmatpush1.bf16.msra.mxu0 0
        %1476 = vmatprep.mubr.bf16.mxu0 0
        %1477 = vmatmul.mubr.bf16.gmra.mrb[0].mxu0 %v1409
        %v1478 = vpop.f32.mrb[0].mxu0
        %v1479 = vadd.f32 0.0, %v1478
        %v1480 = vpop.f32.mrb[0].mxu0
        %v1481 = vpop.f32.mrb[0].mxu0
        %v1482 = vadd.f32 0.0, %v1481
        %v1483 = vpop.f32.mrb[0].mxu0
        %1484 = vmatprep.mubr.bf16.mxu0 0
        %1485 = vmatmul.mubr.bf16.gmra.mrb[0].mxu0 %v1412
        %v1486 = vpop.f32.mrb[0].mxu0
        %v1487 = vadd.f32 0.0, %v1486
        %v1488 = vpop.f32.mrb[0].mxu0
        %v1489 = vpop.f32.mrb[0].mxu0
        %v1490 = vadd.f32 0.0, %v1489
        %v1491 = vpop.f32.mrb[0].mxu0
        %1492 = vmatprep.mubr.bf16.mxu0 0
        %1493 = vmatmul.mubr.bf16.gmra.mrb[0].mxu0 %v1415
        %v1494 = vpop.f32.mrb[0].mxu0
        %v1495 = vadd.f32 0.0, %v1494
        %v1496 = vpop.f32.mrb[0].mxu0
        %v1497 = vpop.f32.mrb[0].mxu0
        %v1498 = vadd.f32 0.0, %v1497
        %v1499 = vpop.f32.mrb[0].mxu0
        %1500 = vmatprep.mubr.bf16.mxu0 0
        %1501 = vmatmul.mubr.bf16.gmra.mrb[0].mxu0 %v1418
        %v1502 = vpop.f32.mrb[0].mxu0
        %v1503 = vadd.f32 0.0, %v1502
        %v1504 = vpop.f32.mrb[0].mxu0
        %v1505 = vpop.f32.mrb[0].mxu0
        %v1506 = vadd.f32 0.0, %v1505
        %v1507 = vpop.f32.mrb[0].mxu0
        %1508 = vmatprep.mubr.bf16.mxu0 0
        %1509 = vmatmul.mubr.bf16.gmra.mrb[0].mxu0 %v1421
        %v1510 = vpop.f32.mrb[0].mxu0
        %v1511 = vadd.f32 0.0, %v1510
        %v1512 = vpop.f32.mrb[0].mxu0
        %v1513 = vpop.f32.mrb[0].mxu0
        %v1514 = vadd.f32 0.0, %v1513
        %v1515 = vpop.f32.mrb[0].mxu0
        %1516 = vmatprep.mubr.bf16.mxu0 0
        %1517 = vmatmul.mubr.bf16.gmra.mrb[0].mxu0 %v1424
        %v1518 = vpop.f32.mrb[0].mxu0
        %v1519 = vadd.f32 0.0, %v1518
        %v1520 = vpop.f32.mrb[0].mxu0
        %v1521 = vpop.f32.mrb[0].mxu0
        %v1522 = vadd.f32 0.0, %v1521
        %v1523 = vpop.f32.mrb[0].mxu0
        %1524 = vmatprep.mubr.bf16.mxu0 0
        %1525 = vmatmul.mubr.bf16.gmra.mrb[0].mxu0 %v1427
        %v1526 = vpop.f32.mrb[0].mxu0
        %v1527 = vadd.f32 0.0, %v1526
        %v1528 = vpop.f32.mrb[0].mxu0
        %v1529 = vpop.f32.mrb[0].mxu0
        %v1530 = vadd.f32 0.0, %v1529
        %v1531 = vpop.f32.mrb[0].mxu0
        %1532 = vmatprep.mubr.bf16.mxu0 0
        %1533 = vmatmul.mubr.bf16.gmra.mrb[0].mxu0 %v1430
        %v1534 = vpop.f32.mrb[0].mxu0
        %v1535 = vadd.f32 0.0, %v1534
        %v1536 = vpop.f32.mrb[0].mxu0
        %v1537 = vpop.f32.mrb[0].mxu0
        %v1538 = vadd.f32 0.0, %v1537
        %v1539 = vpop.f32.mrb[0].mxu0
        %1540 = vmatprep.mubr.bf16.mxu0 0
        %1541 = vmatmul.mubr.bf16.gmra.mrb[0].mxu0 %v1433
        %v1542 = vpop.f32.mrb[0].mxu0
        %v1543 = vadd.f32 0.0, %v1542
        %v1544 = vpop.f32.mrb[0].mxu0
        %v1545 = vpop.f32.mrb[0].mxu0
        %v1546 = vadd.f32 0.0, %v1545
        %v1547 = vpop.f32.mrb[0].mxu0
        %1548 = vmatprep.mubr.bf16.mxu0 0
        %1549 = vmatmul.mubr.bf16.gmra.mrb[0].mxu0 %v1436
        %v1550 = vpop.f32.mrb[0].mxu0
        %v1551 = vadd.f32 0.0, %v1550
        %v1552 = vpop.f32.mrb[0].mxu0
        %v1553 = vpop.f32.mrb[0].mxu0
        %v1554 = vadd.f32 0.0, %v1553
        %v1555 = vpop.f32.mrb[0].mxu0
        %1556 = vmatprep.mubr.bf16.mxu0 0
        %1557 = vmatmul.mubr.bf16.gmra.mrb[0].mxu0 %v1439
        %v1558 = vpop.f32.mrb[0].mxu0
        %v1559 = vadd.f32 0.0, %v1558
        %v1560 = vpop.f32.mrb[0].mxu0
        %v1561 = vpop.f32.mrb[0].mxu0
        %v1562 = vadd.f32 0.0, %v1561
        %v1563 = vpop.f32.mrb[0].mxu0
        %1564 = vmatprep.mubr.bf16.mxu0 0
        %1565 = vmatmul.mubr.bf16.gmra.mrb[0].mxu0 %v1442
        %v1566 = vpop.f32.mrb[0].mxu0
        %v1567 = vadd.f32 0.0, %v1566
        %v1568 = vpop.f32.mrb[0].mxu0
        %v1569 = vpop.f32.mrb[0].mxu0
        %v1570 = vadd.f32 0.0, %v1569
        %v1571 = vpop.f32.mrb[0].mxu0
        %1572 = vdwg.mxu0
        %v1575 = vunpack.c.l.b16 %v1231
        %v1576 = vunpack.c.l.b16 %v1232
        %v1577 = vpack.c.b16 %v1576, %v1575
        %v1579 = vsel %vm1407, %v1287, 0
        %v1581 = vsel %vm1407, %v1288, 0
        %v1583 = vsel %vm1407, %v1289, 0
        %v1585 = vsel %vm1407, %v1290, 0
        %v1587 = vsel %vm1407, %v1291, 0
        %v1589 = vsel %vm1407, %v1292, 0
        %v1591 = vsel %vm1407, %v1293, 0
        %v1593 = vsel %vm1407, %v1294, 0
        %v1595 = vsel %vm1407, %v1295, 0
        %v1597 = vsel %vm1407, %v1296, 0
        %v1599 = vsel %vm1407, %v1297, 0
        %v1601 = vsel %vm1407, %v1298, 0
        %1603 = vmatprep.subr.bf16.mxu0 0
        %1604 = vmatpush1.bf16.msra.mxu0 %v1577
        %1605 = vmatprep.subr.bf16.mxu0 0
        %1606 = vmatpush1.bf16.msra.mxu0 0
        %1607 = vmatprep.subr.bf16.mxu0 0
        %1608 = vmatpush1.bf16.msra.mxu0 0
        %1609 = vmatprep.subr.bf16.mxu0 0
        %1610 = vmatpush1.bf16.msra.mxu0 0
        %1611 = vmatprep.subr.bf16.mxu0 0
        %1612 = vmatpush1.bf16.msra.mxu0 0
        %1613 = vmatprep.subr.bf16.mxu0 0
        %1614 = vmatpush1.bf16.msra.mxu0 0
        %1615 = vmatprep.subr.bf16.mxu0 0
        %1616 = vmatpush1.bf16.msra.mxu0 0
        %1617 = vmatprep.subr.bf16.mxu0 0
        %1618 = vmatpush1.bf16.msra.mxu0 0
        %1619 = vmatprep.subr.bf16.mxu0 0
        %1620 = vmatpush1.bf16.msra.mxu0 0
        %1621 = vmatprep.subr.bf16.mxu0 0
        %1622 = vmatpush1.bf16.msra.mxu0 0
        %1623 = vmatprep.subr.bf16.mxu0 0
        %1624 = vmatpush1.bf16.msra.mxu0 0
        %1625 = vmatprep.subr.bf16.mxu0 0
        %1626 = vmatpush1.bf16.msra.mxu0 0
        %1627 = vmatprep.subr.bf16.mxu0 0
        %1628 = vmatpush1.bf16.msra.mxu0 0
        %1629 = vmatprep.subr.bf16.mxu0 0
        %1630 = vmatpush1.bf16.msra.mxu0 0
        %1631 = vmatprep.subr.bf16.mxu0 0
        %1632 = vmatpush1.bf16.msra.mxu0 0
        %1633 = vmatprep.subr.bf16.mxu0 0
        %1634 = vmatpush1.bf16.msra.mxu0 0
        %1635 = vmatprep.mubr.bf16.mxu0 0
        %1636 = vmatmul.mubr.bf16.gmra.mrb[0].mxu0 %v1579
        %v1637 = vpop.f32.mrb[0].mxu0
        %v1638 = vadd.f32 %v1479, %v1637
        %v1639 = vpop.f32.mrb[0].mxu0
        %v1640 = vpop.f32.mrb[0].mxu0
        %v1641 = vadd.f32 %v1482, %v1640
        %v1642 = vpop.f32.mrb[0].mxu0
        %1643 = vmatprep.mubr.bf16.mxu0 0
        %1644 = vmatmul.mubr.bf16.gmra.mrb[0].mxu0 %v1581
        %v1645 = vpop.f32.mrb[0].mxu0
        %v1646 = vadd.f32 %v1487, %v1645
        %v1647 = vpop.f32.mrb[0].mxu0
        %v1648 = vpop.f32.mrb[0].mxu0
        %v1649 = vadd.f32 %v1490, %v1648
        %v1650 = vpop.f32.mrb[0].mxu0
        %1651 = vmatprep.mubr.bf16.mxu0 0
        %1652 = vmatmul.mubr.bf16.gmra.mrb[0].mxu0 %v1583
        %v1653 = vpop.f32.mrb[0].mxu0
        %v1654 = vadd.f32 %v1495, %v1653
        %v1655 = vpop.f32.mrb[0].mxu0
        %v1656 = vpop.f32.mrb[0].mxu0
        %v1657 = vadd.f32 %v1498, %v1656
        %v1658 = vpop.f32.mrb[0].mxu0
        %1659 = vmatprep.mubr.bf16.mxu0 0
        %1660 = vmatmul.mubr.bf16.gmra.mrb[0].mxu0 %v1585
        %v1661 = vpop.f32.mrb[0].mxu0
        %v1662 = vadd.f32 %v1503, %v1661
        %v1663 = vpop.f32.mrb[0].mxu0
        %v1664 = vpop.f32.mrb[0].mxu0
        %v1665 = vadd.f32 %v1506, %v1664
        %v1666 = vpop.f32.mrb[0].mxu0
        %1667 = vmatprep.mubr.bf16.mxu0 0
        %1668 = vmatmul.mubr.bf16.gmra.mrb[0].mxu0 %v1587
        %v1669 = vpop.f32.mrb[0].mxu0
        %v1670 = vadd.f32 %v1511, %v1669
        %v1671 = vpop.f32.mrb[0].mxu0
        %v1672 = vpop.f32.mrb[0].mxu0
        %v1673 = vadd.f32 %v1514, %v1672
        %v1674 = vpop.f32.mrb[0].mxu0
        %1675 = vmatprep.mubr.bf16.mxu0 0
        %1676 = vmatmul.mubr.bf16.gmra.mrb[0].mxu0 %v1589
        %v1677 = vpop.f32.mrb[0].mxu0
        %v1678 = vadd.f32 %v1519, %v1677
        %v1679 = vpop.f32.mrb[0].mxu0
        %v1680 = vpop.f32.mrb[0].mxu0
        %v1681 = vadd.f32 %v1522, %v1680
        %v1682 = vpop.f32.mrb[0].mxu0
        %1683 = vmatprep.mubr.bf16.mxu0 0
        %1684 = vmatmul.mubr.bf16.gmra.mrb[0].mxu0 %v1591
        %v1685 = vpop.f32.mrb[0].mxu0
        %v1686 = vadd.f32 %v1527, %v1685
        %v1687 = vpop.f32.mrb[0].mxu0
        %v1688 = vpop.f32.mrb[0].mxu0
        %v1689 = vadd.f32 %v1530, %v1688
        %v1690 = vpop.f32.mrb[0].mxu0
        %1691 = vmatprep.mubr.bf16.mxu0 0
        %1692 = vmatmul.mubr.bf16.gmra.mrb[0].mxu0 %v1593
        %v1693 = vpop.f32.mrb[0].mxu0
        %v1694 = vadd.f32 %v1535, %v1693
        %v1695 = vpop.f32.mrb[0].mxu0
        %v1696 = vpop.f32.mrb[0].mxu0
        %v1697 = vadd.f32 %v1538, %v1696
        %v1698 = vpop.f32.mrb[0].mxu0
        %1699 = vmatprep.mubr.bf16.mxu0 0
        %1700 = vmatmul.mubr.bf16.gmra.mrb[0].mxu0 %v1595
        %v1701 = vpop.f32.mrb[0].mxu0
        %v1702 = vadd.f32 %v1543, %v1701
        %v1703 = vpop.f32.mrb[0].mxu0
        %v1704 = vpop.f32.mrb[0].mxu0
        %v1705 = vadd.f32 %v1546, %v1704
        %v1706 = vpop.f32.mrb[0].mxu0
        %1707 = vmatprep.mubr.bf16.mxu0 0
        %1708 = vmatmul.mubr.bf16.gmra.mrb[0].mxu0 %v1597
        %v1709 = vpop.f32.mrb[0].mxu0
        %v1710 = vadd.f32 %v1551, %v1709
        %v1711 = vpop.f32.mrb[0].mxu0
        %v1712 = vpop.f32.mrb[0].mxu0
        %v1713 = vadd.f32 %v1554, %v1712
        %v1714 = vpop.f32.mrb[0].mxu0
        %1715 = vmatprep.mubr.bf16.mxu0 0
        %1716 = vmatmul.mubr.bf16.gmra.mrb[0].mxu0 %v1599
        %v1717 = vpop.f32.mrb[0].mxu0
        %v1718 = vadd.f32 %v1559, %v1717
        %v1719 = vpop.f32.mrb[0].mxu0
        %v1720 = vpop.f32.mrb[0].mxu0
        %v1721 = vadd.f32 %v1562, %v1720
        %v1722 = vpop.f32.mrb[0].mxu0
        %1723 = vmatprep.mubr.bf16.mxu0 0
        %1724 = vmatmul.mubr.bf16.gmra.mrb[0].mxu0 %v1601
        %v1725 = vpop.f32.mrb[0].mxu0
        %v1726 = vadd.f32 %v1567, %v1725
        %v1727 = vpop.f32.mrb[0].mxu0
        %v1728 = vpop.f32.mrb[0].mxu0
        %v1729 = vadd.f32 %v1570, %v1728
        %v1730 = vpop.f32.mrb[0].mxu0
        %1731 = vdwg.mxu0
        %v1732 = vld [vmem:[%s325 + $0xc] sm:$0xe]
        %s1733 = scalar_lea.vmem %s330, 16
        %v1734 = vld [vmem:[%s1733] sm:$0xf]
        %v1735 = vld [vmem:[%s1733 + $0x4] sm:$0xf]
        %v1737 = vunpack.c.l.b16 %v1732
        %v1738 = vpack.c.b16 %v1263, %v1737
        %vm1739 = vcmask 1046528
        %v1740 = vrot.slane %v1738, 1
        %v1741 = vrot.slane %v1288, 1
        %v1742 = vsel %vm1739, %v1740, %v1741
        %v1743 = vrot.slane %v1289, 1
        %v1744 = vsel %vm1739, %v1741, %v1743
        %v1745 = vrot.slane %v1290, 1
        %v1746 = vsel %vm1739, %v1743, %v1745
        %v1747 = vrot.slane %v1291, 1
        %v1748 = vsel %vm1739, %v1745, %v1747
        %v1749 = vrot.slane %v1292, 1
        %v1750 = vsel %vm1739, %v1747, %v1749
        %v1751 = vrot.slane %v1293, 1
        %v1752 = vsel %vm1739, %v1749, %v1751
        %v1753 = vrot.slane %v1294, 1
        %v1754 = vsel %vm1739, %v1751, %v1753
        %v1755 = vrot.slane %v1295, 1
        %v1756 = vsel %vm1739, %v1753, %v1755
        %v1757 = vrot.slane %v1296, 1
        %v1758 = vsel %vm1739, %v1755, %v1757
        %v1759 = vrot.slane %v1297, 1
        %v1760 = vsel %vm1739, %v1757, %v1759
        %v1761 = vrot.slane %v1298, 1
        %v1762 = vsel %vm1739, %v1759, %v1761
        %v1763 = vrot.slane %v1299, 1
        %v1764 = vsel %vm1739, %v1761, %v1763
        %v1767 = vunpack.c.l.b16 %v1734
        %v1768 = vunpack.c.l.b16 %v1735
        %v1769 = vpack.c.b16 %v1768, %v1767
        %v1772 = vsel %vm1407, %v1742, 0
        %v1775 = vsel %vm1407, %v1744, 0
        %v1778 = vsel %vm1407, %v1746, 0
        %v1781 = vsel %vm1407, %v1748, 0
        %v1784 = vsel %vm1407, %v1750, 0
        %v1787 = vsel %vm1407, %v1752, 0
        %v1790 = vsel %vm1407, %v1754, 0
        %v1793 = vsel %vm1407, %v1756, 0
        %v1796 = vsel %vm1407, %v1758, 0
        %v1799 = vsel %vm1407, %v1760, 0
        %v1802 = vsel %vm1407, %v1762, 0
        %v1805 = vsel %vm1407, %v1764, 0
        %1807 = vmatprep.subr.bf16.mxu0 0
        %1808 = vmatpush1.bf16.msra.mxu0 %v1769
        %1809 = vmatprep.subr.bf16.mxu0 0
        %1810 = vmatpush1.bf16.msra.mxu0 0
        %1811 = vmatprep.subr.bf16.mxu0 0
        %1812 = vmatpush1.bf16.msra.mxu0 0
        %1813 = vmatprep.subr.bf16.mxu0 0
        %1814 = vmatpush1.bf16.msra.mxu0 0
        %1815 = vmatprep.subr.bf16.mxu0 0
        %1816 = vmatpush1.bf16.msra.mxu0 0
        %1817 = vmatprep.subr.bf16.mxu0 0
        %1818 = vmatpush1.bf16.msra.mxu0 0
        %1819 = vmatprep.subr.bf16.mxu0 0
        %1820 = vmatpush1.bf16.msra.mxu0 0
        %1821 = vmatprep.subr.bf16.mxu0 0
        %1822 = vmatpush1.bf16.msra.mxu0 0
        %1823 = vmatprep.subr.bf16.mxu0 0
        %1824 = vmatpush1.bf16.msra.mxu0 0
        %1825 = vmatprep.subr.bf16.mxu0 0
        %1826 = vmatpush1.bf16.msra.mxu0 0
        %1827 = vmatprep.subr.bf16.mxu0 0
        %1828 = vmatpush1.bf16.msra.mxu0 0
        %1829 = vmatprep.subr.bf16.mxu0 0
        %1830 = vmatpush1.bf16.msra.mxu0 0
        %1831 = vmatprep.subr.bf16.mxu0 0
        %1832 = vmatpush1.bf16.msra.mxu0 0
        %1833 = vmatprep.subr.bf16.mxu0 0
        %1834 = vmatpush1.bf16.msra.mxu0 0
        %1835 = vmatprep.subr.bf16.mxu0 0
        %1836 = vmatpush1.bf16.msra.mxu0 0
        %1837 = vmatprep.subr.bf16.mxu0 0
        %1838 = vmatpush1.bf16.msra.mxu0 0
        %1839 = vmatprep.mubr.bf16.mxu0 0
        %1840 = vmatmul.mubr.bf16.gmra.mrb[0].mxu0 %v1772
        %v1841 = vpop.f32.mrb[0].mxu0
        %v1842 = vadd.f32 0.0, %v1841
        %v1843 = vpop.f32.mrb[0].mxu0
        %v1844 = vpop.f32.mrb[0].mxu0
        %v1845 = vadd.f32 0.0, %v1844
        %v1846 = vpop.f32.mrb[0].mxu0
        %1847 = vmatprep.mubr.bf16.mxu0 0
        %1848 = vmatmul.mubr.bf16.gmra.mrb[0].mxu0 %v1775
        %v1849 = vpop.f32.mrb[0].mxu0
        %v1850 = vadd.f32 0.0, %v1849
        %v1851 = vpop.f32.mrb[0].mxu0
        %v1852 = vpop.f32.mrb[0].mxu0
        %v1853 = vadd.f32 0.0, %v1852
        %v1854 = vpop.f32.mrb[0].mxu0
        %1855 = vmatprep.mubr.bf16.mxu0 0
        %1856 = vmatmul.mubr.bf16.gmra.mrb[0].mxu0 %v1778
        %v1857 = vpop.f32.mrb[0].mxu0
        %v1858 = vadd.f32 0.0, %v1857
        %v1859 = vpop.f32.mrb[0].mxu0
        %v1860 = vpop.f32.mrb[0].mxu0
        %v1861 = vadd.f32 0.0, %v1860
        %v1862 = vpop.f32.mrb[0].mxu0
        %1863 = vmatprep.mubr.bf16.mxu0 0
        %1864 = vmatmul.mubr.bf16.gmra.mrb[0].mxu0 %v1781
        %v1865 = vpop.f32.mrb[0].mxu0
        %v1866 = vadd.f32 0.0, %v1865
        %v1867 = vpop.f32.mrb[0].mxu0
        %v1868 = vpop.f32.mrb[0].mxu0
        %v1869 = vadd.f32 0.0, %v1868
        %v1870 = vpop.f32.mrb[0].mxu0
        %1871 = vmatprep.mubr.bf16.mxu0 0
        %1872 = vmatmul.mubr.bf16.gmra.mrb[0].mxu0 %v1784
        %v1873 = vpop.f32.mrb[0].mxu0
        %v1874 = vadd.f32 0.0, %v1873
        %v1875 = vpop.f32.mrb[0].mxu0
        %v1876 = vpop.f32.mrb[0].mxu0
        %v1877 = vadd.f32 0.0, %v1876
        %v1878 = vpop.f32.mrb[0].mxu0
        %1879 = vmatprep.mubr.bf16.mxu0 0
        %1880 = vmatmul.mubr.bf16.gmra.mrb[0].mxu0 %v1787
        %v1881 = vpop.f32.mrb[0].mxu0
        %v1882 = vadd.f32 0.0, %v1881
        %v1883 = vpop.f32.mrb[0].mxu0
        %v1884 = vpop.f32.mrb[0].mxu0
        %v1885 = vadd.f32 0.0, %v1884
        %v1886 = vpop.f32.mrb[0].mxu0
        %1887 = vmatprep.mubr.bf16.mxu0 0
        %1888 = vmatmul.mubr.bf16.gmra.mrb[0].mxu0 %v1790
        %v1889 = vpop.f32.mrb[0].mxu0
        %v1890 = vadd.f32 0.0, %v1889
        %v1891 = vpop.f32.mrb[0].mxu0
        %v1892 = vpop.f32.mrb[0].mxu0
        %v1893 = vadd.f32 0.0, %v1892
        %v1894 = vpop.f32.mrb[0].mxu0
        %1895 = vmatprep.mubr.bf16.mxu0 0
        %1896 = vmatmul.mubr.bf16.gmra.mrb[0].mxu0 %v1793
        %v1897 = vpop.f32.mrb[0].mxu0
        %v1898 = vadd.f32 0.0, %v1897
        %v1899 = vpop.f32.mrb[0].mxu0
        %v1900 = vpop.f32.mrb[0].mxu0
        %v1901 = vadd.f32 0.0, %v1900
        %v1902 = vpop.f32.mrb[0].mxu0
        %1903 = vmatprep.mubr.bf16.mxu0 0
        %1904 = vmatmul.mubr.bf16.gmra.mrb[0].mxu0 %v1796
        %v1905 = vpop.f32.mrb[0].mxu0
        %v1906 = vadd.f32 0.0, %v1905
        %v1907 = vpop.f32.mrb[0].mxu0
        %v1908 = vpop.f32.mrb[0].mxu0
        %v1909 = vadd.f32 0.0, %v1908
        %v1910 = vpop.f32.mrb[0].mxu0
        %1911 = vmatprep.mubr.bf16.mxu0 0
        %1912 = vmatmul.mubr.bf16.gmra.mrb[0].mxu0 %v1799
        %v1913 = vpop.f32.mrb[0].mxu0
        %v1914 = vadd.f32 0.0, %v1913
        %v1915 = vpop.f32.mrb[0].mxu0
        %v1916 = vpop.f32.mrb[0].mxu0
        %v1917 = vadd.f32 0.0, %v1916
        %v1918 = vpop.f32.mrb[0].mxu0
        %1919 = vmatprep.mubr.bf16.mxu0 0
        %1920 = vmatmul.mubr.bf16.gmra.mrb[0].mxu0 %v1802
        %v1921 = vpop.f32.mrb[0].mxu0
        %v1922 = vadd.f32 0.0, %v1921
        %v1923 = vpop.f32.mrb[0].mxu0
        %v1924 = vpop.f32.mrb[0].mxu0
        %v1925 = vadd.f32 0.0, %v1924
        %v1926 = vpop.f32.mrb[0].mxu0
        %1927 = vmatprep.mubr.bf16.mxu0 0
        %1928 = vmatmul.mubr.bf16.gmra.mrb[0].mxu0 %v1805
        %v1929 = vpop.f32.mrb[0].mxu0
        %v1930 = vadd.f32 0.0, %v1929
        %v1931 = vpop.f32.mrb[0].mxu0
        %v1932 = vpop.f32.mrb[0].mxu0
        %v1933 = vadd.f32 0.0, %v1932
        %v1934 = vpop.f32.mrb[0].mxu0
        %1935 = vdwg.mxu0
        %v1936 = vadd.f32 %v1638, %v1842
        %v1937 = vadd.f32 %v1641, %v1845
        %v1938 = vadd.f32 %v1646, %v1850
        %v1939 = vadd.f32 %v1649, %v1853
        %v1940 = vadd.f32 %v1654, %v1858
        %v1941 = vadd.f32 %v1657, %v1861
        %v1942 = vadd.f32 %v1662, %v1866
        %v1943 = vadd.f32 %v1665, %v1869
        %v1944 = vadd.f32 %v1670, %v1874
        %v1945 = vadd.f32 %v1673, %v1877
        %v1946 = vadd.f32 %v1678, %v1882
        %v1947 = vadd.f32 %v1681, %v1885
        %v1948 = vadd.f32 %v1686, %v1890
        %v1949 = vadd.f32 %v1689, %v1893
        %v1950 = vadd.f32 %v1694, %v1898
        %v1951 = vadd.f32 %v1697, %v1901
        %v1952 = vadd.f32 %v1702, %v1906
        %v1953 = vadd.f32 %v1705, %v1909
        %v1954 = vadd.f32 %v1710, %v1914
        %v1955 = vadd.f32 %v1713, %v1917
        %v1956 = vadd.f32 %v1718, %v1922
        %v1957 = vadd.f32 %v1721, %v1925
        %v1958 = vadd.f32 %v1726, %v1930
        %v1959 = vadd.f32 %v1729, %v1933
        %v1960 = vld [vmem:[#allocation2] sm:$0xff]
        %v1961 = vld [vmem:[#allocation2 + $0x8] sm:$0xff]
        %v1962 = vld [vmem:[#allocation2 + $0x10] sm:$0xff]
        %v1963 = vld [vmem:[#allocation2 + $0x18] sm:$0xff]
        %v1964 = vld [vmem:[#allocation2 + $0x20] sm:$0xff]
        %v1965 = vld [vmem:[#allocation2 + $0x28] sm:$0xff]
        %v1966 = vld [vmem:[#allocation2 + $0x30] sm:$0xff]
        %v1967 = vld [vmem:[#allocation2 + $0x38] sm:$0xff]
        %v1968 = vld [vmem:[#allocation2 + $0x40] sm:$0xff]
        %v1969 = vld [vmem:[#allocation2 + $0x48] sm:$0xff]
        %v1970 = vld [vmem:[#allocation2 + $0x50] sm:$0xff]
        %v1971 = vld [vmem:[#allocation2 + $0x58] sm:$0xff]
        %v1972 = vld [vmem:[#allocation2 + $0x60] sm:$0xff]
        %v1973 = vld [vmem:[#allocation2 + $0x68] sm:$0xff]
        %v1974 = vld [vmem:[#allocation2 + $0x70] sm:$0xff]
        %v1975 = vld [vmem:[#allocation2 + $0x78] sm:$0xff]
        %v1976 = vld [vmem:[#allocation2 + $0x80] sm:$0xff]
        %v1977 = vld [vmem:[#allocation2 + $0x88] sm:$0xff]
        %v1978 = vld [vmem:[#allocation2 + $0x90] sm:$0xff]
        %v1979 = vld [vmem:[#allocation2 + $0x98] sm:$0xff]
        %v1980 = vld [vmem:[#allocation2 + $0xa0] sm:$0xff]
        %v1981 = vld [vmem:[#allocation2 + $0xa8] sm:$0xff]
        %v1982 = vld [vmem:[#allocation2 + $0xb0] sm:$0xff]
        %v1983 = vld [vmem:[#allocation2 + $0xb8] sm:$0xff]
        %v1984 = vadd.f32 %v1960, %v1936
        %v1985 = vadd.f32 %v1961, %v1937
        %v1986 = vadd.f32 %v1962, %v1938
        %v1987 = vadd.f32 %v1963, %v1939
        %v1988 = vadd.f32 %v1964, %v1940
        %v1989 = vadd.f32 %v1965, %v1941
        %v1990 = vadd.f32 %v1966, %v1942
        %v1991 = vadd.f32 %v1967, %v1943
        %v1992 = vadd.f32 %v1968, %v1944
        %v1993 = vadd.f32 %v1969, %v1945
        %v1994 = vadd.f32 %v1970, %v1946
        %v1995 = vadd.f32 %v1971, %v1947
        %v1996 = vadd.f32 %v1972, %v1948
        %v1997 = vadd.f32 %v1973, %v1949
        %v1998 = vadd.f32 %v1974, %v1950
        %v1999 = vadd.f32 %v1975, %v1951
        %v2000 = vadd.f32 %v1976, %v1952
        %v2001 = vadd.f32 %v1977, %v1953
        %v2002 = vadd.f32 %v1978, %v1954
        %v2003 = vadd.f32 %v1979, %v1955
        %v2004 = vadd.f32 %v1980, %v1956
        %v2005 = vadd.f32 %v1981, %v1957
        %v2006 = vadd.f32 %v1982, %v1958
        %v2007 = vadd.f32 %v1983, %v1959
        %2008 = vst.msk [vmem:[#allocation2] sm:$0xff] %vm1407, %v1984
        %2009 = vst.msk [vmem:[#allocation2 + $0x8] sm:$0xff] %vm1407, %v1985
        %2010 = vst.msk [vmem:[#allocation2 + $0x10] sm:$0xff] %vm1407, %v1986
        %2011 = vst.msk [vmem:[#allocation2 + $0x18] sm:$0xff] %vm1407, %v1987
        %2012 = vst.msk [vmem:[#allocation2 + $0x20] sm:$0xff] %vm1407, %v1988
        %2013 = vst.msk [vmem:[#allocation2 + $0x28] sm:$0xff] %vm1407, %v1989
        %2014 = vst.msk [vmem:[#allocation2 + $0x30] sm:$0xff] %vm1407, %v1990
        %2015 = vst.msk [vmem:[#allocation2 + $0x38] sm:$0xff] %vm1407, %v1991
        %2016 = vst.msk [vmem:[#allocation2 + $0x40] sm:$0xff] %vm1407, %v1992
        %2017 = vst.msk [vmem:[#allocation2 + $0x48] sm:$0xff] %vm1407, %v1993
        %2018 = vst.msk [vmem:[#allocation2 + $0x50] sm:$0xff] %vm1407, %v1994
        %2019 = vst.msk [vmem:[#allocation2 + $0x58] sm:$0xff] %vm1407, %v1995
        %2020 = vst.msk [vmem:[#allocation2 + $0x60] sm:$0xff] %vm1407, %v1996
        %2021 = vst.msk [vmem:[#allocation2 + $0x68] sm:$0xff] %vm1407, %v1997
        %2022 = vst.msk [vmem:[#allocation2 + $0x70] sm:$0xff] %vm1407, %v1998
        %2023 = vst.msk [vmem:[#allocation2 + $0x78] sm:$0xff] %vm1407, %v1999
        %2024 = vst.msk [vmem:[#allocation2 + $0x80] sm:$0xff] %vm1407, %v2000
        %2025 = vst.msk [vmem:[#allocation2 + $0x88] sm:$0xff] %vm1407, %v2001
        %2026 = vst.msk [vmem:[#allocation2 + $0x90] sm:$0xff] %vm1407, %v2002
        %2027 = vst.msk [vmem:[#allocation2 + $0x98] sm:$0xff] %vm1407, %v2003
        %2028 = vst.msk [vmem:[#allocation2 + $0xa0] sm:$0xff] %vm1407, %v2004
        %2029 = vst.msk [vmem:[#allocation2 + $0xa8] sm:$0xff] %vm1407, %v2005
        %2030 = vst.msk [vmem:[#allocation2 + $0xb0] sm:$0xff] %vm1407, %v2006
        %2031 = vst.msk [vmem:[#allocation2 + $0xb8] sm:$0xff] %vm1407, %v2007
      $region52: #{fpn_psp_head_forward.6} parent=43 // pred_fallthru
        _
      %p2032 = scmp.eq.s32.totalorder %s24, 2
      // Predicated region
      $region53: #{fpn_psp_head_forward.6} parent=43 // pred_check
        %p2033 = pneg %p2032
      $region54: #{fpn_psp_head_forward.6} parent=43 // pred_check_branch
        %2035 = sbr.rel (%p2033) target = $region56
      $region55: #{fpn_psp_head_forward.6} parent=43 // pred_region
        %v2036 = vld [vmem:[%s325 + $0x18] sm:$0xf]
        %v2037 = vld [vmem:[%s325 + $0x1c] sm:$0xf]
        %v2038 = vld [vmem:[%s325 + $0x20] sm:$0xf]
        %v2039 = vld [vmem:[%s325 + $0x24] sm:$0xf]
        %v2040 = vld [vmem:[%s325 + $0x28] sm:$0xf]
        %v2041 = vld [vmem:[%s325 + $0x2c] sm:$0xf]
        %v2042 = vld [vmem:[%s325 + $0x30] sm:$0xf]
        %v2043 = vld [vmem:[%s325 + $0x34] sm:$0xf]
        %v2044 = vld [vmem:[%s325 + $0x38] sm:$0xf]
        %v2045 = vld [vmem:[%s325 + $0x3c] sm:$0xf]
        %v2046 = vld [vmem:[%s325 + $0x40] sm:$0xf]
        %v2047 = vld [vmem:[%s325 + $0x44] sm:$0xf]
        %v2048 = vld [vmem:[%s325 + $0x48] sm:$0xf]
        %v2049 = vld [vmem:[%s325 + $0x4c] sm:$0xf]
        %v2050 = vld [vmem:[%s325 + $0x50] sm:$0xf]
        %v2051 = vld [vmem:[%s325 + $0x54] sm:$0xf]
        %v2052 = vld [vmem:[%s325 + $0x58] sm:$0xf]
        %v2053 = vld [vmem:[%s325 + $0x5c] sm:$0xf]
        %v2054 = vld [vmem:[%s325 + $0x60] sm:$0xf]
        %v2055 = vld [vmem:[%s325 + $0x64] sm:$0xf]
        %v2056 = vld [vmem:[%s325 + $0x68] sm:$0xf]
        %v2057 = vld [vmem:[%s325 + $0x6c] sm:$0xf]
        %v2058 = vld [vmem:[%s325 + $0x70] sm:$0xf]
        %v2059 = vld [vmem:[%s325 + $0x74] sm:$0xf]
        %v2060 = vld [vmem:[%s330] sm:$0xf]
        %v2061 = vld [vmem:[%s330 + $0x4] sm:$0xf]
        %v2062 = vld [vmem:[%s325 + $0x78] sm:$0x1]
        %s2063 = scalar_lea.vmem %s330, 8
        %v2064 = vld [vmem:[%s2063] sm:$0xf]
        %v2065 = vld [vmem:[%s2063 + $0x4] sm:$0xf]
        %v2091 = vunpack.c.l.b16 %v2036
        %v2092 = vunpack.c.l.b16 %v2037
        %v2093 = vunpack.c.l.b16 %v2038
        %v2094 = vunpack.c.l.b16 %v2039
        %v2095 = vunpack.c.l.b16 %v2040
        %v2096 = vunpack.c.l.b16 %v2041
        %v2097 = vunpack.c.l.b16 %v2042
        %v2098 = vunpack.c.l.b16 %v2043
        %v2099 = vunpack.c.l.b16 %v2044
        %v2100 = vunpack.c.l.b16 %v2045
        %v2101 = vunpack.c.l.b16 %v2046
        %v2102 = vunpack.c.l.b16 %v2047
        %v2103 = vunpack.c.l.b16 %v2048
        %v2104 = vunpack.c.l.b16 %v2049
        %v2105 = vunpack.c.l.b16 %v2050
        %v2106 = vunpack.c.l.b16 %v2051
        %v2107 = vunpack.c.l.b16 %v2052
        %v2108 = vunpack.c.l.b16 %v2053
        %v2109 = vunpack.c.l.b16 %v2054
        %v2110 = vunpack.c.l.b16 %v2055
        %v2111 = vunpack.c.l.b16 %v2056
        %v2112 = vunpack.c.l.b16 %v2057
        %v2113 = vunpack.c.l.b16 %v2058
        %v2114 = vunpack.c.l.b16 %v2059
        %v2115 = vunpack.c.l.b16 %v2062
        %v2116 = vpack.c.b16 %v2092, %v2091
        %v2117 = vpack.c.b16 %v2094, %v2093
        %v2118 = vpack.c.b16 %v2096, %v2095
        %v2119 = vpack.c.b16 %v2098, %v2097
        %v2120 = vpack.c.b16 %v2100, %v2099
        %v2121 = vpack.c.b16 %v2102, %v2101
        %v2122 = vpack.c.b16 %v2104, %v2103
        %v2123 = vpack.c.b16 %v2106, %v2105
        %v2124 = vpack.c.b16 %v2108, %v2107
        %v2125 = vpack.c.b16 %v2110, %v2109
        %v2126 = vpack.c.b16 %v2112, %v2111
        %v2127 = vpack.c.b16 %v2114, %v2113
        %v2128 = vpack.c.b16 %v2115, %v2115
        %vm2129 = vsmask.f32 7424
        %v2131 = vshrl.u32 %v2116, 16
        %v2133 = vshll.u32 %v2116, 16
        %v2135 = vrot.slane %v2133, 1
        %v2136 = vor.u32 %v2131, %v2135
        %v2138 = vshll.u32 %v2117, 16
        %v2140 = vrot.slane %v2138, 1
        %v2141 = vsel %vm2129, %v2136, %v2140
        %v2142 = vshrl.u32 %v2117, 16
        %v2144 = vor.u32 %v2142, %v2140
        %v2146 = vshll.u32 %v2118, 16
        %v2148 = vrot.slane %v2146, 1
        %v2149 = vsel %vm2129, %v2144, %v2148
        %v2150 = vshrl.u32 %v2118, 16
        %v2152 = vor.u32 %v2150, %v2148
        %v2154 = vshll.u32 %v2119, 16
        %v2156 = vrot.slane %v2154, 1
        %v2157 = vsel %vm2129, %v2152, %v2156
        %v2158 = vshrl.u32 %v2119, 16
        %v2160 = vor.u32 %v2158, %v2156
        %v2162 = vshll.u32 %v2120, 16
        %v2164 = vrot.slane %v2162, 1
        %v2165 = vsel %vm2129, %v2160, %v2164
        %v2166 = vshrl.u32 %v2120, 16
        %v2168 = vor.u32 %v2166, %v2164
        %v2170 = vshll.u32 %v2121, 16
        %v2172 = vrot.slane %v2170, 1
        %v2173 = vsel %vm2129, %v2168, %v2172
        %v2174 = vshrl.u32 %v2121, 16
        %v2176 = vor.u32 %v2174, %v2172
        %v2178 = vshll.u32 %v2122, 16
        %v2180 = vrot.slane %v2178, 1
        %v2181 = vsel %vm2129, %v2176, %v2180
        %v2182 = vshrl.u32 %v2122, 16
        %v2184 = vor.u32 %v2182, %v2180
        %v2186 = vshll.u32 %v2123, 16
        %v2188 = vrot.slane %v2186, 1
        %v2189 = vsel %vm2129, %v2184, %v2188
        %v2190 = vshrl.u32 %v2123, 16
        %v2192 = vor.u32 %v2190, %v2188
        %v2194 = vshll.u32 %v2124, 16
        %v2196 = vrot.slane %v2194, 1
        %v2197 = vsel %vm2129, %v2192, %v2196
        %v2198 = vshrl.u32 %v2124, 16
        %v2200 = vor.u32 %v2198, %v2196
        %v2202 = vshll.u32 %v2125, 16
        %v2204 = vrot.slane %v2202, 1
        %v2205 = vsel %vm2129, %v2200, %v2204
        %v2206 = vshrl.u32 %v2125, 16
        %v2208 = vor.u32 %v2206, %v2204
        %v2210 = vshll.u32 %v2126, 16
        %v2212 = vrot.slane %v2210, 1
        %v2213 = vsel %vm2129, %v2208, %v2212
        %v2214 = vshrl.u32 %v2126, 16
        %v2216 = vor.u32 %v2214, %v2212
        %v2218 = vshll.u32 %v2127, 16
        %v2220 = vrot.slane %v2218, 1
        %v2221 = vsel %vm2129, %v2216, %v2220
        %v2222 = vshrl.u32 %v2127, 16
        %v2224 = vor.u32 %v2222, %v2220
        %v2226 = vshll.u32 %v2128, 16
        %v2228 = vrot.slane %v2226, 1
        %v2229 = vsel %vm2129, %v2224, %v2228
        %v2232 = vunpack.c.l.b16 %v2064
        %v2233 = vunpack.c.l.b16 %v2065
        %v2234 = vpack.c.b16 %v2233, %v2232
        %vm2236 = vcmask 130048
        %v2238 = vsel %vm2236, %v2141, 0
        %v2241 = vsel %vm2236, %v2149, 0
        %v2244 = vsel %vm2236, %v2157, 0
        %v2247 = vsel %vm2236, %v2165, 0
        %v2250 = vsel %vm2236, %v2173, 0
        %v2253 = vsel %vm2236, %v2181, 0
        %v2256 = vsel %vm2236, %v2189, 0
        %v2259 = vsel %vm2236, %v2197, 0
        %v2262 = vsel %vm2236, %v2205, 0
        %v2265 = vsel %vm2236, %v2213, 0
        %v2268 = vsel %vm2236, %v2221, 0
        %v2271 = vsel %vm2236, %v2229, 0
        %2273 = vmatprep.subr.bf16.mxu0 0
        %2274 = vmatpush1.bf16.msra.mxu0 %v2234
        %2275 = vmatprep.subr.bf16.mxu0 0
        %2276 = vmatpush1.bf16.msra.mxu0 0
        %2277 = vmatprep.subr.bf16.mxu0 0
        %2278 = vmatpush1.bf16.msra.mxu0 0
        %2279 = vmatprep.subr.bf16.mxu0 0
        %2280 = vmatpush1.bf16.msra.mxu0 0
        %2281 = vmatprep.subr.bf16.mxu0 0
        %2282 = vmatpush1.bf16.msra.mxu0 0
        %2283 = vmatprep.subr.bf16.mxu0 0
        %2284 = vmatpush1.bf16.msra.mxu0 0
        %2285 = vmatprep.subr.bf16.mxu0 0
        %2286 = vmatpush1.bf16.msra.mxu0 0
        %2287 = vmatprep.subr.bf16.mxu0 0
        %2288 = vmatpush1.bf16.msra.mxu0 0
        %2289 = vmatprep.subr.bf16.mxu0 0
        %2290 = vmatpush1.bf16.msra.mxu0 0
        %2291 = vmatprep.subr.bf16.mxu0 0
        %2292 = vmatpush1.bf16.msra.mxu0 0
        %2293 = vmatprep.subr.bf16.mxu0 0
        %2294 = vmatpush1.bf16.msra.mxu0 0
        %2295 = vmatprep.subr.bf16.mxu0 0
        %2296 = vmatpush1.bf16.msra.mxu0 0
        %2297 = vmatprep.subr.bf16.mxu0 0
        %2298 = vmatpush1.bf16.msra.mxu0 0
        %2299 = vmatprep.subr.bf16.mxu0 0
        %2300 = vmatpush1.bf16.msra.mxu0 0
        %2301 = vmatprep.subr.bf16.mxu0 0
        %2302 = vmatpush1.bf16.msra.mxu0 0
        %2303 = vmatprep.subr.bf16.mxu0 0
        %2304 = vmatpush1.bf16.msra.mxu0 0
        %2305 = vmatprep.mubr.bf16.mxu0 0
        %2306 = vmatmul.mubr.bf16.gmra.mrb[0].mxu0 %v2238
        %v2307 = vpop.f32.mrb[0].mxu0
        %v2308 = vadd.f32 0.0, %v2307
        %v2309 = vpop.f32.mrb[0].mxu0
        %v2310 = vpop.f32.mrb[0].mxu0
        %v2311 = vadd.f32 0.0, %v2310
        %v2312 = vpop.f32.mrb[0].mxu0
        %2313 = vmatprep.mubr.bf16.mxu0 0
        %2314 = vmatmul.mubr.bf16.gmra.mrb[0].mxu0 %v2241
        %v2315 = vpop.f32.mrb[0].mxu0
        %v2316 = vadd.f32 0.0, %v2315
        %v2317 = vpop.f32.mrb[0].mxu0
        %v2318 = vpop.f32.mrb[0].mxu0
        %v2319 = vadd.f32 0.0, %v2318
        %v2320 = vpop.f32.mrb[0].mxu0
        %2321 = vmatprep.mubr.bf16.mxu0 0
        %2322 = vmatmul.mubr.bf16.gmra.mrb[0].mxu0 %v2244
        %v2323 = vpop.f32.mrb[0].mxu0
        %v2324 = vadd.f32 0.0, %v2323
        %v2325 = vpop.f32.mrb[0].mxu0
        %v2326 = vpop.f32.mrb[0].mxu0
        %v2327 = vadd.f32 0.0, %v2326
        %v2328 = vpop.f32.mrb[0].mxu0
        %2329 = vmatprep.mubr.bf16.mxu0 0
        %2330 = vmatmul.mubr.bf16.gmra.mrb[0].mxu0 %v2247
        %v2331 = vpop.f32.mrb[0].mxu0
        %v2332 = vadd.f32 0.0, %v2331
        %v2333 = vpop.f32.mrb[0].mxu0
        %v2334 = vpop.f32.mrb[0].mxu0
        %v2335 = vadd.f32 0.0, %v2334
        %v2336 = vpop.f32.mrb[0].mxu0
        %2337 = vmatprep.mubr.bf16.mxu0 0
        %2338 = vmatmul.mubr.bf16.gmra.mrb[0].mxu0 %v2250
        %v2339 = vpop.f32.mrb[0].mxu0
        %v2340 = vadd.f32 0.0, %v2339
        %v2341 = vpop.f32.mrb[0].mxu0
        %v2342 = vpop.f32.mrb[0].mxu0
        %v2343 = vadd.f32 0.0, %v2342
        %v2344 = vpop.f32.mrb[0].mxu0
        %2345 = vmatprep.mubr.bf16.mxu0 0
        %2346 = vmatmul.mubr.bf16.gmra.mrb[0].mxu0 %v2253
        %v2347 = vpop.f32.mrb[0].mxu0
        %v2348 = vadd.f32 0.0, %v2347
        %v2349 = vpop.f32.mrb[0].mxu0
        %v2350 = vpop.f32.mrb[0].mxu0
        %v2351 = vadd.f32 0.0, %v2350
        %v2352 = vpop.f32.mrb[0].mxu0
        %2353 = vmatprep.mubr.bf16.mxu0 0
        %2354 = vmatmul.mubr.bf16.gmra.mrb[0].mxu0 %v2256
        %v2355 = vpop.f32.mrb[0].mxu0
        %v2356 = vadd.f32 0.0, %v2355
        %v2357 = vpop.f32.mrb[0].mxu0
        %v2358 = vpop.f32.mrb[0].mxu0
        %v2359 = vadd.f32 0.0, %v2358
        %v2360 = vpop.f32.mrb[0].mxu0
        %2361 = vmatprep.mubr.bf16.mxu0 0
        %2362 = vmatmul.mubr.bf16.gmra.mrb[0].mxu0 %v2259
        %v2363 = vpop.f32.mrb[0].mxu0
        %v2364 = vadd.f32 0.0, %v2363
        %v2365 = vpop.f32.mrb[0].mxu0
        %v2366 = vpop.f32.mrb[0].mxu0
        %v2367 = vadd.f32 0.0, %v2366
        %v2368 = vpop.f32.mrb[0].mxu0
        %2369 = vmatprep.mubr.bf16.mxu0 0
        %2370 = vmatmul.mubr.bf16.gmra.mrb[0].mxu0 %v2262
        %v2371 = vpop.f32.mrb[0].mxu0
        %v2372 = vadd.f32 0.0, %v2371
        %v2373 = vpop.f32.mrb[0].mxu0
        %v2374 = vpop.f32.mrb[0].mxu0
        %v2375 = vadd.f32 0.0, %v2374
        %v2376 = vpop.f32.mrb[0].mxu0
        %2377 = vmatprep.mubr.bf16.mxu0 0
        %2378 = vmatmul.mubr.bf16.gmra.mrb[0].mxu0 %v2265
        %v2379 = vpop.f32.mrb[0].mxu0
        %v2380 = vadd.f32 0.0, %v2379
        %v2381 = vpop.f32.mrb[0].mxu0
        %v2382 = vpop.f32.mrb[0].mxu0
        %v2383 = vadd.f32 0.0, %v2382
        %v2384 = vpop.f32.mrb[0].mxu0
        %2385 = vmatprep.mubr.bf16.mxu0 0
        %2386 = vmatmul.mubr.bf16.gmra.mrb[0].mxu0 %v2268
        %v2387 = vpop.f32.mrb[0].mxu0
        %v2388 = vadd.f32 0.0, %v2387
        %v2389 = vpop.f32.mrb[0].mxu0
        %v2390 = vpop.f32.mrb[0].mxu0
        %v2391 = vadd.f32 0.0, %v2390
        %v2392 = vpop.f32.mrb[0].mxu0
        %2393 = vmatprep.mubr.bf16.mxu0 0
        %2394 = vmatmul.mubr.bf16.gmra.mrb[0].mxu0 %v2271
        %v2395 = vpop.f32.mrb[0].mxu0
        %v2396 = vadd.f32 0.0, %v2395
        %v2397 = vpop.f32.mrb[0].mxu0
        %v2398 = vpop.f32.mrb[0].mxu0
        %v2399 = vadd.f32 0.0, %v2398
        %v2400 = vpop.f32.mrb[0].mxu0
        %2401 = vdwg.mxu0
        %v2404 = vunpack.c.l.b16 %v2060
        %v2405 = vunpack.c.l.b16 %v2061
        %v2406 = vpack.c.b16 %v2405, %v2404
        %v2408 = vsel %vm2236, %v2116, 0
        %v2410 = vsel %vm2236, %v2117, 0
        %v2412 = vsel %vm2236, %v2118, 0
        %v2414 = vsel %vm2236, %v2119, 0
        %v2416 = vsel %vm2236, %v2120, 0
        %v2418 = vsel %vm2236, %v2121, 0
        %v2420 = vsel %vm2236, %v2122, 0
        %v2422 = vsel %vm2236, %v2123, 0
        %v2424 = vsel %vm2236, %v2124, 0
        %v2426 = vsel %vm2236, %v2125, 0
        %v2428 = vsel %vm2236, %v2126, 0
        %v2430 = vsel %vm2236, %v2127, 0
        %2432 = vmatprep.subr.bf16.mxu0 0
        %2433 = vmatpush1.bf16.msra.mxu0 %v2406
        %2434 = vmatprep.subr.bf16.mxu0 0
        %2435 = vmatpush1.bf16.msra.mxu0 0
        %2436 = vmatprep.subr.bf16.mxu0 0
        %2437 = vmatpush1.bf16.msra.mxu0 0
        %2438 = vmatprep.subr.bf16.mxu0 0
        %2439 = vmatpush1.bf16.msra.mxu0 0
        %2440 = vmatprep.subr.bf16.mxu0 0
        %2441 = vmatpush1.bf16.msra.mxu0 0
        %2442 = vmatprep.subr.bf16.mxu0 0
        %2443 = vmatpush1.bf16.msra.mxu0 0
        %2444 = vmatprep.subr.bf16.mxu0 0
        %2445 = vmatpush1.bf16.msra.mxu0 0
        %2446 = vmatprep.subr.bf16.mxu0 0
        %2447 = vmatpush1.bf16.msra.mxu0 0
        %2448 = vmatprep.subr.bf16.mxu0 0
        %2449 = vmatpush1.bf16.msra.mxu0 0
        %2450 = vmatprep.subr.bf16.mxu0 0
        %2451 = vmatpush1.bf16.msra.mxu0 0
        %2452 = vmatprep.subr.bf16.mxu0 0
        %2453 = vmatpush1.bf16.msra.mxu0 0
        %2454 = vmatprep.subr.bf16.mxu0 0
        %2455 = vmatpush1.bf16.msra.mxu0 0
        %2456 = vmatprep.subr.bf16.mxu0 0
        %2457 = vmatpush1.bf16.msra.mxu0 0
        %2458 = vmatprep.subr.bf16.mxu0 0
        %2459 = vmatpush1.bf16.msra.mxu0 0
        %2460 = vmatprep.subr.bf16.mxu0 0
        %2461 = vmatpush1.bf16.msra.mxu0 0
        %2462 = vmatprep.subr.bf16.mxu0 0
        %2463 = vmatpush1.bf16.msra.mxu0 0
        %2464 = vmatprep.mubr.bf16.mxu0 0
        %2465 = vmatmul.mubr.bf16.gmra.mrb[0].mxu0 %v2408
        %v2466 = vpop.f32.mrb[0].mxu0
        %v2467 = vadd.f32 %v2308, %v2466
        %v2468 = vpop.f32.mrb[0].mxu0
        %v2469 = vpop.f32.mrb[0].mxu0
        %v2470 = vadd.f32 %v2311, %v2469
        %v2471 = vpop.f32.mrb[0].mxu0
        %2472 = vmatprep.mubr.bf16.mxu0 0
        %2473 = vmatmul.mubr.bf16.gmra.mrb[0].mxu0 %v2410
        %v2474 = vpop.f32.mrb[0].mxu0
        %v2475 = vadd.f32 %v2316, %v2474
        %v2476 = vpop.f32.mrb[0].mxu0
        %v2477 = vpop.f32.mrb[0].mxu0
        %v2478 = vadd.f32 %v2319, %v2477
        %v2479 = vpop.f32.mrb[0].mxu0
        %2480 = vmatprep.mubr.bf16.mxu0 0
        %2481 = vmatmul.mubr.bf16.gmra.mrb[0].mxu0 %v2412
        %v2482 = vpop.f32.mrb[0].mxu0
        %v2483 = vadd.f32 %v2324, %v2482
        %v2484 = vpop.f32.mrb[0].mxu0
        %v2485 = vpop.f32.mrb[0].mxu0
        %v2486 = vadd.f32 %v2327, %v2485
        %v2487 = vpop.f32.mrb[0].mxu0
        %2488 = vmatprep.mubr.bf16.mxu0 0
        %2489 = vmatmul.mubr.bf16.gmra.mrb[0].mxu0 %v2414
        %v2490 = vpop.f32.mrb[0].mxu0
        %v2491 = vadd.f32 %v2332, %v2490
        %v2492 = vpop.f32.mrb[0].mxu0
        %v2493 = vpop.f32.mrb[0].mxu0
        %v2494 = vadd.f32 %v2335, %v2493
        %v2495 = vpop.f32.mrb[0].mxu0
        %2496 = vmatprep.mubr.bf16.mxu0 0
        %2497 = vmatmul.mubr.bf16.gmra.mrb[0].mxu0 %v2416
        %v2498 = vpop.f32.mrb[0].mxu0
        %v2499 = vadd.f32 %v2340, %v2498
        %v2500 = vpop.f32.mrb[0].mxu0
        %v2501 = vpop.f32.mrb[0].mxu0
        %v2502 = vadd.f32 %v2343, %v2501
        %v2503 = vpop.f32.mrb[0].mxu0
        %2504 = vmatprep.mubr.bf16.mxu0 0
        %2505 = vmatmul.mubr.bf16.gmra.mrb[0].mxu0 %v2418
        %v2506 = vpop.f32.mrb[0].mxu0
        %v2507 = vadd.f32 %v2348, %v2506
        %v2508 = vpop.f32.mrb[0].mxu0
        %v2509 = vpop.f32.mrb[0].mxu0
        %v2510 = vadd.f32 %v2351, %v2509
        %v2511 = vpop.f32.mrb[0].mxu0
        %2512 = vmatprep.mubr.bf16.mxu0 0
        %2513 = vmatmul.mubr.bf16.gmra.mrb[0].mxu0 %v2420
        %v2514 = vpop.f32.mrb[0].mxu0
        %v2515 = vadd.f32 %v2356, %v2514
        %v2516 = vpop.f32.mrb[0].mxu0
        %v2517 = vpop.f32.mrb[0].mxu0
        %v2518 = vadd.f32 %v2359, %v2517
        %v2519 = vpop.f32.mrb[0].mxu0
        %2520 = vmatprep.mubr.bf16.mxu0 0
        %2521 = vmatmul.mubr.bf16.gmra.mrb[0].mxu0 %v2422
        %v2522 = vpop.f32.mrb[0].mxu0
        %v2523 = vadd.f32 %v2364, %v2522
        %v2524 = vpop.f32.mrb[0].mxu0
        %v2525 = vpop.f32.mrb[0].mxu0
        %v2526 = vadd.f32 %v2367, %v2525
        %v2527 = vpop.f32.mrb[0].mxu0
        %2528 = vmatprep.mubr.bf16.mxu0 0
        %2529 = vmatmul.mubr.bf16.gmra.mrb[0].mxu0 %v2424
        %v2530 = vpop.f32.mrb[0].mxu0
        %v2531 = vadd.f32 %v2372, %v2530
        %v2532 = vpop.f32.mrb[0].mxu0
        %v2533 = vpop.f32.mrb[0].mxu0
        %v2534 = vadd.f32 %v2375, %v2533
        %v2535 = vpop.f32.mrb[0].mxu0
        %2536 = vmatprep.mubr.bf16.mxu0 0
        %2537 = vmatmul.mubr.bf16.gmra.mrb[0].mxu0 %v2426
        %v2538 = vpop.f32.mrb[0].mxu0
        %v2539 = vadd.f32 %v2380, %v2538
        %v2540 = vpop.f32.mrb[0].mxu0
        %v2541 = vpop.f32.mrb[0].mxu0
        %v2542 = vadd.f32 %v2383, %v2541
        %v2543 = vpop.f32.mrb[0].mxu0
        %2544 = vmatprep.mubr.bf16.mxu0 0
        %2545 = vmatmul.mubr.bf16.gmra.mrb[0].mxu0 %v2428
        %v2546 = vpop.f32.mrb[0].mxu0
        %v2547 = vadd.f32 %v2388, %v2546
        %v2548 = vpop.f32.mrb[0].mxu0
        %v2549 = vpop.f32.mrb[0].mxu0
        %v2550 = vadd.f32 %v2391, %v2549
        %v2551 = vpop.f32.mrb[0].mxu0
        %2552 = vmatprep.mubr.bf16.mxu0 0
        %2553 = vmatmul.mubr.bf16.gmra.mrb[0].mxu0 %v2430
        %v2554 = vpop.f32.mrb[0].mxu0
        %v2555 = vadd.f32 %v2396, %v2554
        %v2556 = vpop.f32.mrb[0].mxu0
        %v2557 = vpop.f32.mrb[0].mxu0
        %v2558 = vadd.f32 %v2399, %v2557
        %v2559 = vpop.f32.mrb[0].mxu0
        %2560 = vdwg.mxu0
        %v2561 = vld [vmem:[%s325 + $0x18] sm:$0xe]
        %s2562 = scalar_lea.vmem %s330, 16
        %v2563 = vld [vmem:[%s2562] sm:$0xf]
        %v2564 = vld [vmem:[%s2562 + $0x4] sm:$0xf]
        %v2566 = vunpack.c.l.b16 %v2561
        %v2567 = vpack.c.b16 %v2092, %v2566
        %vm2568 = vcmask 1046528
        %v2569 = vrot.slane %v2567, 1
        %v2570 = vrot.slane %v2117, 1
        %v2571 = vsel %vm2568, %v2569, %v2570
        %v2572 = vrot.slane %v2118, 1
        %v2573 = vsel %vm2568, %v2570, %v2572
        %v2574 = vrot.slane %v2119, 1
        %v2575 = vsel %vm2568, %v2572, %v2574
        %v2576 = vrot.slane %v2120, 1
        %v2577 = vsel %vm2568, %v2574, %v2576
        %v2578 = vrot.slane %v2121, 1
        %v2579 = vsel %vm2568, %v2576, %v2578
        %v2580 = vrot.slane %v2122, 1
        %v2581 = vsel %vm2568, %v2578, %v2580
        %v2582 = vrot.slane %v2123, 1
        %v2583 = vsel %vm2568, %v2580, %v2582
        %v2584 = vrot.slane %v2124, 1
        %v2585 = vsel %vm2568, %v2582, %v2584
        %v2586 = vrot.slane %v2125, 1
        %v2587 = vsel %vm2568, %v2584, %v2586
        %v2588 = vrot.slane %v2126, 1
        %v2589 = vsel %vm2568, %v2586, %v2588
        %v2590 = vrot.slane %v2127, 1
        %v2591 = vsel %vm2568, %v2588, %v2590
        %v2592 = vrot.slane %v2128, 1
        %v2593 = vsel %vm2568, %v2590, %v2592
        %v2596 = vunpack.c.l.b16 %v2563
        %v2597 = vunpack.c.l.b16 %v2564
        %v2598 = vpack.c.b16 %v2597, %v2596
        %v2601 = vsel %vm2236, %v2571, 0
        %v2604 = vsel %vm2236, %v2573, 0
        %v2607 = vsel %vm2236, %v2575, 0
        %v2610 = vsel %vm2236, %v2577, 0
        %v2613 = vsel %vm2236, %v2579, 0
        %v2616 = vsel %vm2236, %v2581, 0
        %v2619 = vsel %vm2236, %v2583, 0
        %v2622 = vsel %vm2236, %v2585, 0
        %v2625 = vsel %vm2236, %v2587, 0
        %v2628 = vsel %vm2236, %v2589, 0
        %v2631 = vsel %vm2236, %v2591, 0
        %v2634 = vsel %vm2236, %v2593, 0
        %2636 = vmatprep.subr.bf16.mxu0 0
        %2637 = vmatpush1.bf16.msra.mxu0 %v2598
        %2638 = vmatprep.subr.bf16.mxu0 0
        %2639 = vmatpush1.bf16.msra.mxu0 0
        %2640 = vmatprep.subr.bf16.mxu0 0
        %2641 = vmatpush1.bf16.msra.mxu0 0
        %2642 = vmatprep.subr.bf16.mxu0 0
        %2643 = vmatpush1.bf16.msra.mxu0 0
        %2644 = vmatprep.subr.bf16.mxu0 0
        %2645 = vmatpush1.bf16.msra.mxu0 0
        %2646 = vmatprep.subr.bf16.mxu0 0
        %2647 = vmatpush1.bf16.msra.mxu0 0
        %2648 = vmatprep.subr.bf16.mxu0 0
        %2649 = vmatpush1.bf16.msra.mxu0 0
        %2650 = vmatprep.subr.bf16.mxu0 0
        %2651 = vmatpush1.bf16.msra.mxu0 0
        %2652 = vmatprep.subr.bf16.mxu0 0
        %2653 = vmatpush1.bf16.msra.mxu0 0
        %2654 = vmatprep.subr.bf16.mxu0 0
        %2655 = vmatpush1.bf16.msra.mxu0 0
        %2656 = vmatprep.subr.bf16.mxu0 0
        %2657 = vmatpush1.bf16.msra.mxu0 0
        %2658 = vmatprep.subr.bf16.mxu0 0
        %2659 = vmatpush1.bf16.msra.mxu0 0
        %2660 = vmatprep.subr.bf16.mxu0 0
        %2661 = vmatpush1.bf16.msra.mxu0 0
        %2662 = vmatprep.subr.bf16.mxu0 0
        %2663 = vmatpush1.bf16.msra.mxu0 0
        %2664 = vmatprep.subr.bf16.mxu0 0
        %2665 = vmatpush1.bf16.msra.mxu0 0
        %2666 = vmatprep.subr.bf16.mxu0 0
        %2667 = vmatpush1.bf16.msra.mxu0 0
        %2668 = vmatprep.mubr.bf16.mxu0 0
        %2669 = vmatmul.mubr.bf16.gmra.mrb[0].mxu0 %v2601
        %v2670 = vpop.f32.mrb[0].mxu0
        %v2671 = vadd.f32 0.0, %v2670
        %v2672 = vpop.f32.mrb[0].mxu0
        %v2673 = vpop.f32.mrb[0].mxu0
        %v2674 = vadd.f32 0.0, %v2673
        %v2675 = vpop.f32.mrb[0].mxu0
        %2676 = vmatprep.mubr.bf16.mxu0 0
        %2677 = vmatmul.mubr.bf16.gmra.mrb[0].mxu0 %v2604
        %v2678 = vpop.f32.mrb[0].mxu0
        %v2679 = vadd.f32 0.0, %v2678
        %v2680 = vpop.f32.mrb[0].mxu0
        %v2681 = vpop.f32.mrb[0].mxu0
        %v2682 = vadd.f32 0.0, %v2681
        %v2683 = vpop.f32.mrb[0].mxu0
        %2684 = vmatprep.mubr.bf16.mxu0 0
        %2685 = vmatmul.mubr.bf16.gmra.mrb[0].mxu0 %v2607
        %v2686 = vpop.f32.mrb[0].mxu0
        %v2687 = vadd.f32 0.0, %v2686
        %v2688 = vpop.f32.mrb[0].mxu0
        %v2689 = vpop.f32.mrb[0].mxu0
        %v2690 = vadd.f32 0.0, %v2689
        %v2691 = vpop.f32.mrb[0].mxu0
        %2692 = vmatprep.mubr.bf16.mxu0 0
        %2693 = vmatmul.mubr.bf16.gmra.mrb[0].mxu0 %v2610
        %v2694 = vpop.f32.mrb[0].mxu0
        %v2695 = vadd.f32 0.0, %v2694
        %v2696 = vpop.f32.mrb[0].mxu0
        %v2697 = vpop.f32.mrb[0].mxu0
        %v2698 = vadd.f32 0.0, %v2697
        %v2699 = vpop.f32.mrb[0].mxu0
        %2700 = vmatprep.mubr.bf16.mxu0 0
        %2701 = vmatmul.mubr.bf16.gmra.mrb[0].mxu0 %v2613
        %v2702 = vpop.f32.mrb[0].mxu0
        %v2703 = vadd.f32 0.0, %v2702
        %v2704 = vpop.f32.mrb[0].mxu0
        %v2705 = vpop.f32.mrb[0].mxu0
        %v2706 = vadd.f32 0.0, %v2705
        %v2707 = vpop.f32.mrb[0].mxu0
        %2708 = vmatprep.mubr.bf16.mxu0 0
        %2709 = vmatmul.mubr.bf16.gmra.mrb[0].mxu0 %v2616
        %v2710 = vpop.f32.mrb[0].mxu0
        %v2711 = vadd.f32 0.0, %v2710
        %v2712 = vpop.f32.mrb[0].mxu0
        %v2713 = vpop.f32.mrb[0].mxu0
        %v2714 = vadd.f32 0.0, %v2713
        %v2715 = vpop.f32.mrb[0].mxu0
        %2716 = vmatprep.mubr.bf16.mxu0 0
        %2717 = vmatmul.mubr.bf16.gmra.mrb[0].mxu0 %v2619
        %v2718 = vpop.f32.mrb[0].mxu0
        %v2719 = vadd.f32 0.0, %v2718
        %v2720 = vpop.f32.mrb[0].mxu0
        %v2721 = vpop.f32.mrb[0].mxu0
        %v2722 = vadd.f32 0.0, %v2721
        %v2723 = vpop.f32.mrb[0].mxu0
        %2724 = vmatprep.mubr.bf16.mxu0 0
        %2725 = vmatmul.mubr.bf16.gmra.mrb[0].mxu0 %v2622
        %v2726 = vpop.f32.mrb[0].mxu0
        %v2727 = vadd.f32 0.0, %v2726
        %v2728 = vpop.f32.mrb[0].mxu0
        %v2729 = vpop.f32.mrb[0].mxu0
        %v2730 = vadd.f32 0.0, %v2729
        %v2731 = vpop.f32.mrb[0].mxu0
        %2732 = vmatprep.mubr.bf16.mxu0 0
        %2733 = vmatmul.mubr.bf16.gmra.mrb[0].mxu0 %v2625
        %v2734 = vpop.f32.mrb[0].mxu0
        %v2735 = vadd.f32 0.0, %v2734
        %v2736 = vpop.f32.mrb[0].mxu0
        %v2737 = vpop.f32.mrb[0].mxu0
        %v2738 = vadd.f32 0.0, %v2737
        %v2739 = vpop.f32.mrb[0].mxu0
        %2740 = vmatprep.mubr.bf16.mxu0 0
        %2741 = vmatmul.mubr.bf16.gmra.mrb[0].mxu0 %v2628
        %v2742 = vpop.f32.mrb[0].mxu0
        %v2743 = vadd.f32 0.0, %v2742
        %v2744 = vpop.f32.mrb[0].mxu0
        %v2745 = vpop.f32.mrb[0].mxu0
        %v2746 = vadd.f32 0.0, %v2745
        %v2747 = vpop.f32.mrb[0].mxu0
        %2748 = vmatprep.mubr.bf16.mxu0 0
        %2749 = vmatmul.mubr.bf16.gmra.mrb[0].mxu0 %v2631
        %v2750 = vpop.f32.mrb[0].mxu0
        %v2751 = vadd.f32 0.0, %v2750
        %v2752 = vpop.f32.mrb[0].mxu0
        %v2753 = vpop.f32.mrb[0].mxu0
        %v2754 = vadd.f32 0.0, %v2753
        %v2755 = vpop.f32.mrb[0].mxu0
        %2756 = vmatprep.mubr.bf16.mxu0 0
        %2757 = vmatmul.mubr.bf16.gmra.mrb[0].mxu0 %v2634
        %v2758 = vpop.f32.mrb[0].mxu0
        %v2759 = vadd.f32 0.0, %v2758
        %v2760 = vpop.f32.mrb[0].mxu0
        %v2761 = vpop.f32.mrb[0].mxu0
        %v2762 = vadd.f32 0.0, %v2761
        %v2763 = vpop.f32.mrb[0].mxu0
        %2764 = vdwg.mxu0
        %v2765 = vadd.f32 %v2467, %v2671
        %v2766 = vadd.f32 %v2470, %v2674
        %v2767 = vadd.f32 %v2475, %v2679
        %v2768 = vadd.f32 %v2478, %v2682
        %v2769 = vadd.f32 %v2483, %v2687
        %v2770 = vadd.f32 %v2486, %v2690
        %v2771 = vadd.f32 %v2491, %v2695
        %v2772 = vadd.f32 %v2494, %v2698
        %v2773 = vadd.f32 %v2499, %v2703
        %v2774 = vadd.f32 %v2502, %v2706
        %v2775 = vadd.f32 %v2507, %v2711
        %v2776 = vadd.f32 %v2510, %v2714
        %v2777 = vadd.f32 %v2515, %v2719
        %v2778 = vadd.f32 %v2518, %v2722
        %v2779 = vadd.f32 %v2523, %v2727
        %v2780 = vadd.f32 %v2526, %v2730
        %v2781 = vadd.f32 %v2531, %v2735
        %v2782 = vadd.f32 %v2534, %v2738
        %v2783 = vadd.f32 %v2539, %v2743
        %v2784 = vadd.f32 %v2542, %v2746
        %v2785 = vadd.f32 %v2547, %v2751
        %v2786 = vadd.f32 %v2550, %v2754
        %v2787 = vadd.f32 %v2555, %v2759
        %v2788 = vadd.f32 %v2558, %v2762
        %v2789 = vld [vmem:[#allocation2] sm:$0xff]
        %v2790 = vld [vmem:[#allocation2 + $0x8] sm:$0xff]
        %v2791 = vld [vmem:[#allocation2 + $0x10] sm:$0xff]
        %v2792 = vld [vmem:[#allocation2 + $0x18] sm:$0xff]
        %v2793 = vld [vmem:[#allocation2 + $0x20] sm:$0xff]
        %v2794 = vld [vmem:[#allocation2 + $0x28] sm:$0xff]
        %v2795 = vld [vmem:[#allocation2 + $0x30] sm:$0xff]
        %v2796 = vld [vmem:[#allocation2 + $0x38] sm:$0xff]
        %v2797 = vld [vmem:[#allocation2 + $0x40] sm:$0xff]
        %v2798 = vld [vmem:[#allocation2 + $0x48] sm:$0xff]
        %v2799 = vld [vmem:[#allocation2 + $0x50] sm:$0xff]
        %v2800 = vld [vmem:[#allocation2 + $0x58] sm:$0xff]
        %v2801 = vld [vmem:[#allocation2 + $0x60] sm:$0xff]
        %v2802 = vld [vmem:[#allocation2 + $0x68] sm:$0xff]
        %v2803 = vld [vmem:[#allocation2 + $0x70] sm:$0xff]
        %v2804 = vld [vmem:[#allocation2 + $0x78] sm:$0xff]
        %v2805 = vld [vmem:[#allocation2 + $0x80] sm:$0xff]
        %v2806 = vld [vmem:[#allocation2 + $0x88] sm:$0xff]
        %v2807 = vld [vmem:[#allocation2 + $0x90] sm:$0xff]
        %v2808 = vld [vmem:[#allocation2 + $0x98] sm:$0xff]
        %v2809 = vld [vmem:[#allocation2 + $0xa0] sm:$0xff]
        %v2810 = vld [vmem:[#allocation2 + $0xa8] sm:$0xff]
        %v2811 = vld [vmem:[#allocation2 + $0xb0] sm:$0xff]
        %v2812 = vld [vmem:[#allocation2 + $0xb8] sm:$0xff]
        %v2813 = vadd.f32 %v2789, %v2765
        %v2814 = vadd.f32 %v2790, %v2766
        %v2815 = vadd.f32 %v2791, %v2767
        %v2816 = vadd.f32 %v2792, %v2768
        %v2817 = vadd.f32 %v2793, %v2769
        %v2818 = vadd.f32 %v2794, %v2770
        %v2819 = vadd.f32 %v2795, %v2771
        %v2820 = vadd.f32 %v2796, %v2772
        %v2821 = vadd.f32 %v2797, %v2773
        %v2822 = vadd.f32 %v2798, %v2774
        %v2823 = vadd.f32 %v2799, %v2775
        %v2824 = vadd.f32 %v2800, %v2776
        %v2825 = vadd.f32 %v2801, %v2777
        %v2826 = vadd.f32 %v2802, %v2778
        %v2827 = vadd.f32 %v2803, %v2779
        %v2828 = vadd.f32 %v2804, %v2780
        %v2829 = vadd.f32 %v2805, %v2781
        %v2830 = vadd.f32 %v2806, %v2782
        %v2831 = vadd.f32 %v2807, %v2783
        %v2832 = vadd.f32 %v2808, %v2784
        %v2833 = vadd.f32 %v2809, %v2785
        %v2834 = vadd.f32 %v2810, %v2786
        %v2835 = vadd.f32 %v2811, %v2787
        %v2836 = vadd.f32 %v2812, %v2788
        %2837 = vst.msk [vmem:[#allocation2] sm:$0xff] %vm2236, %v2813
        %2838 = vst.msk [vmem:[#allocation2 + $0x8] sm:$0xff] %vm2236, %v2814
        %2839 = vst.msk [vmem:[#allocation2 + $0x10] sm:$0xff] %vm2236, %v2815
        %2840 = vst.msk [vmem:[#allocation2 + $0x18] sm:$0xff] %vm2236, %v2816
        %2841 = vst.msk [vmem:[#allocation2 + $0x20] sm:$0xff] %vm2236, %v2817
        %2842 = vst.msk [vmem:[#allocation2 + $0x28] sm:$0xff] %vm2236, %v2818
        %2843 = vst.msk [vmem:[#allocation2 + $0x30] sm:$0xff] %vm2236, %v2819
        %2844 = vst.msk [vmem:[#allocation2 + $0x38] sm:$0xff] %vm2236, %v2820
        %2845 = vst.msk [vmem:[#allocation2 + $0x40] sm:$0xff] %vm2236, %v2821
        %2846 = vst.msk [vmem:[#allocation2 + $0x48] sm:$0xff] %vm2236, %v2822
        %2847 = vst.msk [vmem:[#allocation2 + $0x50] sm:$0xff] %vm2236, %v2823
        %2848 = vst.msk [vmem:[#allocation2 + $0x58] sm:$0xff] %vm2236, %v2824
        %2849 = vst.msk [vmem:[#allocation2 + $0x60] sm:$0xff] %vm2236, %v2825
        %2850 = vst.msk [vmem:[#allocation2 + $0x68] sm:$0xff] %vm2236, %v2826
        %2851 = vst.msk [vmem:[#allocation2 + $0x70] sm:$0xff] %vm2236, %v2827
        %2852 = vst.msk [vmem:[#allocation2 + $0x78] sm:$0xff] %vm2236, %v2828
        %2853 = vst.msk [vmem:[#allocation2 + $0x80] sm:$0xff] %vm2236, %v2829
        %2854 = vst.msk [vmem:[#allocation2 + $0x88] sm:$0xff] %vm2236, %v2830
        %2855 = vst.msk [vmem:[#allocation2 + $0x90] sm:$0xff] %vm2236, %v2831
        %2856 = vst.msk [vmem:[#allocation2 + $0x98] sm:$0xff] %vm2236, %v2832
        %2857 = vst.msk [vmem:[#allocation2 + $0xa0] sm:$0xff] %vm2236, %v2833
        %2858 = vst.msk [vmem:[#allocation2 + $0xa8] sm:$0xff] %vm2236, %v2834
        %2859 = vst.msk [vmem:[#allocation2 + $0xb0] sm:$0xff] %vm2236, %v2835
        %2860 = vst.msk [vmem:[#allocation2 + $0xb8] sm:$0xff] %vm2236, %v2836
        %v2861 = vld [vmem:[#allocation2] sm:$0xff]
        %v2862 = vld [vmem:[#allocation2 + $0x8] sm:$0xff]
        %v2863 = vld [vmem:[#allocation2 + $0x10] sm:$0xff]
        %v2864 = vld [vmem:[#allocation2 + $0x18] sm:$0xff]
        %v2865 = vld [vmem:[#allocation2 + $0x20] sm:$0xff]
        %v2866 = vld [vmem:[#allocation2 + $0x28] sm:$0xff]
        %v2867 = vld [vmem:[#allocation2 + $0x30] sm:$0xff]
        %v2868 = vld [vmem:[#allocation2 + $0x38] sm:$0xff]
        %v2869 = vld [vmem:[#allocation2 + $0x40] sm:$0xff]
        %v2870 = vld [vmem:[#allocation2 + $0x48] sm:$0xff]
        %v2871 = vld [vmem:[#allocation2 + $0x50] sm:$0xff]
        %v2872 = vld [vmem:[#allocation2 + $0x58] sm:$0xff]
        %v2873 = vld [vmem:[#allocation2 + $0x60] sm:$0xff]
        %v2874 = vld [vmem:[#allocation2 + $0x68] sm:$0xff]
        %v2875 = vld [vmem:[#allocation2 + $0x70] sm:$0xff]
        %v2876 = vld [vmem:[#allocation2 + $0x78] sm:$0xff]
        %v2877 = vld [vmem:[#allocation2 + $0x80] sm:$0xff]
        %v2878 = vld [vmem:[#allocation2 + $0x88] sm:$0xff]
        %v2879 = vld [vmem:[#allocation2 + $0x90] sm:$0xff]
        %v2880 = vld [vmem:[#allocation2 + $0x98] sm:$0xff]
        %v2881 = vld [vmem:[#allocation2 + $0xa0] sm:$0xff]
        %v2882 = vld [vmem:[#allocation2 + $0xa8] sm:$0xff]
        %v2883 = vld [vmem:[#allocation2 + $0xb0] sm:$0xff]
        %v2884 = vld [vmem:[#allocation2 + $0xb8] sm:$0xff]
        %v2885 = vld [vmem:[%s2] sm:$0x1]
        %v2887 = vlaneseq
        %v2888 = vshrl.u32 %v2887, 7
        %v2889 = vsub.s32 0, %v2888
        %v2890 = vrot.slane %v2885, %v2889
        %v2892 = vadd.f32 %v2861, %v2890
        %v2893 = vadd.f32 %v2862, %v2890
        %v2894 = vadd.f32 %v2863, %v2890
        %v2895 = vadd.f32 %v2864, %v2890
        %v2896 = vadd.f32 %v2865, %v2890
        %v2897 = vadd.f32 %v2866, %v2890
        %v2898 = vadd.f32 %v2867, %v2890
        %v2899 = vadd.f32 %v2868, %v2890
        %v2900 = vadd.f32 %v2869, %v2890
        %v2901 = vadd.f32 %v2870, %v2890
        %v2902 = vadd.f32 %v2871, %v2890
        %v2903 = vadd.f32 %v2872, %v2890
        %v2904 = vadd.f32 %v2873, %v2890
        %v2905 = vadd.f32 %v2874, %v2890
        %v2906 = vadd.f32 %v2875, %v2890
        %v2907 = vadd.f32 %v2876, %v2890
        %v2908 = vadd.f32 %v2877, %v2890
        %v2909 = vadd.f32 %v2878, %v2890
        %v2910 = vadd.f32 %v2879, %v2890
        %v2911 = vadd.f32 %v2880, %v2890
        %v2912 = vadd.f32 %v2881, %v2890
        %v2913 = vadd.f32 %v2882, %v2890
        %v2914 = vadd.f32 %v2883, %v2890
        %v2915 = vadd.f32 %v2884, %v2890
        %v2916 = vmax.f32 %v2892, 0.0
        %v2917 = vmax.f32 %v2893, 0.0
        %v2918 = vmax.f32 %v2894, 0.0
        %v2919 = vmax.f32 %v2895, 0.0
        %v2920 = vmax.f32 %v2896, 0.0
        %v2921 = vmax.f32 %v2897, 0.0
        %v2922 = vmax.f32 %v2898, 0.0
        %v2923 = vmax.f32 %v2899, 0.0
        %v2924 = vmax.f32 %v2900, 0.0
        %v2925 = vmax.f32 %v2901, 0.0
        %v2926 = vmax.f32 %v2902, 0.0
        %v2927 = vmax.f32 %v2903, 0.0
        %v2928 = vmax.f32 %v2904, 0.0
        %v2929 = vmax.f32 %v2905, 0.0
        %v2930 = vmax.f32 %v2906, 0.0
        %v2931 = vmax.f32 %v2907, 0.0
        %v2932 = vmax.f32 %v2908, 0.0
        %v2933 = vmax.f32 %v2909, 0.0
        %v2934 = vmax.f32 %v2910, 0.0
        %v2935 = vmax.f32 %v2911, 0.0
        %v2936 = vmax.f32 %v2912, 0.0
        %v2937 = vmax.f32 %v2913, 0.0
        %v2938 = vmax.f32 %v2914, 0.0
        %v2939 = vmax.f32 %v2915, 0.0
        %v2940 = vpack.c.bf16 %v2917, %v2916
        %v2941 = vpack.c.bf16 %v2919, %v2918
        %v2942 = vpack.c.bf16 %v2921, %v2920
        %v2943 = vpack.c.bf16 %v2923, %v2922
        %v2944 = vpack.c.bf16 %v2925, %v2924
        %v2945 = vpack.c.bf16 %v2927, %v2926
        %v2946 = vpack.c.bf16 %v2929, %v2928
        %v2947 = vpack.c.bf16 %v2931, %v2930
        %v2948 = vpack.c.bf16 %v2933, %v2932
        %v2949 = vpack.c.bf16 %v2935, %v2934
        %v2950 = vpack.c.bf16 %v2937, %v2936
        %v2951 = vpack.c.bf16 %v2939, %v2938
        %v2952 = vld [vmem:[%s3] sm:$0xf]
        %v2953 = vld [vmem:[%s3 + $0x4] sm:$0xf]
        %v2954 = vld [vmem:[%s4] sm:$0x1]
        %v2956 = vlaneseq
        %v2957 = vshrl.u32 %v2956, 7
        %v2958 = vsub.s32 0, %v2957
        %v2959 = vrot.slane %v2954, %v2958
        %v2963 = vunpack.c.l.b16 %v2952
        %v2964 = vunpack.c.l.b16 %v2953
        %v2965 = vpack.c.b16 %v2964, %v2963
        %v2968 = vsel %vm2236, %v2940, 0
        %v2971 = vsel %vm2236, %v2941, 0
        %v2974 = vsel %vm2236, %v2942, 0
        %v2977 = vsel %vm2236, %v2943, 0
        %v2980 = vsel %vm2236, %v2944, 0
        %v2983 = vsel %vm2236, %v2945, 0
        %v2986 = vsel %vm2236, %v2946, 0
        %v2989 = vsel %vm2236, %v2947, 0
        %v2992 = vsel %vm2236, %v2948, 0
        %v2995 = vsel %vm2236, %v2949, 0
        %v2998 = vsel %vm2236, %v2950, 0
        %v3001 = vsel %vm2236, %v2951, 0
        %3003 = vmatprep.subr.bf16.mxu0 0
        %3004 = vmatpush1.bf16.msra.mxu0 %v2965
        %3005 = vmatprep.subr.bf16.mxu0 0
        %3006 = vmatpush1.bf16.msra.mxu0 0
        %3007 = vmatprep.subr.bf16.mxu0 0
        %3008 = vmatpush1.bf16.msra.mxu0 0
        %3009 = vmatprep.subr.bf16.mxu0 0
        %3010 = vmatpush1.bf16.msra.mxu0 0
        %3011 = vmatprep.subr.bf16.mxu0 0
        %3012 = vmatpush1.bf16.msra.mxu0 0
        %3013 = vmatprep.subr.bf16.mxu0 0
        %3014 = vmatpush1.bf16.msra.mxu0 0
        %3015 = vmatprep.subr.bf16.mxu0 0
        %3016 = vmatpush1.bf16.msra.mxu0 0
        %3017 = vmatprep.subr.bf16.mxu0 0
        %3018 = vmatpush1.bf16.msra.mxu0 0
        %3019 = vmatprep.subr.bf16.mxu0 0
        %3020 = vmatpush1.bf16.msra.mxu0 0
        %3021 = vmatprep.subr.bf16.mxu0 0
        %3022 = vmatpush1.bf16.msra.mxu0 0
        %3023 = vmatprep.subr.bf16.mxu0 0
        %3024 = vmatpush1.bf16.msra.mxu0 0
        %3025 = vmatprep.subr.bf16.mxu0 0
        %3026 = vmatpush1.bf16.msra.mxu0 0
        %3027 = vmatprep.subr.bf16.mxu0 0
        %3028 = vmatpush1.bf16.msra.mxu0 0
        %3029 = vmatprep.subr.bf16.mxu0 0
        %3030 = vmatpush1.bf16.msra.mxu0 0
        %3031 = vmatprep.subr.bf16.mxu0 0
        %3032 = vmatpush1.bf16.msra.mxu0 0
        %3033 = vmatprep.subr.bf16.mxu0 0
        %3034 = vmatpush1.bf16.msra.mxu0 0
        %3035 = vmatprep.mubr.bf16.mxu0 0
        %3036 = vmatmul.mubr.bf16.gmra.mrb[0].mxu0 %v2968
        %v3037 = vpop.f32.mrb[0].mxu0
        %v3038 = vadd.f32 %v2959, %v3037
        %v3039 = vpop.f32.mrb[0].mxu0
        %v3040 = vpop.f32.mrb[0].mxu0
        %v3041 = vadd.f32 %v2959, %v3040
        %v3042 = vpop.f32.mrb[0].mxu0
        %3043 = vmatprep.mubr.bf16.mxu0 0
        %3044 = vmatmul.mubr.bf16.gmra.mrb[0].mxu0 %v2971
        %v3045 = vpop.f32.mrb[0].mxu0
        %v3046 = vadd.f32 %v2959, %v3045
        %v3047 = vpop.f32.mrb[0].mxu0
        %v3048 = vpop.f32.mrb[0].mxu0
        %v3049 = vadd.f32 %v2959, %v3048
        %v3050 = vpop.f32.mrb[0].mxu0
        %3051 = vmatprep.mubr.bf16.mxu0 0
        %3052 = vmatmul.mubr.bf16.gmra.mrb[0].mxu0 %v2974
        %v3053 = vpop.f32.mrb[0].mxu0
        %v3054 = vadd.f32 %v2959, %v3053
        %v3055 = vpop.f32.mrb[0].mxu0
        %v3056 = vpop.f32.mrb[0].mxu0
        %v3057 = vadd.f32 %v2959, %v3056
        %v3058 = vpop.f32.mrb[0].mxu0
        %3059 = vmatprep.mubr.bf16.mxu0 0
        %3060 = vmatmul.mubr.bf16.gmra.mrb[0].mxu0 %v2977
        %v3061 = vpop.f32.mrb[0].mxu0
        %v3062 = vadd.f32 %v2959, %v3061
        %v3063 = vpop.f32.mrb[0].mxu0
        %v3064 = vpop.f32.mrb[0].mxu0
        %v3065 = vadd.f32 %v2959, %v3064
        %v3066 = vpop.f32.mrb[0].mxu0
        %3067 = vmatprep.mubr.bf16.mxu0 0
        %3068 = vmatmul.mubr.bf16.gmra.mrb[0].mxu0 %v2980
        %v3069 = vpop.f32.mrb[0].mxu0
        %v3070 = vadd.f32 %v2959, %v3069
        %v3071 = vpop.f32.mrb[0].mxu0
        %v3072 = vpop.f32.mrb[0].mxu0
        %v3073 = vadd.f32 %v2959, %v3072
        %v3074 = vpop.f32.mrb[0].mxu0
        %3075 = vmatprep.mubr.bf16.mxu0 0
        %3076 = vmatmul.mubr.bf16.gmra.mrb[0].mxu0 %v2983
        %v3077 = vpop.f32.mrb[0].mxu0
        %v3078 = vadd.f32 %v2959, %v3077
        %v3079 = vpop.f32.mrb[0].mxu0
        %v3080 = vpop.f32.mrb[0].mxu0
        %v3081 = vadd.f32 %v2959, %v3080
        %v3082 = vpop.f32.mrb[0].mxu0
        %3083 = vmatprep.mubr.bf16.mxu0 0
        %3084 = vmatmul.mubr.bf16.gmra.mrb[0].mxu0 %v2986
        %v3085 = vpop.f32.mrb[0].mxu0
        %v3086 = vadd.f32 %v2959, %v3085
        %v3087 = vpop.f32.mrb[0].mxu0
        %v3088 = vpop.f32.mrb[0].mxu0
        %v3089 = vadd.f32 %v2959, %v3088
        %v3090 = vpop.f32.mrb[0].mxu0
        %3091 = vmatprep.mubr.bf16.mxu0 0
        %3092 = vmatmul.mubr.bf16.gmra.mrb[0].mxu0 %v2989
        %v3093 = vpop.f32.mrb[0].mxu0
        %v3094 = vadd.f32 %v2959, %v3093
        %v3095 = vpop.f32.mrb[0].mxu0
        %v3096 = vpop.f32.mrb[0].mxu0
        %v3097 = vadd.f32 %v2959, %v3096
        %v3098 = vpop.f32.mrb[0].mxu0
        %3099 = vmatprep.mubr.bf16.mxu0 0
        %3100 = vmatmul.mubr.bf16.gmra.mrb[0].mxu0 %v2992
        %v3101 = vpop.f32.mrb[0].mxu0
        %v3102 = vadd.f32 %v2959, %v3101
        %v3103 = vpop.f32.mrb[0].mxu0
        %v3104 = vpop.f32.mrb[0].mxu0
        %v3105 = vadd.f32 %v2959, %v3104
        %v3106 = vpop.f32.mrb[0].mxu0
        %3107 = vmatprep.mubr.bf16.mxu0 0
        %3108 = vmatmul.mubr.bf16.gmra.mrb[0].mxu0 %v2995
        %v3109 = vpop.f32.mrb[0].mxu0
        %v3110 = vadd.f32 %v2959, %v3109
        %v3111 = vpop.f32.mrb[0].mxu0
        %v3112 = vpop.f32.mrb[0].mxu0
        %v3113 = vadd.f32 %v2959, %v3112
        %v3114 = vpop.f32.mrb[0].mxu0
        %3115 = vmatprep.mubr.bf16.mxu0 0
        %3116 = vmatmul.mubr.bf16.gmra.mrb[0].mxu0 %v2998
        %v3117 = vpop.f32.mrb[0].mxu0
        %v3118 = vadd.f32 %v2959, %v3117
        %v3119 = vpop.f32.mrb[0].mxu0
        %v3120 = vpop.f32.mrb[0].mxu0
        %v3121 = vadd.f32 %v2959, %v3120
        %v3122 = vpop.f32.mrb[0].mxu0
        %3123 = vmatprep.mubr.bf16.mxu0 0
        %3124 = vmatmul.mubr.bf16.gmra.mrb[0].mxu0 %v3001
        %v3125 = vpop.f32.mrb[0].mxu0
        %v3126 = vadd.f32 %v2959, %v3125
        %v3127 = vpop.f32.mrb[0].mxu0
        %v3128 = vpop.f32.mrb[0].mxu0
        %v3129 = vadd.f32 %v2959, %v3128
        %v3130 = vpop.f32.mrb[0].mxu0
        %3131 = vdwg.mxu0
        %v3132 = vmax.f32 %v3038, 0.0
        %v3133 = vmax.f32 %v3041, 0.0
        %v3134 = vmax.f32 %v3046, 0.0
        %v3135 = vmax.f32 %v3049, 0.0
        %v3136 = vmax.f32 %v3054, 0.0
        %v3137 = vmax.f32 %v3057, 0.0
        %v3138 = vmax.f32 %v3062, 0.0
        %v3139 = vmax.f32 %v3065, 0.0
        %v3140 = vmax.f32 %v3070, 0.0
        %v3141 = vmax.f32 %v3073, 0.0
        %v3142 = vmax.f32 %v3078, 0.0
        %v3143 = vmax.f32 %v3081, 0.0
        %v3144 = vmax.f32 %v3086, 0.0
        %v3145 = vmax.f32 %v3089, 0.0
        %v3146 = vmax.f32 %v3094, 0.0
        %v3147 = vmax.f32 %v3097, 0.0
        %v3148 = vmax.f32 %v3102, 0.0
        %v3149 = vmax.f32 %v3105, 0.0
        %v3150 = vmax.f32 %v3110, 0.0
        %v3151 = vmax.f32 %v3113, 0.0
        %v3152 = vmax.f32 %v3118, 0.0
        %v3153 = vmax.f32 %v3121, 0.0
        %v3154 = vmax.f32 %v3126, 0.0
        %v3155 = vmax.f32 %v3129, 0.0
        %v3156 = vld [vmem:[%s339] sm:$0xf]
        %v3157 = vld [vmem:[%s339 + $0x4] sm:$0xf]
        %v3158 = vld [vmem:[%s339 + $0x8] sm:$0xf]
        %v3159 = vld [vmem:[%s339 + $0xc] sm:$0xf]
        %v3160 = vld [vmem:[%s339 + $0x10] sm:$0xf]
        %v3161 = vld [vmem:[%s339 + $0x14] sm:$0xf]
        %v3162 = vld [vmem:[%s339 + $0x18] sm:$0xf]
        %v3163 = vld [vmem:[%s339 + $0x1c] sm:$0xf]
        %v3164 = vld [vmem:[%s339 + $0x20] sm:$0xf]
        %v3165 = vld [vmem:[%s339 + $0x24] sm:$0xf]
        %v3166 = vld [vmem:[%s339 + $0x28] sm:$0xf]
        %v3167 = vld [vmem:[%s339 + $0x2c] sm:$0xf]
        %v3168 = vld [vmem:[%s339 + $0x30] sm:$0xf]
        %v3169 = vld [vmem:[%s339 + $0x34] sm:$0xf]
        %v3170 = vld [vmem:[%s339 + $0x38] sm:$0xf]
        %v3171 = vld [vmem:[%s339 + $0x3c] sm:$0xf]
        %v3172 = vld [vmem:[%s339 + $0x40] sm:$0xf]
        %v3173 = vld [vmem:[%s339 + $0x44] sm:$0xf]
        %v3174 = vld [vmem:[%s339 + $0x48] sm:$0xf]
        %v3175 = vld [vmem:[%s339 + $0x4c] sm:$0xf]
        %v3176 = vld [vmem:[%s339 + $0x50] sm:$0xf]
        %v3177 = vld [vmem:[%s339 + $0x54] sm:$0xf]
        %v3178 = vld [vmem:[%s339 + $0x58] sm:$0xf]
        %v3179 = vld [vmem:[%s339 + $0x5c] sm:$0xf]
        %v3180 = vunpack.c.l.bf16 %v3156
        %v3181 = vunpack.c.l.bf16 %v3157
        %v3182 = vunpack.c.l.bf16 %v3158
        %v3183 = vunpack.c.l.bf16 %v3159
        %v3184 = vunpack.c.l.bf16 %v3160
        %v3185 = vunpack.c.l.bf16 %v3161
        %v3186 = vunpack.c.l.bf16 %v3162
        %v3187 = vunpack.c.l.bf16 %v3163
        %v3188 = vunpack.c.l.bf16 %v3164
        %v3189 = vunpack.c.l.bf16 %v3165
        %v3190 = vunpack.c.l.bf16 %v3166
        %v3191 = vunpack.c.l.bf16 %v3167
        %v3192 = vunpack.c.l.bf16 %v3168
        %v3193 = vunpack.c.l.bf16 %v3169
        %v3194 = vunpack.c.l.bf16 %v3170
        %v3195 = vunpack.c.l.bf16 %v3171
        %v3196 = vunpack.c.l.bf16 %v3172
        %v3197 = vunpack.c.l.bf16 %v3173
        %v3198 = vunpack.c.l.bf16 %v3174
        %v3199 = vunpack.c.l.bf16 %v3175
        %v3200 = vunpack.c.l.bf16 %v3176
        %v3201 = vunpack.c.l.bf16 %v3177
        %v3202 = vunpack.c.l.bf16 %v3178
        %v3203 = vunpack.c.l.bf16 %v3179
        %v3204 = vadd.f32 %v3132, %v3180
        %v3205 = vadd.f32 %v3133, %v3181
        %v3206 = vadd.f32 %v3134, %v3182
        %v3207 = vadd.f32 %v3135, %v3183
        %v3208 = vadd.f32 %v3136, %v3184
        %v3209 = vadd.f32 %v3137, %v3185
        %v3210 = vadd.f32 %v3138, %v3186
        %v3211 = vadd.f32 %v3139, %v3187
        %v3212 = vadd.f32 %v3140, %v3188
        %v3213 = vadd.f32 %v3141, %v3189
        %v3214 = vadd.f32 %v3142, %v3190
        %v3215 = vadd.f32 %v3143, %v3191
        %v3216 = vadd.f32 %v3144, %v3192
        %v3217 = vadd.f32 %v3145, %v3193
        %v3218 = vadd.f32 %v3146, %v3194
        %v3219 = vadd.f32 %v3147, %v3195
        %v3220 = vadd.f32 %v3148, %v3196
        %v3221 = vadd.f32 %v3149, %v3197
        %v3222 = vadd.f32 %v3150, %v3198
        %v3223 = vadd.f32 %v3151, %v3199
        %v3224 = vadd.f32 %v3152, %v3200
        %v3225 = vadd.f32 %v3153, %v3201
        %v3226 = vadd.f32 %v3154, %v3202
        %v3227 = vadd.f32 %v3155, %v3203
        %v3228 = vpack.c.bf16 %v3205, %v3204
        %v3229 = vpack.c.bf16 %v3207, %v3206
        %v3230 = vpack.c.bf16 %v3209, %v3208
        %v3231 = vpack.c.bf16 %v3211, %v3210
        %v3232 = vpack.c.bf16 %v3213, %v3212
        %v3233 = vpack.c.bf16 %v3215, %v3214
        %v3234 = vpack.c.bf16 %v3217, %v3216
        %v3235 = vpack.c.bf16 %v3219, %v3218
        %v3236 = vpack.c.bf16 %v3221, %v3220
        %v3237 = vpack.c.bf16 %v3223, %v3222
        %v3238 = vpack.c.bf16 %v3225, %v3224
        %v3239 = vpack.c.bf16 %v3227, %v3226
        %v3252 = vunpack.c.l.b16 %v3228
        %v3253 = vunpack.c.h.b16 %v3228
        %v3254 = vunpack.c.l.b16 %v3229
        %v3255 = vunpack.c.h.b16 %v3229
        %v3256 = vunpack.c.l.b16 %v3230
        %v3257 = vunpack.c.h.b16 %v3230
        %v3258 = vunpack.c.l.b16 %v3231
        %v3259 = vunpack.c.h.b16 %v3231
        %v3260 = vunpack.c.l.b16 %v3232
        %v3261 = vunpack.c.h.b16 %v3232
        %v3262 = vunpack.c.l.b16 %v3233
        %v3263 = vunpack.c.h.b16 %v3233
        %v3264 = vunpack.c.l.b16 %v3234
        %v3265 = vunpack.c.h.b16 %v3234
        %v3266 = vunpack.c.l.b16 %v3235
        %v3267 = vunpack.c.h.b16 %v3235
        %v3268 = vunpack.c.l.b16 %v3236
        %v3269 = vunpack.c.h.b16 %v3236
        %v3270 = vunpack.c.l.b16 %v3237
        %v3271 = vunpack.c.h.b16 %v3237
        %v3272 = vunpack.c.l.b16 %v3238
        %v3273 = vunpack.c.h.b16 %v3238
        %v3274 = vunpack.c.l.b16 %v3239
        %v3275 = vunpack.c.h.b16 %v3239
        %v3276 = vpack.c.b16 %v3252, %v3252
        %v3277 = vpack.c.b16 %v3253, %v3253
        %v3278 = vpack.c.b16 %v3254, %v3254
        %v3279 = vpack.c.b16 %v3255, %v3255
        %v3280 = vpack.c.b16 %v3256, %v3256
        %v3281 = vpack.c.b16 %v3257, %v3257
        %v3282 = vpack.c.b16 %v3258, %v3258
        %v3283 = vpack.c.b16 %v3259, %v3259
        %v3284 = vpack.c.b16 %v3260, %v3260
        %v3285 = vpack.c.b16 %v3261, %v3261
        %v3286 = vpack.c.b16 %v3262, %v3262
        %v3287 = vpack.c.b16 %v3263, %v3263
        %v3288 = vpack.c.b16 %v3264, %v3264
        %v3289 = vpack.c.b16 %v3265, %v3265
        %v3290 = vpack.c.b16 %v3266, %v3266
        %v3291 = vpack.c.b16 %v3267, %v3267
        %v3292 = vpack.c.b16 %v3268, %v3268
        %v3293 = vpack.c.b16 %v3269, %v3269
        %v3294 = vpack.c.b16 %v3270, %v3270
        %v3295 = vpack.c.b16 %v3271, %v3271
        %v3296 = vpack.c.b16 %v3272, %v3272
        %v3297 = vpack.c.b16 %v3273, %v3273
        %v3298 = vpack.c.b16 %v3274, %v3274
        %v3299 = vpack.c.b16 %v3275, %v3275
        %vm3324 = vcmask 519168
        %3325 = vst.msk [vmem:[%s348] sm:$0xf] %vm3324, %v3276
        %3326 = vst.msk [vmem:[%s348 + $0x4] sm:$0xf] %vm3324, %v3277
        %3327 = vst.msk [vmem:[%s348 + $0x8] sm:$0xf] %vm3324, %v3278
        %3328 = vst.msk [vmem:[%s348 + $0xc] sm:$0xf] %vm3324, %v3279
        %3329 = vst.msk [vmem:[%s348 + $0x10] sm:$0xf] %vm3324, %v3280
        %3330 = vst.msk [vmem:[%s348 + $0x14] sm:$0xf] %vm3324, %v3281
        %3331 = vst.msk [vmem:[%s348 + $0x18] sm:$0xf] %vm3324, %v3282
        %3332 = vst.msk [vmem:[%s348 + $0x1c] sm:$0xf] %vm3324, %v3283
        %3333 = vst.msk [vmem:[%s348 + $0x20] sm:$0xf] %vm3324, %v3284
        %3334 = vst.msk [vmem:[%s348 + $0x24] sm:$0xf] %vm3324, %v3285
        %3335 = vst.msk [vmem:[%s348 + $0x28] sm:$0xf] %vm3324, %v3286
        %3336 = vst.msk [vmem:[%s348 + $0x2c] sm:$0xf] %vm3324, %v3287
        %3337 = vst.msk [vmem:[%s348 + $0x30] sm:$0xf] %vm3324, %v3288
        %3338 = vst.msk [vmem:[%s348 + $0x34] sm:$0xf] %vm3324, %v3289
        %3339 = vst.msk [vmem:[%s348 + $0x38] sm:$0xf] %vm3324, %v3290
        %3340 = vst.msk [vmem:[%s348 + $0x3c] sm:$0xf] %vm3324, %v3291
        %3341 = vst.msk [vmem:[%s348 + $0x40] sm:$0xf] %vm3324, %v3292
        %3342 = vst.msk [vmem:[%s348 + $0x44] sm:$0xf] %vm3324, %v3293
        %3343 = vst.msk [vmem:[%s348 + $0x48] sm:$0xf] %vm3324, %v3294
        %3344 = vst.msk [vmem:[%s348 + $0x4c] sm:$0xf] %vm3324, %v3295
        %3345 = vst.msk [vmem:[%s348 + $0x50] sm:$0xf] %vm3324, %v3296
        %3346 = vst.msk [vmem:[%s348 + $0x54] sm:$0xf] %vm3324, %v3297
        %3347 = vst.msk [vmem:[%s348 + $0x58] sm:$0xf] %vm3324, %v3298
        %3348 = vst.msk [vmem:[%s348 + $0x5c] sm:$0xf] %vm3324, %v3299
      $region56: #{fpn_psp_head_forward.6} parent=43 // pred_fallthru
        _
      %p3349 = scmp.lt.s32.totalorder %s22, 1
      %s3350 = scalar_select %p3349, %s22, 1
      %p3351 = scmp.lt.s32.totalorder %s23, 1
      %s3352 = scalar_select %p3351, %s23, 1
      %s3353 = smul.addr %s3352, 24
      %s3354 = smul.addr %s3350, 48
      %s3355 = sadd.s32 %s3353, %s3354
      %s3356 = smul.addr %s3355, 4
      %s3357 = scalar_lea.vmem %s6, %s3356
      // Predicated region
      $region57: #{fpn_psp_head_forward.6} parent=43 // pred_check
        %p3358 = pneg %p201
      $region58: #{fpn_psp_head_forward.6} parent=43 // pred_check_branch
        %3360 = sbr.rel (%p3358) target = $region60
      $region59: #{fpn_psp_head_forward.6} parent=43 // pred_region
        _
      $region60: #{fpn_psp_head_forward.6} parent=43 // pred_fallthru
        _
    $region44: #{fpn_psp_head_forward.6} parent=5 // pred_fallthru
      _
    %p3361 = scmp.le.s32.totalorder 2, %s12
    // Predicated region
    $region61: #{fpn_psp_head_forward.6} parent=5 // pred_check
      %p3362 = pneg %p3361
    $region62: #{fpn_psp_head_forward.6} parent=5 // pred_check_branch
      %3364 = sbr.rel (%p3362) target = $region64
    $region63: #{fpn_psp_head_forward.6} parent=5 // pred_region
      %s3365 = ssub.s32 %s12, 2
      // Predicated region
      $region65: #{fpn_psp_head_forward.6} parent=63 // pred_check
        %p3366 = pneg %p207
      $region66: #{fpn_psp_head_forward.6} parent=63 // pred_check_branch
        %3368 = sbr.rel (%p3366) target = $region68
      $region67: #{fpn_psp_head_forward.6} parent=63 // pred_region
        %p3369 = scmp.lt.s32.totalorder %s25, 1
        %s3370 = scalar_select %p3369, %s25, 1
        %p3371 = scmp.lt.s32.totalorder %s26, 1
        %s3372 = scalar_select %p3371, %s26, 1
        %s3373 = smul.addr %s3372, 24
        %s3374 = smul.addr %s3370, 48
        %s3375 = sadd.s32 %s3373, %s3374
        %s3376 = smul.addr %s3375, 4
        %s3377 = scalar_lea.vmem %s6, %s3376
      $region68: #{fpn_psp_head_forward.6} parent=63 // pred_fallthru
        _
    $region64: #{fpn_psp_head_forward.6} parent=5 // pred_fallthru
      _
  $region6: #{fpn_psp_head_forward.6} parent=0 // loop_footer
    %s16 = sadd.s32 1, %s12
  $region7: #{fpn_psp_head_forward.6} parent=0 // loop_footer_branch
    %11 = sbr.rel target = $region3
  $region8: #{fpn_psp_head_forward.6} parent=0 // loop_exit
    _

// kernel: fpn_psp_head_forward.7
$region0: #{fpn_psp_head_forward.7}
  #allocation0 [shape = 'u32[]', space=smem, size = 0x4, offset = 0x4, fixed_abs, tag = 'smem constant byte address 0x4 - core index']
  #allocation1 [shape = 'u32[144,128]{1,0:T(1,128)}', space=vmem, size = 0x12000, scoped, tag = 'internal scratch']
  %s0 = inlined_call_operand.vmem [shape: bf16[4,72,64], index: 0, kind: input, shape index: {}]
  %s1 = inlined_call_operand.vmem [shape: bf16[4,64,16], index: 1, kind: input, shape index: {}]
  %s2 = inlined_call_operand.vmem [shape: f32[4,1,16], index: 2, kind: input, shape index: {}]
  %s3 = inlined_call_operand.vmem [shape: bf16[4,72,16], index: 3, kind: output, shape index: {}]
  %s4 = sld [smem:[#allocation0]]
  $region45: #{fpn_psp_head_forward.7} parent=0
    _
  %s6 = ssub.s32 1, %s4
  %s7 = scalar_select 0, %s6, %s4
  loop: start=0, step=1, limit=6
  $region2: #{fpn_psp_head_forward.7} parent=0 // loop_pre_header
    _
  $region3: #{fpn_psp_head_forward.7} parent=0 // loop_header
    %s9 = sphi 0, %s13
    %p10 = scmp.ge.s32.totalorder %s9, 6
    %s19 = sphi 0, %s21
    %s22 = sphi 0, %s19
    %s23 = sphi 0, %s22
    %s39 = sphi 0, %s23
    %s45 = sphi 0, %s47
    %s48 = sphi 0, %s45
    %s49 = sphi 0, %s48
    %s65 = sphi 0, %s49
    %s71 = sphi 0, %s73
    %s74 = sphi 0, %s71
    %s75 = sphi 0, %s74
    %s91 = sphi 0, %s75
    %s97 = sphi 0, %s99
    %s100 = sphi 0, %s97
    %s101 = sphi 0, %s100
    %s117 = sphi 0, %s101
  $region4: #{fpn_psp_head_forward.7} parent=0 // loop_header_branch
    %12 = sbr.rel (%p10) target = $region8
  $region5: #{fpn_psp_head_forward.7} parent=0 // loop_body
    %s14 = ssub.s32 %s9, 1
    %s15 = ssub.s32 %s9, 2
    %s16 = sadd.s32 %s9, 1
    %s17 = ssub.s32 %s9, %s16
    %p18 = scmp.eq.s32.totalorder %s17, 0
    %s20 = sadd.s32 %s19, 1
    %s21 = scalar_select %p18, %s19, %s20
    %p24 = pneg %p18
    %p25 = scmp.eq.s32.totalorder %s9, 3
    %p26 = por %p24, %p25
    %p27 = scmp.ne.s32.totalorder %s19, %s22
    %p28 = scmp.eq.s32.totalorder %s9, 0
    %p29 = por %p27, %p28
    %p30 = scmp.ne.s32.totalorder %s19, %s22
    %p31 = scmp.eq.s32.totalorder %s14, 3
    %p32 = por %p30, %p31
    %p33 = scmp.ne.s32.totalorder %s22, %s23
    %p34 = scmp.eq.s32.totalorder %s14, 0
    %p35 = por %p33, %p34
    %p36 = scmp.ne.s32.totalorder %s22, %s23
    %p37 = scmp.eq.s32.totalorder %s15, 3
    %p38 = por %p36, %p37
    %p40 = scmp.ne.s32.totalorder %s23, %s39
    %p41 = scmp.eq.s32.totalorder %s15, 0
    %p42 = por %p40, %p41
    %s43 = ssub.s32 %s9, %s16
    %p44 = scmp.eq.s32.totalorder %s43, 0
    %s46 = sadd.s32 %s45, 1
    %s47 = scalar_select %p44, %s45, %s46
    %p50 = pneg %p44
    %p51 = scmp.eq.s32.totalorder %s9, 3
    %p52 = por %p50, %p51
    %p53 = scmp.ne.s32.totalorder %s45, %s48
    %p54 = scmp.eq.s32.totalorder %s9, 0
    %p55 = por %p53, %p54
    %p56 = scmp.ne.s32.totalorder %s45, %s48
    %p57 = scmp.eq.s32.totalorder %s14, 3
    %p58 = por %p56, %p57
    %p59 = scmp.ne.s32.totalorder %s48, %s49
    %p60 = scmp.eq.s32.totalorder %s14, 0
    %p61 = por %p59, %p60
    %p62 = scmp.ne.s32.totalorder %s48, %s49
    %p63 = scmp.eq.s32.totalorder %s15, 3
    %p64 = por %p62, %p63
    %p66 = scmp.ne.s32.totalorder %s49, %s65
    %p67 = scmp.eq.s32.totalorder %s15, 0
    %p68 = por %p66, %p67
    %s69 = ssub.s32 %s9, %s16
    %p70 = scmp.eq.s32.totalorder %s69, 0
    %s72 = sadd.s32 %s71, 1
    %s73 = scalar_select %p70, %s71, %s72
    %p76 = pneg %p70
    %p77 = scmp.eq.s32.totalorder %s9, 3
    %p78 = por %p76, %p77
    %p79 = scmp.ne.s32.totalorder %s71, %s74
    %p80 = scmp.eq.s32.totalorder %s9, 0
    %p81 = por %p79, %p80
    %p82 = scmp.ne.s32.totalorder %s71, %s74
    %p83 = scmp.eq.s32.totalorder %s14, 3
    %p84 = por %p82, %p83
    %p85 = scmp.ne.s32.totalorder %s74, %s75
    %p86 = scmp.eq.s32.totalorder %s14, 0
    %p87 = por %p85, %p86
    %p88 = scmp.ne.s32.totalorder %s74, %s75
    %p89 = scmp.eq.s32.totalorder %s15, 3
    %p90 = por %p88, %p89
    %p92 = scmp.ne.s32.totalorder %s75, %s91
    %p93 = scmp.eq.s32.totalorder %s15, 0
    %p94 = por %p92, %p93
    %s95 = ssub.s32 %s9, %s16
    %p96 = scmp.eq.s32.totalorder %s95, 0
    %s98 = sadd.s32 %s97, 1
    %s99 = scalar_select %p96, %s97, %s98
    %p102 = pneg %p96
    %p103 = scmp.eq.s32.totalorder %s9, 3
    %p104 = por %p102, %p103
    %p105 = scmp.ne.s32.totalorder %s97, %s100
    %p106 = scmp.eq.s32.totalorder %s9, 0
    %p107 = por %p105, %p106
    %p108 = scmp.ne.s32.totalorder %s97, %s100
    %p109 = scmp.eq.s32.totalorder %s14, 3
    %p110 = por %p108, %p109
    %p111 = scmp.ne.s32.totalorder %s100, %s101
    %p112 = scmp.eq.s32.totalorder %s14, 0
    %p113 = por %p111, %p112
    %p114 = scmp.ne.s32.totalorder %s100, %s101
    %p115 = scmp.eq.s32.totalorder %s15, 3
    %p116 = por %p114, %p115
    %p118 = scmp.ne.s32.totalorder %s101, %s117
    %p119 = scmp.eq.s32.totalorder %s15, 0
    %p120 = por %p118, %p119
    %p121 = scmp.le.s32.totalorder 1, %s9
    %p122 = scmp.lt.s32.totalorder %s9, 5
    %p123 = pnand %p121, %p122
    %p124 = pneg %p123
    // Predicated region
    $region9: #{fpn_psp_head_forward.7} parent=5 // pred_check
      _
    $region10: #{fpn_psp_head_forward.7} parent=5 // pred_check_branch
      %126 = sbr.rel (%p123) target = $region12
    $region11: #{fpn_psp_head_forward.7} parent=5 // pred_region
      %s127 = ssub.s32 %s9, 1
    $region12: #{fpn_psp_head_forward.7} parent=5 // pred_fallthru
      _
    %p128 = scmp.lt.s32.totalorder %s9, 4
    // Predicated region
    $region13: #{fpn_psp_head_forward.7} parent=5 // pred_check
      %p129 = pneg %p128
    $region14: #{fpn_psp_head_forward.7} parent=5 // pred_check_branch
      %131 = sbr.rel (%p129) target = $region16
    $region15: #{fpn_psp_head_forward.7} parent=5 // pred_region
      // Predicated region
      $region17: #{fpn_psp_head_forward.7} parent=15 // pred_check
        %p132 = pneg %p29
      $region18: #{fpn_psp_head_forward.7} parent=15 // pred_check_branch
        %134 = sbr.rel (%p132) target = $region20
      $region19: #{fpn_psp_head_forward.7} parent=15 // pred_region
        %p135 = scmp.lt.s32.totalorder %s9, 3
        %s136 = scalar_select %p135, %s9, 3
        %s137 = smul.addr %s136, 9
        %s138 = smul.addr %s137, 4
        %s139 = scalar_lea.vmem %s0, %s138
      $region20: #{fpn_psp_head_forward.7} parent=15 // pred_fallthru
        _
      // Predicated region
      $region21: #{fpn_psp_head_forward.7} parent=15 // pred_check
        %p140 = pneg %p55
      $region22: #{fpn_psp_head_forward.7} parent=15 // pred_check_branch
        %142 = sbr.rel (%p140) target = $region24
      $region23: #{fpn_psp_head_forward.7} parent=15 // pred_region
        %p143 = scmp.lt.s32.totalorder %s9, 3
        %s144 = scalar_select %p143, %s9, 3
        %s145 = smul.addr %s144, 8
        %s146 = smul.addr %s145, 4
        %s147 = scalar_lea.vmem %s1, %s146
      $region24: #{fpn_psp_head_forward.7} parent=15 // pred_fallthru
        _
      // Predicated region
      $region25: #{fpn_psp_head_forward.7} parent=15 // pred_check
        %p148 = pneg %p81
      $region26: #{fpn_psp_head_forward.7} parent=15 // pred_check_branch
        %150 = sbr.rel (%p148) target = $region28
      $region27: #{fpn_psp_head_forward.7} parent=15 // pred_region
        %p151 = scmp.lt.s32.totalorder %s9, 3
        %s152 = scalar_select %p151, %s9, 3
        %s153 = scalar_lea.vmem %s2, %s152
      $region28: #{fpn_psp_head_forward.7} parent=15 // pred_fallthru
        _
    $region16: #{fpn_psp_head_forward.7} parent=5 // pred_fallthru
      _
    %p154 = scmp.le.s32.totalorder 1, %s9
    %p155 = scmp.lt.s32.totalorder %s9, 5
    %p156 = pnand %p154, %p155
    %p157 = pneg %p156
    // Predicated region
    $region29: #{fpn_psp_head_forward.7} parent=5 // pred_check
      _
    $region30: #{fpn_psp_head_forward.7} parent=5 // pred_check_branch
      %159 = sbr.rel (%p156) target = $region32
    $region31: #{fpn_psp_head_forward.7} parent=5 // pred_region
      %s160 = ssub.s32 %s9, 1
      %p161 = scmp.lt.s32.totalorder %s14, 3
      %s162 = scalar_select %p161, %s14, 3
      %s163 = smul.addr %s162, 9
      %s164 = smul.addr %s163, 4
      %s165 = scalar_lea.vmem %s0, %s164
      %p166 = pneg %p35
      %p167 = pneg %p32
      %p168 = scmp.lt.s32.totalorder %s14, 3
      %s169 = scalar_select %p168, %s14, 3
      %s170 = smul.addr %s169, 8
      %s171 = smul.addr %s170, 4
      %s172 = scalar_lea.vmem %s1, %s171
      %p173 = pneg %p61
      %p174 = pneg %p58
      %p175 = scmp.lt.s32.totalorder %s14, 3
      %s176 = scalar_select %p175, %s14, 3
      %s177 = scalar_lea.vmem %s2, %s176
      %p178 = pneg %p87
      %p179 = pneg %p84
      %p180 = pneg %p113
      %p181 = pneg %p110
      %p182 = scmp.lt.s32.totalorder %s14, 3
      %s183 = scalar_select %p182, %s14, 3
      %s184 = smul.addr %s183, 9
      %s185 = smul.addr %s184, 4
      %s186 = scalar_lea.vmem %s3, %s185
      %p187 = scmp.lt.s32.totalorder %s14, 3
      %s188 = scalar_select %p187, %s14, 3
      %s189 = smul.addr %s188, 9
      %s190 = smul.addr %s189, 4
      %s191 = scalar_lea.vmem %s0, %s190
      %p192 = scmp.lt.s32.totalorder %s14, 3
      %s193 = scalar_select %p192, %s14, 3
      %s194 = smul.addr %s193, 8
      %s195 = smul.addr %s194, 4
      %s196 = scalar_lea.vmem %s1, %s195
      %p197 = scmp.lt.s32.totalorder %s14, 3
      %s198 = scalar_select %p197, %s14, 3
      %s199 = scalar_lea.vmem %s2, %s198
      %p200 = scmp.lt.s32.totalorder %s14, 3
      %s201 = scalar_select %p200, %s14, 3
      %s202 = smul.addr %s201, 9
      %s203 = smul.addr %s202, 4
      %s204 = scalar_lea.vmem %s3, %s203
      %v206 = vld [vmem:[%s191] sm:$0xf]
      %v207 = vld [vmem:[%s191 + $0x4] sm:$0xf]
      %v208 = vld [vmem:[%s191 + $0x8] sm:$0xf]
      %v209 = vld [vmem:[%s191 + $0xc] sm:$0xf]
      %v210 = vld [vmem:[%s191 + $0x10] sm:$0xf]
      %v211 = vld [vmem:[%s191 + $0x14] sm:$0xf]
      %v212 = vld [vmem:[%s191 + $0x18] sm:$0xf]
      %v213 = vld [vmem:[%s191 + $0x1c] sm:$0xf]
      %v214 = vld [vmem:[%s191 + $0x20] sm:$0xf]
      %v215 = vld [vmem:[%s196] sm:$0xf]
      %v216 = vld [vmem:[%s196 + $0x4] sm:$0xf]
      %v217 = vld [vmem:[%s196 + $0x8] sm:$0xf]
      %v218 = vld [vmem:[%s196 + $0xc] sm:$0xf]
      %v219 = vld [vmem:[%s196 + $0x10] sm:$0xf]
      %v220 = vld [vmem:[%s196 + $0x14] sm:$0xf]
      %v221 = vld [vmem:[%s196 + $0x18] sm:$0xf]
      %v222 = vld [vmem:[%s196 + $0x1c] sm:$0xf]
      %v223 = vld [vmem:[%s199] sm:$0x1]
      %v225 = vlaneseq
      %v226 = vshrl.u32 %v225, 7
      %v227 = vsub.s32 0, %v226
      %v228 = vrot.slane %v223, %v227
      %v239 = vunpack.c.l.b16 %v206
      %v240 = vunpack.c.l.b16 %v207
      %v241 = vunpack.c.l.b16 %v208
      %v242 = vunpack.c.l.b16 %v209
      %v243 = vunpack.c.l.b16 %v210
      %v244 = vunpack.c.l.b16 %v211
      %v245 = vunpack.c.l.b16 %v212
      %v246 = vunpack.c.l.b16 %v213
      %v247 = vunpack.c.l.b16 %v214
      %v248 = vpack.c.b16 %v240, %v239
      %v249 = vpack.c.b16 %v242, %v241
      %v250 = vpack.c.b16 %v244, %v243
      %v251 = vpack.c.b16 %v246, %v245
      %v252 = vpack.c.b16 %v247, %v247
      %v261 = vunpack.c.l.b16 %v215
      %v262 = vunpack.c.l.b16 %v216
      %v263 = vunpack.c.l.b16 %v217
      %v264 = vunpack.c.l.b16 %v218
      %v265 = vunpack.c.l.b16 %v219
      %v266 = vunpack.c.l.b16 %v220
      %v267 = vunpack.c.l.b16 %v221
      %v268 = vunpack.c.l.b16 %v222
      %v269 = vpack.c.b16 %v262, %v261
      %v270 = vpack.c.b16 %v264, %v263
      %v271 = vpack.c.b16 %v266, %v265
      %v272 = vpack.c.b16 %v268, %v267
      %vm277 = vcmask 523264
      %v279 = vsel %vm277, %v248, 0
      %v282 = vsel %vm277, %v249, 0
      %v285 = vsel %vm277, %v250, 0
      %v288 = vsel %vm277, %v251, 0
      %v291 = vsel %vm277, %v252, 0
      %293 = vmatprep.subr.bf16.mxu0 0
      %294 = vmatpush1.bf16.msra.mxu0 %v269
      %295 = vmatprep.subr.bf16.mxu0 0
      %296 = vmatpush1.bf16.msra.mxu0 %v270
      %297 = vmatprep.subr.bf16.mxu0 0
      %298 = vmatpush1.bf16.msra.mxu0 %v271
      %299 = vmatprep.subr.bf16.mxu0 0
      %300 = vmatpush1.bf16.msra.mxu0 %v272
      %301 = vmatprep.subr.bf16.mxu0 0
      %302 = vmatpush1.bf16.msra.mxu0 0
      %303 = vmatprep.subr.bf16.mxu0 0
      %304 = vmatpush1.bf16.msra.mxu0 0
      %305 = vmatprep.subr.bf16.mxu0 0
      %306 = vmatpush1.bf16.msra.mxu0 0
      %307 = vmatprep.subr.bf16.mxu0 0
      %308 = vmatpush1.bf16.msra.mxu0 0
      %309 = vmatprep.subr.bf16.mxu0 0
      %310 = vmatpush1.bf16.msra.mxu0 0
      %311 = vmatprep.subr.bf16.mxu0 0
      %312 = vmatpush1.bf16.msra.mxu0 0
      %313 = vmatprep.subr.bf16.mxu0 0
      %314 = vmatpush1.bf16.msra.mxu0 0
      %315 = vmatprep.subr.bf16.mxu0 0
      %316 = vmatpush1.bf16.msra.mxu0 0
      %317 = vmatprep.subr.bf16.mxu0 0
      %318 = vmatpush1.bf16.msra.mxu0 0
      %319 = vmatprep.subr.bf16.mxu0 0
      %320 = vmatpush1.bf16.msra.mxu0 0
      %321 = vmatprep.subr.bf16.mxu0 0
      %322 = vmatpush1.bf16.msra.mxu0 0
      %323 = vmatprep.subr.bf16.mxu0 0
      %324 = vmatpush1.bf16.msra.mxu0 0
      %325 = vmatprep.mubr.bf16.mxu0 0
      %326 = vmatmul.mubr.bf16.gmra.mrb[0].mxu0 %v279
      %v327 = vpop.f32.mrb[0].mxu0
      %v328 = vadd.f32 %v228, %v327
      %v329 = vpop.f32.mrb[0].mxu0
      %v330 = vpop.f32.mrb[0].mxu0
      %v331 = vadd.f32 %v228, %v330
      %v332 = vpop.f32.mrb[0].mxu0
      %333 = vmatprep.mubr.bf16.mxu0 0
      %334 = vmatmul.mubr.bf16.gmra.mrb[0].mxu0 %v282
      %v335 = vpop.f32.mrb[0].mxu0
      %v336 = vadd.f32 %v228, %v335
      %v337 = vpop.f32.mrb[0].mxu0
      %v338 = vpop.f32.mrb[0].mxu0
      %v339 = vadd.f32 %v228, %v338
      %v340 = vpop.f32.mrb[0].mxu0
      %341 = vmatprep.mubr.bf16.mxu0 0
      %342 = vmatmul.mubr.bf16.gmra.mrb[0].mxu0 %v285
      %v343 = vpop.f32.mrb[0].mxu0
      %v344 = vadd.f32 %v228, %v343
      %v345 = vpop.f32.mrb[0].mxu0
      %v346 = vpop.f32.mrb[0].mxu0
      %v347 = vadd.f32 %v228, %v346
      %v348 = vpop.f32.mrb[0].mxu0
      %349 = vmatprep.mubr.bf16.mxu0 0
      %350 = vmatmul.mubr.bf16.gmra.mrb[0].mxu0 %v288
      %v351 = vpop.f32.mrb[0].mxu0
      %v352 = vadd.f32 %v228, %v351
      %v353 = vpop.f32.mrb[0].mxu0
      %v354 = vpop.f32.mrb[0].mxu0
      %v355 = vadd.f32 %v228, %v354
      %v356 = vpop.f32.mrb[0].mxu0
      %357 = vmatprep.mubr.bf16.mxu0 0
      %358 = vmatmul.mubr.bf16.gmra.mrb[0].mxu0 %v291
      %v359 = vpop.f32.mrb[0].mxu0
      %v360 = vadd.f32 %v228, %v359
      %v361 = vpop.f32.mrb[0].mxu0
      %v362 = vpop.f32.mrb[0].mxu0
      %v363 = vpop.f32.mrb[0].mxu0
      %364 = vdwg.mxu0
      %v365 = vmax.f32 %v328, 0.0
      %v366 = vmax.f32 %v331, 0.0
      %v367 = vmax.f32 %v336, 0.0
      %v368 = vmax.f32 %v339, 0.0
      %v369 = vmax.f32 %v344, 0.0
      %v370 = vmax.f32 %v347, 0.0
      %v371 = vmax.f32 %v352, 0.0
      %v372 = vmax.f32 %v355, 0.0
      %v373 = vmax.f32 %v360, 0.0
      %v374 = vpack.c.bf16 %v366, %v365
      %v375 = vpack.c.bf16 %v368, %v367
      %v376 = vpack.c.bf16 %v370, %v369
      %v377 = vpack.c.bf16 %v372, %v371
      %v378 = vpack.c.bf16 %v373, %v373
      %v384 = vunpack.c.l.b16 %v374
      %v385 = vunpack.c.h.b16 %v374
      %v386 = vunpack.c.l.b16 %v375
      %v387 = vunpack.c.h.b16 %v375
      %v388 = vunpack.c.l.b16 %v376
      %v389 = vunpack.c.h.b16 %v376
      %v390 = vunpack.c.l.b16 %v377
      %v391 = vunpack.c.h.b16 %v377
      %v392 = vunpack.c.l.b16 %v378
      %v393 = vpack.c.b16 %v384, %v384
      %v394 = vpack.c.b16 %v385, %v385
      %v395 = vpack.c.b16 %v386, %v386
      %v396 = vpack.c.b16 %v387, %v387
      %v397 = vpack.c.b16 %v388, %v388
      %v398 = vpack.c.b16 %v389, %v389
      %v399 = vpack.c.b16 %v390, %v390
      %v400 = vpack.c.b16 %v391, %v391
      %v401 = vpack.c.b16 %v392, %v392
      %vm411 = vcmask 125952
      %412 = vst.msk [vmem:[%s204] sm:$0xf] %vm411, %v393
      %413 = vst.msk [vmem:[%s204 + $0x4] sm:$0xf] %vm411, %v394
      %414 = vst.msk [vmem:[%s204 + $0x8] sm:$0xf] %vm411, %v395
      %415 = vst.msk [vmem:[%s204 + $0xc] sm:$0xf] %vm411, %v396
      %416 = vst.msk [vmem:[%s204 + $0x10] sm:$0xf] %vm411, %v397
      %417 = vst.msk [vmem:[%s204 + $0x14] sm:$0xf] %vm411, %v398
      %418 = vst.msk [vmem:[%s204 + $0x18] sm:$0xf] %vm411, %v399
      %419 = vst.msk [vmem:[%s204 + $0x1c] sm:$0xf] %vm411, %v400
      %420 = vst.msk [vmem:[%s204 + $0x20] sm:$0xf] %vm411, %v401
      %p421 = scmp.lt.s32.totalorder %s14, 3
      %s422 = scalar_select %p421, %s14, 3
      %s423 = smul.addr %s422, 9
      %s424 = smul.addr %s423, 4
      %s425 = scalar_lea.vmem %s3, %s424
      // Predicated region
      $region33: #{fpn_psp_head_forward.7} parent=31 // pred_check
        %p426 = pneg %p110
      $region34: #{fpn_psp_head_forward.7} parent=31 // pred_check_branch
        %428 = sbr.rel (%p426) target = $region36
      $region35: #{fpn_psp_head_forward.7} parent=31 // pred_region
        _
      $region36: #{fpn_psp_head_forward.7} parent=31 // pred_fallthru
        _
    $region32: #{fpn_psp_head_forward.7} parent=5 // pred_fallthru
      _
    %p429 = scmp.le.s32.totalorder 2, %s9
    // Predicated region
    $region37: #{fpn_psp_head_forward.7} parent=5 // pred_check
      %p430 = pneg %p429
    $region38: #{fpn_psp_head_forward.7} parent=5 // pred_check_branch
      %432 = sbr.rel (%p430) target = $region40
    $region39: #{fpn_psp_head_forward.7} parent=5 // pred_region
      %s433 = ssub.s32 %s9, 2
      // Predicated region
      $region41: #{fpn_psp_head_forward.7} parent=39 // pred_check
        %p434 = pneg %p116
      $region42: #{fpn_psp_head_forward.7} parent=39 // pred_check_branch
        %436 = sbr.rel (%p434) target = $region44
      $region43: #{fpn_psp_head_forward.7} parent=39 // pred_region
        %p437 = scmp.lt.s32.totalorder %s15, 3
        %s438 = scalar_select %p437, %s15, 3
        %s439 = smul.addr %s438, 9
        %s440 = smul.addr %s439, 4
        %s441 = scalar_lea.vmem %s3, %s440
      $region44: #{fpn_psp_head_forward.7} parent=39 // pred_fallthru
        _
    $region40: #{fpn_psp_head_forward.7} parent=5 // pred_fallthru
      _
  $region6: #{fpn_psp_head_forward.7} parent=0 // loop_footer
    %s13 = sadd.s32 1, %s9
  $region7: #{fpn_psp_head_forward.7} parent=0 // loop_footer_branch
    %8 = sbr.rel target = $region3
  $region8: #{fpn_psp_head_forward.7} parent=0 // loop_exit
    _

// kernel: squeeze.6
$region0: #{squeeze.6}
  %s0 = inlined_call_operand.vmem [shape: bf16[1,18,16], index: 0, kind: input, shape index: {}]
  %s1 = inlined_call_operand.vmem [shape: bf16[2,3,3,16], index: 1, kind: output, shape index: {}]
  $region1: #{squeeze.6} parent=0
    #allocation0 [shape = 'u8[24576]{0}', space=vmem, size = 0x6000, scoped, tag = 'scoped mem for output reshape']
    #allocation1 [shape = 'u8[12288]{0}', space=vmem, size = 0x3000, scoped, tag = 'scoped mem for input reshape']
    %s3 = smul.u32 4, 2
    %s4 = sshllo.u32 0, %s3
    %s5 = smul.addr 4, 2
    %s6 = scalar_lea.vmem %s0, %s5
    %s7 = sshrl.u32 %s4, 1
    %s8 = sor.u32 %s4, %s7
    %s9 = sand.u32 %s8, 85
    %s10 = sshrl.u32 %s9, 1
    %s11 = sor.u32 %s9, %s10
    %s12 = sand.u32 51, %s11
    %s13 = sshrl.u32 %s12, 2
    %s14 = sor.u32 %s12, %s13
    %s15 = sand.u32 15, %s14
    %v16 = vld [vmem:[%s6] sm:%s15]
    %v17 = vunpack.c.l.bf16 %v16
    %v18 = vunpack.c.h.bf16 %v16
    %s19 = scalar_lea.vmem [#allocation1], 16
    %20 = vst [vmem:[%s19] sm:%s4] %v17
    %s21 = scalar_lea.vmem %s0, 4
    %s22 = sshrl.u32 %s4, 1
    %s23 = sor.u32 %s4, %s22
    %s24 = sand.u32 %s23, 85
    %s25 = sshrl.u32 %s24, 1
    %s26 = sor.u32 %s24, %s25
    %s27 = sand.u32 51, %s26
    %s28 = sshrl.u32 %s27, 2
    %s29 = sor.u32 %s27, %s28
    %s30 = sand.u32 15, %s29
    %v31 = vld [vmem:[%s21] sm:%s30]
    %v32 = vunpack.c.l.bf16 %v31
    %v33 = vunpack.c.h.bf16 %v31
    %s34 = scalar_lea.vmem [#allocation1], 8
    %35 = vst [vmem:[%s34] sm:%s4] %v32
    %s36 = sshrl.u32 %s4, 1
    %s37 = sor.u32 %s4, %s36
    %s38 = sand.u32 %s37, 85
    %s39 = sshrl.u32 %s38, 1
    %s40 = sor.u32 %s38, %s39
    %s41 = sand.u32 51, %s40
    %s42 = sshrl.u32 %s41, 2
    %s43 = sor.u32 %s41, %s42
    %s44 = sand.u32 15, %s43
    %v45 = vld [vmem:[%s0] sm:%s44]
    %v46 = vunpack.c.l.bf16 %v45
    %v47 = vunpack.c.h.bf16 %v45
    %48 = vst [vmem:[#allocation1] sm:%s4] %v46
    %v49 = vld [vmem:[#allocation1] sm:$0xff]
    %vm50 = vcmask 130048
    %51 = vst.msk [vmem:[#allocation0] sm:$0x7] %vm50, %v49
    %s52 = scalar_lea.vmem [#allocation0], 5
    %53 = vst.msk [vmem:[%s52] sm:$0x38] %vm50, %v49
    %s54 = scalar_lea.vmem [#allocation0], 10
    %55 = vst.msk [vmem:[%s54] sm:$0xc0] %vm50, %v49
    %s56 = scalar_lea.vmem [#allocation1], 8
    %v57 = vld [vmem:[%s56] sm:$0xff]
    %vm58 = vcmask 130048
    %s59 = scalar_lea.vmem [#allocation0], 18
    %60 = vst.msk [vmem:[%s59] ss:$6 sm:$0x3] %vm58, %v57
    %s61 = scalar_lea.vmem [#allocation0], 23
    %62 = vst.msk [vmem:[%s61] sm:$0xc] %vm58, %v57
    %s63 = scalar_lea.vmem [#allocation0], 28
    %64 = vst.msk [vmem:[%s63] sm:$0x70] %vm58, %v57
    %s65 = scalar_lea.vmem [#allocation0], 33
    %66 = vst.msk [vmem:[%s65] sm:$0x80] %vm58, %v57
    %s67 = scalar_lea.vmem [#allocation1], 16
    %v68 = vld [vmem:[%s67] sm:$0x3]
    %vm69 = vcmask 130048
    %s70 = scalar_lea.vmem [#allocation0], 41
    %71 = vst.msk [vmem:[%s70] sm:$0x3] %vm69, %v68
    %s73 = smul.u32 2, 2
    %s74 = sshllo.u32 0, %s73
    %s75 = sshrl.u32 %s73, 1
    %v76 = vld [vmem:[#allocation0] sm:%s74]
    %v77 = vpack.c.bf16 0.0, %v76
    %s78 = sshllo.u32 0, %s75
    %79 = vst [vmem:[%s1] sm:%s78] %v77
    %s80 = scalar_lea.vmem [#allocation0], 8
    %v81 = vld [vmem:[%s80] sm:%s74]
    %v82 = vpack.c.bf16 0.0, %v81
    %s83 = sshllo.u32 0, %s75
    %s84 = scalar_lea.vmem %s1, 2
    %85 = vst [vmem:[%s84] sm:%s83] %v82
    %s86 = scalar_lea.vmem [#allocation0], 16
    %v87 = vld [vmem:[%s86] sm:%s74]
    %v88 = vpack.c.bf16 0.0, %v87
    %s89 = sshllo.u32 0, %s75
    %s90 = smul.addr 2, 2
    %s91 = scalar_lea.vmem %s1, %s90
    %92 = vst [vmem:[%s91] sm:%s89] %v88
    %s93 = scalar_lea.vmem [#allocation0], 24
    %v94 = vld [vmem:[%s93] sm:%s74]
    %v95 = vpack.c.bf16 0.0, %v94
    %s96 = sshllo.u32 0, %s75
    %s97 = smul.addr 2, 3
    %s98 = scalar_lea.vmem %s1, %s97
    %99 = vst [vmem:[%s98] sm:%s96] %v95
    %s100 = scalar_lea.vmem [#allocation0], 32
    %v101 = vld [vmem:[%s100] sm:%s74]
    %v102 = vpack.c.bf16 0.0, %v101
    %s103 = sshllo.u32 0, %s75
    %s104 = smul.addr 2, 4
    %s105 = scalar_lea.vmem %s1, %s104
    %106 = vst [vmem:[%s105] sm:%s103] %v102
    %s107 = scalar_lea.vmem [#allocation0], 40
    %v108 = vld [vmem:[%s107] sm:%s74]
    %v109 = vpack.c.bf16 0.0, %v108
    %s110 = sshllo.u32 0, %s75
    %s111 = smul.addr 2, 5
    %s112 = scalar_lea.vmem %s1, %s111
    %113 = vst [vmem:[%s112] sm:%s110] %v109

// kernel: fpn_psp_head_forward.9
$region0: #{fpn_psp_head_forward.9}
  #allocation0 [shape = 'u32[]', space=smem, size = 0x4, offset = 0x4, fixed_abs, tag = 'smem constant byte address 0x4 - core index']
  #allocation1 [shape = 'u32[144,128]{1,0:T(1,128)}', space=vmem, size = 0x12000, scoped, tag = 'internal scratch']
  %s0 = inlined_call_operand.vmem [shape: bf16[512,16], index: 0, kind: input, shape index: {}]
  %s1 = inlined_call_operand.vmem [shape: bf16[16,128], index: 1, kind: input, shape index: {}]
  %s2 = inlined_call_operand.vmem [shape: f32[1,128], index: 2, kind: input, shape index: {}]
  %s3 = inlined_call_operand.vmem [shape: f32[512,128], index: 3, kind: output, shape index: {}]
  %s4 = sld [smem:[#allocation0]]
  $region22: #{fpn_psp_head_forward.9} parent=0
    _
  %s6 = ssub.s32 1, %s4
  %s7 = scalar_select 0, %s6, %s4
  // Predicated region
  $region2: #{fpn_psp_head_forward.9} parent=0 // pred_check
    _
  $region3: #{fpn_psp_head_forward.9} parent=0 // pred_check_branch
    %9 = sbr.rel (0) target = $region5
  $region4: #{fpn_psp_head_forward.9} parent=0 // pred_region
    _
  $region5: #{fpn_psp_head_forward.9} parent=0 // pred_fallthru
    _
  // Predicated region
  $region6: #{fpn_psp_head_forward.9} parent=0 // pred_check
    _
  $region7: #{fpn_psp_head_forward.9} parent=0 // pred_check_branch
    %11 = sbr.rel (0) target = $region9
  $region8: #{fpn_psp_head_forward.9} parent=0 // pred_region
    _
  $region9: #{fpn_psp_head_forward.9} parent=0 // pred_fallthru
    _
  // Predicated region
  $region10: #{fpn_psp_head_forward.9} parent=0 // pred_check
    _
  $region11: #{fpn_psp_head_forward.9} parent=0 // pred_check_branch
    %13 = sbr.rel (0) target = $region13
  $region12: #{fpn_psp_head_forward.9} parent=0 // pred_region
    _
  $region13: #{fpn_psp_head_forward.9} parent=0 // pred_fallthru
    _
  %v15 = vld [vmem:[%s0] sm:$0xf]
  %v16 = vld [vmem:[%s0 + $0x4] sm:$0xf]
  %v17 = vld [vmem:[%s0 + $0x8] sm:$0xf]
  %v18 = vld [vmem:[%s0 + $0xc] sm:$0xf]
  %v19 = vld [vmem:[%s0 + $0x10] sm:$0xf]
  %v20 = vld [vmem:[%s0 + $0x14] sm:$0xf]
  %v21 = vld [vmem:[%s0 + $0x18] sm:$0xf]
  %v22 = vld [vmem:[%s0 + $0x1c] sm:$0xf]
  %v23 = vld [vmem:[%s0 + $0x20] sm:$0xf]
  %v24 = vld [vmem:[%s0 + $0x24] sm:$0xf]
  %v25 = vld [vmem:[%s0 + $0x28] sm:$0xf]
  %v26 = vld [vmem:[%s0 + $0x2c] sm:$0xf]
  %v27 = vld [vmem:[%s0 + $0x30] sm:$0xf]
  %v28 = vld [vmem:[%s0 + $0x34] sm:$0xf]
  %v29 = vld [vmem:[%s0 + $0x38] sm:$0xf]
  %v30 = vld [vmem:[%s0 + $0x3c] sm:$0xf]
  %v31 = vld [vmem:[%s0 + $0x40] sm:$0xf]
  %v32 = vld [vmem:[%s0 + $0x44] sm:$0xf]
  %v33 = vld [vmem:[%s0 + $0x48] sm:$0xf]
  %v34 = vld [vmem:[%s0 + $0x4c] sm:$0xf]
  %v35 = vld [vmem:[%s0 + $0x50] sm:$0xf]
  %v36 = vld [vmem:[%s0 + $0x54] sm:$0xf]
  %v37 = vld [vmem:[%s0 + $0x58] sm:$0xf]
  %v38 = vld [vmem:[%s0 + $0x5c] sm:$0xf]
  %v39 = vld [vmem:[%s0 + $0x60] sm:$0xf]
  %v40 = vld [vmem:[%s0 + $0x64] sm:$0xf]
  %v41 = vld [vmem:[%s0 + $0x68] sm:$0xf]
  %v42 = vld [vmem:[%s0 + $0x6c] sm:$0xf]
  %v43 = vld [vmem:[%s0 + $0x70] sm:$0xf]
  %v44 = vld [vmem:[%s0 + $0x74] sm:$0xf]
  %v45 = vld [vmem:[%s0 + $0x78] sm:$0xf]
  %v46 = vld [vmem:[%s0 + $0x7c] sm:$0xf]
  %v47 = vld [vmem:[%s0 + $0x80] sm:$0xf]
  %v48 = vld [vmem:[%s0 + $0x84] sm:$0xf]
  %v49 = vld [vmem:[%s0 + $0x88] sm:$0xf]
  %v50 = vld [vmem:[%s0 + $0x8c] sm:$0xf]
  %v51 = vld [vmem:[%s0 + $0x90] sm:$0xf]
  %v52 = vld [vmem:[%s0 + $0x94] sm:$0xf]
  %v53 = vld [vmem:[%s0 + $0x98] sm:$0xf]
  %v54 = vld [vmem:[%s0 + $0x9c] sm:$0xf]
  %v55 = vld [vmem:[%s0 + $0xa0] sm:$0xf]
  %v56 = vld [vmem:[%s0 + $0xa4] sm:$0xf]
  %v57 = vld [vmem:[%s0 + $0xa8] sm:$0xf]
  %v58 = vld [vmem:[%s0 + $0xac] sm:$0xf]
  %v59 = vld [vmem:[%s0 + $0xb0] sm:$0xf]
  %v60 = vld [vmem:[%s0 + $0xb4] sm:$0xf]
  %v61 = vld [vmem:[%s0 + $0xb8] sm:$0xf]
  %v62 = vld [vmem:[%s0 + $0xbc] sm:$0xf]
  %v63 = vld [vmem:[%s0 + $0xc0] sm:$0xf]
  %v64 = vld [vmem:[%s0 + $0xc4] sm:$0xf]
  %v65 = vld [vmem:[%s0 + $0xc8] sm:$0xf]
  %v66 = vld [vmem:[%s0 + $0xcc] sm:$0xf]
  %v67 = vld [vmem:[%s0 + $0xd0] sm:$0xf]
  %v68 = vld [vmem:[%s0 + $0xd4] sm:$0xf]
  %v69 = vld [vmem:[%s0 + $0xd8] sm:$0xf]
  %v70 = vld [vmem:[%s0 + $0xdc] sm:$0xf]
  %v71 = vld [vmem:[%s0 + $0xe0] sm:$0xf]
  %v72 = vld [vmem:[%s0 + $0xe4] sm:$0xf]
  %v73 = vld [vmem:[%s0 + $0xe8] sm:$0xf]
  %v74 = vld [vmem:[%s0 + $0xec] sm:$0xf]
  %v75 = vld [vmem:[%s0 + $0xf0] sm:$0xf]
  %v76 = vld [vmem:[%s0 + $0xf4] sm:$0xf]
  %v77 = vld [vmem:[%s0 + $0xf8] sm:$0xf]
  %v78 = vld [vmem:[%s0 + $0xfc] sm:$0xf]
  %v79 = vld [vmem:[%s1] sm:$0xf]
  %v80 = vld [vmem:[%s1 + $0x4] sm:$0xf]
  %v81 = vld [vmem:[%s2] sm:$0x1]
  %v83 = vlaneseq
  %v84 = vshrl.u32 %v83, 7
  %v85 = vsub.s32 0, %v84
  %v86 = vrot.slane %v81, %v85
  %v152 = vunpack.c.l.b16 %v15
  %v153 = vunpack.c.l.b16 %v16
  %v154 = vunpack.c.l.b16 %v17
  %v155 = vunpack.c.l.b16 %v18
  %v156 = vunpack.c.l.b16 %v19
  %v157 = vunpack.c.l.b16 %v20
  %v158 = vunpack.c.l.b16 %v21
  %v159 = vunpack.c.l.b16 %v22
  %v160 = vunpack.c.l.b16 %v23
  %v161 = vunpack.c.l.b16 %v24
  %v162 = vunpack.c.l.b16 %v25
  %v163 = vunpack.c.l.b16 %v26
  %v164 = vunpack.c.l.b16 %v27
  %v165 = vunpack.c.l.b16 %v28
  %v166 = vunpack.c.l.b16 %v29
  %v167 = vunpack.c.l.b16 %v30
  %v168 = vunpack.c.l.b16 %v31
  %v169 = vunpack.c.l.b16 %v32
  %v170 = vunpack.c.l.b16 %v33
  %v171 = vunpack.c.l.b16 %v34
  %v172 = vunpack.c.l.b16 %v35
  %v173 = vunpack.c.l.b16 %v36
  %v174 = vunpack.c.l.b16 %v37
  %v175 = vunpack.c.l.b16 %v38
  %v176 = vunpack.c.l.b16 %v39
  %v177 = vunpack.c.l.b16 %v40
  %v178 = vunpack.c.l.b16 %v41
  %v179 = vunpack.c.l.b16 %v42
  %v180 = vunpack.c.l.b16 %v43
  %v181 = vunpack.c.l.b16 %v44
  %v182 = vunpack.c.l.b16 %v45
  %v183 = vunpack.c.l.b16 %v46
  %v184 = vunpack.c.l.b16 %v47
  %v185 = vunpack.c.l.b16 %v48
  %v186 = vunpack.c.l.b16 %v49
  %v187 = vunpack.c.l.b16 %v50
  %v188 = vunpack.c.l.b16 %v51
  %v189 = vunpack.c.l.b16 %v52
  %v190 = vunpack.c.l.b16 %v53
  %v191 = vunpack.c.l.b16 %v54
  %v192 = vunpack.c.l.b16 %v55
  %v193 = vunpack.c.l.b16 %v56
  %v194 = vunpack.c.l.b16 %v57
  %v195 = vunpack.c.l.b16 %v58
  %v196 = vunpack.c.l.b16 %v59
  %v197 = vunpack.c.l.b16 %v60
  %v198 = vunpack.c.l.b16 %v61
  %v199 = vunpack.c.l.b16 %v62
  %v200 = vunpack.c.l.b16 %v63
  %v201 = vunpack.c.l.b16 %v64
  %v202 = vunpack.c.l.b16 %v65
  %v203 = vunpack.c.l.b16 %v66
  %v204 = vunpack.c.l.b16 %v67
  %v205 = vunpack.c.l.b16 %v68
  %v206 = vunpack.c.l.b16 %v69
  %v207 = vunpack.c.l.b16 %v70
  %v208 = vunpack.c.l.b16 %v71
  %v209 = vunpack.c.l.b16 %v72
  %v210 = vunpack.c.l.b16 %v73
  %v211 = vunpack.c.l.b16 %v74
  %v212 = vunpack.c.l.b16 %v75
  %v213 = vunpack.c.l.b16 %v76
  %v214 = vunpack.c.l.b16 %v77
  %v215 = vunpack.c.l.b16 %v78
  %v216 = vpack.c.b16 %v153, %v152
  %v217 = vpack.c.b16 %v155, %v154
  %v218 = vpack.c.b16 %v157, %v156
  %v219 = vpack.c.b16 %v159, %v158
  %v220 = vpack.c.b16 %v161, %v160
  %v221 = vpack.c.b16 %v163, %v162
  %v222 = vpack.c.b16 %v165, %v164
  %v223 = vpack.c.b16 %v167, %v166
  %v224 = vpack.c.b16 %v169, %v168
  %v225 = vpack.c.b16 %v171, %v170
  %v226 = vpack.c.b16 %v173, %v172
  %v227 = vpack.c.b16 %v175, %v174
  %v228 = vpack.c.b16 %v177, %v176
  %v229 = vpack.c.b16 %v179, %v178
  %v230 = vpack.c.b16 %v181, %v180
  %v231 = vpack.c.b16 %v183, %v182
  %v232 = vpack.c.b16 %v185, %v184
  %v233 = vpack.c.b16 %v187, %v186
  %v234 = vpack.c.b16 %v189, %v188
  %v235 = vpack.c.b16 %v191, %v190
  %v236 = vpack.c.b16 %v193, %v192
  %v237 = vpack.c.b16 %v195, %v194
  %v238 = vpack.c.b16 %v197, %v196
  %v239 = vpack.c.b16 %v199, %v198
  %v240 = vpack.c.b16 %v201, %v200
  %v241 = vpack.c.b16 %v203, %v202
  %v242 = vpack.c.b16 %v205, %v204
  %v243 = vpack.c.b16 %v207, %v206
  %v244 = vpack.c.b16 %v209, %v208
  %v245 = vpack.c.b16 %v211, %v210
  %v246 = vpack.c.b16 %v213, %v212
  %v247 = vpack.c.b16 %v215, %v214
  %v250 = vunpack.c.l.b16 %v79
  %v251 = vunpack.c.l.b16 %v80
  %v252 = vpack.c.b16 %v251, %v250
  %vm254 = vcmask 130048
  %v256 = vsel %vm254, %v216, 0
  %v259 = vsel %vm254, %v217, 0
  %v262 = vsel %vm254, %v218, 0
  %v265 = vsel %vm254, %v219, 0
  %v268 = vsel %vm254, %v220, 0
  %v271 = vsel %vm254, %v221, 0
  %v274 = vsel %vm254, %v222, 0
  %v277 = vsel %vm254, %v223, 0
  %v280 = vsel %vm254, %v224, 0
  %v283 = vsel %vm254, %v225, 0
  %v286 = vsel %vm254, %v226, 0
  %v289 = vsel %vm254, %v227, 0
  %v292 = vsel %vm254, %v228, 0
  %v295 = vsel %vm254, %v229, 0
  %v298 = vsel %vm254, %v230, 0
  %v301 = vsel %vm254, %v231, 0
  %v304 = vsel %vm254, %v232, 0
  %v307 = vsel %vm254, %v233, 0
  %v310 = vsel %vm254, %v234, 0
  %v313 = vsel %vm254, %v235, 0
  %v316 = vsel %vm254, %v236, 0
  %v319 = vsel %vm254, %v237, 0
  %v322 = vsel %vm254, %v238, 0
  %v325 = vsel %vm254, %v239, 0
  %v328 = vsel %vm254, %v240, 0
  %v331 = vsel %vm254, %v241, 0
  %v334 = vsel %vm254, %v242, 0
  %v337 = vsel %vm254, %v243, 0
  %v340 = vsel %vm254, %v244, 0
  %v343 = vsel %vm254, %v245, 0
  %v346 = vsel %vm254, %v246, 0
  %v349 = vsel %vm254, %v247, 0
  %351 = vmatprep.subr.bf16.mxu0 0
  %352 = vmatpush1.bf16.msra.mxu0 %v252
  %353 = vmatprep.subr.bf16.mxu0 0
  %354 = vmatpush1.bf16.msra.mxu0 0
  %355 = vmatprep.subr.bf16.mxu0 0
  %356 = vmatpush1.bf16.msra.mxu0 0
  %357 = vmatprep.subr.bf16.mxu0 0
  %358 = vmatpush1.bf16.msra.mxu0 0
  %359 = vmatprep.subr.bf16.mxu0 0
  %360 = vmatpush1.bf16.msra.mxu0 0
  %361 = vmatprep.subr.bf16.mxu0 0
  %362 = vmatpush1.bf16.msra.mxu0 0
  %363 = vmatprep.subr.bf16.mxu0 0
  %364 = vmatpush1.bf16.msra.mxu0 0
  %365 = vmatprep.subr.bf16.mxu0 0
  %366 = vmatpush1.bf16.msra.mxu0 0
  %367 = vmatprep.subr.bf16.mxu0 0
  %368 = vmatpush1.bf16.msra.mxu0 0
  %369 = vmatprep.subr.bf16.mxu0 0
  %370 = vmatpush1.bf16.msra.mxu0 0
  %371 = vmatprep.subr.bf16.mxu0 0
  %372 = vmatpush1.bf16.msra.mxu0 0
  %373 = vmatprep.subr.bf16.mxu0 0
  %374 = vmatpush1.bf16.msra.mxu0 0
  %375 = vmatprep.subr.bf16.mxu0 0
  %376 = vmatpush1.bf16.msra.mxu0 0
  %377 = vmatprep.subr.bf16.mxu0 0
  %378 = vmatpush1.bf16.msra.mxu0 0
  %379 = vmatprep.subr.bf16.mxu0 0
  %380 = vmatpush1.bf16.msra.mxu0 0
  %381 = vmatprep.subr.bf16.mxu0 0
  %382 = vmatpush1.bf16.msra.mxu0 0
  %383 = vmatprep.mubr.bf16.mxu0 0
  %384 = vmatmul.mubr.bf16.gmra.mrb[0].mxu0 %v256
  %v385 = vpop.f32.mrb[0].mxu0
  %v386 = vadd.f32 %v86, %v385
  %v387 = vpop.f32.mrb[0].mxu0
  %v388 = vpop.f32.mrb[0].mxu0
  %v389 = vadd.f32 %v86, %v388
  %v390 = vpop.f32.mrb[0].mxu0
  %391 = vmatprep.mubr.bf16.mxu0 0
  %392 = vmatmul.mubr.bf16.gmra.mrb[0].mxu0 %v259
  %v393 = vpop.f32.mrb[0].mxu0
  %v394 = vadd.f32 %v86, %v393
  %v395 = vpop.f32.mrb[0].mxu0
  %v396 = vpop.f32.mrb[0].mxu0
  %v397 = vadd.f32 %v86, %v396
  %v398 = vpop.f32.mrb[0].mxu0
  %399 = vmatprep.mubr.bf16.mxu0 0
  %400 = vmatmul.mubr.bf16.gmra.mrb[0].mxu0 %v262
  %v401 = vpop.f32.mrb[0].mxu0
  %v402 = vadd.f32 %v86, %v401
  %v403 = vpop.f32.mrb[0].mxu0
  %v404 = vpop.f32.mrb[0].mxu0
  %v405 = vadd.f32 %v86, %v404
  %v406 = vpop.f32.mrb[0].mxu0
  %407 = vmatprep.mubr.bf16.mxu0 0
  %408 = vmatmul.mubr.bf16.gmra.mrb[0].mxu0 %v265
  %v409 = vpop.f32.mrb[0].mxu0
  %v410 = vadd.f32 %v86, %v409
  %v411 = vpop.f32.mrb[0].mxu0
  %v412 = vpop.f32.mrb[0].mxu0
  %v413 = vadd.f32 %v86, %v412
  %v414 = vpop.f32.mrb[0].mxu0
  %415 = vmatprep.mubr.bf16.mxu0 0
  %416 = vmatmul.mubr.bf16.gmra.mrb[0].mxu0 %v268
  %v417 = vpop.f32.mrb[0].mxu0
  %v418 = vadd.f32 %v86, %v417
  %v419 = vpop.f32.mrb[0].mxu0
  %v420 = vpop.f32.mrb[0].mxu0
  %v421 = vadd.f32 %v86, %v420
  %v422 = vpop.f32.mrb[0].mxu0
  %423 = vmatprep.mubr.bf16.mxu0 0
  %424 = vmatmul.mubr.bf16.gmra.mrb[0].mxu0 %v271
  %v425 = vpop.f32.mrb[0].mxu0
  %v426 = vadd.f32 %v86, %v425
  %v427 = vpop.f32.mrb[0].mxu0
  %v428 = vpop.f32.mrb[0].mxu0
  %v429 = vadd.f32 %v86, %v428
  %v430 = vpop.f32.mrb[0].mxu0
  %431 = vmatprep.mubr.bf16.mxu0 0
  %432 = vmatmul.mubr.bf16.gmra.mrb[0].mxu0 %v274
  %v433 = vpop.f32.mrb[0].mxu0
  %v434 = vadd.f32 %v86, %v433
  %v435 = vpop.f32.mrb[0].mxu0
  %v436 = vpop.f32.mrb[0].mxu0
  %v437 = vadd.f32 %v86, %v436
  %v438 = vpop.f32.mrb[0].mxu0
  %439 = vmatprep.mubr.bf16.mxu0 0
  %440 = vmatmul.mubr.bf16.gmra.mrb[0].mxu0 %v277
  %v441 = vpop.f32.mrb[0].mxu0
  %v442 = vadd.f32 %v86, %v441
  %v443 = vpop.f32.mrb[0].mxu0
  %v444 = vpop.f32.mrb[0].mxu0
  %v445 = vadd.f32 %v86, %v444
  %v446 = vpop.f32.mrb[0].mxu0
  %447 = vmatprep.mubr.bf16.mxu0 0
  %448 = vmatmul.mubr.bf16.gmra.mrb[0].mxu0 %v280
  %v449 = vpop.f32.mrb[0].mxu0
  %v450 = vadd.f32 %v86, %v449
  %v451 = vpop.f32.mrb[0].mxu0
  %v452 = vpop.f32.mrb[0].mxu0
  %v453 = vadd.f32 %v86, %v452
  %v454 = vpop.f32.mrb[0].mxu0
  %455 = vmatprep.mubr.bf16.mxu0 0
  %456 = vmatmul.mubr.bf16.gmra.mrb[0].mxu0 %v283
  %v457 = vpop.f32.mrb[0].mxu0
  %v458 = vadd.f32 %v86, %v457
  %v459 = vpop.f32.mrb[0].mxu0
  %v460 = vpop.f32.mrb[0].mxu0
  %v461 = vadd.f32 %v86, %v460
  %v462 = vpop.f32.mrb[0].mxu0
  %463 = vmatprep.mubr.bf16.mxu0 0
  %464 = vmatmul.mubr.bf16.gmra.mrb[0].mxu0 %v286
  %v465 = vpop.f32.mrb[0].mxu0
  %v466 = vadd.f32 %v86, %v465
  %v467 = vpop.f32.mrb[0].mxu0
  %v468 = vpop.f32.mrb[0].mxu0
  %v469 = vadd.f32 %v86, %v468
  %v470 = vpop.f32.mrb[0].mxu0
  %471 = vmatprep.mubr.bf16.mxu0 0
  %472 = vmatmul.mubr.bf16.gmra.mrb[0].mxu0 %v289
  %v473 = vpop.f32.mrb[0].mxu0
  %v474 = vadd.f32 %v86, %v473
  %v475 = vpop.f32.mrb[0].mxu0
  %v476 = vpop.f32.mrb[0].mxu0
  %v477 = vadd.f32 %v86, %v476
  %v478 = vpop.f32.mrb[0].mxu0
  %479 = vmatprep.mubr.bf16.mxu0 0
  %480 = vmatmul.mubr.bf16.gmra.mrb[0].mxu0 %v292
  %v481 = vpop.f32.mrb[0].mxu0
  %v482 = vadd.f32 %v86, %v481
  %v483 = vpop.f32.mrb[0].mxu0
  %v484 = vpop.f32.mrb[0].mxu0
  %v485 = vadd.f32 %v86, %v484
  %v486 = vpop.f32.mrb[0].mxu0
  %487 = vmatprep.mubr.bf16.mxu0 0
  %488 = vmatmul.mubr.bf16.gmra.mrb[0].mxu0 %v295
  %v489 = vpop.f32.mrb[0].mxu0
  %v490 = vadd.f32 %v86, %v489
  %v491 = vpop.f32.mrb[0].mxu0
  %v492 = vpop.f32.mrb[0].mxu0
  %v493 = vadd.f32 %v86, %v492
  %v494 = vpop.f32.mrb[0].mxu0
  %495 = vmatprep.mubr.bf16.mxu0 0
  %496 = vmatmul.mubr.bf16.gmra.mrb[0].mxu0 %v298
  %v497 = vpop.f32.mrb[0].mxu0
  %v498 = vadd.f32 %v86, %v497
  %v499 = vpop.f32.mrb[0].mxu0
  %v500 = vpop.f32.mrb[0].mxu0
  %v501 = vadd.f32 %v86, %v500
  %v502 = vpop.f32.mrb[0].mxu0
  %503 = vmatprep.mubr.bf16.mxu0 0
  %504 = vmatmul.mubr.bf16.gmra.mrb[0].mxu0 %v301
  %v505 = vpop.f32.mrb[0].mxu0
  %v506 = vadd.f32 %v86, %v505
  %v507 = vpop.f32.mrb[0].mxu0
  %v508 = vpop.f32.mrb[0].mxu0
  %v509 = vadd.f32 %v86, %v508
  %v510 = vpop.f32.mrb[0].mxu0
  %511 = vmatprep.mubr.bf16.mxu0 0
  %512 = vmatmul.mubr.bf16.gmra.mrb[0].mxu0 %v304
  %v513 = vpop.f32.mrb[0].mxu0
  %v514 = vadd.f32 %v86, %v513
  %v515 = vpop.f32.mrb[0].mxu0
  %v516 = vpop.f32.mrb[0].mxu0
  %v517 = vadd.f32 %v86, %v516
  %v518 = vpop.f32.mrb[0].mxu0
  %519 = vmatprep.mubr.bf16.mxu0 0
  %520 = vmatmul.mubr.bf16.gmra.mrb[0].mxu0 %v307
  %v521 = vpop.f32.mrb[0].mxu0
  %v522 = vadd.f32 %v86, %v521
  %v523 = vpop.f32.mrb[0].mxu0
  %v524 = vpop.f32.mrb[0].mxu0
  %v525 = vadd.f32 %v86, %v524
  %v526 = vpop.f32.mrb[0].mxu0
  %527 = vmatprep.mubr.bf16.mxu0 0
  %528 = vmatmul.mubr.bf16.gmra.mrb[0].mxu0 %v310
  %v529 = vpop.f32.mrb[0].mxu0
  %v530 = vadd.f32 %v86, %v529
  %v531 = vpop.f32.mrb[0].mxu0
  %v532 = vpop.f32.mrb[0].mxu0
  %v533 = vadd.f32 %v86, %v532
  %v534 = vpop.f32.mrb[0].mxu0
  %535 = vmatprep.mubr.bf16.mxu0 0
  %536 = vmatmul.mubr.bf16.gmra.mrb[0].mxu0 %v313
  %v537 = vpop.f32.mrb[0].mxu0
  %v538 = vadd.f32 %v86, %v537
  %v539 = vpop.f32.mrb[0].mxu0
  %v540 = vpop.f32.mrb[0].mxu0
  %v541 = vadd.f32 %v86, %v540
  %v542 = vpop.f32.mrb[0].mxu0
  %543 = vmatprep.mubr.bf16.mxu0 0
  %544 = vmatmul.mubr.bf16.gmra.mrb[0].mxu0 %v316
  %v545 = vpop.f32.mrb[0].mxu0
  %v546 = vadd.f32 %v86, %v545
  %v547 = vpop.f32.mrb[0].mxu0
  %v548 = vpop.f32.mrb[0].mxu0
  %v549 = vadd.f32 %v86, %v548
  %v550 = vpop.f32.mrb[0].mxu0
  %551 = vmatprep.mubr.bf16.mxu0 0
  %552 = vmatmul.mubr.bf16.gmra.mrb[0].mxu0 %v319
  %v553 = vpop.f32.mrb[0].mxu0
  %v554 = vadd.f32 %v86, %v553
  %v555 = vpop.f32.mrb[0].mxu0
  %v556 = vpop.f32.mrb[0].mxu0
  %v557 = vadd.f32 %v86, %v556
  %v558 = vpop.f32.mrb[0].mxu0
  %559 = vmatprep.mubr.bf16.mxu0 0
  %560 = vmatmul.mubr.bf16.gmra.mrb[0].mxu0 %v322
  %v561 = vpop.f32.mrb[0].mxu0
  %v562 = vadd.f32 %v86, %v561
  %v563 = vpop.f32.mrb[0].mxu0
  %v564 = vpop.f32.mrb[0].mxu0
  %v565 = vadd.f32 %v86, %v564
  %v566 = vpop.f32.mrb[0].mxu0
  %567 = vmatprep.mubr.bf16.mxu0 0
  %568 = vmatmul.mubr.bf16.gmra.mrb[0].mxu0 %v325
  %v569 = vpop.f32.mrb[0].mxu0
  %v570 = vadd.f32 %v86, %v569
  %v571 = vpop.f32.mrb[0].mxu0
  %v572 = vpop.f32.mrb[0].mxu0
  %v573 = vadd.f32 %v86, %v572
  %v574 = vpop.f32.mrb[0].mxu0
  %575 = vmatprep.mubr.bf16.mxu0 0
  %576 = vmatmul.mubr.bf16.gmra.mrb[0].mxu0 %v328
  %v577 = vpop.f32.mrb[0].mxu0
  %v578 = vadd.f32 %v86, %v577
  %v579 = vpop.f32.mrb[0].mxu0
  %v580 = vpop.f32.mrb[0].mxu0
  %v581 = vadd.f32 %v86, %v580
  %v582 = vpop.f32.mrb[0].mxu0
  %583 = vmatprep.mubr.bf16.mxu0 0
  %584 = vmatmul.mubr.bf16.gmra.mrb[0].mxu0 %v331
  %v585 = vpop.f32.mrb[0].mxu0
  %v586 = vadd.f32 %v86, %v585
  %v587 = vpop.f32.mrb[0].mxu0
  %v588 = vpop.f32.mrb[0].mxu0
  %v589 = vadd.f32 %v86, %v588
  %v590 = vpop.f32.mrb[0].mxu0
  %591 = vmatprep.mubr.bf16.mxu0 0
  %592 = vmatmul.mubr.bf16.gmra.mrb[0].mxu0 %v334
  %v593 = vpop.f32.mrb[0].mxu0
  %v594 = vadd.f32 %v86, %v593
  %v595 = vpop.f32.mrb[0].mxu0
  %v596 = vpop.f32.mrb[0].mxu0
  %v597 = vadd.f32 %v86, %v596
  %v598 = vpop.f32.mrb[0].mxu0
  %599 = vmatprep.mubr.bf16.mxu0 0
  %600 = vmatmul.mubr.bf16.gmra.mrb[0].mxu0 %v337
  %v601 = vpop.f32.mrb[0].mxu0
  %v602 = vadd.f32 %v86, %v601
  %v603 = vpop.f32.mrb[0].mxu0
  %v604 = vpop.f32.mrb[0].mxu0
  %v605 = vadd.f32 %v86, %v604
  %v606 = vpop.f32.mrb[0].mxu0
  %607 = vmatprep.mubr.bf16.mxu0 0
  %608 = vmatmul.mubr.bf16.gmra.mrb[0].mxu0 %v340
  %v609 = vpop.f32.mrb[0].mxu0
  %v610 = vadd.f32 %v86, %v609
  %v611 = vpop.f32.mrb[0].mxu0
  %v612 = vpop.f32.mrb[0].mxu0
  %v613 = vadd.f32 %v86, %v612
  %v614 = vpop.f32.mrb[0].mxu0
  %615 = vmatprep.mubr.bf16.mxu0 0
  %616 = vmatmul.mubr.bf16.gmra.mrb[0].mxu0 %v343
  %v617 = vpop.f32.mrb[0].mxu0
  %v618 = vadd.f32 %v86, %v617
  %v619 = vpop.f32.mrb[0].mxu0
  %v620 = vpop.f32.mrb[0].mxu0
  %v621 = vadd.f32 %v86, %v620
  %v622 = vpop.f32.mrb[0].mxu0
  %623 = vmatprep.mubr.bf16.mxu0 0
  %624 = vmatmul.mubr.bf16.gmra.mrb[0].mxu0 %v346
  %v625 = vpop.f32.mrb[0].mxu0
  %v626 = vadd.f32 %v86, %v625
  %v627 = vpop.f32.mrb[0].mxu0
  %v628 = vpop.f32.mrb[0].mxu0
  %v629 = vadd.f32 %v86, %v628
  %v630 = vpop.f32.mrb[0].mxu0
  %631 = vmatprep.mubr.bf16.mxu0 0
  %632 = vmatmul.mubr.bf16.gmra.mrb[0].mxu0 %v349
  %v633 = vpop.f32.mrb[0].mxu0
  %v634 = vadd.f32 %v86, %v633
  %v635 = vpop.f32.mrb[0].mxu0
  %v636 = vpop.f32.mrb[0].mxu0
  %v637 = vadd.f32 %v86, %v636
  %v638 = vpop.f32.mrb[0].mxu0
  %639 = vdwg.mxu0
  %640 = vst [vmem:[%s3] sm:$0xff] %v386
  %641 = vst [vmem:[%s3 + $0x8] sm:$0xff] %v389
  %642 = vst [vmem:[%s3 + $0x10] sm:$0xff] %v394
  %643 = vst [vmem:[%s3 + $0x18] sm:$0xff] %v397
  %644 = vst [vmem:[%s3 + $0x20] sm:$0xff] %v402
  %645 = vst [vmem:[%s3 + $0x28] sm:$0xff] %v405
  %646 = vst [vmem:[%s3 + $0x30] sm:$0xff] %v410
  %647 = vst [vmem:[%s3 + $0x38] sm:$0xff] %v413
  %648 = vst [vmem:[%s3 + $0x40] sm:$0xff] %v418
  %649 = vst [vmem:[%s3 + $0x48] sm:$0xff] %v421
  %650 = vst [vmem:[%s3 + $0x50] sm:$0xff] %v426
  %651 = vst [vmem:[%s3 + $0x58] sm:$0xff] %v429
  %652 = vst [vmem:[%s3 + $0x60] sm:$0xff] %v434
  %653 = vst [vmem:[%s3 + $0x68] sm:$0xff] %v437
  %654 = vst [vmem:[%s3 + $0x70] sm:$0xff] %v442
  %655 = vst [vmem:[%s3 + $0x78] sm:$0xff] %v445
  %656 = vst [vmem:[%s3 + $0x80] sm:$0xff] %v450
  %657 = vst [vmem:[%s3 + $0x88] sm:$0xff] %v453
  %658 = vst [vmem:[%s3 + $0x90] sm:$0xff] %v458
  %659 = vst [vmem:[%s3 + $0x98] sm:$0xff] %v461
  %660 = vst [vmem:[%s3 + $0xa0] sm:$0xff] %v466
  %661 = vst [vmem:[%s3 + $0xa8] sm:$0xff] %v469
  %662 = vst [vmem:[%s3 + $0xb0] sm:$0xff] %v474
  %663 = vst [vmem:[%s3 + $0xb8] sm:$0xff] %v477
  %664 = vst [vmem:[%s3 + $0xc0] sm:$0xff] %v482
  %665 = vst [vmem:[%s3 + $0xc8] sm:$0xff] %v485
  %666 = vst [vmem:[%s3 + $0xd0] sm:$0xff] %v490
  %667 = vst [vmem:[%s3 + $0xd8] sm:$0xff] %v493
  %668 = vst [vmem:[%s3 + $0xe0] sm:$0xff] %v498
  %669 = vst [vmem:[%s3 + $0xe8] sm:$0xff] %v501
  %670 = vst [vmem:[%s3 + $0xf0] sm:$0xff] %v506
  %671 = vst [vmem:[%s3 + $0xf8] sm:$0xff] %v509
  %672 = vst [vmem:[%s3 + $0x100] sm:$0xff] %v514
  %673 = vst [vmem:[%s3 + $0x108] sm:$0xff] %v517
  %674 = vst [vmem:[%s3 + $0x110] sm:$0xff] %v522
  %675 = vst [vmem:[%s3 + $0x118] sm:$0xff] %v525
  %676 = vst [vmem:[%s3 + $0x120] sm:$0xff] %v530
  %677 = vst [vmem:[%s3 + $0x128] sm:$0xff] %v533
  %678 = vst [vmem:[%s3 + $0x130] sm:$0xff] %v538
  %679 = vst [vmem:[%s3 + $0x138] sm:$0xff] %v541
  %680 = vst [vmem:[%s3 + $0x140] sm:$0xff] %v546
  %681 = vst [vmem:[%s3 + $0x148] sm:$0xff] %v549
  %682 = vst [vmem:[%s3 + $0x150] sm:$0xff] %v554
  %683 = vst [vmem:[%s3 + $0x158] sm:$0xff] %v557
  %684 = vst [vmem:[%s3 + $0x160] sm:$0xff] %v562
  %685 = vst [vmem:[%s3 + $0x168] sm:$0xff] %v565
  %686 = vst [vmem:[%s3 + $0x170] sm:$0xff] %v570
  %687 = vst [vmem:[%s3 + $0x178] sm:$0xff] %v573
  %688 = vst [vmem:[%s3 + $0x180] sm:$0xff] %v578
  %689 = vst [vmem:[%s3 + $0x188] sm:$0xff] %v581
  %690 = vst [vmem:[%s3 + $0x190] sm:$0xff] %v586
  %691 = vst [vmem:[%s3 + $0x198] sm:$0xff] %v589
  %692 = vst [vmem:[%s3 + $0x1a0] sm:$0xff] %v594
  %693 = vst [vmem:[%s3 + $0x1a8] sm:$0xff] %v597
  %694 = vst [vmem:[%s3 + $0x1b0] sm:$0xff] %v602
  %695 = vst [vmem:[%s3 + $0x1b8] sm:$0xff] %v605
  %696 = vst [vmem:[%s3 + $0x1c0] sm:$0xff] %v610
  %697 = vst [vmem:[%s3 + $0x1c8] sm:$0xff] %v613
  %698 = vst [vmem:[%s3 + $0x1d0] sm:$0xff] %v618
  %699 = vst [vmem:[%s3 + $0x1d8] sm:$0xff] %v621
  %700 = vst [vmem:[%s3 + $0x1e0] sm:$0xff] %v626
  %701 = vst [vmem:[%s3 + $0x1e8] sm:$0xff] %v629
  %702 = vst [vmem:[%s3 + $0x1f0] sm:$0xff] %v634
  %703 = vst [vmem:[%s3 + $0x1f8] sm:$0xff] %v637
  // Predicated region
  $region14: #{fpn_psp_head_forward.9} parent=0 // pred_check
    _
  $region15: #{fpn_psp_head_forward.9} parent=0 // pred_check_branch
    %705 = sbr.rel (0) target = $region17
  $region16: #{fpn_psp_head_forward.9} parent=0 // pred_region
    _
  $region17: #{fpn_psp_head_forward.9} parent=0 // pred_fallthru
    _
  // Predicated region
  $region18: #{fpn_psp_head_forward.9} parent=0 // pred_check
    _
  $region19: #{fpn_psp_head_forward.9} parent=0 // pred_check_branch
    %707 = sbr.rel (0) target = $region21
  $region20: #{fpn_psp_head_forward.9} parent=0 // pred_region
    _
  $region21: #{fpn_psp_head_forward.9} parent=0 // pred_fallthru
    _

// kernel: fpn_psp_head_forward.8
$region0: #{fpn_psp_head_forward.8}
  #allocation0 [shape = 'u32[]', space=smem, size = 0x4, offset = 0x4, fixed_abs, tag = 'smem constant byte address 0x4 - core index']
  #allocation1 [shape = 'u32[144,128]{1,0:T(1,128)}', space=vmem, size = 0x12000, scoped, tag = 'internal scratch']
  #allocation2 [shape = 'f32[192,16]{1,0:T(8,128)}', space=vmem, size = 0x18000, scoped, tag = 'scratch operand']
  %s0 = inlined_call_operand.vmem [shape: bf16[2,2,264,128], index: 0, kind: input, shape index: {}]
  %s1 = inlined_call_operand.vmem [shape: bf16[3,3,128,16], index: 1, kind: input, shape index: {}]
  %s2 = inlined_call_operand.vmem [shape: f32[1,16], index: 2, kind: input, shape index: {}]
  %s3 = inlined_call_operand.vmem [shape: bf16[2,2,192,16], index: 3, kind: output, shape index: {}]
  %s4 = sld [smem:[#allocation0]]
  $region57: #{fpn_psp_head_forward.8} parent=0
    _
  %s6 = ssub.s32 1, %s4
  %s7 = scalar_select 0, %s6, %s4
  loop: start=0, step=1, limit=14
  $region2: #{fpn_psp_head_forward.8} parent=0 // loop_pre_header
    _
  $region3: #{fpn_psp_head_forward.8} parent=0 // loop_header
    %s9 = sphi 0, %s13
    %p10 = scmp.ge.s32.totalorder %s9, 14
    %s16 = sphi 0, %s35
    %s17 = sphi 0, %s31
    %s18 = sphi 0, %s27
    %s19 = sphi 0, %s16
    %s20 = sphi 0, %s17
    %s21 = sphi 0, %s18
    %s22 = sphi 0, %s19
    %s23 = sphi 0, %s20
    %s24 = sphi 0, %s21
    %s40 = sphi 0, %s42
    %s43 = sphi 0, %s40
    %s44 = sphi 0, %s43
    %s60 = sphi 0, %s44
    %s66 = sphi 0, %s68
    %s69 = sphi 0, %s66
    %s70 = sphi 0, %s69
    %s86 = sphi 0, %s70
    %s90 = sphi 0, %s90
    %s92 = sphi 0, %s90
    %s93 = sphi 0, %s92
    %s107 = sphi 0, %s93
    %s115 = sphi 0, %s117
    %s118 = sphi 0, %s115
    %s119 = sphi 0, %s118
    %s135 = sphi 0, %s119
  $region4: #{fpn_psp_head_forward.8} parent=0 // loop_header_branch
    %12 = sbr.rel (%p10) target = $region8
  $region5: #{fpn_psp_head_forward.8} parent=0 // loop_body
    %s14 = ssub.s32 %s9, 1
    %s15 = ssub.s32 %s9, 2
    %s25 = sadd.s32 1, %s18
    %p26 = scmp.ge.s32.totalorder %s25, 3
    %s27 = scalar_select %p26, 0, %s25
    %s28 = sadd.s32 1, %s17
    %s29 = scalar_select %p26, %s28, %s17
    %p30 = scmp.ge.s32.totalorder %s29, 2
    %s31 = scalar_select %p30, 0, %s29
    %s32 = sadd.s32 1, %s16
    %s33 = scalar_select %p30, %s32, %s16
    %p34 = scmp.ge.s32.totalorder %s33, 2
    %s35 = scalar_select %p34, 0, %s33
    %s36 = ssub.s32 %s16, %s35
    %s37 = ssub.s32 %s17, %s31
    %s38 = sor.u32 %s36, %s37
    %p39 = scmp.eq.s32.totalorder %s38, 0
    %s41 = sadd.s32 %s40, 1
    %s42 = scalar_select %p39, %s40, %s41
    %p45 = pneg %p39
    %p46 = scmp.eq.s32.totalorder %s9, 11
    %p47 = por %p45, %p46
    %p48 = scmp.ne.s32.totalorder %s40, %s43
    %p49 = scmp.eq.s32.totalorder %s9, 0
    %p50 = por %p48, %p49
    %p51 = scmp.ne.s32.totalorder %s40, %s43
    %p52 = scmp.eq.s32.totalorder %s14, 11
    %p53 = por %p51, %p52
    %p54 = scmp.ne.s32.totalorder %s43, %s44
    %p55 = scmp.eq.s32.totalorder %s14, 0
    %p56 = por %p54, %p55
    %p57 = scmp.ne.s32.totalorder %s43, %s44
    %p58 = scmp.eq.s32.totalorder %s15, 11
    %p59 = por %p57, %p58
    %p61 = scmp.ne.s32.totalorder %s44, %s60
    %p62 = scmp.eq.s32.totalorder %s15, 0
    %p63 = por %p61, %p62
    %s64 = ssub.s32 %s18, %s27
    %p65 = scmp.eq.s32.totalorder %s64, 0
    %s67 = sadd.s32 %s66, 1
    %s68 = scalar_select %p65, %s66, %s67
    %p71 = pneg %p65
    %p72 = scmp.eq.s32.totalorder %s9, 11
    %p73 = por %p71, %p72
    %p74 = scmp.ne.s32.totalorder %s66, %s69
    %p75 = scmp.eq.s32.totalorder %s9, 0
    %p76 = por %p74, %p75
    %p77 = scmp.ne.s32.totalorder %s66, %s69
    %p78 = scmp.eq.s32.totalorder %s14, 11
    %p79 = por %p77, %p78
    %p80 = scmp.ne.s32.totalorder %s69, %s70
    %p81 = scmp.eq.s32.totalorder %s14, 0
    %p82 = por %p80, %p81
    %p83 = scmp.ne.s32.totalorder %s69, %s70
    %p84 = scmp.eq.s32.totalorder %s15, 11
    %p85 = por %p83, %p84
    %p87 = scmp.ne.s32.totalorder %s70, %s86
    %p88 = scmp.eq.s32.totalorder %s15, 0
    %p89 = por %p87, %p88
    %s91 = sadd.s32 %s90, 1
    %p94 = scmp.eq.s32.totalorder %s9, 11
    %p95 = scmp.ne.s32.totalorder %s90, %s92
    %p96 = scmp.eq.s32.totalorder %s9, 0
    %p97 = por %p95, %p96
    %p98 = scmp.ne.s32.totalorder %s90, %s92
    %p99 = scmp.eq.s32.totalorder %s14, 11
    %p100 = por %p98, %p99
    %p101 = scmp.ne.s32.totalorder %s92, %s93
    %p102 = scmp.eq.s32.totalorder %s14, 0
    %p103 = por %p101, %p102
    %p104 = scmp.ne.s32.totalorder %s92, %s93
    %p105 = scmp.eq.s32.totalorder %s15, 11
    %p106 = por %p104, %p105
    %p108 = scmp.ne.s32.totalorder %s93, %s107
    %p109 = scmp.eq.s32.totalorder %s15, 0
    %p110 = por %p108, %p109
    %s111 = ssub.s32 %s16, %s35
    %s112 = ssub.s32 %s17, %s31
    %s113 = sor.u32 %s111, %s112
    %p114 = scmp.eq.s32.totalorder %s113, 0
    %s116 = sadd.s32 %s115, 1
    %s117 = scalar_select %p114, %s115, %s116
    %p120 = pneg %p114
    %p121 = scmp.eq.s32.totalorder %s9, 11
    %p122 = por %p120, %p121
    %p123 = scmp.ne.s32.totalorder %s115, %s118
    %p124 = scmp.eq.s32.totalorder %s9, 0
    %p125 = por %p123, %p124
    %p126 = scmp.ne.s32.totalorder %s115, %s118
    %p127 = scmp.eq.s32.totalorder %s14, 11
    %p128 = por %p126, %p127
    %p129 = scmp.ne.s32.totalorder %s118, %s119
    %p130 = scmp.eq.s32.totalorder %s14, 0
    %p131 = por %p129, %p130
    %p132 = scmp.ne.s32.totalorder %s118, %s119
    %p133 = scmp.eq.s32.totalorder %s15, 11
    %p134 = por %p132, %p133
    %p136 = scmp.ne.s32.totalorder %s119, %s135
    %p137 = scmp.eq.s32.totalorder %s15, 0
    %p138 = por %p136, %p137
    %p139 = scmp.le.s32.totalorder 1, %s9
    %p140 = scmp.lt.s32.totalorder %s9, 13
    %p141 = pnand %p139, %p140
    %p142 = pneg %p141
    // Predicated region
    $region9: #{fpn_psp_head_forward.8} parent=5 // pred_check
      _
    $region10: #{fpn_psp_head_forward.8} parent=5 // pred_check_branch
      %144 = sbr.rel (%p141) target = $region12
    $region11: #{fpn_psp_head_forward.8} parent=5 // pred_region
      %s145 = ssub.s32 %s9, 1
      // Predicated region
      $region13: #{fpn_psp_head_forward.8} parent=11 // pred_check
        %p146 = pneg %p103
      $region14: #{fpn_psp_head_forward.8} parent=11 // pred_check_branch
        %148 = sbr.rel (%p146) target = $region16
      $region15: #{fpn_psp_head_forward.8} parent=11 // pred_region
        _
      $region16: #{fpn_psp_head_forward.8} parent=11 // pred_fallthru
        _
    $region12: #{fpn_psp_head_forward.8} parent=5 // pred_fallthru
      _
    %p149 = scmp.lt.s32.totalorder %s9, 12
    // Predicated region
    $region17: #{fpn_psp_head_forward.8} parent=5 // pred_check
      %p150 = pneg %p149
    $region18: #{fpn_psp_head_forward.8} parent=5 // pred_check_branch
      %152 = sbr.rel (%p150) target = $region20
    $region19: #{fpn_psp_head_forward.8} parent=5 // pred_region
      // Predicated region
      $region21: #{fpn_psp_head_forward.8} parent=19 // pred_check
        %p153 = pneg %p50
      $region22: #{fpn_psp_head_forward.8} parent=19 // pred_check_branch
        %155 = sbr.rel (%p153) target = $region24
      $region23: #{fpn_psp_head_forward.8} parent=19 // pred_region
        %p156 = scmp.lt.s32.totalorder %s16, 1
        %s157 = scalar_select %p156, %s16, 1
        %p158 = scmp.lt.s32.totalorder %s17, 1
        %s159 = scalar_select %p158, %s17, 1
        %s160 = smul.addr %s159, 33
        %s161 = smul.addr %s157, 66
        %s162 = sadd.s32 %s160, %s161
        %s163 = smul.addr %s162, 4
        %s164 = scalar_lea.vmem %s0, %s163
      $region24: #{fpn_psp_head_forward.8} parent=19 // pred_fallthru
        _
      // Predicated region
      $region25: #{fpn_psp_head_forward.8} parent=19 // pred_check
        %p165 = pneg %p76
      $region26: #{fpn_psp_head_forward.8} parent=19 // pred_check_branch
        %167 = sbr.rel (%p165) target = $region28
      $region27: #{fpn_psp_head_forward.8} parent=19 // pred_region
        %p168 = scmp.lt.s32.totalorder %s18, 2
        %s169 = scalar_select %p168, %s18, 2
        %s170 = smul.addr %s169, 48
        %s171 = smul.addr %s170, 4
        %s172 = scalar_lea.vmem %s1, %s171
      $region28: #{fpn_psp_head_forward.8} parent=19 // pred_fallthru
        _
    $region20: #{fpn_psp_head_forward.8} parent=5 // pred_fallthru
      _
    %p173 = scmp.le.s32.totalorder 1, %s9
    %p174 = scmp.lt.s32.totalorder %s9, 13
    %p175 = pnand %p173, %p174
    %p176 = pneg %p175
    // Predicated region
    $region29: #{fpn_psp_head_forward.8} parent=5 // pred_check
      _
    $region30: #{fpn_psp_head_forward.8} parent=5 // pred_check_branch
      %178 = sbr.rel (%p175) target = $region32
    $region31: #{fpn_psp_head_forward.8} parent=5 // pred_region
      %s179 = ssub.s32 %s9, 1
      %p180 = scmp.lt.s32.totalorder %s19, 1
      %s181 = scalar_select %p180, %s19, 1
      %p182 = scmp.lt.s32.totalorder %s20, 1
      %s183 = scalar_select %p182, %s20, 1
      %s184 = smul.addr %s183, 33
      %s185 = smul.addr %s181, 66
      %s186 = sadd.s32 %s184, %s185
      %s187 = smul.addr %s186, 4
      %s188 = scalar_lea.vmem %s0, %s187
      %p189 = pneg %p56
      %p190 = pneg %p53
      %p191 = scmp.lt.s32.totalorder %s21, 2
      %s192 = scalar_select %p191, %s21, 2
      %s193 = smul.addr %s192, 48
      %s194 = smul.addr %s193, 4
      %s195 = scalar_lea.vmem %s1, %s194
      %p196 = pneg %p82
      %p197 = pneg %p79
      %p198 = pneg %p103
      %p199 = pneg %p100
      %p200 = pneg %p131
      %p201 = pneg %p128
      %p202 = scmp.lt.s32.totalorder %s19, 1
      %s203 = scalar_select %p202, %s19, 1
      %p204 = scmp.lt.s32.totalorder %s20, 1
      %s205 = scalar_select %p204, %s20, 1
      %s206 = smul.addr %s205, 24
      %s207 = smul.addr %s203, 48
      %s208 = sadd.s32 %s206, %s207
      %s209 = smul.addr %s208, 4
      %s210 = scalar_lea.vmem %s3, %s209
      %p211 = scmp.lt.s32.totalorder %s19, 1
      %s212 = scalar_select %p211, %s19, 1
      %p213 = scmp.lt.s32.totalorder %s20, 1
      %s214 = scalar_select %p213, %s20, 1
      %s215 = smul.addr %s214, 33
      %s216 = smul.addr %s212, 66
      %s217 = sadd.s32 %s215, %s216
      %s218 = smul.addr %s217, 4
      %s219 = scalar_lea.vmem %s0, %s218
      %p220 = scmp.lt.s32.totalorder %s21, 2
      %s221 = scalar_select %p220, %s21, 2
      %s222 = smul.addr %s221, 48
      %s223 = smul.addr %s222, 4
      %s224 = scalar_lea.vmem %s1, %s223
      %p225 = scmp.lt.s32.totalorder %s19, 1
      %s226 = scalar_select %p225, %s19, 1
      %p227 = scmp.lt.s32.totalorder %s20, 1
      %s228 = scalar_select %p227, %s20, 1
      %s229 = smul.addr %s228, 24
      %s230 = smul.addr %s226, 48
      %s231 = sadd.s32 %s229, %s230
      %s232 = smul.addr %s231, 4
      %s233 = scalar_lea.vmem %s3, %s232
      %p235 = scmp.eq.s32.totalorder %s21, 0
      // Predicated region
      $region33: #{fpn_psp_head_forward.8} parent=31 // pred_check
        %p236 = pneg %p235
      $region34: #{fpn_psp_head_forward.8} parent=31 // pred_check_branch
        %238 = sbr.rel (%p236) target = $region36
      $region35: #{fpn_psp_head_forward.8} parent=31 // pred_region
        %vm239 = vcmask 130048
        %240 = vst.msk [vmem:[#allocation2] sm:$0xff] %vm239, 0.0
        %241 = vst.msk [vmem:[#allocation2 + $0x8] sm:$0xff] %vm239, 0.0
        %242 = vst.msk [vmem:[#allocation2 + $0x10] sm:$0xff] %vm239, 0.0
        %243 = vst.msk [vmem:[#allocation2 + $0x18] sm:$0xff] %vm239, 0.0
        %244 = vst.msk [vmem:[#allocation2 + $0x20] sm:$0xff] %vm239, 0.0
        %245 = vst.msk [vmem:[#allocation2 + $0x28] sm:$0xff] %vm239, 0.0
        %246 = vst.msk [vmem:[#allocation2 + $0x30] sm:$0xff] %vm239, 0.0
        %247 = vst.msk [vmem:[#allocation2 + $0x38] sm:$0xff] %vm239, 0.0
        %248 = vst.msk [vmem:[#allocation2 + $0x40] sm:$0xff] %vm239, 0.0
        %249 = vst.msk [vmem:[#allocation2 + $0x48] sm:$0xff] %vm239, 0.0
        %250 = vst.msk [vmem:[#allocation2 + $0x50] sm:$0xff] %vm239, 0.0
        %251 = vst.msk [vmem:[#allocation2 + $0x58] sm:$0xff] %vm239, 0.0
        %252 = vst.msk [vmem:[#allocation2 + $0x60] sm:$0xff] %vm239, 0.0
        %253 = vst.msk [vmem:[#allocation2 + $0x68] sm:$0xff] %vm239, 0.0
        %254 = vst.msk [vmem:[#allocation2 + $0x70] sm:$0xff] %vm239, 0.0
        %255 = vst.msk [vmem:[#allocation2 + $0x78] sm:$0xff] %vm239, 0.0
        %256 = vst.msk [vmem:[#allocation2 + $0x80] sm:$0xff] %vm239, 0.0
        %257 = vst.msk [vmem:[#allocation2 + $0x88] sm:$0xff] %vm239, 0.0
        %258 = vst.msk [vmem:[#allocation2 + $0x90] sm:$0xff] %vm239, 0.0
        %259 = vst.msk [vmem:[#allocation2 + $0x98] sm:$0xff] %vm239, 0.0
        %260 = vst.msk [vmem:[#allocation2 + $0xa0] sm:$0xff] %vm239, 0.0
        %261 = vst.msk [vmem:[#allocation2 + $0xa8] sm:$0xff] %vm239, 0.0
        %262 = vst.msk [vmem:[#allocation2 + $0xb0] sm:$0xff] %vm239, 0.0
        %263 = vst.msk [vmem:[#allocation2 + $0xb8] sm:$0xff] %vm239, 0.0
        %v264 = vld [vmem:[%s219] sm:$0xf]
        %v265 = vld [vmem:[%s219 + $0x4] sm:$0xf]
        %v266 = vld [vmem:[%s219 + $0x8] sm:$0xf]
        %v267 = vld [vmem:[%s219 + $0xc] sm:$0xf]
        %v268 = vld [vmem:[%s219 + $0x10] sm:$0xf]
        %v269 = vld [vmem:[%s219 + $0x14] sm:$0xf]
        %v270 = vld [vmem:[%s219 + $0x18] sm:$0xf]
        %v271 = vld [vmem:[%s219 + $0x1c] sm:$0xf]
        %v272 = vld [vmem:[%s219 + $0x20] sm:$0xf]
        %v273 = vld [vmem:[%s219 + $0x24] sm:$0xf]
        %v274 = vld [vmem:[%s219 + $0x28] sm:$0xf]
        %v275 = vld [vmem:[%s219 + $0x2c] sm:$0xf]
        %v276 = vld [vmem:[%s219 + $0x30] sm:$0xf]
        %v277 = vld [vmem:[%s219 + $0x34] sm:$0xf]
        %v278 = vld [vmem:[%s219 + $0x38] sm:$0xf]
        %v279 = vld [vmem:[%s219 + $0x3c] sm:$0xf]
        %v280 = vld [vmem:[%s219 + $0x40] sm:$0xf]
        %v281 = vld [vmem:[%s219 + $0x44] sm:$0xf]
        %v282 = vld [vmem:[%s219 + $0x48] sm:$0xf]
        %v283 = vld [vmem:[%s219 + $0x4c] sm:$0xf]
        %v284 = vld [vmem:[%s219 + $0x50] sm:$0xf]
        %v285 = vld [vmem:[%s219 + $0x54] sm:$0xf]
        %v286 = vld [vmem:[%s219 + $0x58] sm:$0xf]
        %v287 = vld [vmem:[%s219 + $0x5c] sm:$0xf]
        %v288 = vld [vmem:[%s224] sm:$0xf]
        %v289 = vld [vmem:[%s224 + $0x4] sm:$0xf]
        %v290 = vld [vmem:[%s224 + $0x8] sm:$0xf]
        %v291 = vld [vmem:[%s224 + $0xc] sm:$0xf]
        %v292 = vld [vmem:[%s224 + $0x10] sm:$0xf]
        %v293 = vld [vmem:[%s224 + $0x14] sm:$0xf]
        %v294 = vld [vmem:[%s224 + $0x18] sm:$0xf]
        %v295 = vld [vmem:[%s224 + $0x1c] sm:$0xf]
        %v296 = vld [vmem:[%s224 + $0x20] sm:$0xf]
        %v297 = vld [vmem:[%s224 + $0x24] sm:$0xf]
        %v298 = vld [vmem:[%s224 + $0x28] sm:$0xf]
        %v299 = vld [vmem:[%s224 + $0x2c] sm:$0xf]
        %v300 = vld [vmem:[%s224 + $0x30] sm:$0xf]
        %v301 = vld [vmem:[%s224 + $0x34] sm:$0xf]
        %v302 = vld [vmem:[%s224 + $0x38] sm:$0xf]
        %v303 = vld [vmem:[%s224 + $0x3c] sm:$0xf]
        %v304 = vld [vmem:[%s219 + $0x60] sm:$0x1]
        %s305 = scalar_lea.vmem %s224, 64
        %v306 = vld [vmem:[%s305] sm:$0xf]
        %v307 = vld [vmem:[%s305 + $0x4] sm:$0xf]
        %v308 = vld [vmem:[%s305 + $0x8] sm:$0xf]
        %v309 = vld [vmem:[%s305 + $0xc] sm:$0xf]
        %v310 = vld [vmem:[%s305 + $0x10] sm:$0xf]
        %v311 = vld [vmem:[%s305 + $0x14] sm:$0xf]
        %v312 = vld [vmem:[%s305 + $0x18] sm:$0xf]
        %v313 = vld [vmem:[%s305 + $0x1c] sm:$0xf]
        %v314 = vld [vmem:[%s305 + $0x20] sm:$0xf]
        %v315 = vld [vmem:[%s305 + $0x24] sm:$0xf]
        %v316 = vld [vmem:[%s305 + $0x28] sm:$0xf]
        %v317 = vld [vmem:[%s305 + $0x2c] sm:$0xf]
        %v318 = vld [vmem:[%s305 + $0x30] sm:$0xf]
        %v319 = vld [vmem:[%s305 + $0x34] sm:$0xf]
        %v320 = vld [vmem:[%s305 + $0x38] sm:$0xf]
        %v321 = vld [vmem:[%s305 + $0x3c] sm:$0xf]
        %v347 = vunpack.c.l.b16 %v264
        %v348 = vunpack.c.l.b16 %v265
        %v349 = vunpack.c.l.b16 %v266
        %v350 = vunpack.c.l.b16 %v267
        %v351 = vunpack.c.l.b16 %v268
        %v352 = vunpack.c.l.b16 %v269
        %v353 = vunpack.c.l.b16 %v270
        %v354 = vunpack.c.l.b16 %v271
        %v355 = vunpack.c.l.b16 %v272
        %v356 = vunpack.c.l.b16 %v273
        %v357 = vunpack.c.l.b16 %v274
        %v358 = vunpack.c.l.b16 %v275
        %v359 = vunpack.c.l.b16 %v276
        %v360 = vunpack.c.l.b16 %v277
        %v361 = vunpack.c.l.b16 %v278
        %v362 = vunpack.c.l.b16 %v279
        %v363 = vunpack.c.l.b16 %v280
        %v364 = vunpack.c.l.b16 %v281
        %v365 = vunpack.c.l.b16 %v282
        %v366 = vunpack.c.l.b16 %v283
        %v367 = vunpack.c.l.b16 %v284
        %v368 = vunpack.c.l.b16 %v285
        %v369 = vunpack.c.l.b16 %v286
        %v370 = vunpack.c.l.b16 %v287
        %v371 = vunpack.c.l.b16 %v304
        %v372 = vpack.c.b16 %v348, %v347
        %v373 = vpack.c.b16 %v350, %v349
        %v374 = vpack.c.b16 %v352, %v351
        %v375 = vpack.c.b16 %v354, %v353
        %v376 = vpack.c.b16 %v356, %v355
        %v377 = vpack.c.b16 %v358, %v357
        %v378 = vpack.c.b16 %v360, %v359
        %v379 = vpack.c.b16 %v362, %v361
        %v380 = vpack.c.b16 %v364, %v363
        %v381 = vpack.c.b16 %v366, %v365
        %v382 = vpack.c.b16 %v368, %v367
        %v383 = vpack.c.b16 %v370, %v369
        %v384 = vpack.c.b16 %v371, %v371
        %vm385 = vsmask.f32 7424
        %v387 = vshrl.u32 %v372, 16
        %v389 = vshll.u32 %v372, 16
        %v391 = vrot.slane %v389, 1
        %v392 = vor.u32 %v387, %v391
        %v394 = vshll.u32 %v373, 16
        %v396 = vrot.slane %v394, 1
        %v397 = vsel %vm385, %v392, %v396
        %v398 = vshrl.u32 %v373, 16
        %v400 = vor.u32 %v398, %v396
        %v402 = vshll.u32 %v374, 16
        %v404 = vrot.slane %v402, 1
        %v405 = vsel %vm385, %v400, %v404
        %v406 = vshrl.u32 %v374, 16
        %v408 = vor.u32 %v406, %v404
        %v410 = vshll.u32 %v375, 16
        %v412 = vrot.slane %v410, 1
        %v413 = vsel %vm385, %v408, %v412
        %v414 = vshrl.u32 %v375, 16
        %v416 = vor.u32 %v414, %v412
        %v418 = vshll.u32 %v376, 16
        %v420 = vrot.slane %v418, 1
        %v421 = vsel %vm385, %v416, %v420
        %v422 = vshrl.u32 %v376, 16
        %v424 = vor.u32 %v422, %v420
        %v426 = vshll.u32 %v377, 16
        %v428 = vrot.slane %v426, 1
        %v429 = vsel %vm385, %v424, %v428
        %v430 = vshrl.u32 %v377, 16
        %v432 = vor.u32 %v430, %v428
        %v434 = vshll.u32 %v378, 16
        %v436 = vrot.slane %v434, 1
        %v437 = vsel %vm385, %v432, %v436
        %v438 = vshrl.u32 %v378, 16
        %v440 = vor.u32 %v438, %v436
        %v442 = vshll.u32 %v379, 16
        %v444 = vrot.slane %v442, 1
        %v445 = vsel %vm385, %v440, %v444
        %v446 = vshrl.u32 %v379, 16
        %v448 = vor.u32 %v446, %v444
        %v450 = vshll.u32 %v380, 16
        %v452 = vrot.slane %v450, 1
        %v453 = vsel %vm385, %v448, %v452
        %v454 = vshrl.u32 %v380, 16
        %v456 = vor.u32 %v454, %v452
        %v458 = vshll.u32 %v381, 16
        %v460 = vrot.slane %v458, 1
        %v461 = vsel %vm385, %v456, %v460
        %v462 = vshrl.u32 %v381, 16
        %v464 = vor.u32 %v462, %v460
        %v466 = vshll.u32 %v382, 16
        %v468 = vrot.slane %v466, 1
        %v469 = vsel %vm385, %v464, %v468
        %v470 = vshrl.u32 %v382, 16
        %v472 = vor.u32 %v470, %v468
        %v474 = vshll.u32 %v383, 16
        %v476 = vrot.slane %v474, 1
        %v477 = vsel %vm385, %v472, %v476
        %v478 = vshrl.u32 %v383, 16
        %v480 = vor.u32 %v478, %v476
        %v482 = vshll.u32 %v384, 16
        %v484 = vrot.slane %v482, 1
        %v485 = vsel %vm385, %v480, %v484
        %v514 = vunpack.c.l.b16 %v306
        %v515 = vunpack.c.l.b16 %v307
        %v516 = vunpack.c.l.b16 %v308
        %v517 = vunpack.c.l.b16 %v309
        %v518 = vunpack.c.l.b16 %v310
        %v519 = vunpack.c.l.b16 %v311
        %v520 = vunpack.c.l.b16 %v312
        %v521 = vunpack.c.l.b16 %v313
        %v522 = vunpack.c.l.b16 %v314
        %v523 = vunpack.c.l.b16 %v315
        %v524 = vunpack.c.l.b16 %v316
        %v525 = vunpack.c.l.b16 %v317
        %v526 = vunpack.c.l.b16 %v318
        %v527 = vunpack.c.l.b16 %v319
        %v528 = vunpack.c.l.b16 %v320
        %v529 = vunpack.c.l.b16 %v321
        %v530 = vpack.c.b16 %v515, %v514
        %v531 = vpack.c.b16 %v517, %v516
        %v532 = vpack.c.b16 %v519, %v518
        %v533 = vpack.c.b16 %v521, %v520
        %v534 = vpack.c.b16 %v523, %v522
        %v535 = vpack.c.b16 %v525, %v524
        %v536 = vpack.c.b16 %v527, %v526
        %v537 = vpack.c.b16 %v529, %v528
        %546 = vmatprep.subr.bf16.mxu0 0
        %547 = vmatpush1.bf16.msra.mxu0 %v530
        %548 = vmatprep.subr.bf16.mxu0 0
        %549 = vmatpush1.bf16.msra.mxu0 %v531
        %550 = vmatprep.subr.bf16.mxu0 0
        %551 = vmatpush1.bf16.msra.mxu0 %v532
        %552 = vmatprep.subr.bf16.mxu0 0
        %553 = vmatpush1.bf16.msra.mxu0 %v533
        %554 = vmatprep.subr.bf16.mxu0 0
        %555 = vmatpush1.bf16.msra.mxu0 %v534
        %556 = vmatprep.subr.bf16.mxu0 0
        %557 = vmatpush1.bf16.msra.mxu0 %v535
        %558 = vmatprep.subr.bf16.mxu0 0
        %559 = vmatpush1.bf16.msra.mxu0 %v536
        %560 = vmatprep.subr.bf16.mxu0 0
        %561 = vmatpush1.bf16.msra.mxu0 %v537
        %562 = vmatprep.subr.bf16.mxu0 0
        %563 = vmatpush1.bf16.msra.mxu0 0
        %564 = vmatprep.subr.bf16.mxu0 0
        %565 = vmatpush1.bf16.msra.mxu0 0
        %566 = vmatprep.subr.bf16.mxu0 0
        %567 = vmatpush1.bf16.msra.mxu0 0
        %568 = vmatprep.subr.bf16.mxu0 0
        %569 = vmatpush1.bf16.msra.mxu0 0
        %570 = vmatprep.subr.bf16.mxu0 0
        %571 = vmatpush1.bf16.msra.mxu0 0
        %572 = vmatprep.subr.bf16.mxu0 0
        %573 = vmatpush1.bf16.msra.mxu0 0
        %574 = vmatprep.subr.bf16.mxu0 0
        %575 = vmatpush1.bf16.msra.mxu0 0
        %576 = vmatprep.subr.bf16.mxu0 0
        %577 = vmatpush1.bf16.msra.mxu0 0
        %578 = vmatprep.mubr.bf16.mxu0 0
        %579 = vmatmul.mubr.bf16.gmra.mrb[0].mxu0 %v397
        %v580 = vpop.f32.mrb[0].mxu0
        %v581 = vadd.f32 0.0, %v580
        %v582 = vpop.f32.mrb[0].mxu0
        %v583 = vpop.f32.mrb[0].mxu0
        %v584 = vadd.f32 0.0, %v583
        %v585 = vpop.f32.mrb[0].mxu0
        %586 = vmatprep.mubr.bf16.mxu0 0
        %587 = vmatmul.mubr.bf16.gmra.mrb[0].mxu0 %v405
        %v588 = vpop.f32.mrb[0].mxu0
        %v589 = vadd.f32 0.0, %v588
        %v590 = vpop.f32.mrb[0].mxu0
        %v591 = vpop.f32.mrb[0].mxu0
        %v592 = vadd.f32 0.0, %v591
        %v593 = vpop.f32.mrb[0].mxu0
        %594 = vmatprep.mubr.bf16.mxu0 0
        %595 = vmatmul.mubr.bf16.gmra.mrb[0].mxu0 %v413
        %v596 = vpop.f32.mrb[0].mxu0
        %v597 = vadd.f32 0.0, %v596
        %v598 = vpop.f32.mrb[0].mxu0
        %v599 = vpop.f32.mrb[0].mxu0
        %v600 = vadd.f32 0.0, %v599
        %v601 = vpop.f32.mrb[0].mxu0
        %602 = vmatprep.mubr.bf16.mxu0 0
        %603 = vmatmul.mubr.bf16.gmra.mrb[0].mxu0 %v421
        %v604 = vpop.f32.mrb[0].mxu0
        %v605 = vadd.f32 0.0, %v604
        %v606 = vpop.f32.mrb[0].mxu0
        %v607 = vpop.f32.mrb[0].mxu0
        %v608 = vadd.f32 0.0, %v607
        %v609 = vpop.f32.mrb[0].mxu0
        %610 = vmatprep.mubr.bf16.mxu0 0
        %611 = vmatmul.mubr.bf16.gmra.mrb[0].mxu0 %v429
        %v612 = vpop.f32.mrb[0].mxu0
        %v613 = vadd.f32 0.0, %v612
        %v614 = vpop.f32.mrb[0].mxu0
        %v615 = vpop.f32.mrb[0].mxu0
        %v616 = vadd.f32 0.0, %v615
        %v617 = vpop.f32.mrb[0].mxu0
        %618 = vmatprep.mubr.bf16.mxu0 0
        %619 = vmatmul.mubr.bf16.gmra.mrb[0].mxu0 %v437
        %v620 = vpop.f32.mrb[0].mxu0
        %v621 = vadd.f32 0.0, %v620
        %v622 = vpop.f32.mrb[0].mxu0
        %v623 = vpop.f32.mrb[0].mxu0
        %v624 = vadd.f32 0.0, %v623
        %v625 = vpop.f32.mrb[0].mxu0
        %626 = vmatprep.mubr.bf16.mxu0 0
        %627 = vmatmul.mubr.bf16.gmra.mrb[0].mxu0 %v445
        %v628 = vpop.f32.mrb[0].mxu0
        %v629 = vadd.f32 0.0, %v628
        %v630 = vpop.f32.mrb[0].mxu0
        %v631 = vpop.f32.mrb[0].mxu0
        %v632 = vadd.f32 0.0, %v631
        %v633 = vpop.f32.mrb[0].mxu0
        %634 = vmatprep.mubr.bf16.mxu0 0
        %635 = vmatmul.mubr.bf16.gmra.mrb[0].mxu0 %v453
        %v636 = vpop.f32.mrb[0].mxu0
        %v637 = vadd.f32 0.0, %v636
        %v638 = vpop.f32.mrb[0].mxu0
        %v639 = vpop.f32.mrb[0].mxu0
        %v640 = vadd.f32 0.0, %v639
        %v641 = vpop.f32.mrb[0].mxu0
        %642 = vmatprep.mubr.bf16.mxu0 0
        %643 = vmatmul.mubr.bf16.gmra.mrb[0].mxu0 %v461
        %v644 = vpop.f32.mrb[0].mxu0
        %v645 = vadd.f32 0.0, %v644
        %v646 = vpop.f32.mrb[0].mxu0
        %v647 = vpop.f32.mrb[0].mxu0
        %v648 = vadd.f32 0.0, %v647
        %v649 = vpop.f32.mrb[0].mxu0
        %650 = vmatprep.mubr.bf16.mxu0 0
        %651 = vmatmul.mubr.bf16.gmra.mrb[0].mxu0 %v469
        %v652 = vpop.f32.mrb[0].mxu0
        %v653 = vadd.f32 0.0, %v652
        %v654 = vpop.f32.mrb[0].mxu0
        %v655 = vpop.f32.mrb[0].mxu0
        %v656 = vadd.f32 0.0, %v655
        %v657 = vpop.f32.mrb[0].mxu0
        %658 = vmatprep.mubr.bf16.mxu0 0
        %659 = vmatmul.mubr.bf16.gmra.mrb[0].mxu0 %v477
        %v660 = vpop.f32.mrb[0].mxu0
        %v661 = vadd.f32 0.0, %v660
        %v662 = vpop.f32.mrb[0].mxu0
        %v663 = vpop.f32.mrb[0].mxu0
        %v664 = vadd.f32 0.0, %v663
        %v665 = vpop.f32.mrb[0].mxu0
        %666 = vmatprep.mubr.bf16.mxu0 0
        %667 = vmatmul.mubr.bf16.gmra.mrb[0].mxu0 %v485
        %v668 = vpop.f32.mrb[0].mxu0
        %v669 = vadd.f32 0.0, %v668
        %v670 = vpop.f32.mrb[0].mxu0
        %v671 = vpop.f32.mrb[0].mxu0
        %v672 = vadd.f32 0.0, %v671
        %v673 = vpop.f32.mrb[0].mxu0
        %674 = vdwg.mxu0
        %v703 = vunpack.c.l.b16 %v288
        %v704 = vunpack.c.l.b16 %v289
        %v705 = vunpack.c.l.b16 %v290
        %v706 = vunpack.c.l.b16 %v291
        %v707 = vunpack.c.l.b16 %v292
        %v708 = vunpack.c.l.b16 %v293
        %v709 = vunpack.c.l.b16 %v294
        %v710 = vunpack.c.l.b16 %v295
        %v711 = vunpack.c.l.b16 %v296
        %v712 = vunpack.c.l.b16 %v297
        %v713 = vunpack.c.l.b16 %v298
        %v714 = vunpack.c.l.b16 %v299
        %v715 = vunpack.c.l.b16 %v300
        %v716 = vunpack.c.l.b16 %v301
        %v717 = vunpack.c.l.b16 %v302
        %v718 = vunpack.c.l.b16 %v303
        %v719 = vpack.c.b16 %v704, %v703
        %v720 = vpack.c.b16 %v706, %v705
        %v721 = vpack.c.b16 %v708, %v707
        %v722 = vpack.c.b16 %v710, %v709
        %v723 = vpack.c.b16 %v712, %v711
        %v724 = vpack.c.b16 %v714, %v713
        %v725 = vpack.c.b16 %v716, %v715
        %v726 = vpack.c.b16 %v718, %v717
        %735 = vmatprep.subr.bf16.mxu0 0
        %736 = vmatpush1.bf16.msra.mxu0 %v719
        %737 = vmatprep.subr.bf16.mxu0 0
        %738 = vmatpush1.bf16.msra.mxu0 %v720
        %739 = vmatprep.subr.bf16.mxu0 0
        %740 = vmatpush1.bf16.msra.mxu0 %v721
        %741 = vmatprep.subr.bf16.mxu0 0
        %742 = vmatpush1.bf16.msra.mxu0 %v722
        %743 = vmatprep.subr.bf16.mxu0 0
        %744 = vmatpush1.bf16.msra.mxu0 %v723
        %745 = vmatprep.subr.bf16.mxu0 0
        %746 = vmatpush1.bf16.msra.mxu0 %v724
        %747 = vmatprep.subr.bf16.mxu0 0
        %748 = vmatpush1.bf16.msra.mxu0 %v725
        %749 = vmatprep.subr.bf16.mxu0 0
        %750 = vmatpush1.bf16.msra.mxu0 %v726
        %751 = vmatprep.subr.bf16.mxu0 0
        %752 = vmatpush1.bf16.msra.mxu0 0
        %753 = vmatprep.subr.bf16.mxu0 0
        %754 = vmatpush1.bf16.msra.mxu0 0
        %755 = vmatprep.subr.bf16.mxu0 0
        %756 = vmatpush1.bf16.msra.mxu0 0
        %757 = vmatprep.subr.bf16.mxu0 0
        %758 = vmatpush1.bf16.msra.mxu0 0
        %759 = vmatprep.subr.bf16.mxu0 0
        %760 = vmatpush1.bf16.msra.mxu0 0
        %761 = vmatprep.subr.bf16.mxu0 0
        %762 = vmatpush1.bf16.msra.mxu0 0
        %763 = vmatprep.subr.bf16.mxu0 0
        %764 = vmatpush1.bf16.msra.mxu0 0
        %765 = vmatprep.subr.bf16.mxu0 0
        %766 = vmatpush1.bf16.msra.mxu0 0
        %767 = vmatprep.mubr.bf16.mxu0 0
        %768 = vmatmul.mubr.bf16.gmra.mrb[0].mxu0 %v372
        %v769 = vpop.f32.mrb[0].mxu0
        %v770 = vadd.f32 %v581, %v769
        %v771 = vpop.f32.mrb[0].mxu0
        %v772 = vpop.f32.mrb[0].mxu0
        %v773 = vadd.f32 %v584, %v772
        %v774 = vpop.f32.mrb[0].mxu0
        %775 = vmatprep.mubr.bf16.mxu0 0
        %776 = vmatmul.mubr.bf16.gmra.mrb[0].mxu0 %v373
        %v777 = vpop.f32.mrb[0].mxu0
        %v778 = vadd.f32 %v589, %v777
        %v779 = vpop.f32.mrb[0].mxu0
        %v780 = vpop.f32.mrb[0].mxu0
        %v781 = vadd.f32 %v592, %v780
        %v782 = vpop.f32.mrb[0].mxu0
        %783 = vmatprep.mubr.bf16.mxu0 0
        %784 = vmatmul.mubr.bf16.gmra.mrb[0].mxu0 %v374
        %v785 = vpop.f32.mrb[0].mxu0
        %v786 = vadd.f32 %v597, %v785
        %v787 = vpop.f32.mrb[0].mxu0
        %v788 = vpop.f32.mrb[0].mxu0
        %v789 = vadd.f32 %v600, %v788
        %v790 = vpop.f32.mrb[0].mxu0
        %791 = vmatprep.mubr.bf16.mxu0 0
        %792 = vmatmul.mubr.bf16.gmra.mrb[0].mxu0 %v375
        %v793 = vpop.f32.mrb[0].mxu0
        %v794 = vadd.f32 %v605, %v793
        %v795 = vpop.f32.mrb[0].mxu0
        %v796 = vpop.f32.mrb[0].mxu0
        %v797 = vadd.f32 %v608, %v796
        %v798 = vpop.f32.mrb[0].mxu0
        %799 = vmatprep.mubr.bf16.mxu0 0
        %800 = vmatmul.mubr.bf16.gmra.mrb[0].mxu0 %v376
        %v801 = vpop.f32.mrb[0].mxu0
        %v802 = vadd.f32 %v613, %v801
        %v803 = vpop.f32.mrb[0].mxu0
        %v804 = vpop.f32.mrb[0].mxu0
        %v805 = vadd.f32 %v616, %v804
        %v806 = vpop.f32.mrb[0].mxu0
        %807 = vmatprep.mubr.bf16.mxu0 0
        %808 = vmatmul.mubr.bf16.gmra.mrb[0].mxu0 %v377
        %v809 = vpop.f32.mrb[0].mxu0
        %v810 = vadd.f32 %v621, %v809
        %v811 = vpop.f32.mrb[0].mxu0
        %v812 = vpop.f32.mrb[0].mxu0
        %v813 = vadd.f32 %v624, %v812
        %v814 = vpop.f32.mrb[0].mxu0
        %815 = vmatprep.mubr.bf16.mxu0 0
        %816 = vmatmul.mubr.bf16.gmra.mrb[0].mxu0 %v378
        %v817 = vpop.f32.mrb[0].mxu0
        %v818 = vadd.f32 %v629, %v817
        %v819 = vpop.f32.mrb[0].mxu0
        %v820 = vpop.f32.mrb[0].mxu0
        %v821 = vadd.f32 %v632, %v820
        %v822 = vpop.f32.mrb[0].mxu0
        %823 = vmatprep.mubr.bf16.mxu0 0
        %824 = vmatmul.mubr.bf16.gmra.mrb[0].mxu0 %v379
        %v825 = vpop.f32.mrb[0].mxu0
        %v826 = vadd.f32 %v637, %v825
        %v827 = vpop.f32.mrb[0].mxu0
        %v828 = vpop.f32.mrb[0].mxu0
        %v829 = vadd.f32 %v640, %v828
        %v830 = vpop.f32.mrb[0].mxu0
        %831 = vmatprep.mubr.bf16.mxu0 0
        %832 = vmatmul.mubr.bf16.gmra.mrb[0].mxu0 %v380
        %v833 = vpop.f32.mrb[0].mxu0
        %v834 = vadd.f32 %v645, %v833
        %v835 = vpop.f32.mrb[0].mxu0
        %v836 = vpop.f32.mrb[0].mxu0
        %v837 = vadd.f32 %v648, %v836
        %v838 = vpop.f32.mrb[0].mxu0
        %839 = vmatprep.mubr.bf16.mxu0 0
        %840 = vmatmul.mubr.bf16.gmra.mrb[0].mxu0 %v381
        %v841 = vpop.f32.mrb[0].mxu0
        %v842 = vadd.f32 %v653, %v841
        %v843 = vpop.f32.mrb[0].mxu0
        %v844 = vpop.f32.mrb[0].mxu0
        %v845 = vadd.f32 %v656, %v844
        %v846 = vpop.f32.mrb[0].mxu0
        %847 = vmatprep.mubr.bf16.mxu0 0
        %848 = vmatmul.mubr.bf16.gmra.mrb[0].mxu0 %v382
        %v849 = vpop.f32.mrb[0].mxu0
        %v850 = vadd.f32 %v661, %v849
        %v851 = vpop.f32.mrb[0].mxu0
        %v852 = vpop.f32.mrb[0].mxu0
        %v853 = vadd.f32 %v664, %v852
        %v854 = vpop.f32.mrb[0].mxu0
        %855 = vmatprep.mubr.bf16.mxu0 0
        %856 = vmatmul.mubr.bf16.gmra.mrb[0].mxu0 %v383
        %v857 = vpop.f32.mrb[0].mxu0
        %v858 = vadd.f32 %v669, %v857
        %v859 = vpop.f32.mrb[0].mxu0
        %v860 = vpop.f32.mrb[0].mxu0
        %v861 = vadd.f32 %v672, %v860
        %v862 = vpop.f32.mrb[0].mxu0
        %863 = vdwg.mxu0
        %v864 = vld [vmem:[%s219] sm:$0xe]
        %s865 = scalar_lea.vmem %s224, 128
        %v866 = vld [vmem:[%s865] sm:$0xf]
        %v867 = vld [vmem:[%s865 + $0x4] sm:$0xf]
        %v868 = vld [vmem:[%s865 + $0x8] sm:$0xf]
        %v869 = vld [vmem:[%s865 + $0xc] sm:$0xf]
        %v870 = vld [vmem:[%s865 + $0x10] sm:$0xf]
        %v871 = vld [vmem:[%s865 + $0x14] sm:$0xf]
        %v872 = vld [vmem:[%s865 + $0x18] sm:$0xf]
        %v873 = vld [vmem:[%s865 + $0x1c] sm:$0xf]
        %v874 = vld [vmem:[%s865 + $0x20] sm:$0xf]
        %v875 = vld [vmem:[%s865 + $0x24] sm:$0xf]
        %v876 = vld [vmem:[%s865 + $0x28] sm:$0xf]
        %v877 = vld [vmem:[%s865 + $0x2c] sm:$0xf]
        %v878 = vld [vmem:[%s865 + $0x30] sm:$0xf]
        %v879 = vld [vmem:[%s865 + $0x34] sm:$0xf]
        %v880 = vld [vmem:[%s865 + $0x38] sm:$0xf]
        %v881 = vld [vmem:[%s865 + $0x3c] sm:$0xf]
        %v883 = vunpack.c.l.b16 %v864
        %v884 = vpack.c.b16 %v348, %v883
        %vm885 = vcmask 1046528
        %v886 = vrot.slane %v884, 1
        %v887 = vrot.slane %v373, 1
        %v888 = vsel %vm885, %v886, %v887
        %v889 = vrot.slane %v374, 1
        %v890 = vsel %vm885, %v887, %v889
        %v891 = vrot.slane %v375, 1
        %v892 = vsel %vm885, %v889, %v891
        %v893 = vrot.slane %v376, 1
        %v894 = vsel %vm885, %v891, %v893
        %v895 = vrot.slane %v377, 1
        %v896 = vsel %vm885, %v893, %v895
        %v897 = vrot.slane %v378, 1
        %v898 = vsel %vm885, %v895, %v897
        %v899 = vrot.slane %v379, 1
        %v900 = vsel %vm885, %v897, %v899
        %v901 = vrot.slane %v380, 1
        %v902 = vsel %vm885, %v899, %v901
        %v903 = vrot.slane %v381, 1
        %v904 = vsel %vm885, %v901, %v903
        %v905 = vrot.slane %v382, 1
        %v906 = vsel %vm885, %v903, %v905
        %v907 = vrot.slane %v383, 1
        %v908 = vsel %vm885, %v905, %v907
        %v909 = vrot.slane %v384, 1
        %v910 = vsel %vm885, %v907, %v909
        %v939 = vunpack.c.l.b16 %v866
        %v940 = vunpack.c.l.b16 %v867
        %v941 = vunpack.c.l.b16 %v868
        %v942 = vunpack.c.l.b16 %v869
        %v943 = vunpack.c.l.b16 %v870
        %v944 = vunpack.c.l.b16 %v871
        %v945 = vunpack.c.l.b16 %v872
        %v946 = vunpack.c.l.b16 %v873
        %v947 = vunpack.c.l.b16 %v874
        %v948 = vunpack.c.l.b16 %v875
        %v949 = vunpack.c.l.b16 %v876
        %v950 = vunpack.c.l.b16 %v877
        %v951 = vunpack.c.l.b16 %v878
        %v952 = vunpack.c.l.b16 %v879
        %v953 = vunpack.c.l.b16 %v880
        %v954 = vunpack.c.l.b16 %v881
        %v955 = vpack.c.b16 %v940, %v939
        %v956 = vpack.c.b16 %v942, %v941
        %v957 = vpack.c.b16 %v944, %v943
        %v958 = vpack.c.b16 %v946, %v945
        %v959 = vpack.c.b16 %v948, %v947
        %v960 = vpack.c.b16 %v950, %v949
        %v961 = vpack.c.b16 %v952, %v951
        %v962 = vpack.c.b16 %v954, %v953
        %971 = vmatprep.subr.bf16.mxu0 0
        %972 = vmatpush1.bf16.msra.mxu0 %v955
        %973 = vmatprep.subr.bf16.mxu0 0
        %974 = vmatpush1.bf16.msra.mxu0 %v956
        %975 = vmatprep.subr.bf16.mxu0 0
        %976 = vmatpush1.bf16.msra.mxu0 %v957
        %977 = vmatprep.subr.bf16.mxu0 0
        %978 = vmatpush1.bf16.msra.mxu0 %v958
        %979 = vmatprep.subr.bf16.mxu0 0
        %980 = vmatpush1.bf16.msra.mxu0 %v959
        %981 = vmatprep.subr.bf16.mxu0 0
        %982 = vmatpush1.bf16.msra.mxu0 %v960
        %983 = vmatprep.subr.bf16.mxu0 0
        %984 = vmatpush1.bf16.msra.mxu0 %v961
        %985 = vmatprep.subr.bf16.mxu0 0
        %986 = vmatpush1.bf16.msra.mxu0 %v962
        %987 = vmatprep.subr.bf16.mxu0 0
        %988 = vmatpush1.bf16.msra.mxu0 0
        %989 = vmatprep.subr.bf16.mxu0 0
        %990 = vmatpush1.bf16.msra.mxu0 0
        %991 = vmatprep.subr.bf16.mxu0 0
        %992 = vmatpush1.bf16.msra.mxu0 0
        %993 = vmatprep.subr.bf16.mxu0 0
        %994 = vmatpush1.bf16.msra.mxu0 0
        %995 = vmatprep.subr.bf16.mxu0 0
        %996 = vmatpush1.bf16.msra.mxu0 0
        %997 = vmatprep.subr.bf16.mxu0 0
        %998 = vmatpush1.bf16.msra.mxu0 0
        %999 = vmatprep.subr.bf16.mxu0 0
        %1000 = vmatpush1.bf16.msra.mxu0 0
        %1001 = vmatprep.subr.bf16.mxu0 0
        %1002 = vmatpush1.bf16.msra.mxu0 0
        %1003 = vmatprep.mubr.bf16.mxu0 0
        %1004 = vmatmul.mubr.bf16.gmra.mrb[0].mxu0 %v888
        %v1005 = vpop.f32.mrb[0].mxu0
        %v1006 = vadd.f32 0.0, %v1005
        %v1007 = vpop.f32.mrb[0].mxu0
        %v1008 = vpop.f32.mrb[0].mxu0
        %v1009 = vadd.f32 0.0, %v1008
        %v1010 = vpop.f32.mrb[0].mxu0
        %1011 = vmatprep.mubr.bf16.mxu0 0
        %1012 = vmatmul.mubr.bf16.gmra.mrb[0].mxu0 %v890
        %v1013 = vpop.f32.mrb[0].mxu0
        %v1014 = vadd.f32 0.0, %v1013
        %v1015 = vpop.f32.mrb[0].mxu0
        %v1016 = vpop.f32.mrb[0].mxu0
        %v1017 = vadd.f32 0.0, %v1016
        %v1018 = vpop.f32.mrb[0].mxu0
        %1019 = vmatprep.mubr.bf16.mxu0 0
        %1020 = vmatmul.mubr.bf16.gmra.mrb[0].mxu0 %v892
        %v1021 = vpop.f32.mrb[0].mxu0
        %v1022 = vadd.f32 0.0, %v1021
        %v1023 = vpop.f32.mrb[0].mxu0
        %v1024 = vpop.f32.mrb[0].mxu0
        %v1025 = vadd.f32 0.0, %v1024
        %v1026 = vpop.f32.mrb[0].mxu0
        %1027 = vmatprep.mubr.bf16.mxu0 0
        %1028 = vmatmul.mubr.bf16.gmra.mrb[0].mxu0 %v894
        %v1029 = vpop.f32.mrb[0].mxu0
        %v1030 = vadd.f32 0.0, %v1029
        %v1031 = vpop.f32.mrb[0].mxu0
        %v1032 = vpop.f32.mrb[0].mxu0
        %v1033 = vadd.f32 0.0, %v1032
        %v1034 = vpop.f32.mrb[0].mxu0
        %1035 = vmatprep.mubr.bf16.mxu0 0
        %1036 = vmatmul.mubr.bf16.gmra.mrb[0].mxu0 %v896
        %v1037 = vpop.f32.mrb[0].mxu0
        %v1038 = vadd.f32 0.0, %v1037
        %v1039 = vpop.f32.mrb[0].mxu0
        %v1040 = vpop.f32.mrb[0].mxu0
        %v1041 = vadd.f32 0.0, %v1040
        %v1042 = vpop.f32.mrb[0].mxu0
        %1043 = vmatprep.mubr.bf16.mxu0 0
        %1044 = vmatmul.mubr.bf16.gmra.mrb[0].mxu0 %v898
        %v1045 = vpop.f32.mrb[0].mxu0
        %v1046 = vadd.f32 0.0, %v1045
        %v1047 = vpop.f32.mrb[0].mxu0
        %v1048 = vpop.f32.mrb[0].mxu0
        %v1049 = vadd.f32 0.0, %v1048
        %v1050 = vpop.f32.mrb[0].mxu0
        %1051 = vmatprep.mubr.bf16.mxu0 0
        %1052 = vmatmul.mubr.bf16.gmra.mrb[0].mxu0 %v900
        %v1053 = vpop.f32.mrb[0].mxu0
        %v1054 = vadd.f32 0.0, %v1053
        %v1055 = vpop.f32.mrb[0].mxu0
        %v1056 = vpop.f32.mrb[0].mxu0
        %v1057 = vadd.f32 0.0, %v1056
        %v1058 = vpop.f32.mrb[0].mxu0
        %1059 = vmatprep.mubr.bf16.mxu0 0
        %1060 = vmatmul.mubr.bf16.gmra.mrb[0].mxu0 %v902
        %v1061 = vpop.f32.mrb[0].mxu0
        %v1062 = vadd.f32 0.0, %v1061
        %v1063 = vpop.f32.mrb[0].mxu0
        %v1064 = vpop.f32.mrb[0].mxu0
        %v1065 = vadd.f32 0.0, %v1064
        %v1066 = vpop.f32.mrb[0].mxu0
        %1067 = vmatprep.mubr.bf16.mxu0 0
        %1068 = vmatmul.mubr.bf16.gmra.mrb[0].mxu0 %v904
        %v1069 = vpop.f32.mrb[0].mxu0
        %v1070 = vadd.f32 0.0, %v1069
        %v1071 = vpop.f32.mrb[0].mxu0
        %v1072 = vpop.f32.mrb[0].mxu0
        %v1073 = vadd.f32 0.0, %v1072
        %v1074 = vpop.f32.mrb[0].mxu0
        %1075 = vmatprep.mubr.bf16.mxu0 0
        %1076 = vmatmul.mubr.bf16.gmra.mrb[0].mxu0 %v906
        %v1077 = vpop.f32.mrb[0].mxu0
        %v1078 = vadd.f32 0.0, %v1077
        %v1079 = vpop.f32.mrb[0].mxu0
        %v1080 = vpop.f32.mrb[0].mxu0
        %v1081 = vadd.f32 0.0, %v1080
        %v1082 = vpop.f32.mrb[0].mxu0
        %1083 = vmatprep.mubr.bf16.mxu0 0
        %1084 = vmatmul.mubr.bf16.gmra.mrb[0].mxu0 %v908
        %v1085 = vpop.f32.mrb[0].mxu0
        %v1086 = vadd.f32 0.0, %v1085
        %v1087 = vpop.f32.mrb[0].mxu0
        %v1088 = vpop.f32.mrb[0].mxu0
        %v1089 = vadd.f32 0.0, %v1088
        %v1090 = vpop.f32.mrb[0].mxu0
        %1091 = vmatprep.mubr.bf16.mxu0 0
        %1092 = vmatmul.mubr.bf16.gmra.mrb[0].mxu0 %v910
        %v1093 = vpop.f32.mrb[0].mxu0
        %v1094 = vadd.f32 0.0, %v1093
        %v1095 = vpop.f32.mrb[0].mxu0
        %v1096 = vpop.f32.mrb[0].mxu0
        %v1097 = vadd.f32 0.0, %v1096
        %v1098 = vpop.f32.mrb[0].mxu0
        %1099 = vdwg.mxu0
        %v1100 = vadd.f32 %v770, %v1006
        %v1101 = vadd.f32 %v773, %v1009
        %v1102 = vadd.f32 %v778, %v1014
        %v1103 = vadd.f32 %v781, %v1017
        %v1104 = vadd.f32 %v786, %v1022
        %v1105 = vadd.f32 %v789, %v1025
        %v1106 = vadd.f32 %v794, %v1030
        %v1107 = vadd.f32 %v797, %v1033
        %v1108 = vadd.f32 %v802, %v1038
        %v1109 = vadd.f32 %v805, %v1041
        %v1110 = vadd.f32 %v810, %v1046
        %v1111 = vadd.f32 %v813, %v1049
        %v1112 = vadd.f32 %v818, %v1054
        %v1113 = vadd.f32 %v821, %v1057
        %v1114 = vadd.f32 %v826, %v1062
        %v1115 = vadd.f32 %v829, %v1065
        %v1116 = vadd.f32 %v834, %v1070
        %v1117 = vadd.f32 %v837, %v1073
        %v1118 = vadd.f32 %v842, %v1078
        %v1119 = vadd.f32 %v845, %v1081
        %v1120 = vadd.f32 %v850, %v1086
        %v1121 = vadd.f32 %v853, %v1089
        %v1122 = vadd.f32 %v858, %v1094
        %v1123 = vadd.f32 %v861, %v1097
        %v1124 = vld [vmem:[#allocation2] sm:$0xff]
        %v1125 = vld [vmem:[#allocation2 + $0x8] sm:$0xff]
        %v1126 = vld [vmem:[#allocation2 + $0x10] sm:$0xff]
        %v1127 = vld [vmem:[#allocation2 + $0x18] sm:$0xff]
        %v1128 = vld [vmem:[#allocation2 + $0x20] sm:$0xff]
        %v1129 = vld [vmem:[#allocation2 + $0x28] sm:$0xff]
        %v1130 = vld [vmem:[#allocation2 + $0x30] sm:$0xff]
        %v1131 = vld [vmem:[#allocation2 + $0x38] sm:$0xff]
        %v1132 = vld [vmem:[#allocation2 + $0x40] sm:$0xff]
        %v1133 = vld [vmem:[#allocation2 + $0x48] sm:$0xff]
        %v1134 = vld [vmem:[#allocation2 + $0x50] sm:$0xff]
        %v1135 = vld [vmem:[#allocation2 + $0x58] sm:$0xff]
        %v1136 = vld [vmem:[#allocation2 + $0x60] sm:$0xff]
        %v1137 = vld [vmem:[#allocation2 + $0x68] sm:$0xff]
        %v1138 = vld [vmem:[#allocation2 + $0x70] sm:$0xff]
        %v1139 = vld [vmem:[#allocation2 + $0x78] sm:$0xff]
        %v1140 = vld [vmem:[#allocation2 + $0x80] sm:$0xff]
        %v1141 = vld [vmem:[#allocation2 + $0x88] sm:$0xff]
        %v1142 = vld [vmem:[#allocation2 + $0x90] sm:$0xff]
        %v1143 = vld [vmem:[#allocation2 + $0x98] sm:$0xff]
        %v1144 = vld [vmem:[#allocation2 + $0xa0] sm:$0xff]
        %v1145 = vld [vmem:[#allocation2 + $0xa8] sm:$0xff]
        %v1146 = vld [vmem:[#allocation2 + $0xb0] sm:$0xff]
        %v1147 = vld [vmem:[#allocation2 + $0xb8] sm:$0xff]
        %v1148 = vadd.f32 %v1124, %v1100
        %v1149 = vadd.f32 %v1125, %v1101
        %v1150 = vadd.f32 %v1126, %v1102
        %v1151 = vadd.f32 %v1127, %v1103
        %v1152 = vadd.f32 %v1128, %v1104
        %v1153 = vadd.f32 %v1129, %v1105
        %v1154 = vadd.f32 %v1130, %v1106
        %v1155 = vadd.f32 %v1131, %v1107
        %v1156 = vadd.f32 %v1132, %v1108
        %v1157 = vadd.f32 %v1133, %v1109
        %v1158 = vadd.f32 %v1134, %v1110
        %v1159 = vadd.f32 %v1135, %v1111
        %v1160 = vadd.f32 %v1136, %v1112
        %v1161 = vadd.f32 %v1137, %v1113
        %v1162 = vadd.f32 %v1138, %v1114
        %v1163 = vadd.f32 %v1139, %v1115
        %v1164 = vadd.f32 %v1140, %v1116
        %v1165 = vadd.f32 %v1141, %v1117
        %v1166 = vadd.f32 %v1142, %v1118
        %v1167 = vadd.f32 %v1143, %v1119
        %v1168 = vadd.f32 %v1144, %v1120
        %v1169 = vadd.f32 %v1145, %v1121
        %v1170 = vadd.f32 %v1146, %v1122
        %v1171 = vadd.f32 %v1147, %v1123
        %1172 = vst.msk [vmem:[#allocation2] sm:$0xff] %vm239, %v1148
        %1173 = vst.msk [vmem:[#allocation2 + $0x8] sm:$0xff] %vm239, %v1149
        %1174 = vst.msk [vmem:[#allocation2 + $0x10] sm:$0xff] %vm239, %v1150
        %1175 = vst.msk [vmem:[#allocation2 + $0x18] sm:$0xff] %vm239, %v1151
        %1176 = vst.msk [vmem:[#allocation2 + $0x20] sm:$0xff] %vm239, %v1152
        %1177 = vst.msk [vmem:[#allocation2 + $0x28] sm:$0xff] %vm239, %v1153
        %1178 = vst.msk [vmem:[#allocation2 + $0x30] sm:$0xff] %vm239, %v1154
        %1179 = vst.msk [vmem:[#allocation2 + $0x38] sm:$0xff] %vm239, %v1155
        %1180 = vst.msk [vmem:[#allocation2 + $0x40] sm:$0xff] %vm239, %v1156
        %1181 = vst.msk [vmem:[#allocation2 + $0x48] sm:$0xff] %vm239, %v1157
        %1182 = vst.msk [vmem:[#allocation2 + $0x50] sm:$0xff] %vm239, %v1158
        %1183 = vst.msk [vmem:[#allocation2 + $0x58] sm:$0xff] %vm239, %v1159
        %1184 = vst.msk [vmem:[#allocation2 + $0x60] sm:$0xff] %vm239, %v1160
        %1185 = vst.msk [vmem:[#allocation2 + $0x68] sm:$0xff] %vm239, %v1161
        %1186 = vst.msk [vmem:[#allocation2 + $0x70] sm:$0xff] %vm239, %v1162
        %1187 = vst.msk [vmem:[#allocation2 + $0x78] sm:$0xff] %vm239, %v1163
        %1188 = vst.msk [vmem:[#allocation2 + $0x80] sm:$0xff] %vm239, %v1164
        %1189 = vst.msk [vmem:[#allocation2 + $0x88] sm:$0xff] %vm239, %v1165
        %1190 = vst.msk [vmem:[#allocation2 + $0x90] sm:$0xff] %vm239, %v1166
        %1191 = vst.msk [vmem:[#allocation2 + $0x98] sm:$0xff] %vm239, %v1167
        %1192 = vst.msk [vmem:[#allocation2 + $0xa0] sm:$0xff] %vm239, %v1168
        %1193 = vst.msk [vmem:[#allocation2 + $0xa8] sm:$0xff] %vm239, %v1169
        %1194 = vst.msk [vmem:[#allocation2 + $0xb0] sm:$0xff] %vm239, %v1170
        %1195 = vst.msk [vmem:[#allocation2 + $0xb8] sm:$0xff] %vm239, %v1171
      $region36: #{fpn_psp_head_forward.8} parent=31 // pred_fallthru
        _
      %p1196 = scmp.eq.s32.totalorder %s21, 1
      // Predicated region
      $region37: #{fpn_psp_head_forward.8} parent=31 // pred_check
        %p1197 = pneg %p1196
      $region38: #{fpn_psp_head_forward.8} parent=31 // pred_check_branch
        %1199 = sbr.rel (%p1197) target = $region40
      $region39: #{fpn_psp_head_forward.8} parent=31 // pred_region
        %v1200 = vld [vmem:[%s219 + $0xc] sm:$0xf]
        %v1201 = vld [vmem:[%s219 + $0x10] sm:$0xf]
        %v1202 = vld [vmem:[%s219 + $0x14] sm:$0xf]
        %v1203 = vld [vmem:[%s219 + $0x18] sm:$0xf]
        %v1204 = vld [vmem:[%s219 + $0x1c] sm:$0xf]
        %v1205 = vld [vmem:[%s219 + $0x20] sm:$0xf]
        %v1206 = vld [vmem:[%s219 + $0x24] sm:$0xf]
        %v1207 = vld [vmem:[%s219 + $0x28] sm:$0xf]
        %v1208 = vld [vmem:[%s219 + $0x2c] sm:$0xf]
        %v1209 = vld [vmem:[%s219 + $0x30] sm:$0xf]
        %v1210 = vld [vmem:[%s219 + $0x34] sm:$0xf]
        %v1211 = vld [vmem:[%s219 + $0x38] sm:$0xf]
        %v1212 = vld [vmem:[%s219 + $0x3c] sm:$0xf]
        %v1213 = vld [vmem:[%s219 + $0x40] sm:$0xf]
        %v1214 = vld [vmem:[%s219 + $0x44] sm:$0xf]
        %v1215 = vld [vmem:[%s219 + $0x48] sm:$0xf]
        %v1216 = vld [vmem:[%s219 + $0x4c] sm:$0xf]
        %v1217 = vld [vmem:[%s219 + $0x50] sm:$0xf]
        %v1218 = vld [vmem:[%s219 + $0x54] sm:$0xf]
        %v1219 = vld [vmem:[%s219 + $0x58] sm:$0xf]
        %v1220 = vld [vmem:[%s219 + $0x5c] sm:$0xf]
        %v1221 = vld [vmem:[%s219 + $0x60] sm:$0xf]
        %v1222 = vld [vmem:[%s219 + $0x64] sm:$0xf]
        %v1223 = vld [vmem:[%s219 + $0x68] sm:$0xf]
        %v1224 = vld [vmem:[%s224] sm:$0xf]
        %v1225 = vld [vmem:[%s224 + $0x4] sm:$0xf]
        %v1226 = vld [vmem:[%s224 + $0x8] sm:$0xf]
        %v1227 = vld [vmem:[%s224 + $0xc] sm:$0xf]
        %v1228 = vld [vmem:[%s224 + $0x10] sm:$0xf]
        %v1229 = vld [vmem:[%s224 + $0x14] sm:$0xf]
        %v1230 = vld [vmem:[%s224 + $0x18] sm:$0xf]
        %v1231 = vld [vmem:[%s224 + $0x1c] sm:$0xf]
        %v1232 = vld [vmem:[%s224 + $0x20] sm:$0xf]
        %v1233 = vld [vmem:[%s224 + $0x24] sm:$0xf]
        %v1234 = vld [vmem:[%s224 + $0x28] sm:$0xf]
        %v1235 = vld [vmem:[%s224 + $0x2c] sm:$0xf]
        %v1236 = vld [vmem:[%s224 + $0x30] sm:$0xf]
        %v1237 = vld [vmem:[%s224 + $0x34] sm:$0xf]
        %v1238 = vld [vmem:[%s224 + $0x38] sm:$0xf]
        %v1239 = vld [vmem:[%s224 + $0x3c] sm:$0xf]
        %v1240 = vld [vmem:[%s219 + $0x6c] sm:$0x1]
        %s1241 = scalar_lea.vmem %s224, 64
        %v1242 = vld [vmem:[%s1241] sm:$0xf]
        %v1243 = vld [vmem:[%s1241 + $0x4] sm:$0xf]
        %v1244 = vld [vmem:[%s1241 + $0x8] sm:$0xf]
        %v1245 = vld [vmem:[%s1241 + $0xc] sm:$0xf]
        %v1246 = vld [vmem:[%s1241 + $0x10] sm:$0xf]
        %v1247 = vld [vmem:[%s1241 + $0x14] sm:$0xf]
        %v1248 = vld [vmem:[%s1241 + $0x18] sm:$0xf]
        %v1249 = vld [vmem:[%s1241 + $0x1c] sm:$0xf]
        %v1250 = vld [vmem:[%s1241 + $0x20] sm:$0xf]
        %v1251 = vld [vmem:[%s1241 + $0x24] sm:$0xf]
        %v1252 = vld [vmem:[%s1241 + $0x28] sm:$0xf]
        %v1253 = vld [vmem:[%s1241 + $0x2c] sm:$0xf]
        %v1254 = vld [vmem:[%s1241 + $0x30] sm:$0xf]
        %v1255 = vld [vmem:[%s1241 + $0x34] sm:$0xf]
        %v1256 = vld [vmem:[%s1241 + $0x38] sm:$0xf]
        %v1257 = vld [vmem:[%s1241 + $0x3c] sm:$0xf]
        %v1283 = vunpack.c.l.b16 %v1200
        %v1284 = vunpack.c.l.b16 %v1201
        %v1285 = vunpack.c.l.b16 %v1202
        %v1286 = vunpack.c.l.b16 %v1203
        %v1287 = vunpack.c.l.b16 %v1204
        %v1288 = vunpack.c.l.b16 %v1205
        %v1289 = vunpack.c.l.b16 %v1206
        %v1290 = vunpack.c.l.b16 %v1207
        %v1291 = vunpack.c.l.b16 %v1208
        %v1292 = vunpack.c.l.b16 %v1209
        %v1293 = vunpack.c.l.b16 %v1210
        %v1294 = vunpack.c.l.b16 %v1211
        %v1295 = vunpack.c.l.b16 %v1212
        %v1296 = vunpack.c.l.b16 %v1213
        %v1297 = vunpack.c.l.b16 %v1214
        %v1298 = vunpack.c.l.b16 %v1215
        %v1299 = vunpack.c.l.b16 %v1216
        %v1300 = vunpack.c.l.b16 %v1217
        %v1301 = vunpack.c.l.b16 %v1218
        %v1302 = vunpack.c.l.b16 %v1219
        %v1303 = vunpack.c.l.b16 %v1220
        %v1304 = vunpack.c.l.b16 %v1221
        %v1305 = vunpack.c.l.b16 %v1222
        %v1306 = vunpack.c.l.b16 %v1223
        %v1307 = vunpack.c.l.b16 %v1240
        %v1308 = vpack.c.b16 %v1284, %v1283
        %v1309 = vpack.c.b16 %v1286, %v1285
        %v1310 = vpack.c.b16 %v1288, %v1287
        %v1311 = vpack.c.b16 %v1290, %v1289
        %v1312 = vpack.c.b16 %v1292, %v1291
        %v1313 = vpack.c.b16 %v1294, %v1293
        %v1314 = vpack.c.b16 %v1296, %v1295
        %v1315 = vpack.c.b16 %v1298, %v1297
        %v1316 = vpack.c.b16 %v1300, %v1299
        %v1317 = vpack.c.b16 %v1302, %v1301
        %v1318 = vpack.c.b16 %v1304, %v1303
        %v1319 = vpack.c.b16 %v1306, %v1305
        %v1320 = vpack.c.b16 %v1307, %v1307
        %vm1321 = vsmask.f32 7424
        %v1323 = vshrl.u32 %v1308, 16
        %v1325 = vshll.u32 %v1308, 16
        %v1327 = vrot.slane %v1325, 1
        %v1328 = vor.u32 %v1323, %v1327
        %v1330 = vshll.u32 %v1309, 16
        %v1332 = vrot.slane %v1330, 1
        %v1333 = vsel %vm1321, %v1328, %v1332
        %v1334 = vshrl.u32 %v1309, 16
        %v1336 = vor.u32 %v1334, %v1332
        %v1338 = vshll.u32 %v1310, 16
        %v1340 = vrot.slane %v1338, 1
        %v1341 = vsel %vm1321, %v1336, %v1340
        %v1342 = vshrl.u32 %v1310, 16
        %v1344 = vor.u32 %v1342, %v1340
        %v1346 = vshll.u32 %v1311, 16
        %v1348 = vrot.slane %v1346, 1
        %v1349 = vsel %vm1321, %v1344, %v1348
        %v1350 = vshrl.u32 %v1311, 16
        %v1352 = vor.u32 %v1350, %v1348
        %v1354 = vshll.u32 %v1312, 16
        %v1356 = vrot.slane %v1354, 1
        %v1357 = vsel %vm1321, %v1352, %v1356
        %v1358 = vshrl.u32 %v1312, 16
        %v1360 = vor.u32 %v1358, %v1356
        %v1362 = vshll.u32 %v1313, 16
        %v1364 = vrot.slane %v1362, 1
        %v1365 = vsel %vm1321, %v1360, %v1364
        %v1366 = vshrl.u32 %v1313, 16
        %v1368 = vor.u32 %v1366, %v1364
        %v1370 = vshll.u32 %v1314, 16
        %v1372 = vrot.slane %v1370, 1
        %v1373 = vsel %vm1321, %v1368, %v1372
        %v1374 = vshrl.u32 %v1314, 16
        %v1376 = vor.u32 %v1374, %v1372
        %v1378 = vshll.u32 %v1315, 16
        %v1380 = vrot.slane %v1378, 1
        %v1381 = vsel %vm1321, %v1376, %v1380
        %v1382 = vshrl.u32 %v1315, 16
        %v1384 = vor.u32 %v1382, %v1380
        %v1386 = vshll.u32 %v1316, 16
        %v1388 = vrot.slane %v1386, 1
        %v1389 = vsel %vm1321, %v1384, %v1388
        %v1390 = vshrl.u32 %v1316, 16
        %v1392 = vor.u32 %v1390, %v1388
        %v1394 = vshll.u32 %v1317, 16
        %v1396 = vrot.slane %v1394, 1
        %v1397 = vsel %vm1321, %v1392, %v1396
        %v1398 = vshrl.u32 %v1317, 16
        %v1400 = vor.u32 %v1398, %v1396
        %v1402 = vshll.u32 %v1318, 16
        %v1404 = vrot.slane %v1402, 1
        %v1405 = vsel %vm1321, %v1400, %v1404
        %v1406 = vshrl.u32 %v1318, 16
        %v1408 = vor.u32 %v1406, %v1404
        %v1410 = vshll.u32 %v1319, 16
        %v1412 = vrot.slane %v1410, 1
        %v1413 = vsel %vm1321, %v1408, %v1412
        %v1414 = vshrl.u32 %v1319, 16
        %v1416 = vor.u32 %v1414, %v1412
        %v1418 = vshll.u32 %v1320, 16
        %v1420 = vrot.slane %v1418, 1
        %v1421 = vsel %vm1321, %v1416, %v1420
        %v1450 = vunpack.c.l.b16 %v1242
        %v1451 = vunpack.c.l.b16 %v1243
        %v1452 = vunpack.c.l.b16 %v1244
        %v1453 = vunpack.c.l.b16 %v1245
        %v1454 = vunpack.c.l.b16 %v1246
        %v1455 = vunpack.c.l.b16 %v1247
        %v1456 = vunpack.c.l.b16 %v1248
        %v1457 = vunpack.c.l.b16 %v1249
        %v1458 = vunpack.c.l.b16 %v1250
        %v1459 = vunpack.c.l.b16 %v1251
        %v1460 = vunpack.c.l.b16 %v1252
        %v1461 = vunpack.c.l.b16 %v1253
        %v1462 = vunpack.c.l.b16 %v1254
        %v1463 = vunpack.c.l.b16 %v1255
        %v1464 = vunpack.c.l.b16 %v1256
        %v1465 = vunpack.c.l.b16 %v1257
        %v1466 = vpack.c.b16 %v1451, %v1450
        %v1467 = vpack.c.b16 %v1453, %v1452
        %v1468 = vpack.c.b16 %v1455, %v1454
        %v1469 = vpack.c.b16 %v1457, %v1456
        %v1470 = vpack.c.b16 %v1459, %v1458
        %v1471 = vpack.c.b16 %v1461, %v1460
        %v1472 = vpack.c.b16 %v1463, %v1462
        %v1473 = vpack.c.b16 %v1465, %v1464
        %1482 = vmatprep.subr.bf16.mxu0 0
        %1483 = vmatpush1.bf16.msra.mxu0 %v1466
        %1484 = vmatprep.subr.bf16.mxu0 0
        %1485 = vmatpush1.bf16.msra.mxu0 %v1467
        %1486 = vmatprep.subr.bf16.mxu0 0
        %1487 = vmatpush1.bf16.msra.mxu0 %v1468
        %1488 = vmatprep.subr.bf16.mxu0 0
        %1489 = vmatpush1.bf16.msra.mxu0 %v1469
        %1490 = vmatprep.subr.bf16.mxu0 0
        %1491 = vmatpush1.bf16.msra.mxu0 %v1470
        %1492 = vmatprep.subr.bf16.mxu0 0
        %1493 = vmatpush1.bf16.msra.mxu0 %v1471
        %1494 = vmatprep.subr.bf16.mxu0 0
        %1495 = vmatpush1.bf16.msra.mxu0 %v1472
        %1496 = vmatprep.subr.bf16.mxu0 0
        %1497 = vmatpush1.bf16.msra.mxu0 %v1473
        %1498 = vmatprep.subr.bf16.mxu0 0
        %1499 = vmatpush1.bf16.msra.mxu0 0
        %1500 = vmatprep.subr.bf16.mxu0 0
        %1501 = vmatpush1.bf16.msra.mxu0 0
        %1502 = vmatprep.subr.bf16.mxu0 0
        %1503 = vmatpush1.bf16.msra.mxu0 0
        %1504 = vmatprep.subr.bf16.mxu0 0
        %1505 = vmatpush1.bf16.msra.mxu0 0
        %1506 = vmatprep.subr.bf16.mxu0 0
        %1507 = vmatpush1.bf16.msra.mxu0 0
        %1508 = vmatprep.subr.bf16.mxu0 0
        %1509 = vmatpush1.bf16.msra.mxu0 0
        %1510 = vmatprep.subr.bf16.mxu0 0
        %1511 = vmatpush1.bf16.msra.mxu0 0
        %1512 = vmatprep.subr.bf16.mxu0 0
        %1513 = vmatpush1.bf16.msra.mxu0 0
        %1514 = vmatprep.mubr.bf16.mxu0 0
        %1515 = vmatmul.mubr.bf16.gmra.mrb[0].mxu0 %v1333
        %v1516 = vpop.f32.mrb[0].mxu0
        %v1517 = vadd.f32 0.0, %v1516
        %v1518 = vpop.f32.mrb[0].mxu0
        %v1519 = vpop.f32.mrb[0].mxu0
        %v1520 = vadd.f32 0.0, %v1519
        %v1521 = vpop.f32.mrb[0].mxu0
        %1522 = vmatprep.mubr.bf16.mxu0 0
        %1523 = vmatmul.mubr.bf16.gmra.mrb[0].mxu0 %v1341
        %v1524 = vpop.f32.mrb[0].mxu0
        %v1525 = vadd.f32 0.0, %v1524
        %v1526 = vpop.f32.mrb[0].mxu0
        %v1527 = vpop.f32.mrb[0].mxu0
        %v1528 = vadd.f32 0.0, %v1527
        %v1529 = vpop.f32.mrb[0].mxu0
        %1530 = vmatprep.mubr.bf16.mxu0 0
        %1531 = vmatmul.mubr.bf16.gmra.mrb[0].mxu0 %v1349
        %v1532 = vpop.f32.mrb[0].mxu0
        %v1533 = vadd.f32 0.0, %v1532
        %v1534 = vpop.f32.mrb[0].mxu0
        %v1535 = vpop.f32.mrb[0].mxu0
        %v1536 = vadd.f32 0.0, %v1535
        %v1537 = vpop.f32.mrb[0].mxu0
        %1538 = vmatprep.mubr.bf16.mxu0 0
        %1539 = vmatmul.mubr.bf16.gmra.mrb[0].mxu0 %v1357
        %v1540 = vpop.f32.mrb[0].mxu0
        %v1541 = vadd.f32 0.0, %v1540
        %v1542 = vpop.f32.mrb[0].mxu0
        %v1543 = vpop.f32.mrb[0].mxu0
        %v1544 = vadd.f32 0.0, %v1543
        %v1545 = vpop.f32.mrb[0].mxu0
        %1546 = vmatprep.mubr.bf16.mxu0 0
        %1547 = vmatmul.mubr.bf16.gmra.mrb[0].mxu0 %v1365
        %v1548 = vpop.f32.mrb[0].mxu0
        %v1549 = vadd.f32 0.0, %v1548
        %v1550 = vpop.f32.mrb[0].mxu0
        %v1551 = vpop.f32.mrb[0].mxu0
        %v1552 = vadd.f32 0.0, %v1551
        %v1553 = vpop.f32.mrb[0].mxu0
        %1554 = vmatprep.mubr.bf16.mxu0 0
        %1555 = vmatmul.mubr.bf16.gmra.mrb[0].mxu0 %v1373
        %v1556 = vpop.f32.mrb[0].mxu0
        %v1557 = vadd.f32 0.0, %v1556
        %v1558 = vpop.f32.mrb[0].mxu0
        %v1559 = vpop.f32.mrb[0].mxu0
        %v1560 = vadd.f32 0.0, %v1559
        %v1561 = vpop.f32.mrb[0].mxu0
        %1562 = vmatprep.mubr.bf16.mxu0 0
        %1563 = vmatmul.mubr.bf16.gmra.mrb[0].mxu0 %v1381
        %v1564 = vpop.f32.mrb[0].mxu0
        %v1565 = vadd.f32 0.0, %v1564
        %v1566 = vpop.f32.mrb[0].mxu0
        %v1567 = vpop.f32.mrb[0].mxu0
        %v1568 = vadd.f32 0.0, %v1567
        %v1569 = vpop.f32.mrb[0].mxu0
        %1570 = vmatprep.mubr.bf16.mxu0 0
        %1571 = vmatmul.mubr.bf16.gmra.mrb[0].mxu0 %v1389
        %v1572 = vpop.f32.mrb[0].mxu0
        %v1573 = vadd.f32 0.0, %v1572
        %v1574 = vpop.f32.mrb[0].mxu0
        %v1575 = vpop.f32.mrb[0].mxu0
        %v1576 = vadd.f32 0.0, %v1575
        %v1577 = vpop.f32.mrb[0].mxu0
        %1578 = vmatprep.mubr.bf16.mxu0 0
        %1579 = vmatmul.mubr.bf16.gmra.mrb[0].mxu0 %v1397
        %v1580 = vpop.f32.mrb[0].mxu0
        %v1581 = vadd.f32 0.0, %v1580
        %v1582 = vpop.f32.mrb[0].mxu0
        %v1583 = vpop.f32.mrb[0].mxu0
        %v1584 = vadd.f32 0.0, %v1583
        %v1585 = vpop.f32.mrb[0].mxu0
        %1586 = vmatprep.mubr.bf16.mxu0 0
        %1587 = vmatmul.mubr.bf16.gmra.mrb[0].mxu0 %v1405
        %v1588 = vpop.f32.mrb[0].mxu0
        %v1589 = vadd.f32 0.0, %v1588
        %v1590 = vpop.f32.mrb[0].mxu0
        %v1591 = vpop.f32.mrb[0].mxu0
        %v1592 = vadd.f32 0.0, %v1591
        %v1593 = vpop.f32.mrb[0].mxu0
        %1594 = vmatprep.mubr.bf16.mxu0 0
        %1595 = vmatmul.mubr.bf16.gmra.mrb[0].mxu0 %v1413
        %v1596 = vpop.f32.mrb[0].mxu0
        %v1597 = vadd.f32 0.0, %v1596
        %v1598 = vpop.f32.mrb[0].mxu0
        %v1599 = vpop.f32.mrb[0].mxu0
        %v1600 = vadd.f32 0.0, %v1599
        %v1601 = vpop.f32.mrb[0].mxu0
        %1602 = vmatprep.mubr.bf16.mxu0 0
        %1603 = vmatmul.mubr.bf16.gmra.mrb[0].mxu0 %v1421
        %v1604 = vpop.f32.mrb[0].mxu0
        %v1605 = vadd.f32 0.0, %v1604
        %v1606 = vpop.f32.mrb[0].mxu0
        %v1607 = vpop.f32.mrb[0].mxu0
        %v1608 = vadd.f32 0.0, %v1607
        %v1609 = vpop.f32.mrb[0].mxu0
        %1610 = vdwg.mxu0
        %v1639 = vunpack.c.l.b16 %v1224
        %v1640 = vunpack.c.l.b16 %v1225
        %v1641 = vunpack.c.l.b16 %v1226
        %v1642 = vunpack.c.l.b16 %v1227
        %v1643 = vunpack.c.l.b16 %v1228
        %v1644 = vunpack.c.l.b16 %v1229
        %v1645 = vunpack.c.l.b16 %v1230
        %v1646 = vunpack.c.l.b16 %v1231
        %v1647 = vunpack.c.l.b16 %v1232
        %v1648 = vunpack.c.l.b16 %v1233
        %v1649 = vunpack.c.l.b16 %v1234
        %v1650 = vunpack.c.l.b16 %v1235
        %v1651 = vunpack.c.l.b16 %v1236
        %v1652 = vunpack.c.l.b16 %v1237
        %v1653 = vunpack.c.l.b16 %v1238
        %v1654 = vunpack.c.l.b16 %v1239
        %v1655 = vpack.c.b16 %v1640, %v1639
        %v1656 = vpack.c.b16 %v1642, %v1641
        %v1657 = vpack.c.b16 %v1644, %v1643
        %v1658 = vpack.c.b16 %v1646, %v1645
        %v1659 = vpack.c.b16 %v1648, %v1647
        %v1660 = vpack.c.b16 %v1650, %v1649
        %v1661 = vpack.c.b16 %v1652, %v1651
        %v1662 = vpack.c.b16 %v1654, %v1653
        %1671 = vmatprep.subr.bf16.mxu0 0
        %1672 = vmatpush1.bf16.msra.mxu0 %v1655
        %1673 = vmatprep.subr.bf16.mxu0 0
        %1674 = vmatpush1.bf16.msra.mxu0 %v1656
        %1675 = vmatprep.subr.bf16.mxu0 0
        %1676 = vmatpush1.bf16.msra.mxu0 %v1657
        %1677 = vmatprep.subr.bf16.mxu0 0
        %1678 = vmatpush1.bf16.msra.mxu0 %v1658
        %1679 = vmatprep.subr.bf16.mxu0 0
        %1680 = vmatpush1.bf16.msra.mxu0 %v1659
        %1681 = vmatprep.subr.bf16.mxu0 0
        %1682 = vmatpush1.bf16.msra.mxu0 %v1660
        %1683 = vmatprep.subr.bf16.mxu0 0
        %1684 = vmatpush1.bf16.msra.mxu0 %v1661
        %1685 = vmatprep.subr.bf16.mxu0 0
        %1686 = vmatpush1.bf16.msra.mxu0 %v1662
        %1687 = vmatprep.subr.bf16.mxu0 0
        %1688 = vmatpush1.bf16.msra.mxu0 0
        %1689 = vmatprep.subr.bf16.mxu0 0
        %1690 = vmatpush1.bf16.msra.mxu0 0
        %1691 = vmatprep.subr.bf16.mxu0 0
        %1692 = vmatpush1.bf16.msra.mxu0 0
        %1693 = vmatprep.subr.bf16.mxu0 0
        %1694 = vmatpush1.bf16.msra.mxu0 0
        %1695 = vmatprep.subr.bf16.mxu0 0
        %1696 = vmatpush1.bf16.msra.mxu0 0
        %1697 = vmatprep.subr.bf16.mxu0 0
        %1698 = vmatpush1.bf16.msra.mxu0 0
        %1699 = vmatprep.subr.bf16.mxu0 0
        %1700 = vmatpush1.bf16.msra.mxu0 0
        %1701 = vmatprep.subr.bf16.mxu0 0
        %1702 = vmatpush1.bf16.msra.mxu0 0
        %1703 = vmatprep.mubr.bf16.mxu0 0
        %1704 = vmatmul.mubr.bf16.gmra.mrb[0].mxu0 %v1308
        %v1705 = vpop.f32.mrb[0].mxu0
        %v1706 = vadd.f32 %v1517, %v1705
        %v1707 = vpop.f32.mrb[0].mxu0
        %v1708 = vpop.f32.mrb[0].mxu0
        %v1709 = vadd.f32 %v1520, %v1708
        %v1710 = vpop.f32.mrb[0].mxu0
        %1711 = vmatprep.mubr.bf16.mxu0 0
        %1712 = vmatmul.mubr.bf16.gmra.mrb[0].mxu0 %v1309
        %v1713 = vpop.f32.mrb[0].mxu0
        %v1714 = vadd.f32 %v1525, %v1713
        %v1715 = vpop.f32.mrb[0].mxu0
        %v1716 = vpop.f32.mrb[0].mxu0
        %v1717 = vadd.f32 %v1528, %v1716
        %v1718 = vpop.f32.mrb[0].mxu0
        %1719 = vmatprep.mubr.bf16.mxu0 0
        %1720 = vmatmul.mubr.bf16.gmra.mrb[0].mxu0 %v1310
        %v1721 = vpop.f32.mrb[0].mxu0
        %v1722 = vadd.f32 %v1533, %v1721
        %v1723 = vpop.f32.mrb[0].mxu0
        %v1724 = vpop.f32.mrb[0].mxu0
        %v1725 = vadd.f32 %v1536, %v1724
        %v1726 = vpop.f32.mrb[0].mxu0
        %1727 = vmatprep.mubr.bf16.mxu0 0
        %1728 = vmatmul.mubr.bf16.gmra.mrb[0].mxu0 %v1311
        %v1729 = vpop.f32.mrb[0].mxu0
        %v1730 = vadd.f32 %v1541, %v1729
        %v1731 = vpop.f32.mrb[0].mxu0
        %v1732 = vpop.f32.mrb[0].mxu0
        %v1733 = vadd.f32 %v1544, %v1732
        %v1734 = vpop.f32.mrb[0].mxu0
        %1735 = vmatprep.mubr.bf16.mxu0 0
        %1736 = vmatmul.mubr.bf16.gmra.mrb[0].mxu0 %v1312
        %v1737 = vpop.f32.mrb[0].mxu0
        %v1738 = vadd.f32 %v1549, %v1737
        %v1739 = vpop.f32.mrb[0].mxu0
        %v1740 = vpop.f32.mrb[0].mxu0
        %v1741 = vadd.f32 %v1552, %v1740
        %v1742 = vpop.f32.mrb[0].mxu0
        %1743 = vmatprep.mubr.bf16.mxu0 0
        %1744 = vmatmul.mubr.bf16.gmra.mrb[0].mxu0 %v1313
        %v1745 = vpop.f32.mrb[0].mxu0
        %v1746 = vadd.f32 %v1557, %v1745
        %v1747 = vpop.f32.mrb[0].mxu0
        %v1748 = vpop.f32.mrb[0].mxu0
        %v1749 = vadd.f32 %v1560, %v1748
        %v1750 = vpop.f32.mrb[0].mxu0
        %1751 = vmatprep.mubr.bf16.mxu0 0
        %1752 = vmatmul.mubr.bf16.gmra.mrb[0].mxu0 %v1314
        %v1753 = vpop.f32.mrb[0].mxu0
        %v1754 = vadd.f32 %v1565, %v1753
        %v1755 = vpop.f32.mrb[0].mxu0
        %v1756 = vpop.f32.mrb[0].mxu0
        %v1757 = vadd.f32 %v1568, %v1756
        %v1758 = vpop.f32.mrb[0].mxu0
        %1759 = vmatprep.mubr.bf16.mxu0 0
        %1760 = vmatmul.mubr.bf16.gmra.mrb[0].mxu0 %v1315
        %v1761 = vpop.f32.mrb[0].mxu0
        %v1762 = vadd.f32 %v1573, %v1761
        %v1763 = vpop.f32.mrb[0].mxu0
        %v1764 = vpop.f32.mrb[0].mxu0
        %v1765 = vadd.f32 %v1576, %v1764
        %v1766 = vpop.f32.mrb[0].mxu0
        %1767 = vmatprep.mubr.bf16.mxu0 0
        %1768 = vmatmul.mubr.bf16.gmra.mrb[0].mxu0 %v1316
        %v1769 = vpop.f32.mrb[0].mxu0
        %v1770 = vadd.f32 %v1581, %v1769
        %v1771 = vpop.f32.mrb[0].mxu0
        %v1772 = vpop.f32.mrb[0].mxu0
        %v1773 = vadd.f32 %v1584, %v1772
        %v1774 = vpop.f32.mrb[0].mxu0
        %1775 = vmatprep.mubr.bf16.mxu0 0
        %1776 = vmatmul.mubr.bf16.gmra.mrb[0].mxu0 %v1317
        %v1777 = vpop.f32.mrb[0].mxu0
        %v1778 = vadd.f32 %v1589, %v1777
        %v1779 = vpop.f32.mrb[0].mxu0
        %v1780 = vpop.f32.mrb[0].mxu0
        %v1781 = vadd.f32 %v1592, %v1780
        %v1782 = vpop.f32.mrb[0].mxu0
        %1783 = vmatprep.mubr.bf16.mxu0 0
        %1784 = vmatmul.mubr.bf16.gmra.mrb[0].mxu0 %v1318
        %v1785 = vpop.f32.mrb[0].mxu0
        %v1786 = vadd.f32 %v1597, %v1785
        %v1787 = vpop.f32.mrb[0].mxu0
        %v1788 = vpop.f32.mrb[0].mxu0
        %v1789 = vadd.f32 %v1600, %v1788
        %v1790 = vpop.f32.mrb[0].mxu0
        %1791 = vmatprep.mubr.bf16.mxu0 0
        %1792 = vmatmul.mubr.bf16.gmra.mrb[0].mxu0 %v1319
        %v1793 = vpop.f32.mrb[0].mxu0
        %v1794 = vadd.f32 %v1605, %v1793
        %v1795 = vpop.f32.mrb[0].mxu0
        %v1796 = vpop.f32.mrb[0].mxu0
        %v1797 = vadd.f32 %v1608, %v1796
        %v1798 = vpop.f32.mrb[0].mxu0
        %1799 = vdwg.mxu0
        %v1800 = vld [vmem:[%s219 + $0xc] sm:$0xe]
        %s1801 = scalar_lea.vmem %s224, 128
        %v1802 = vld [vmem:[%s1801] sm:$0xf]
        %v1803 = vld [vmem:[%s1801 + $0x4] sm:$0xf]
        %v1804 = vld [vmem:[%s1801 + $0x8] sm:$0xf]
        %v1805 = vld [vmem:[%s1801 + $0xc] sm:$0xf]
        %v1806 = vld [vmem:[%s1801 + $0x10] sm:$0xf]
        %v1807 = vld [vmem:[%s1801 + $0x14] sm:$0xf]
        %v1808 = vld [vmem:[%s1801 + $0x18] sm:$0xf]
        %v1809 = vld [vmem:[%s1801 + $0x1c] sm:$0xf]
        %v1810 = vld [vmem:[%s1801 + $0x20] sm:$0xf]
        %v1811 = vld [vmem:[%s1801 + $0x24] sm:$0xf]
        %v1812 = vld [vmem:[%s1801 + $0x28] sm:$0xf]
        %v1813 = vld [vmem:[%s1801 + $0x2c] sm:$0xf]
        %v1814 = vld [vmem:[%s1801 + $0x30] sm:$0xf]
        %v1815 = vld [vmem:[%s1801 + $0x34] sm:$0xf]
        %v1816 = vld [vmem:[%s1801 + $0x38] sm:$0xf]
        %v1817 = vld [vmem:[%s1801 + $0x3c] sm:$0xf]
        %v1819 = vunpack.c.l.b16 %v1800
        %v1820 = vpack.c.b16 %v1284, %v1819
        %vm1821 = vcmask 1046528
        %v1822 = vrot.slane %v1820, 1
        %v1823 = vrot.slane %v1309, 1
        %v1824 = vsel %vm1821, %v1822, %v1823
        %v1825 = vrot.slane %v1310, 1
        %v1826 = vsel %vm1821, %v1823, %v1825
        %v1827 = vrot.slane %v1311, 1
        %v1828 = vsel %vm1821, %v1825, %v1827
        %v1829 = vrot.slane %v1312, 1
        %v1830 = vsel %vm1821, %v1827, %v1829
        %v1831 = vrot.slane %v1313, 1
        %v1832 = vsel %vm1821, %v1829, %v1831
        %v1833 = vrot.slane %v1314, 1
        %v1834 = vsel %vm1821, %v1831, %v1833
        %v1835 = vrot.slane %v1315, 1
        %v1836 = vsel %vm1821, %v1833, %v1835
        %v1837 = vrot.slane %v1316, 1
        %v1838 = vsel %vm1821, %v1835, %v1837
        %v1839 = vrot.slane %v1317, 1
        %v1840 = vsel %vm1821, %v1837, %v1839
        %v1841 = vrot.slane %v1318, 1
        %v1842 = vsel %vm1821, %v1839, %v1841
        %v1843 = vrot.slane %v1319, 1
        %v1844 = vsel %vm1821, %v1841, %v1843
        %v1845 = vrot.slane %v1320, 1
        %v1846 = vsel %vm1821, %v1843, %v1845
        %v1875 = vunpack.c.l.b16 %v1802
        %v1876 = vunpack.c.l.b16 %v1803
        %v1877 = vunpack.c.l.b16 %v1804
        %v1878 = vunpack.c.l.b16 %v1805
        %v1879 = vunpack.c.l.b16 %v1806
        %v1880 = vunpack.c.l.b16 %v1807
        %v1881 = vunpack.c.l.b16 %v1808
        %v1882 = vunpack.c.l.b16 %v1809
        %v1883 = vunpack.c.l.b16 %v1810
        %v1884 = vunpack.c.l.b16 %v1811
        %v1885 = vunpack.c.l.b16 %v1812
        %v1886 = vunpack.c.l.b16 %v1813
        %v1887 = vunpack.c.l.b16 %v1814
        %v1888 = vunpack.c.l.b16 %v1815
        %v1889 = vunpack.c.l.b16 %v1816
        %v1890 = vunpack.c.l.b16 %v1817
        %v1891 = vpack.c.b16 %v1876, %v1875
        %v1892 = vpack.c.b16 %v1878, %v1877
        %v1893 = vpack.c.b16 %v1880, %v1879
        %v1894 = vpack.c.b16 %v1882, %v1881
        %v1895 = vpack.c.b16 %v1884, %v1883
        %v1896 = vpack.c.b16 %v1886, %v1885
        %v1897 = vpack.c.b16 %v1888, %v1887
        %v1898 = vpack.c.b16 %v1890, %v1889
        %1907 = vmatprep.subr.bf16.mxu0 0
        %1908 = vmatpush1.bf16.msra.mxu0 %v1891
        %1909 = vmatprep.subr.bf16.mxu0 0
        %1910 = vmatpush1.bf16.msra.mxu0 %v1892
        %1911 = vmatprep.subr.bf16.mxu0 0
        %1912 = vmatpush1.bf16.msra.mxu0 %v1893
        %1913 = vmatprep.subr.bf16.mxu0 0
        %1914 = vmatpush1.bf16.msra.mxu0 %v1894
        %1915 = vmatprep.subr.bf16.mxu0 0
        %1916 = vmatpush1.bf16.msra.mxu0 %v1895
        %1917 = vmatprep.subr.bf16.mxu0 0
        %1918 = vmatpush1.bf16.msra.mxu0 %v1896
        %1919 = vmatprep.subr.bf16.mxu0 0
        %1920 = vmatpush1.bf16.msra.mxu0 %v1897
        %1921 = vmatprep.subr.bf16.mxu0 0
        %1922 = vmatpush1.bf16.msra.mxu0 %v1898
        %1923 = vmatprep.subr.bf16.mxu0 0
        %1924 = vmatpush1.bf16.msra.mxu0 0
        %1925 = vmatprep.subr.bf16.mxu0 0
        %1926 = vmatpush1.bf16.msra.mxu0 0
        %1927 = vmatprep.subr.bf16.mxu0 0
        %1928 = vmatpush1.bf16.msra.mxu0 0
        %1929 = vmatprep.subr.bf16.mxu0 0
        %1930 = vmatpush1.bf16.msra.mxu0 0
        %1931 = vmatprep.subr.bf16.mxu0 0
        %1932 = vmatpush1.bf16.msra.mxu0 0
        %1933 = vmatprep.subr.bf16.mxu0 0
        %1934 = vmatpush1.bf16.msra.mxu0 0
        %1935 = vmatprep.subr.bf16.mxu0 0
        %1936 = vmatpush1.bf16.msra.mxu0 0
        %1937 = vmatprep.subr.bf16.mxu0 0
        %1938 = vmatpush1.bf16.msra.mxu0 0
        %1939 = vmatprep.mubr.bf16.mxu0 0
        %1940 = vmatmul.mubr.bf16.gmra.mrb[0].mxu0 %v1824
        %v1941 = vpop.f32.mrb[0].mxu0
        %v1942 = vadd.f32 0.0, %v1941
        %v1943 = vpop.f32.mrb[0].mxu0
        %v1944 = vpop.f32.mrb[0].mxu0
        %v1945 = vadd.f32 0.0, %v1944
        %v1946 = vpop.f32.mrb[0].mxu0
        %1947 = vmatprep.mubr.bf16.mxu0 0
        %1948 = vmatmul.mubr.bf16.gmra.mrb[0].mxu0 %v1826
        %v1949 = vpop.f32.mrb[0].mxu0
        %v1950 = vadd.f32 0.0, %v1949
        %v1951 = vpop.f32.mrb[0].mxu0
        %v1952 = vpop.f32.mrb[0].mxu0
        %v1953 = vadd.f32 0.0, %v1952
        %v1954 = vpop.f32.mrb[0].mxu0
        %1955 = vmatprep.mubr.bf16.mxu0 0
        %1956 = vmatmul.mubr.bf16.gmra.mrb[0].mxu0 %v1828
        %v1957 = vpop.f32.mrb[0].mxu0
        %v1958 = vadd.f32 0.0, %v1957
        %v1959 = vpop.f32.mrb[0].mxu0
        %v1960 = vpop.f32.mrb[0].mxu0
        %v1961 = vadd.f32 0.0, %v1960
        %v1962 = vpop.f32.mrb[0].mxu0
        %1963 = vmatprep.mubr.bf16.mxu0 0
        %1964 = vmatmul.mubr.bf16.gmra.mrb[0].mxu0 %v1830
        %v1965 = vpop.f32.mrb[0].mxu0
        %v1966 = vadd.f32 0.0, %v1965
        %v1967 = vpop.f32.mrb[0].mxu0
        %v1968 = vpop.f32.mrb[0].mxu0
        %v1969 = vadd.f32 0.0, %v1968
        %v1970 = vpop.f32.mrb[0].mxu0
        %1971 = vmatprep.mubr.bf16.mxu0 0
        %1972 = vmatmul.mubr.bf16.gmra.mrb[0].mxu0 %v1832
        %v1973 = vpop.f32.mrb[0].mxu0
        %v1974 = vadd.f32 0.0, %v1973
        %v1975 = vpop.f32.mrb[0].mxu0
        %v1976 = vpop.f32.mrb[0].mxu0
        %v1977 = vadd.f32 0.0, %v1976
        %v1978 = vpop.f32.mrb[0].mxu0
        %1979 = vmatprep.mubr.bf16.mxu0 0
        %1980 = vmatmul.mubr.bf16.gmra.mrb[0].mxu0 %v1834
        %v1981 = vpop.f32.mrb[0].mxu0
        %v1982 = vadd.f32 0.0, %v1981
        %v1983 = vpop.f32.mrb[0].mxu0
        %v1984 = vpop.f32.mrb[0].mxu0
        %v1985 = vadd.f32 0.0, %v1984
        %v1986 = vpop.f32.mrb[0].mxu0
        %1987 = vmatprep.mubr.bf16.mxu0 0
        %1988 = vmatmul.mubr.bf16.gmra.mrb[0].mxu0 %v1836
        %v1989 = vpop.f32.mrb[0].mxu0
        %v1990 = vadd.f32 0.0, %v1989
        %v1991 = vpop.f32.mrb[0].mxu0
        %v1992 = vpop.f32.mrb[0].mxu0
        %v1993 = vadd.f32 0.0, %v1992
        %v1994 = vpop.f32.mrb[0].mxu0
        %1995 = vmatprep.mubr.bf16.mxu0 0
        %1996 = vmatmul.mubr.bf16.gmra.mrb[0].mxu0 %v1838
        %v1997 = vpop.f32.mrb[0].mxu0
        %v1998 = vadd.f32 0.0, %v1997
        %v1999 = vpop.f32.mrb[0].mxu0
        %v2000 = vpop.f32.mrb[0].mxu0
        %v2001 = vadd.f32 0.0, %v2000
        %v2002 = vpop.f32.mrb[0].mxu0
        %2003 = vmatprep.mubr.bf16.mxu0 0
        %2004 = vmatmul.mubr.bf16.gmra.mrb[0].mxu0 %v1840
        %v2005 = vpop.f32.mrb[0].mxu0
        %v2006 = vadd.f32 0.0, %v2005
        %v2007 = vpop.f32.mrb[0].mxu0
        %v2008 = vpop.f32.mrb[0].mxu0
        %v2009 = vadd.f32 0.0, %v2008
        %v2010 = vpop.f32.mrb[0].mxu0
        %2011 = vmatprep.mubr.bf16.mxu0 0
        %2012 = vmatmul.mubr.bf16.gmra.mrb[0].mxu0 %v1842
        %v2013 = vpop.f32.mrb[0].mxu0
        %v2014 = vadd.f32 0.0, %v2013
        %v2015 = vpop.f32.mrb[0].mxu0
        %v2016 = vpop.f32.mrb[0].mxu0
        %v2017 = vadd.f32 0.0, %v2016
        %v2018 = vpop.f32.mrb[0].mxu0
        %2019 = vmatprep.mubr.bf16.mxu0 0
        %2020 = vmatmul.mubr.bf16.gmra.mrb[0].mxu0 %v1844
        %v2021 = vpop.f32.mrb[0].mxu0
        %v2022 = vadd.f32 0.0, %v2021
        %v2023 = vpop.f32.mrb[0].mxu0
        %v2024 = vpop.f32.mrb[0].mxu0
        %v2025 = vadd.f32 0.0, %v2024
        %v2026 = vpop.f32.mrb[0].mxu0
        %2027 = vmatprep.mubr.bf16.mxu0 0
        %2028 = vmatmul.mubr.bf16.gmra.mrb[0].mxu0 %v1846
        %v2029 = vpop.f32.mrb[0].mxu0
        %v2030 = vadd.f32 0.0, %v2029
        %v2031 = vpop.f32.mrb[0].mxu0
        %v2032 = vpop.f32.mrb[0].mxu0
        %v2033 = vadd.f32 0.0, %v2032
        %v2034 = vpop.f32.mrb[0].mxu0
        %2035 = vdwg.mxu0
        %v2036 = vadd.f32 %v1706, %v1942
        %v2037 = vadd.f32 %v1709, %v1945
        %v2038 = vadd.f32 %v1714, %v1950
        %v2039 = vadd.f32 %v1717, %v1953
        %v2040 = vadd.f32 %v1722, %v1958
        %v2041 = vadd.f32 %v1725, %v1961
        %v2042 = vadd.f32 %v1730, %v1966
        %v2043 = vadd.f32 %v1733, %v1969
        %v2044 = vadd.f32 %v1738, %v1974
        %v2045 = vadd.f32 %v1741, %v1977
        %v2046 = vadd.f32 %v1746, %v1982
        %v2047 = vadd.f32 %v1749, %v1985
        %v2048 = vadd.f32 %v1754, %v1990
        %v2049 = vadd.f32 %v1757, %v1993
        %v2050 = vadd.f32 %v1762, %v1998
        %v2051 = vadd.f32 %v1765, %v2001
        %v2052 = vadd.f32 %v1770, %v2006
        %v2053 = vadd.f32 %v1773, %v2009
        %v2054 = vadd.f32 %v1778, %v2014
        %v2055 = vadd.f32 %v1781, %v2017
        %v2056 = vadd.f32 %v1786, %v2022
        %v2057 = vadd.f32 %v1789, %v2025
        %v2058 = vadd.f32 %v1794, %v2030
        %v2059 = vadd.f32 %v1797, %v2033
        %v2060 = vld [vmem:[#allocation2] sm:$0xff]
        %v2061 = vld [vmem:[#allocation2 + $0x8] sm:$0xff]
        %v2062 = vld [vmem:[#allocation2 + $0x10] sm:$0xff]
        %v2063 = vld [vmem:[#allocation2 + $0x18] sm:$0xff]
        %v2064 = vld [vmem:[#allocation2 + $0x20] sm:$0xff]
        %v2065 = vld [vmem:[#allocation2 + $0x28] sm:$0xff]
        %v2066 = vld [vmem:[#allocation2 + $0x30] sm:$0xff]
        %v2067 = vld [vmem:[#allocation2 + $0x38] sm:$0xff]
        %v2068 = vld [vmem:[#allocation2 + $0x40] sm:$0xff]
        %v2069 = vld [vmem:[#allocation2 + $0x48] sm:$0xff]
        %v2070 = vld [vmem:[#allocation2 + $0x50] sm:$0xff]
        %v2071 = vld [vmem:[#allocation2 + $0x58] sm:$0xff]
        %v2072 = vld [vmem:[#allocation2 + $0x60] sm:$0xff]
        %v2073 = vld [vmem:[#allocation2 + $0x68] sm:$0xff]
        %v2074 = vld [vmem:[#allocation2 + $0x70] sm:$0xff]
        %v2075 = vld [vmem:[#allocation2 + $0x78] sm:$0xff]
        %v2076 = vld [vmem:[#allocation2 + $0x80] sm:$0xff]
        %v2077 = vld [vmem:[#allocation2 + $0x88] sm:$0xff]
        %v2078 = vld [vmem:[#allocation2 + $0x90] sm:$0xff]
        %v2079 = vld [vmem:[#allocation2 + $0x98] sm:$0xff]
        %v2080 = vld [vmem:[#allocation2 + $0xa0] sm:$0xff]
        %v2081 = vld [vmem:[#allocation2 + $0xa8] sm:$0xff]
        %v2082 = vld [vmem:[#allocation2 + $0xb0] sm:$0xff]
        %v2083 = vld [vmem:[#allocation2 + $0xb8] sm:$0xff]
        %v2084 = vadd.f32 %v2060, %v2036
        %v2085 = vadd.f32 %v2061, %v2037
        %v2086 = vadd.f32 %v2062, %v2038
        %v2087 = vadd.f32 %v2063, %v2039
        %v2088 = vadd.f32 %v2064, %v2040
        %v2089 = vadd.f32 %v2065, %v2041
        %v2090 = vadd.f32 %v2066, %v2042
        %v2091 = vadd.f32 %v2067, %v2043
        %v2092 = vadd.f32 %v2068, %v2044
        %v2093 = vadd.f32 %v2069, %v2045
        %v2094 = vadd.f32 %v2070, %v2046
        %v2095 = vadd.f32 %v2071, %v2047
        %v2096 = vadd.f32 %v2072, %v2048
        %v2097 = vadd.f32 %v2073, %v2049
        %v2098 = vadd.f32 %v2074, %v2050
        %v2099 = vadd.f32 %v2075, %v2051
        %v2100 = vadd.f32 %v2076, %v2052
        %v2101 = vadd.f32 %v2077, %v2053
        %v2102 = vadd.f32 %v2078, %v2054
        %v2103 = vadd.f32 %v2079, %v2055
        %v2104 = vadd.f32 %v2080, %v2056
        %v2105 = vadd.f32 %v2081, %v2057
        %v2106 = vadd.f32 %v2082, %v2058
        %v2107 = vadd.f32 %v2083, %v2059
        %vm2108 = vcmask 130048
        %2109 = vst.msk [vmem:[#allocation2] sm:$0xff] %vm2108, %v2084
        %2110 = vst.msk [vmem:[#allocation2 + $0x8] sm:$0xff] %vm2108, %v2085
        %2111 = vst.msk [vmem:[#allocation2 + $0x10] sm:$0xff] %vm2108, %v2086
        %2112 = vst.msk [vmem:[#allocation2 + $0x18] sm:$0xff] %vm2108, %v2087
        %2113 = vst.msk [vmem:[#allocation2 + $0x20] sm:$0xff] %vm2108, %v2088
        %2114 = vst.msk [vmem:[#allocation2 + $0x28] sm:$0xff] %vm2108, %v2089
        %2115 = vst.msk [vmem:[#allocation2 + $0x30] sm:$0xff] %vm2108, %v2090
        %2116 = vst.msk [vmem:[#allocation2 + $0x38] sm:$0xff] %vm2108, %v2091
        %2117 = vst.msk [vmem:[#allocation2 + $0x40] sm:$0xff] %vm2108, %v2092
        %2118 = vst.msk [vmem:[#allocation2 + $0x48] sm:$0xff] %vm2108, %v2093
        %2119 = vst.msk [vmem:[#allocation2 + $0x50] sm:$0xff] %vm2108, %v2094
        %2120 = vst.msk [vmem:[#allocation2 + $0x58] sm:$0xff] %vm2108, %v2095
        %2121 = vst.msk [vmem:[#allocation2 + $0x60] sm:$0xff] %vm2108, %v2096
        %2122 = vst.msk [vmem:[#allocation2 + $0x68] sm:$0xff] %vm2108, %v2097
        %2123 = vst.msk [vmem:[#allocation2 + $0x70] sm:$0xff] %vm2108, %v2098
        %2124 = vst.msk [vmem:[#allocation2 + $0x78] sm:$0xff] %vm2108, %v2099
        %2125 = vst.msk [vmem:[#allocation2 + $0x80] sm:$0xff] %vm2108, %v2100
        %2126 = vst.msk [vmem:[#allocation2 + $0x88] sm:$0xff] %vm2108, %v2101
        %2127 = vst.msk [vmem:[#allocation2 + $0x90] sm:$0xff] %vm2108, %v2102
        %2128 = vst.msk [vmem:[#allocation2 + $0x98] sm:$0xff] %vm2108, %v2103
        %2129 = vst.msk [vmem:[#allocation2 + $0xa0] sm:$0xff] %vm2108, %v2104
        %2130 = vst.msk [vmem:[#allocation2 + $0xa8] sm:$0xff] %vm2108, %v2105
        %2131 = vst.msk [vmem:[#allocation2 + $0xb0] sm:$0xff] %vm2108, %v2106
        %2132 = vst.msk [vmem:[#allocation2 + $0xb8] sm:$0xff] %vm2108, %v2107
      $region40: #{fpn_psp_head_forward.8} parent=31 // pred_fallthru
        _
      %p2133 = scmp.eq.s32.totalorder %s21, 2
      // Predicated region
      $region41: #{fpn_psp_head_forward.8} parent=31 // pred_check
        %p2134 = pneg %p2133
      $region42: #{fpn_psp_head_forward.8} parent=31 // pred_check_branch
        %2136 = sbr.rel (%p2134) target = $region44
      $region43: #{fpn_psp_head_forward.8} parent=31 // pred_region
        %v2137 = vld [vmem:[%s219 + $0x18] sm:$0xf]
        %v2138 = vld [vmem:[%s219 + $0x1c] sm:$0xf]
        %v2139 = vld [vmem:[%s219 + $0x20] sm:$0xf]
        %v2140 = vld [vmem:[%s219 + $0x24] sm:$0xf]
        %v2141 = vld [vmem:[%s219 + $0x28] sm:$0xf]
        %v2142 = vld [vmem:[%s219 + $0x2c] sm:$0xf]
        %v2143 = vld [vmem:[%s219 + $0x30] sm:$0xf]
        %v2144 = vld [vmem:[%s219 + $0x34] sm:$0xf]
        %v2145 = vld [vmem:[%s219 + $0x38] sm:$0xf]
        %v2146 = vld [vmem:[%s219 + $0x3c] sm:$0xf]
        %v2147 = vld [vmem:[%s219 + $0x40] sm:$0xf]
        %v2148 = vld [vmem:[%s219 + $0x44] sm:$0xf]
        %v2149 = vld [vmem:[%s219 + $0x48] sm:$0xf]
        %v2150 = vld [vmem:[%s219 + $0x4c] sm:$0xf]
        %v2151 = vld [vmem:[%s219 + $0x50] sm:$0xf]
        %v2152 = vld [vmem:[%s219 + $0x54] sm:$0xf]
        %v2153 = vld [vmem:[%s219 + $0x58] sm:$0xf]
        %v2154 = vld [vmem:[%s219 + $0x5c] sm:$0xf]
        %v2155 = vld [vmem:[%s219 + $0x60] sm:$0xf]
        %v2156 = vld [vmem:[%s219 + $0x64] sm:$0xf]
        %v2157 = vld [vmem:[%s219 + $0x68] sm:$0xf]
        %v2158 = vld [vmem:[%s219 + $0x6c] sm:$0xf]
        %v2159 = vld [vmem:[%s219 + $0x70] sm:$0xf]
        %v2160 = vld [vmem:[%s219 + $0x74] sm:$0xf]
        %v2161 = vld [vmem:[%s224] sm:$0xf]
        %v2162 = vld [vmem:[%s224 + $0x4] sm:$0xf]
        %v2163 = vld [vmem:[%s224 + $0x8] sm:$0xf]
        %v2164 = vld [vmem:[%s224 + $0xc] sm:$0xf]
        %v2165 = vld [vmem:[%s224 + $0x10] sm:$0xf]
        %v2166 = vld [vmem:[%s224 + $0x14] sm:$0xf]
        %v2167 = vld [vmem:[%s224 + $0x18] sm:$0xf]
        %v2168 = vld [vmem:[%s224 + $0x1c] sm:$0xf]
        %v2169 = vld [vmem:[%s224 + $0x20] sm:$0xf]
        %v2170 = vld [vmem:[%s224 + $0x24] sm:$0xf]
        %v2171 = vld [vmem:[%s224 + $0x28] sm:$0xf]
        %v2172 = vld [vmem:[%s224 + $0x2c] sm:$0xf]
        %v2173 = vld [vmem:[%s224 + $0x30] sm:$0xf]
        %v2174 = vld [vmem:[%s224 + $0x34] sm:$0xf]
        %v2175 = vld [vmem:[%s224 + $0x38] sm:$0xf]
        %v2176 = vld [vmem:[%s224 + $0x3c] sm:$0xf]
        %v2177 = vld [vmem:[%s219 + $0x78] sm:$0x1]
        %s2178 = scalar_lea.vmem %s224, 64
        %v2179 = vld [vmem:[%s2178] sm:$0xf]
        %v2180 = vld [vmem:[%s2178 + $0x4] sm:$0xf]
        %v2181 = vld [vmem:[%s2178 + $0x8] sm:$0xf]
        %v2182 = vld [vmem:[%s2178 + $0xc] sm:$0xf]
        %v2183 = vld [vmem:[%s2178 + $0x10] sm:$0xf]
        %v2184 = vld [vmem:[%s2178 + $0x14] sm:$0xf]
        %v2185 = vld [vmem:[%s2178 + $0x18] sm:$0xf]
        %v2186 = vld [vmem:[%s2178 + $0x1c] sm:$0xf]
        %v2187 = vld [vmem:[%s2178 + $0x20] sm:$0xf]
        %v2188 = vld [vmem:[%s2178 + $0x24] sm:$0xf]
        %v2189 = vld [vmem:[%s2178 + $0x28] sm:$0xf]
        %v2190 = vld [vmem:[%s2178 + $0x2c] sm:$0xf]
        %v2191 = vld [vmem:[%s2178 + $0x30] sm:$0xf]
        %v2192 = vld [vmem:[%s2178 + $0x34] sm:$0xf]
        %v2193 = vld [vmem:[%s2178 + $0x38] sm:$0xf]
        %v2194 = vld [vmem:[%s2178 + $0x3c] sm:$0xf]
        %v2220 = vunpack.c.l.b16 %v2137
        %v2221 = vunpack.c.l.b16 %v2138
        %v2222 = vunpack.c.l.b16 %v2139
        %v2223 = vunpack.c.l.b16 %v2140
        %v2224 = vunpack.c.l.b16 %v2141
        %v2225 = vunpack.c.l.b16 %v2142
        %v2226 = vunpack.c.l.b16 %v2143
        %v2227 = vunpack.c.l.b16 %v2144
        %v2228 = vunpack.c.l.b16 %v2145
        %v2229 = vunpack.c.l.b16 %v2146
        %v2230 = vunpack.c.l.b16 %v2147
        %v2231 = vunpack.c.l.b16 %v2148
        %v2232 = vunpack.c.l.b16 %v2149
        %v2233 = vunpack.c.l.b16 %v2150
        %v2234 = vunpack.c.l.b16 %v2151
        %v2235 = vunpack.c.l.b16 %v2152
        %v2236 = vunpack.c.l.b16 %v2153
        %v2237 = vunpack.c.l.b16 %v2154
        %v2238 = vunpack.c.l.b16 %v2155
        %v2239 = vunpack.c.l.b16 %v2156
        %v2240 = vunpack.c.l.b16 %v2157
        %v2241 = vunpack.c.l.b16 %v2158
        %v2242 = vunpack.c.l.b16 %v2159
        %v2243 = vunpack.c.l.b16 %v2160
        %v2244 = vunpack.c.l.b16 %v2177
        %v2245 = vpack.c.b16 %v2221, %v2220
        %v2246 = vpack.c.b16 %v2223, %v2222
        %v2247 = vpack.c.b16 %v2225, %v2224
        %v2248 = vpack.c.b16 %v2227, %v2226
        %v2249 = vpack.c.b16 %v2229, %v2228
        %v2250 = vpack.c.b16 %v2231, %v2230
        %v2251 = vpack.c.b16 %v2233, %v2232
        %v2252 = vpack.c.b16 %v2235, %v2234
        %v2253 = vpack.c.b16 %v2237, %v2236
        %v2254 = vpack.c.b16 %v2239, %v2238
        %v2255 = vpack.c.b16 %v2241, %v2240
        %v2256 = vpack.c.b16 %v2243, %v2242
        %v2257 = vpack.c.b16 %v2244, %v2244
        %vm2258 = vsmask.f32 7424
        %v2260 = vshrl.u32 %v2245, 16
        %v2262 = vshll.u32 %v2245, 16
        %v2264 = vrot.slane %v2262, 1
        %v2265 = vor.u32 %v2260, %v2264
        %v2267 = vshll.u32 %v2246, 16
        %v2269 = vrot.slane %v2267, 1
        %v2270 = vsel %vm2258, %v2265, %v2269
        %v2271 = vshrl.u32 %v2246, 16
        %v2273 = vor.u32 %v2271, %v2269
        %v2275 = vshll.u32 %v2247, 16
        %v2277 = vrot.slane %v2275, 1
        %v2278 = vsel %vm2258, %v2273, %v2277
        %v2279 = vshrl.u32 %v2247, 16
        %v2281 = vor.u32 %v2279, %v2277
        %v2283 = vshll.u32 %v2248, 16
        %v2285 = vrot.slane %v2283, 1
        %v2286 = vsel %vm2258, %v2281, %v2285
        %v2287 = vshrl.u32 %v2248, 16
        %v2289 = vor.u32 %v2287, %v2285
        %v2291 = vshll.u32 %v2249, 16
        %v2293 = vrot.slane %v2291, 1
        %v2294 = vsel %vm2258, %v2289, %v2293
        %v2295 = vshrl.u32 %v2249, 16
        %v2297 = vor.u32 %v2295, %v2293
        %v2299 = vshll.u32 %v2250, 16
        %v2301 = vrot.slane %v2299, 1
        %v2302 = vsel %vm2258, %v2297, %v2301
        %v2303 = vshrl.u32 %v2250, 16
        %v2305 = vor.u32 %v2303, %v2301
        %v2307 = vshll.u32 %v2251, 16
        %v2309 = vrot.slane %v2307, 1
        %v2310 = vsel %vm2258, %v2305, %v2309
        %v2311 = vshrl.u32 %v2251, 16
        %v2313 = vor.u32 %v2311, %v2309
        %v2315 = vshll.u32 %v2252, 16
        %v2317 = vrot.slane %v2315, 1
        %v2318 = vsel %vm2258, %v2313, %v2317
        %v2319 = vshrl.u32 %v2252, 16
        %v2321 = vor.u32 %v2319, %v2317
        %v2323 = vshll.u32 %v2253, 16
        %v2325 = vrot.slane %v2323, 1
        %v2326 = vsel %vm2258, %v2321, %v2325
        %v2327 = vshrl.u32 %v2253, 16
        %v2329 = vor.u32 %v2327, %v2325
        %v2331 = vshll.u32 %v2254, 16
        %v2333 = vrot.slane %v2331, 1
        %v2334 = vsel %vm2258, %v2329, %v2333
        %v2335 = vshrl.u32 %v2254, 16
        %v2337 = vor.u32 %v2335, %v2333
        %v2339 = vshll.u32 %v2255, 16
        %v2341 = vrot.slane %v2339, 1
        %v2342 = vsel %vm2258, %v2337, %v2341
        %v2343 = vshrl.u32 %v2255, 16
        %v2345 = vor.u32 %v2343, %v2341
        %v2347 = vshll.u32 %v2256, 16
        %v2349 = vrot.slane %v2347, 1
        %v2350 = vsel %vm2258, %v2345, %v2349
        %v2351 = vshrl.u32 %v2256, 16
        %v2353 = vor.u32 %v2351, %v2349
        %v2355 = vshll.u32 %v2257, 16
        %v2357 = vrot.slane %v2355, 1
        %v2358 = vsel %vm2258, %v2353, %v2357
        %v2387 = vunpack.c.l.b16 %v2179
        %v2388 = vunpack.c.l.b16 %v2180
        %v2389 = vunpack.c.l.b16 %v2181
        %v2390 = vunpack.c.l.b16 %v2182
        %v2391 = vunpack.c.l.b16 %v2183
        %v2392 = vunpack.c.l.b16 %v2184
        %v2393 = vunpack.c.l.b16 %v2185
        %v2394 = vunpack.c.l.b16 %v2186
        %v2395 = vunpack.c.l.b16 %v2187
        %v2396 = vunpack.c.l.b16 %v2188
        %v2397 = vunpack.c.l.b16 %v2189
        %v2398 = vunpack.c.l.b16 %v2190
        %v2399 = vunpack.c.l.b16 %v2191
        %v2400 = vunpack.c.l.b16 %v2192
        %v2401 = vunpack.c.l.b16 %v2193
        %v2402 = vunpack.c.l.b16 %v2194
        %v2403 = vpack.c.b16 %v2388, %v2387
        %v2404 = vpack.c.b16 %v2390, %v2389
        %v2405 = vpack.c.b16 %v2392, %v2391
        %v2406 = vpack.c.b16 %v2394, %v2393
        %v2407 = vpack.c.b16 %v2396, %v2395
        %v2408 = vpack.c.b16 %v2398, %v2397
        %v2409 = vpack.c.b16 %v2400, %v2399
        %v2410 = vpack.c.b16 %v2402, %v2401
        %2419 = vmatprep.subr.bf16.mxu0 0
        %2420 = vmatpush1.bf16.msra.mxu0 %v2403
        %2421 = vmatprep.subr.bf16.mxu0 0
        %2422 = vmatpush1.bf16.msra.mxu0 %v2404
        %2423 = vmatprep.subr.bf16.mxu0 0
        %2424 = vmatpush1.bf16.msra.mxu0 %v2405
        %2425 = vmatprep.subr.bf16.mxu0 0
        %2426 = vmatpush1.bf16.msra.mxu0 %v2406
        %2427 = vmatprep.subr.bf16.mxu0 0
        %2428 = vmatpush1.bf16.msra.mxu0 %v2407
        %2429 = vmatprep.subr.bf16.mxu0 0
        %2430 = vmatpush1.bf16.msra.mxu0 %v2408
        %2431 = vmatprep.subr.bf16.mxu0 0
        %2432 = vmatpush1.bf16.msra.mxu0 %v2409
        %2433 = vmatprep.subr.bf16.mxu0 0
        %2434 = vmatpush1.bf16.msra.mxu0 %v2410
        %2435 = vmatprep.subr.bf16.mxu0 0
        %2436 = vmatpush1.bf16.msra.mxu0 0
        %2437 = vmatprep.subr.bf16.mxu0 0
        %2438 = vmatpush1.bf16.msra.mxu0 0
        %2439 = vmatprep.subr.bf16.mxu0 0
        %2440 = vmatpush1.bf16.msra.mxu0 0
        %2441 = vmatprep.subr.bf16.mxu0 0
        %2442 = vmatpush1.bf16.msra.mxu0 0
        %2443 = vmatprep.subr.bf16.mxu0 0
        %2444 = vmatpush1.bf16.msra.mxu0 0
        %2445 = vmatprep.subr.bf16.mxu0 0
        %2446 = vmatpush1.bf16.msra.mxu0 0
        %2447 = vmatprep.subr.bf16.mxu0 0
        %2448 = vmatpush1.bf16.msra.mxu0 0
        %2449 = vmatprep.subr.bf16.mxu0 0
        %2450 = vmatpush1.bf16.msra.mxu0 0
        %2451 = vmatprep.mubr.bf16.mxu0 0
        %2452 = vmatmul.mubr.bf16.gmra.mrb[0].mxu0 %v2270
        %v2453 = vpop.f32.mrb[0].mxu0
        %v2454 = vadd.f32 0.0, %v2453
        %v2455 = vpop.f32.mrb[0].mxu0
        %v2456 = vpop.f32.mrb[0].mxu0
        %v2457 = vadd.f32 0.0, %v2456
        %v2458 = vpop.f32.mrb[0].mxu0
        %2459 = vmatprep.mubr.bf16.mxu0 0
        %2460 = vmatmul.mubr.bf16.gmra.mrb[0].mxu0 %v2278
        %v2461 = vpop.f32.mrb[0].mxu0
        %v2462 = vadd.f32 0.0, %v2461
        %v2463 = vpop.f32.mrb[0].mxu0
        %v2464 = vpop.f32.mrb[0].mxu0
        %v2465 = vadd.f32 0.0, %v2464
        %v2466 = vpop.f32.mrb[0].mxu0
        %2467 = vmatprep.mubr.bf16.mxu0 0
        %2468 = vmatmul.mubr.bf16.gmra.mrb[0].mxu0 %v2286
        %v2469 = vpop.f32.mrb[0].mxu0
        %v2470 = vadd.f32 0.0, %v2469
        %v2471 = vpop.f32.mrb[0].mxu0
        %v2472 = vpop.f32.mrb[0].mxu0
        %v2473 = vadd.f32 0.0, %v2472
        %v2474 = vpop.f32.mrb[0].mxu0
        %2475 = vmatprep.mubr.bf16.mxu0 0
        %2476 = vmatmul.mubr.bf16.gmra.mrb[0].mxu0 %v2294
        %v2477 = vpop.f32.mrb[0].mxu0
        %v2478 = vadd.f32 0.0, %v2477
        %v2479 = vpop.f32.mrb[0].mxu0
        %v2480 = vpop.f32.mrb[0].mxu0
        %v2481 = vadd.f32 0.0, %v2480
        %v2482 = vpop.f32.mrb[0].mxu0
        %2483 = vmatprep.mubr.bf16.mxu0 0
        %2484 = vmatmul.mubr.bf16.gmra.mrb[0].mxu0 %v2302
        %v2485 = vpop.f32.mrb[0].mxu0
        %v2486 = vadd.f32 0.0, %v2485
        %v2487 = vpop.f32.mrb[0].mxu0
        %v2488 = vpop.f32.mrb[0].mxu0
        %v2489 = vadd.f32 0.0, %v2488
        %v2490 = vpop.f32.mrb[0].mxu0
        %2491 = vmatprep.mubr.bf16.mxu0 0
        %2492 = vmatmul.mubr.bf16.gmra.mrb[0].mxu0 %v2310
        %v2493 = vpop.f32.mrb[0].mxu0
        %v2494 = vadd.f32 0.0, %v2493
        %v2495 = vpop.f32.mrb[0].mxu0
        %v2496 = vpop.f32.mrb[0].mxu0
        %v2497 = vadd.f32 0.0, %v2496
        %v2498 = vpop.f32.mrb[0].mxu0
        %2499 = vmatprep.mubr.bf16.mxu0 0
        %2500 = vmatmul.mubr.bf16.gmra.mrb[0].mxu0 %v2318
        %v2501 = vpop.f32.mrb[0].mxu0
        %v2502 = vadd.f32 0.0, %v2501
        %v2503 = vpop.f32.mrb[0].mxu0
        %v2504 = vpop.f32.mrb[0].mxu0
        %v2505 = vadd.f32 0.0, %v2504
        %v2506 = vpop.f32.mrb[0].mxu0
        %2507 = vmatprep.mubr.bf16.mxu0 0
        %2508 = vmatmul.mubr.bf16.gmra.mrb[0].mxu0 %v2326
        %v2509 = vpop.f32.mrb[0].mxu0
        %v2510 = vadd.f32 0.0, %v2509
        %v2511 = vpop.f32.mrb[0].mxu0
        %v2512 = vpop.f32.mrb[0].mxu0
        %v2513 = vadd.f32 0.0, %v2512
        %v2514 = vpop.f32.mrb[0].mxu0
        %2515 = vmatprep.mubr.bf16.mxu0 0
        %2516 = vmatmul.mubr.bf16.gmra.mrb[0].mxu0 %v2334
        %v2517 = vpop.f32.mrb[0].mxu0
        %v2518 = vadd.f32 0.0, %v2517
        %v2519 = vpop.f32.mrb[0].mxu0
        %v2520 = vpop.f32.mrb[0].mxu0
        %v2521 = vadd.f32 0.0, %v2520
        %v2522 = vpop.f32.mrb[0].mxu0
        %2523 = vmatprep.mubr.bf16.mxu0 0
        %2524 = vmatmul.mubr.bf16.gmra.mrb[0].mxu0 %v2342
        %v2525 = vpop.f32.mrb[0].mxu0
        %v2526 = vadd.f32 0.0, %v2525
        %v2527 = vpop.f32.mrb[0].mxu0
        %v2528 = vpop.f32.mrb[0].mxu0
        %v2529 = vadd.f32 0.0, %v2528
        %v2530 = vpop.f32.mrb[0].mxu0
        %2531 = vmatprep.mubr.bf16.mxu0 0
        %2532 = vmatmul.mubr.bf16.gmra.mrb[0].mxu0 %v2350
        %v2533 = vpop.f32.mrb[0].mxu0
        %v2534 = vadd.f32 0.0, %v2533
        %v2535 = vpop.f32.mrb[0].mxu0
        %v2536 = vpop.f32.mrb[0].mxu0
        %v2537 = vadd.f32 0.0, %v2536
        %v2538 = vpop.f32.mrb[0].mxu0
        %2539 = vmatprep.mubr.bf16.mxu0 0
        %2540 = vmatmul.mubr.bf16.gmra.mrb[0].mxu0 %v2358
        %v2541 = vpop.f32.mrb[0].mxu0
        %v2542 = vadd.f32 0.0, %v2541
        %v2543 = vpop.f32.mrb[0].mxu0
        %v2544 = vpop.f32.mrb[0].mxu0
        %v2545 = vadd.f32 0.0, %v2544
        %v2546 = vpop.f32.mrb[0].mxu0
        %2547 = vdwg.mxu0
        %v2576 = vunpack.c.l.b16 %v2161
        %v2577 = vunpack.c.l.b16 %v2162
        %v2578 = vunpack.c.l.b16 %v2163
        %v2579 = vunpack.c.l.b16 %v2164
        %v2580 = vunpack.c.l.b16 %v2165
        %v2581 = vunpack.c.l.b16 %v2166
        %v2582 = vunpack.c.l.b16 %v2167
        %v2583 = vunpack.c.l.b16 %v2168
        %v2584 = vunpack.c.l.b16 %v2169
        %v2585 = vunpack.c.l.b16 %v2170
        %v2586 = vunpack.c.l.b16 %v2171
        %v2587 = vunpack.c.l.b16 %v2172
        %v2588 = vunpack.c.l.b16 %v2173
        %v2589 = vunpack.c.l.b16 %v2174
        %v2590 = vunpack.c.l.b16 %v2175
        %v2591 = vunpack.c.l.b16 %v2176
        %v2592 = vpack.c.b16 %v2577, %v2576
        %v2593 = vpack.c.b16 %v2579, %v2578
        %v2594 = vpack.c.b16 %v2581, %v2580
        %v2595 = vpack.c.b16 %v2583, %v2582
        %v2596 = vpack.c.b16 %v2585, %v2584
        %v2597 = vpack.c.b16 %v2587, %v2586
        %v2598 = vpack.c.b16 %v2589, %v2588
        %v2599 = vpack.c.b16 %v2591, %v2590
        %2608 = vmatprep.subr.bf16.mxu0 0
        %2609 = vmatpush1.bf16.msra.mxu0 %v2592
        %2610 = vmatprep.subr.bf16.mxu0 0
        %2611 = vmatpush1.bf16.msra.mxu0 %v2593
        %2612 = vmatprep.subr.bf16.mxu0 0
        %2613 = vmatpush1.bf16.msra.mxu0 %v2594
        %2614 = vmatprep.subr.bf16.mxu0 0
        %2615 = vmatpush1.bf16.msra.mxu0 %v2595
        %2616 = vmatprep.subr.bf16.mxu0 0
        %2617 = vmatpush1.bf16.msra.mxu0 %v2596
        %2618 = vmatprep.subr.bf16.mxu0 0
        %2619 = vmatpush1.bf16.msra.mxu0 %v2597
        %2620 = vmatprep.subr.bf16.mxu0 0
        %2621 = vmatpush1.bf16.msra.mxu0 %v2598
        %2622 = vmatprep.subr.bf16.mxu0 0
        %2623 = vmatpush1.bf16.msra.mxu0 %v2599
        %2624 = vmatprep.subr.bf16.mxu0 0
        %2625 = vmatpush1.bf16.msra.mxu0 0
        %2626 = vmatprep.subr.bf16.mxu0 0
        %2627 = vmatpush1.bf16.msra.mxu0 0
        %2628 = vmatprep.subr.bf16.mxu0 0
        %2629 = vmatpush1.bf16.msra.mxu0 0
        %2630 = vmatprep.subr.bf16.mxu0 0
        %2631 = vmatpush1.bf16.msra.mxu0 0
        %2632 = vmatprep.subr.bf16.mxu0 0
        %2633 = vmatpush1.bf16.msra.mxu0 0
        %2634 = vmatprep.subr.bf16.mxu0 0
        %2635 = vmatpush1.bf16.msra.mxu0 0
        %2636 = vmatprep.subr.bf16.mxu0 0
        %2637 = vmatpush1.bf16.msra.mxu0 0
        %2638 = vmatprep.subr.bf16.mxu0 0
        %2639 = vmatpush1.bf16.msra.mxu0 0
        %2640 = vmatprep.mubr.bf16.mxu0 0
        %2641 = vmatmul.mubr.bf16.gmra.mrb[0].mxu0 %v2245
        %v2642 = vpop.f32.mrb[0].mxu0
        %v2643 = vadd.f32 %v2454, %v2642
        %v2644 = vpop.f32.mrb[0].mxu0
        %v2645 = vpop.f32.mrb[0].mxu0
        %v2646 = vadd.f32 %v2457, %v2645
        %v2647 = vpop.f32.mrb[0].mxu0
        %2648 = vmatprep.mubr.bf16.mxu0 0
        %2649 = vmatmul.mubr.bf16.gmra.mrb[0].mxu0 %v2246
        %v2650 = vpop.f32.mrb[0].mxu0
        %v2651 = vadd.f32 %v2462, %v2650
        %v2652 = vpop.f32.mrb[0].mxu0
        %v2653 = vpop.f32.mrb[0].mxu0
        %v2654 = vadd.f32 %v2465, %v2653
        %v2655 = vpop.f32.mrb[0].mxu0
        %2656 = vmatprep.mubr.bf16.mxu0 0
        %2657 = vmatmul.mubr.bf16.gmra.mrb[0].mxu0 %v2247
        %v2658 = vpop.f32.mrb[0].mxu0
        %v2659 = vadd.f32 %v2470, %v2658
        %v2660 = vpop.f32.mrb[0].mxu0
        %v2661 = vpop.f32.mrb[0].mxu0
        %v2662 = vadd.f32 %v2473, %v2661
        %v2663 = vpop.f32.mrb[0].mxu0
        %2664 = vmatprep.mubr.bf16.mxu0 0
        %2665 = vmatmul.mubr.bf16.gmra.mrb[0].mxu0 %v2248
        %v2666 = vpop.f32.mrb[0].mxu0
        %v2667 = vadd.f32 %v2478, %v2666
        %v2668 = vpop.f32.mrb[0].mxu0
        %v2669 = vpop.f32.mrb[0].mxu0
        %v2670 = vadd.f32 %v2481, %v2669
        %v2671 = vpop.f32.mrb[0].mxu0
        %2672 = vmatprep.mubr.bf16.mxu0 0
        %2673 = vmatmul.mubr.bf16.gmra.mrb[0].mxu0 %v2249
        %v2674 = vpop.f32.mrb[0].mxu0
        %v2675 = vadd.f32 %v2486, %v2674
        %v2676 = vpop.f32.mrb[0].mxu0
        %v2677 = vpop.f32.mrb[0].mxu0
        %v2678 = vadd.f32 %v2489, %v2677
        %v2679 = vpop.f32.mrb[0].mxu0
        %2680 = vmatprep.mubr.bf16.mxu0 0
        %2681 = vmatmul.mubr.bf16.gmra.mrb[0].mxu0 %v2250
        %v2682 = vpop.f32.mrb[0].mxu0
        %v2683 = vadd.f32 %v2494, %v2682
        %v2684 = vpop.f32.mrb[0].mxu0
        %v2685 = vpop.f32.mrb[0].mxu0
        %v2686 = vadd.f32 %v2497, %v2685
        %v2687 = vpop.f32.mrb[0].mxu0
        %2688 = vmatprep.mubr.bf16.mxu0 0
        %2689 = vmatmul.mubr.bf16.gmra.mrb[0].mxu0 %v2251
        %v2690 = vpop.f32.mrb[0].mxu0
        %v2691 = vadd.f32 %v2502, %v2690
        %v2692 = vpop.f32.mrb[0].mxu0
        %v2693 = vpop.f32.mrb[0].mxu0
        %v2694 = vadd.f32 %v2505, %v2693
        %v2695 = vpop.f32.mrb[0].mxu0
        %2696 = vmatprep.mubr.bf16.mxu0 0
        %2697 = vmatmul.mubr.bf16.gmra.mrb[0].mxu0 %v2252
        %v2698 = vpop.f32.mrb[0].mxu0
        %v2699 = vadd.f32 %v2510, %v2698
        %v2700 = vpop.f32.mrb[0].mxu0
        %v2701 = vpop.f32.mrb[0].mxu0
        %v2702 = vadd.f32 %v2513, %v2701
        %v2703 = vpop.f32.mrb[0].mxu0
        %2704 = vmatprep.mubr.bf16.mxu0 0
        %2705 = vmatmul.mubr.bf16.gmra.mrb[0].mxu0 %v2253
        %v2706 = vpop.f32.mrb[0].mxu0
        %v2707 = vadd.f32 %v2518, %v2706
        %v2708 = vpop.f32.mrb[0].mxu0
        %v2709 = vpop.f32.mrb[0].mxu0
        %v2710 = vadd.f32 %v2521, %v2709
        %v2711 = vpop.f32.mrb[0].mxu0
        %2712 = vmatprep.mubr.bf16.mxu0 0
        %2713 = vmatmul.mubr.bf16.gmra.mrb[0].mxu0 %v2254
        %v2714 = vpop.f32.mrb[0].mxu0
        %v2715 = vadd.f32 %v2526, %v2714
        %v2716 = vpop.f32.mrb[0].mxu0
        %v2717 = vpop.f32.mrb[0].mxu0
        %v2718 = vadd.f32 %v2529, %v2717
        %v2719 = vpop.f32.mrb[0].mxu0
        %2720 = vmatprep.mubr.bf16.mxu0 0
        %2721 = vmatmul.mubr.bf16.gmra.mrb[0].mxu0 %v2255
        %v2722 = vpop.f32.mrb[0].mxu0
        %v2723 = vadd.f32 %v2534, %v2722
        %v2724 = vpop.f32.mrb[0].mxu0
        %v2725 = vpop.f32.mrb[0].mxu0
        %v2726 = vadd.f32 %v2537, %v2725
        %v2727 = vpop.f32.mrb[0].mxu0
        %2728 = vmatprep.mubr.bf16.mxu0 0
        %2729 = vmatmul.mubr.bf16.gmra.mrb[0].mxu0 %v2256
        %v2730 = vpop.f32.mrb[0].mxu0
        %v2731 = vadd.f32 %v2542, %v2730
        %v2732 = vpop.f32.mrb[0].mxu0
        %v2733 = vpop.f32.mrb[0].mxu0
        %v2734 = vadd.f32 %v2545, %v2733
        %v2735 = vpop.f32.mrb[0].mxu0
        %2736 = vdwg.mxu0
        %v2737 = vld [vmem:[%s219 + $0x18] sm:$0xe]
        %s2738 = scalar_lea.vmem %s224, 128
        %v2739 = vld [vmem:[%s2738] sm:$0xf]
        %v2740 = vld [vmem:[%s2738 + $0x4] sm:$0xf]
        %v2741 = vld [vmem:[%s2738 + $0x8] sm:$0xf]
        %v2742 = vld [vmem:[%s2738 + $0xc] sm:$0xf]
        %v2743 = vld [vmem:[%s2738 + $0x10] sm:$0xf]
        %v2744 = vld [vmem:[%s2738 + $0x14] sm:$0xf]
        %v2745 = vld [vmem:[%s2738 + $0x18] sm:$0xf]
        %v2746 = vld [vmem:[%s2738 + $0x1c] sm:$0xf]
        %v2747 = vld [vmem:[%s2738 + $0x20] sm:$0xf]
        %v2748 = vld [vmem:[%s2738 + $0x24] sm:$0xf]
        %v2749 = vld [vmem:[%s2738 + $0x28] sm:$0xf]
        %v2750 = vld [vmem:[%s2738 + $0x2c] sm:$0xf]
        %v2751 = vld [vmem:[%s2738 + $0x30] sm:$0xf]
        %v2752 = vld [vmem:[%s2738 + $0x34] sm:$0xf]
        %v2753 = vld [vmem:[%s2738 + $0x38] sm:$0xf]
        %v2754 = vld [vmem:[%s2738 + $0x3c] sm:$0xf]
        %v2756 = vunpack.c.l.b16 %v2737
        %v2757 = vpack.c.b16 %v2221, %v2756
        %vm2758 = vcmask 1046528
        %v2759 = vrot.slane %v2757, 1
        %v2760 = vrot.slane %v2246, 1
        %v2761 = vsel %vm2758, %v2759, %v2760
        %v2762 = vrot.slane %v2247, 1
        %v2763 = vsel %vm2758, %v2760, %v2762
        %v2764 = vrot.slane %v2248, 1
        %v2765 = vsel %vm2758, %v2762, %v2764
        %v2766 = vrot.slane %v2249, 1
        %v2767 = vsel %vm2758, %v2764, %v2766
        %v2768 = vrot.slane %v2250, 1
        %v2769 = vsel %vm2758, %v2766, %v2768
        %v2770 = vrot.slane %v2251, 1
        %v2771 = vsel %vm2758, %v2768, %v2770
        %v2772 = vrot.slane %v2252, 1
        %v2773 = vsel %vm2758, %v2770, %v2772
        %v2774 = vrot.slane %v2253, 1
        %v2775 = vsel %vm2758, %v2772, %v2774
        %v2776 = vrot.slane %v2254, 1
        %v2777 = vsel %vm2758, %v2774, %v2776
        %v2778 = vrot.slane %v2255, 1
        %v2779 = vsel %vm2758, %v2776, %v2778
        %v2780 = vrot.slane %v2256, 1
        %v2781 = vsel %vm2758, %v2778, %v2780
        %v2782 = vrot.slane %v2257, 1
        %v2783 = vsel %vm2758, %v2780, %v2782
        %v2812 = vunpack.c.l.b16 %v2739
        %v2813 = vunpack.c.l.b16 %v2740
        %v2814 = vunpack.c.l.b16 %v2741
        %v2815 = vunpack.c.l.b16 %v2742
        %v2816 = vunpack.c.l.b16 %v2743
        %v2817 = vunpack.c.l.b16 %v2744
        %v2818 = vunpack.c.l.b16 %v2745
        %v2819 = vunpack.c.l.b16 %v2746
        %v2820 = vunpack.c.l.b16 %v2747
        %v2821 = vunpack.c.l.b16 %v2748
        %v2822 = vunpack.c.l.b16 %v2749
        %v2823 = vunpack.c.l.b16 %v2750
        %v2824 = vunpack.c.l.b16 %v2751
        %v2825 = vunpack.c.l.b16 %v2752
        %v2826 = vunpack.c.l.b16 %v2753
        %v2827 = vunpack.c.l.b16 %v2754
        %v2828 = vpack.c.b16 %v2813, %v2812
        %v2829 = vpack.c.b16 %v2815, %v2814
        %v2830 = vpack.c.b16 %v2817, %v2816
        %v2831 = vpack.c.b16 %v2819, %v2818
        %v2832 = vpack.c.b16 %v2821, %v2820
        %v2833 = vpack.c.b16 %v2823, %v2822
        %v2834 = vpack.c.b16 %v2825, %v2824
        %v2835 = vpack.c.b16 %v2827, %v2826
        %2844 = vmatprep.subr.bf16.mxu0 0
        %2845 = vmatpush1.bf16.msra.mxu0 %v2828
        %2846 = vmatprep.subr.bf16.mxu0 0
        %2847 = vmatpush1.bf16.msra.mxu0 %v2829
        %2848 = vmatprep.subr.bf16.mxu0 0
        %2849 = vmatpush1.bf16.msra.mxu0 %v2830
        %2850 = vmatprep.subr.bf16.mxu0 0
        %2851 = vmatpush1.bf16.msra.mxu0 %v2831
        %2852 = vmatprep.subr.bf16.mxu0 0
        %2853 = vmatpush1.bf16.msra.mxu0 %v2832
        %2854 = vmatprep.subr.bf16.mxu0 0
        %2855 = vmatpush1.bf16.msra.mxu0 %v2833
        %2856 = vmatprep.subr.bf16.mxu0 0
        %2857 = vmatpush1.bf16.msra.mxu0 %v2834
        %2858 = vmatprep.subr.bf16.mxu0 0
        %2859 = vmatpush1.bf16.msra.mxu0 %v2835
        %2860 = vmatprep.subr.bf16.mxu0 0
        %2861 = vmatpush1.bf16.msra.mxu0 0
        %2862 = vmatprep.subr.bf16.mxu0 0
        %2863 = vmatpush1.bf16.msra.mxu0 0
        %2864 = vmatprep.subr.bf16.mxu0 0
        %2865 = vmatpush1.bf16.msra.mxu0 0
        %2866 = vmatprep.subr.bf16.mxu0 0
        %2867 = vmatpush1.bf16.msra.mxu0 0
        %2868 = vmatprep.subr.bf16.mxu0 0
        %2869 = vmatpush1.bf16.msra.mxu0 0
        %2870 = vmatprep.subr.bf16.mxu0 0
        %2871 = vmatpush1.bf16.msra.mxu0 0
        %2872 = vmatprep.subr.bf16.mxu0 0
        %2873 = vmatpush1.bf16.msra.mxu0 0
        %2874 = vmatprep.subr.bf16.mxu0 0
        %2875 = vmatpush1.bf16.msra.mxu0 0
        %2876 = vmatprep.mubr.bf16.mxu0 0
        %2877 = vmatmul.mubr.bf16.gmra.mrb[0].mxu0 %v2761
        %v2878 = vpop.f32.mrb[0].mxu0
        %v2879 = vadd.f32 0.0, %v2878
        %v2880 = vpop.f32.mrb[0].mxu0
        %v2881 = vpop.f32.mrb[0].mxu0
        %v2882 = vadd.f32 0.0, %v2881
        %v2883 = vpop.f32.mrb[0].mxu0
        %2884 = vmatprep.mubr.bf16.mxu0 0
        %2885 = vmatmul.mubr.bf16.gmra.mrb[0].mxu0 %v2763
        %v2886 = vpop.f32.mrb[0].mxu0
        %v2887 = vadd.f32 0.0, %v2886
        %v2888 = vpop.f32.mrb[0].mxu0
        %v2889 = vpop.f32.mrb[0].mxu0
        %v2890 = vadd.f32 0.0, %v2889
        %v2891 = vpop.f32.mrb[0].mxu0
        %2892 = vmatprep.mubr.bf16.mxu0 0
        %2893 = vmatmul.mubr.bf16.gmra.mrb[0].mxu0 %v2765
        %v2894 = vpop.f32.mrb[0].mxu0
        %v2895 = vadd.f32 0.0, %v2894
        %v2896 = vpop.f32.mrb[0].mxu0
        %v2897 = vpop.f32.mrb[0].mxu0
        %v2898 = vadd.f32 0.0, %v2897
        %v2899 = vpop.f32.mrb[0].mxu0
        %2900 = vmatprep.mubr.bf16.mxu0 0
        %2901 = vmatmul.mubr.bf16.gmra.mrb[0].mxu0 %v2767
        %v2902 = vpop.f32.mrb[0].mxu0
        %v2903 = vadd.f32 0.0, %v2902
        %v2904 = vpop.f32.mrb[0].mxu0
        %v2905 = vpop.f32.mrb[0].mxu0
        %v2906 = vadd.f32 0.0, %v2905
        %v2907 = vpop.f32.mrb[0].mxu0
        %2908 = vmatprep.mubr.bf16.mxu0 0
        %2909 = vmatmul.mubr.bf16.gmra.mrb[0].mxu0 %v2769
        %v2910 = vpop.f32.mrb[0].mxu0
        %v2911 = vadd.f32 0.0, %v2910
        %v2912 = vpop.f32.mrb[0].mxu0
        %v2913 = vpop.f32.mrb[0].mxu0
        %v2914 = vadd.f32 0.0, %v2913
        %v2915 = vpop.f32.mrb[0].mxu0
        %2916 = vmatprep.mubr.bf16.mxu0 0
        %2917 = vmatmul.mubr.bf16.gmra.mrb[0].mxu0 %v2771
        %v2918 = vpop.f32.mrb[0].mxu0
        %v2919 = vadd.f32 0.0, %v2918
        %v2920 = vpop.f32.mrb[0].mxu0
        %v2921 = vpop.f32.mrb[0].mxu0
        %v2922 = vadd.f32 0.0, %v2921
        %v2923 = vpop.f32.mrb[0].mxu0
        %2924 = vmatprep.mubr.bf16.mxu0 0
        %2925 = vmatmul.mubr.bf16.gmra.mrb[0].mxu0 %v2773
        %v2926 = vpop.f32.mrb[0].mxu0
        %v2927 = vadd.f32 0.0, %v2926
        %v2928 = vpop.f32.mrb[0].mxu0
        %v2929 = vpop.f32.mrb[0].mxu0
        %v2930 = vadd.f32 0.0, %v2929
        %v2931 = vpop.f32.mrb[0].mxu0
        %2932 = vmatprep.mubr.bf16.mxu0 0
        %2933 = vmatmul.mubr.bf16.gmra.mrb[0].mxu0 %v2775
        %v2934 = vpop.f32.mrb[0].mxu0
        %v2935 = vadd.f32 0.0, %v2934
        %v2936 = vpop.f32.mrb[0].mxu0
        %v2937 = vpop.f32.mrb[0].mxu0
        %v2938 = vadd.f32 0.0, %v2937
        %v2939 = vpop.f32.mrb[0].mxu0
        %2940 = vmatprep.mubr.bf16.mxu0 0
        %2941 = vmatmul.mubr.bf16.gmra.mrb[0].mxu0 %v2777
        %v2942 = vpop.f32.mrb[0].mxu0
        %v2943 = vadd.f32 0.0, %v2942
        %v2944 = vpop.f32.mrb[0].mxu0
        %v2945 = vpop.f32.mrb[0].mxu0
        %v2946 = vadd.f32 0.0, %v2945
        %v2947 = vpop.f32.mrb[0].mxu0
        %2948 = vmatprep.mubr.bf16.mxu0 0
        %2949 = vmatmul.mubr.bf16.gmra.mrb[0].mxu0 %v2779
        %v2950 = vpop.f32.mrb[0].mxu0
        %v2951 = vadd.f32 0.0, %v2950
        %v2952 = vpop.f32.mrb[0].mxu0
        %v2953 = vpop.f32.mrb[0].mxu0
        %v2954 = vadd.f32 0.0, %v2953
        %v2955 = vpop.f32.mrb[0].mxu0
        %2956 = vmatprep.mubr.bf16.mxu0 0
        %2957 = vmatmul.mubr.bf16.gmra.mrb[0].mxu0 %v2781
        %v2958 = vpop.f32.mrb[0].mxu0
        %v2959 = vadd.f32 0.0, %v2958
        %v2960 = vpop.f32.mrb[0].mxu0
        %v2961 = vpop.f32.mrb[0].mxu0
        %v2962 = vadd.f32 0.0, %v2961
        %v2963 = vpop.f32.mrb[0].mxu0
        %2964 = vmatprep.mubr.bf16.mxu0 0
        %2965 = vmatmul.mubr.bf16.gmra.mrb[0].mxu0 %v2783
        %v2966 = vpop.f32.mrb[0].mxu0
        %v2967 = vadd.f32 0.0, %v2966
        %v2968 = vpop.f32.mrb[0].mxu0
        %v2969 = vpop.f32.mrb[0].mxu0
        %v2970 = vadd.f32 0.0, %v2969
        %v2971 = vpop.f32.mrb[0].mxu0
        %2972 = vdwg.mxu0
        %v2973 = vadd.f32 %v2643, %v2879
        %v2974 = vadd.f32 %v2646, %v2882
        %v2975 = vadd.f32 %v2651, %v2887
        %v2976 = vadd.f32 %v2654, %v2890
        %v2977 = vadd.f32 %v2659, %v2895
        %v2978 = vadd.f32 %v2662, %v2898
        %v2979 = vadd.f32 %v2667, %v2903
        %v2980 = vadd.f32 %v2670, %v2906
        %v2981 = vadd.f32 %v2675, %v2911
        %v2982 = vadd.f32 %v2678, %v2914
        %v2983 = vadd.f32 %v2683, %v2919
        %v2984 = vadd.f32 %v2686, %v2922
        %v2985 = vadd.f32 %v2691, %v2927
        %v2986 = vadd.f32 %v2694, %v2930
        %v2987 = vadd.f32 %v2699, %v2935
        %v2988 = vadd.f32 %v2702, %v2938
        %v2989 = vadd.f32 %v2707, %v2943
        %v2990 = vadd.f32 %v2710, %v2946
        %v2991 = vadd.f32 %v2715, %v2951
        %v2992 = vadd.f32 %v2718, %v2954
        %v2993 = vadd.f32 %v2723, %v2959
        %v2994 = vadd.f32 %v2726, %v2962
        %v2995 = vadd.f32 %v2731, %v2967
        %v2996 = vadd.f32 %v2734, %v2970
        %v2997 = vld [vmem:[#allocation2] sm:$0xff]
        %v2998 = vld [vmem:[#allocation2 + $0x8] sm:$0xff]
        %v2999 = vld [vmem:[#allocation2 + $0x10] sm:$0xff]
        %v3000 = vld [vmem:[#allocation2 + $0x18] sm:$0xff]
        %v3001 = vld [vmem:[#allocation2 + $0x20] sm:$0xff]
        %v3002 = vld [vmem:[#allocation2 + $0x28] sm:$0xff]
        %v3003 = vld [vmem:[#allocation2 + $0x30] sm:$0xff]
        %v3004 = vld [vmem:[#allocation2 + $0x38] sm:$0xff]
        %v3005 = vld [vmem:[#allocation2 + $0x40] sm:$0xff]
        %v3006 = vld [vmem:[#allocation2 + $0x48] sm:$0xff]
        %v3007 = vld [vmem:[#allocation2 + $0x50] sm:$0xff]
        %v3008 = vld [vmem:[#allocation2 + $0x58] sm:$0xff]
        %v3009 = vld [vmem:[#allocation2 + $0x60] sm:$0xff]
        %v3010 = vld [vmem:[#allocation2 + $0x68] sm:$0xff]
        %v3011 = vld [vmem:[#allocation2 + $0x70] sm:$0xff]
        %v3012 = vld [vmem:[#allocation2 + $0x78] sm:$0xff]
        %v3013 = vld [vmem:[#allocation2 + $0x80] sm:$0xff]
        %v3014 = vld [vmem:[#allocation2 + $0x88] sm:$0xff]
        %v3015 = vld [vmem:[#allocation2 + $0x90] sm:$0xff]
        %v3016 = vld [vmem:[#allocation2 + $0x98] sm:$0xff]
        %v3017 = vld [vmem:[#allocation2 + $0xa0] sm:$0xff]
        %v3018 = vld [vmem:[#allocation2 + $0xa8] sm:$0xff]
        %v3019 = vld [vmem:[#allocation2 + $0xb0] sm:$0xff]
        %v3020 = vld [vmem:[#allocation2 + $0xb8] sm:$0xff]
        %v3021 = vadd.f32 %v2997, %v2973
        %v3022 = vadd.f32 %v2998, %v2974
        %v3023 = vadd.f32 %v2999, %v2975
        %v3024 = vadd.f32 %v3000, %v2976
        %v3025 = vadd.f32 %v3001, %v2977
        %v3026 = vadd.f32 %v3002, %v2978
        %v3027 = vadd.f32 %v3003, %v2979
        %v3028 = vadd.f32 %v3004, %v2980
        %v3029 = vadd.f32 %v3005, %v2981
        %v3030 = vadd.f32 %v3006, %v2982
        %v3031 = vadd.f32 %v3007, %v2983
        %v3032 = vadd.f32 %v3008, %v2984
        %v3033 = vadd.f32 %v3009, %v2985
        %v3034 = vadd.f32 %v3010, %v2986
        %v3035 = vadd.f32 %v3011, %v2987
        %v3036 = vadd.f32 %v3012, %v2988
        %v3037 = vadd.f32 %v3013, %v2989
        %v3038 = vadd.f32 %v3014, %v2990
        %v3039 = vadd.f32 %v3015, %v2991
        %v3040 = vadd.f32 %v3016, %v2992
        %v3041 = vadd.f32 %v3017, %v2993
        %v3042 = vadd.f32 %v3018, %v2994
        %v3043 = vadd.f32 %v3019, %v2995
        %v3044 = vadd.f32 %v3020, %v2996
        %vm3045 = vcmask 130048
        %3046 = vst.msk [vmem:[#allocation2] sm:$0xff] %vm3045, %v3021
        %3047 = vst.msk [vmem:[#allocation2 + $0x8] sm:$0xff] %vm3045, %v3022
        %3048 = vst.msk [vmem:[#allocation2 + $0x10] sm:$0xff] %vm3045, %v3023
        %3049 = vst.msk [vmem:[#allocation2 + $0x18] sm:$0xff] %vm3045, %v3024
        %3050 = vst.msk [vmem:[#allocation2 + $0x20] sm:$0xff] %vm3045, %v3025
        %3051 = vst.msk [vmem:[#allocation2 + $0x28] sm:$0xff] %vm3045, %v3026
        %3052 = vst.msk [vmem:[#allocation2 + $0x30] sm:$0xff] %vm3045, %v3027
        %3053 = vst.msk [vmem:[#allocation2 + $0x38] sm:$0xff] %vm3045, %v3028
        %3054 = vst.msk [vmem:[#allocation2 + $0x40] sm:$0xff] %vm3045, %v3029
        %3055 = vst.msk [vmem:[#allocation2 + $0x48] sm:$0xff] %vm3045, %v3030
        %3056 = vst.msk [vmem:[#allocation2 + $0x50] sm:$0xff] %vm3045, %v3031
        %3057 = vst.msk [vmem:[#allocation2 + $0x58] sm:$0xff] %vm3045, %v3032
        %3058 = vst.msk [vmem:[#allocation2 + $0x60] sm:$0xff] %vm3045, %v3033
        %3059 = vst.msk [vmem:[#allocation2 + $0x68] sm:$0xff] %vm3045, %v3034
        %3060 = vst.msk [vmem:[#allocation2 + $0x70] sm:$0xff] %vm3045, %v3035
        %3061 = vst.msk [vmem:[#allocation2 + $0x78] sm:$0xff] %vm3045, %v3036
        %3062 = vst.msk [vmem:[#allocation2 + $0x80] sm:$0xff] %vm3045, %v3037
        %3063 = vst.msk [vmem:[#allocation2 + $0x88] sm:$0xff] %vm3045, %v3038
        %3064 = vst.msk [vmem:[#allocation2 + $0x90] sm:$0xff] %vm3045, %v3039
        %3065 = vst.msk [vmem:[#allocation2 + $0x98] sm:$0xff] %vm3045, %v3040
        %3066 = vst.msk [vmem:[#allocation2 + $0xa0] sm:$0xff] %vm3045, %v3041
        %3067 = vst.msk [vmem:[#allocation2 + $0xa8] sm:$0xff] %vm3045, %v3042
        %3068 = vst.msk [vmem:[#allocation2 + $0xb0] sm:$0xff] %vm3045, %v3043
        %3069 = vst.msk [vmem:[#allocation2 + $0xb8] sm:$0xff] %vm3045, %v3044
        %v3070 = vld [vmem:[#allocation2] sm:$0xff]
        %v3071 = vld [vmem:[#allocation2 + $0x8] sm:$0xff]
        %v3072 = vld [vmem:[#allocation2 + $0x10] sm:$0xff]
        %v3073 = vld [vmem:[#allocation2 + $0x18] sm:$0xff]
        %v3074 = vld [vmem:[#allocation2 + $0x20] sm:$0xff]
        %v3075 = vld [vmem:[#allocation2 + $0x28] sm:$0xff]
        %v3076 = vld [vmem:[#allocation2 + $0x30] sm:$0xff]
        %v3077 = vld [vmem:[#allocation2 + $0x38] sm:$0xff]
        %v3078 = vld [vmem:[#allocation2 + $0x40] sm:$0xff]
        %v3079 = vld [vmem:[#allocation2 + $0x48] sm:$0xff]
        %v3080 = vld [vmem:[#allocation2 + $0x50] sm:$0xff]
        %v3081 = vld [vmem:[#allocation2 + $0x58] sm:$0xff]
        %v3082 = vld [vmem:[#allocation2 + $0x60] sm:$0xff]
        %v3083 = vld [vmem:[#allocation2 + $0x68] sm:$0xff]
        %v3084 = vld [vmem:[#allocation2 + $0x70] sm:$0xff]
        %v3085 = vld [vmem:[#allocation2 + $0x78] sm:$0xff]
        %v3086 = vld [vmem:[#allocation2 + $0x80] sm:$0xff]
        %v3087 = vld [vmem:[#allocation2 + $0x88] sm:$0xff]
        %v3088 = vld [vmem:[#allocation2 + $0x90] sm:$0xff]
        %v3089 = vld [vmem:[#allocation2 + $0x98] sm:$0xff]
        %v3090 = vld [vmem:[#allocation2 + $0xa0] sm:$0xff]
        %v3091 = vld [vmem:[#allocation2 + $0xa8] sm:$0xff]
        %v3092 = vld [vmem:[#allocation2 + $0xb0] sm:$0xff]
        %v3093 = vld [vmem:[#allocation2 + $0xb8] sm:$0xff]
        %v3094 = vld [vmem:[%s2] sm:$0x1]
        %v3096 = vlaneseq
        %v3097 = vshrl.u32 %v3096, 7
        %v3098 = vsub.s32 0, %v3097
        %v3099 = vrot.slane %v3094, %v3098
        %v3101 = vadd.f32 %v3070, %v3099
        %v3102 = vadd.f32 %v3071, %v3099
        %v3103 = vadd.f32 %v3072, %v3099
        %v3104 = vadd.f32 %v3073, %v3099
        %v3105 = vadd.f32 %v3074, %v3099
        %v3106 = vadd.f32 %v3075, %v3099
        %v3107 = vadd.f32 %v3076, %v3099
        %v3108 = vadd.f32 %v3077, %v3099
        %v3109 = vadd.f32 %v3078, %v3099
        %v3110 = vadd.f32 %v3079, %v3099
        %v3111 = vadd.f32 %v3080, %v3099
        %v3112 = vadd.f32 %v3081, %v3099
        %v3113 = vadd.f32 %v3082, %v3099
        %v3114 = vadd.f32 %v3083, %v3099
        %v3115 = vadd.f32 %v3084, %v3099
        %v3116 = vadd.f32 %v3085, %v3099
        %v3117 = vadd.f32 %v3086, %v3099
        %v3118 = vadd.f32 %v3087, %v3099
        %v3119 = vadd.f32 %v3088, %v3099
        %v3120 = vadd.f32 %v3089, %v3099
        %v3121 = vadd.f32 %v3090, %v3099
        %v3122 = vadd.f32 %v3091, %v3099
        %v3123 = vadd.f32 %v3092, %v3099
        %v3124 = vadd.f32 %v3093, %v3099
        %v3125 = vmax.f32 %v3101, 0.0
        %v3126 = vmax.f32 %v3102, 0.0
        %v3127 = vmax.f32 %v3103, 0.0
        %v3128 = vmax.f32 %v3104, 0.0
        %v3129 = vmax.f32 %v3105, 0.0
        %v3130 = vmax.f32 %v3106, 0.0
        %v3131 = vmax.f32 %v3107, 0.0
        %v3132 = vmax.f32 %v3108, 0.0
        %v3133 = vmax.f32 %v3109, 0.0
        %v3134 = vmax.f32 %v3110, 0.0
        %v3135 = vmax.f32 %v3111, 0.0
        %v3136 = vmax.f32 %v3112, 0.0
        %v3137 = vmax.f32 %v3113, 0.0
        %v3138 = vmax.f32 %v3114, 0.0
        %v3139 = vmax.f32 %v3115, 0.0
        %v3140 = vmax.f32 %v3116, 0.0
        %v3141 = vmax.f32 %v3117, 0.0
        %v3142 = vmax.f32 %v3118, 0.0
        %v3143 = vmax.f32 %v3119, 0.0
        %v3144 = vmax.f32 %v3120, 0.0
        %v3145 = vmax.f32 %v3121, 0.0
        %v3146 = vmax.f32 %v3122, 0.0
        %v3147 = vmax.f32 %v3123, 0.0
        %v3148 = vmax.f32 %v3124, 0.0
        %v3149 = vpack.c.bf16 %v3126, %v3125
        %v3150 = vpack.c.bf16 %v3128, %v3127
        %v3151 = vpack.c.bf16 %v3130, %v3129
        %v3152 = vpack.c.bf16 %v3132, %v3131
        %v3153 = vpack.c.bf16 %v3134, %v3133
        %v3154 = vpack.c.bf16 %v3136, %v3135
        %v3155 = vpack.c.bf16 %v3138, %v3137
        %v3156 = vpack.c.bf16 %v3140, %v3139
        %v3157 = vpack.c.bf16 %v3142, %v3141
        %v3158 = vpack.c.bf16 %v3144, %v3143
        %v3159 = vpack.c.bf16 %v3146, %v3145
        %v3160 = vpack.c.bf16 %v3148, %v3147
        %v3173 = vunpack.c.l.b16 %v3149
        %v3174 = vunpack.c.h.b16 %v3149
        %v3175 = vunpack.c.l.b16 %v3150
        %v3176 = vunpack.c.h.b16 %v3150
        %v3177 = vunpack.c.l.b16 %v3151
        %v3178 = vunpack.c.h.b16 %v3151
        %v3179 = vunpack.c.l.b16 %v3152
        %v3180 = vunpack.c.h.b16 %v3152
        %v3181 = vunpack.c.l.b16 %v3153
        %v3182 = vunpack.c.h.b16 %v3153
        %v3183 = vunpack.c.l.b16 %v3154
        %v3184 = vunpack.c.h.b16 %v3154
        %v3185 = vunpack.c.l.b16 %v3155
        %v3186 = vunpack.c.h.b16 %v3155
        %v3187 = vunpack.c.l.b16 %v3156
        %v3188 = vunpack.c.h.b16 %v3156
        %v3189 = vunpack.c.l.b16 %v3157
        %v3190 = vunpack.c.h.b16 %v3157
        %v3191 = vunpack.c.l.b16 %v3158
        %v3192 = vunpack.c.h.b16 %v3158
        %v3193 = vunpack.c.l.b16 %v3159
        %v3194 = vunpack.c.h.b16 %v3159
        %v3195 = vunpack.c.l.b16 %v3160
        %v3196 = vunpack.c.h.b16 %v3160
        %v3197 = vpack.c.b16 %v3173, %v3173
        %v3198 = vpack.c.b16 %v3174, %v3174
        %v3199 = vpack.c.b16 %v3175, %v3175
        %v3200 = vpack.c.b16 %v3176, %v3176
        %v3201 = vpack.c.b16 %v3177, %v3177
        %v3202 = vpack.c.b16 %v3178, %v3178
        %v3203 = vpack.c.b16 %v3179, %v3179
        %v3204 = vpack.c.b16 %v3180, %v3180
        %v3205 = vpack.c.b16 %v3181, %v3181
        %v3206 = vpack.c.b16 %v3182, %v3182
        %v3207 = vpack.c.b16 %v3183, %v3183
        %v3208 = vpack.c.b16 %v3184, %v3184
        %v3209 = vpack.c.b16 %v3185, %v3185
        %v3210 = vpack.c.b16 %v3186, %v3186
        %v3211 = vpack.c.b16 %v3187, %v3187
        %v3212 = vpack.c.b16 %v3188, %v3188
        %v3213 = vpack.c.b16 %v3189, %v3189
        %v3214 = vpack.c.b16 %v3190, %v3190
        %v3215 = vpack.c.b16 %v3191, %v3191
        %v3216 = vpack.c.b16 %v3192, %v3192
        %v3217 = vpack.c.b16 %v3193, %v3193
        %v3218 = vpack.c.b16 %v3194, %v3194
        %v3219 = vpack.c.b16 %v3195, %v3195
        %v3220 = vpack.c.b16 %v3196, %v3196
        %vm3245 = vcmask 125952
        %3246 = vst.msk [vmem:[%s233] sm:$0xf] %vm3245, %v3197
        %3247 = vst.msk [vmem:[%s233 + $0x4] sm:$0xf] %vm3245, %v3198
        %3248 = vst.msk [vmem:[%s233 + $0x8] sm:$0xf] %vm3245, %v3199
        %3249 = vst.msk [vmem:[%s233 + $0xc] sm:$0xf] %vm3245, %v3200
        %3250 = vst.msk [vmem:[%s233 + $0x10] sm:$0xf] %vm3245, %v3201
        %3251 = vst.msk [vmem:[%s233 + $0x14] sm:$0xf] %vm3245, %v3202
        %3252 = vst.msk [vmem:[%s233 + $0x18] sm:$0xf] %vm3245, %v3203
        %3253 = vst.msk [vmem:[%s233 + $0x1c] sm:$0xf] %vm3245, %v3204
        %3254 = vst.msk [vmem:[%s233 + $0x20] sm:$0xf] %vm3245, %v3205
        %3255 = vst.msk [vmem:[%s233 + $0x24] sm:$0xf] %vm3245, %v3206
        %3256 = vst.msk [vmem:[%s233 + $0x28] sm:$0xf] %vm3245, %v3207
        %3257 = vst.msk [vmem:[%s233 + $0x2c] sm:$0xf] %vm3245, %v3208
        %3258 = vst.msk [vmem:[%s233 + $0x30] sm:$0xf] %vm3245, %v3209
        %3259 = vst.msk [vmem:[%s233 + $0x34] sm:$0xf] %vm3245, %v3210
        %3260 = vst.msk [vmem:[%s233 + $0x38] sm:$0xf] %vm3245, %v3211
        %3261 = vst.msk [vmem:[%s233 + $0x3c] sm:$0xf] %vm3245, %v3212
        %3262 = vst.msk [vmem:[%s233 + $0x40] sm:$0xf] %vm3245, %v3213
        %3263 = vst.msk [vmem:[%s233 + $0x44] sm:$0xf] %vm3245, %v3214
        %3264 = vst.msk [vmem:[%s233 + $0x48] sm:$0xf] %vm3245, %v3215
        %3265 = vst.msk [vmem:[%s233 + $0x4c] sm:$0xf] %vm3245, %v3216
        %3266 = vst.msk [vmem:[%s233 + $0x50] sm:$0xf] %vm3245, %v3217
        %3267 = vst.msk [vmem:[%s233 + $0x54] sm:$0xf] %vm3245, %v3218
        %3268 = vst.msk [vmem:[%s233 + $0x58] sm:$0xf] %vm3245, %v3219
        %3269 = vst.msk [vmem:[%s233 + $0x5c] sm:$0xf] %vm3245, %v3220
      $region44: #{fpn_psp_head_forward.8} parent=31 // pred_fallthru
        _
      %p3270 = scmp.lt.s32.totalorder %s19, 1
      %s3271 = scalar_select %p3270, %s19, 1
      %p3272 = scmp.lt.s32.totalorder %s20, 1
      %s3273 = scalar_select %p3272, %s20, 1
      %s3274 = smul.addr %s3273, 24
      %s3275 = smul.addr %s3271, 48
      %s3276 = sadd.s32 %s3274, %s3275
      %s3277 = smul.addr %s3276, 4
      %s3278 = scalar_lea.vmem %s3, %s3277
      // Predicated region
      $region45: #{fpn_psp_head_forward.8} parent=31 // pred_check
        %p3279 = pneg %p128
      $region46: #{fpn_psp_head_forward.8} parent=31 // pred_check_branch
        %3281 = sbr.rel (%p3279) target = $region48
      $region47: #{fpn_psp_head_forward.8} parent=31 // pred_region
        _
      $region48: #{fpn_psp_head_forward.8} parent=31 // pred_fallthru
        _
    $region32: #{fpn_psp_head_forward.8} parent=5 // pred_fallthru
      _
    %p3282 = scmp.le.s32.totalorder 2, %s9
    // Predicated region
    $region49: #{fpn_psp_head_forward.8} parent=5 // pred_check
      %p3283 = pneg %p3282
    $region50: #{fpn_psp_head_forward.8} parent=5 // pred_check_branch
      %3285 = sbr.rel (%p3283) target = $region52
    $region51: #{fpn_psp_head_forward.8} parent=5 // pred_region
      %s3286 = ssub.s32 %s9, 2
      // Predicated region
      $region53: #{fpn_psp_head_forward.8} parent=51 // pred_check
        %p3287 = pneg %p134
      $region54: #{fpn_psp_head_forward.8} parent=51 // pred_check_branch
        %3289 = sbr.rel (%p3287) target = $region56
      $region55: #{fpn_psp_head_forward.8} parent=51 // pred_region
        %p3290 = scmp.lt.s32.totalorder %s22, 1
        %s3291 = scalar_select %p3290, %s22, 1
        %p3292 = scmp.lt.s32.totalorder %s23, 1
        %s3293 = scalar_select %p3292, %s23, 1
        %s3294 = smul.addr %s3293, 24
        %s3295 = smul.addr %s3291, 48
        %s3296 = sadd.s32 %s3294, %s3295
        %s3297 = smul.addr %s3296, 4
        %s3298 = scalar_lea.vmem %s3, %s3297
      $region56: #{fpn_psp_head_forward.8} parent=51 // pred_fallthru
        _
    $region52: #{fpn_psp_head_forward.8} parent=5 // pred_fallthru
      _
  $region6: #{fpn_psp_head_forward.8} parent=0 // loop_footer
    %s13 = sadd.s32 1, %s9
  $region7: #{fpn_psp_head_forward.8} parent=0 // loop_footer_branch
    %8 = sbr.rel target = $region3
  $region8: #{fpn_psp_head_forward.8} parent=0 // loop_exit
    _

</llo_original>
